<compile_context>
chip_gen: v7x
topology: tpu7x:2x2x1
jax: 0.10.0
libtpu: 0.0.40
codegen_flags: <defaults>
</compile_context>

<pallas_src>
import functools

import jax
import jax.numpy as jnp
from jax import lax
from jax.experimental import pallas as pl
from jax.experimental.pallas import tpu as pltpu

# Hyperparameters implied by the PyTorch module's forward path.
VOCAB = 51           # linear_0.in_features = 250 = 10 * (VOCAB - 26)  => VOCAB = 51
MOL_LEN = 16         # tokenizer.mol_length  (= conv_1 in_channels)
LATENT = 50
K1, K2, K3 = 9, 9, 11
C1, C2, C3 = 9, 9, 10
L1 = VOCAB - K1 + 1  # 43
L2 = L1 - K2 + 1     # 35
L3 = L2 - K3 + 1     # 25
FLAT = C3 * L3       # 250
H0 = 435
FEAT1 = MOL_LEN * VOCAB   # 816 : flattened (channel, vocab) one-hot width
OUT_W = 128               # fused mu|logvar head, padded to a full lane tile


def _round_up(x, m):
    return (x + m - 1) // m * m


# Lane-padded (multiple-of-128) widths for every intermediate.
FEAT1P = _round_up(FEAT1, 128)    # 896
N1, N1P = C1 * L1, _round_up(C1 * L1, 128)   # 387 -> 512
N2, N2P = C2 * L2, _round_up(C2 * L2, 128)   # 315 -> 384
N3P = _round_up(FLAT, 128)                   # 250 -> 256
H0P = _round_up(H0, 128)                     # 435 -> 512

DOT_DTYPE = jnp.bfloat16  # MXU input dtype (accumulation stays f32)


def _selu(x):
    alpha = 1.6732632423543772
    scale = 1.0507009873554805
    # exp(min(x,0)) avoids overflow in the unused branch of where.  selu(0) == 0, so the
    # zero-padded lanes stay exactly zero through this nonlinearity.
    return scale * jnp.where(x > 0, x, alpha * (jnp.exp(jnp.minimum(x, 0.0)) - 1.0))


def encoder_kernel(tok_ref, sel_ref, vmod_ref,
                   w1_ref, b1_ref, w2_ref, b2_ref, w3_ref, b3_ref,
                   w0_ref, b0_ref, wh_ref, bh_ref, out_ref):
    f32 = jnp.float32

    # ---- one-hot for the whole batch tile, laid out (TB, FEAT1P) ----
    # tok_rep[b, m*VOCAB + v] = tokens[b, m] via a tiny selector matmul; bf16 is exact
    # for integers < 256, so the compare below reproduces one_hot exactly.
    tok_b = tok_ref[...].astype(DOT_DTYPE)                               # (TB, MOL_LEN)
    tok_rep = jnp.dot(tok_b, sel_ref[...], preferred_element_type=f32)   # (TB, FEAT1P)
    x = (jnp.abs(tok_rep - vmod_ref[...]) < 0.5).astype(DOT_DTYPE)       # one-hot

    # ---- conv_1 as one matmul against its (lane-padded) block-Toeplitz weight ----
    h1 = jnp.dot(x, w1_ref[...], preferred_element_type=f32) + b1_ref[...]
    h1 = jnp.maximum(h1, 0.0).astype(DOT_DTYPE)                          # (TB, N1P)

    # ---- conv_2 ----
    h2 = jnp.dot(h1, w2_ref[...], preferred_element_type=f32) + b2_ref[...]
    h2 = jnp.maximum(h2, 0.0).astype(DOT_DTYPE)                          # (TB, N2P)

    # ---- conv_3 ----
    h3 = jnp.dot(h2, w3_ref[...], preferred_element_type=f32) + b3_ref[...]
    h3 = jnp.maximum(h3, 0.0).astype(DOT_DTYPE)                          # (TB, N3P)

    # ---- flatten (already channel-major) + linear_0 + SELU ----
    y = jnp.dot(h3, w0_ref[...], preferred_element_type=f32) + b0_ref[...]
    y = _selu(y).astype(DOT_DTYPE)                                       # (TB, H0P)

    # ---- fused heads: [linear_1 | linear_2 | zero-pad] -> lane-dense (TB, 128) ----
    out_ref[...] = jnp.dot(y, wh_ref[...], preferred_element_type=f32) + bh_ref[...]


def _conv_toeplitz(w, l_out):
    """Expand Conv1d weight (C_out, C_in, K) into a (C_in*L_in, C_out*L_out) matrix
    so that  y_flat = x_flat @ T  reproduces VALID conv with channel-major flattening."""
    c_out, c_in, k = w.shape
    l_in = l_out + k - 1
    d = jnp.arange(l_in)[:, None] - jnp.arange(l_out)[None, :]          # (L_in, L_out)
    mask = (d >= 0) & (d < k)
    kidx = jnp.clip(d, 0, k - 1)
    g = jnp.take(w, kidx, axis=2)                                       # (C_out, C_in, L_in, L_out)
    g = jnp.where(mask[None, None], g, 0.0)
    return jnp.transpose(g, (1, 2, 0, 3)).reshape(c_in * l_in, c_out * l_out)


def _pad2d(a, rows, cols):
    return jnp.pad(a, ((0, rows - a.shape[0]), (0, cols - a.shape[1])))


@functools.partial(jax.jit, static_argnames=("tile_b",))
def tipd_encoder_forward(tokens, params, *, tile_b=256):
    """tokens: (B, MOL_LEN) int. Returns (mu, logvar), each (B, LATENT) f32."""
    B = tokens.shape[0]
    (w1, b1, w2, b2, w3, b3, W0, b0, Wm, bm, Wv, bv) = params

    # ---- parameter re-layout (glue, plain JAX, traced once per jit) ----
    # Zero padding of rows/cols keeps results exact: padded activation lanes are 0 and
    # the matching weight rows are 0, so they never contribute.
    w1t = _pad2d(_conv_toeplitz(w1, L1), FEAT1P, N1P).astype(DOT_DTYPE)   # (896, 512)
    w2t = _pad2d(_conv_toeplitz(w2, L2), N1P, N2P).astype(DOT_DTYPE)      # (512, 384)
    w3t = _pad2d(_conv_toeplitz(w3, L3), N2P, N3P).astype(DOT_DTYPE)      # (384, 256)
    b1r = _pad2d(jnp.repeat(b1, L1).reshape(1, N1), 1, N1P).astype(jnp.float32)
    b2r = _pad2d(jnp.repeat(b2, L2).reshape(1, N2), 1, N2P).astype(jnp.float32)
    b3r = _pad2d(jnp.repeat(b3, L3).reshape(1, FLAT), 1, N3P).astype(jnp.float32)
    w0t = _pad2d(W0.T, N3P, H0P).astype(DOT_DTYPE)                        # (256, 512)
    b0r = _pad2d(b0.reshape(1, H0), 1, H0P).astype(jnp.float32)
    wh = jnp.concatenate([Wm.T, Wv.T], axis=1)                            # (435, 100)
    wh = _pad2d(wh, H0P, OUT_W).astype(DOT_DTYPE)                         # (512, 128)
    bh = jnp.concatenate(
        [bm, bv, jnp.zeros((OUT_W - 2 * LATENT,), jnp.float32)]).reshape(1, OUT_W)

    # selector for in-kernel one-hot: sel[m, m*VOCAB + v] = 1 ; vmod[j] = j % VOCAB
    # (padded lanes get a huge vmod so the compare is always false there).
    j = jnp.arange(FEAT1)
    sel = (j[None, :] // VOCAB == jnp.arange(MOL_LEN)[:, None])
    sel = _pad2d(sel.astype(jnp.float32), MOL_LEN, FEAT1P).astype(DOT_DTYPE)  # (16, 896)
    vmod = _pad2d((j % VOCAB).astype(jnp.float32).reshape(1, FEAT1), 1, FEAT1P)
    vmod = vmod + jnp.pad(jnp.zeros((1, FEAT1), jnp.float32),
                          ((0, 0), (0, FEAT1P - FEAT1)), constant_values=1e4)

    # ---- batch tiling ----
    TB = min(tile_b, _round_up(B, 8))
    B_pad = _round_up(B, TB)
    tok_p = jnp.pad(tokens.astype(jnp.int32), ((0, B_pad - B), (0, 0)))

    def full_spec(shape):
        nd = len(shape)
        return pl.BlockSpec(shape, lambda b, _nd=nd: (0,) * _nd)

    out = pl.pallas_call(
        encoder_kernel,
        out_shape=jax.ShapeDtypeStruct((B_pad, OUT_W), jnp.float32),
        grid_spec=pltpu.PrefetchScalarGridSpec(
            num_scalar_prefetch=0,
            grid=(B_pad // TB,),
            in_specs=[
                pl.BlockSpec((TB, MOL_LEN), lambda b: (b, 0)),
                full_spec(sel.shape), full_spec(vmod.shape),
                full_spec(w1t.shape), full_spec(b1r.shape),
                full_spec(w2t.shape), full_spec(b2r.shape),
                full_spec(w3t.shape), full_spec(b3r.shape),
                full_spec(w0t.shape), full_spec(b0r.shape),
                full_spec(wh.shape), full_spec(bh.shape),
            ],
            out_specs=pl.BlockSpec((TB, OUT_W), lambda b: (b, 0)),
        ),
        compiler_params=pltpu.CompilerParams(
            dimension_semantics=("parallel",)),   # batch axis -> both TCs on v7x
    )(tok_p, sel, vmod, w1t, b1r, w2t, b2r, w3t, b3r, w0t, b0r, wh, bh)

    return out[:B, :LATENT], out[:B, LATENT:2 * LATENT]


def ref_forward(tokens, params):
    """Pure-JAX reference matching the PyTorch forward semantics (f32)."""
    (w1, b1, w2, b2, w3, b3, W0, b0, Wm, bm, Wv, bv) = params
    x = jax.nn.one_hot(tokens, VOCAB, dtype=jnp.float32)   # (B, MOL_LEN, VOCAB)

    def conv1d(x, w, b):   # x: (B, Cin, L), w: (Cout, Cin, K)
        y = lax.conv_general_dilated(x, w, (1,), "VALID",
                                     dimension_numbers=("NCH", "OIH", "NCH"))
        return y + b[None, :, None]

    h = jax.nn.relu(conv1d(x, w1, b1))
    h = jax.nn.relu(conv1d(h, w2, b2))
    h = jax.nn.relu(conv1d(h, w3, b3))
    flat = h.reshape(h.shape[0], -1)                        # (B, 250)
    y = jax.nn.selu(flat @ W0.T + b0)
    return y @ Wm.T + bm, y @ Wv.T + bv


def init_params(key):
    ks = jax.random.split(key, 12)
    s = 0.1
    w1 = jax.random.normal(ks[0], (C1, MOL_LEN, K1), jnp.float32) * s
    b1 = jax.random.normal(ks[1], (C1,), jnp.float32) * s
    w2 = jax.random.normal(ks[2], (C2, C1, K2), jnp.float32) * s
    b2 = jax.random.normal(ks[3], (C2,), jnp.float32) * s
    w3 = jax.random.normal(ks[4], (C3, C2, K3), jnp.float32) * s
    b3 = jax.random.normal(ks[5], (C3,), jnp.float32) * s
    W0 = jax.random.normal(ks[6], (H0, FLAT), jnp.float32) * s
    b0 = jax.random.normal(ks[7], (H0,), jnp.float32) * s
    Wm = jax.random.normal(ks[8], (LATENT, H0), jnp.float32) * s
    bm = jax.random.normal(ks[9], (LATENT,), jnp.float32) * s
    Wv = jax.random.normal(ks[10], (LATENT, H0), jnp.float32) * s
    bv = jax.random.normal(ks[11], (LATENT,), jnp.float32) * s
    return (w1, b1, w2, b2, w3, b3, W0, b0, Wm, bm, Wv, bv)

# TODO(synk): the LSTM / embedding / final_mlp_* branch is dead code in forward()
# (returned only after an unconditional return), so it is intentionally not implemented.


if __name__ == "__main__":
    key = jax.random.PRNGKey(0)
    pkey, tkey = jax.random.split(key)
    params = init_params(pkey)

    # B chosen to exercise multi-step batch tiling + padding (300 -> 2 grid steps of 256).
    B = 300
    tokens = jax.random.randint(tkey, (B, MOL_LEN), 0, VOCAB, dtype=jnp.int32)

    mu, lv = tipd_encoder_forward(tokens, params)
    jax.block_until_ready((mu, lv))

    mu_ref, lv_ref = ref_forward(tokens, params)
    assert mu.shape == (B, LATENT) and lv.shape == (B, LATENT)
    # bf16 MXU inputs (f32 accumulation): tolerance loosened accordingly.
    assert jnp.allclose(mu, mu_ref, rtol=2e-2, atol=2e-2), "mu mismatch"
    assert jnp.allclose(lv, lv_ref, rtol=2e-2, atol=2e-2), "logvar mismatch"

    print("KERNEL_OK")
</pallas_src>

<mosaic_0001>
module attributes {stable_mosaic.version = 11 : i64} {
  func.func @encoder_kernel(%arg0: i32, %arg1: memref<256x16xi32, #tpu.memory_space<vmem>>, %arg2: memref<16x896xbf16, #tpu.memory_space<vmem>>, %arg3: memref<1x896xf32, #tpu.memory_space<vmem>>, %arg4: memref<896x512xbf16, #tpu.memory_space<vmem>>, %arg5: memref<1x512xf32, #tpu.memory_space<vmem>>, %arg6: memref<512x384xbf16, #tpu.memory_space<vmem>>, %arg7: memref<1x384xf32, #tpu.memory_space<vmem>>, %arg8: memref<384x256xbf16, #tpu.memory_space<vmem>>, %arg9: memref<1x256xf32, #tpu.memory_space<vmem>>, %arg10: memref<256x512xbf16, #tpu.memory_space<vmem>>, %arg11: memref<1x512xf32, #tpu.memory_space<vmem>>, %arg12: memref<512x128xbf16, #tpu.memory_space<vmem>>, %arg13: memref<1x128xf32, #tpu.memory_space<vmem>>, %arg14: memref<256x128xf32, #tpu.memory_space<vmem>>) attributes {dimension_semantics = [#tpu.dimension_semantics<parallel>], iteration_bounds = array<i64: 2>, scalar_prefetch = 0 : i64, scratch_operands = 0 : i64, tpu.core_type = #tpu.core_type<tc>, window_params = [{transform_indices = @transform_0, window_bounds = array<i64: 256, 16>}, {pipeline_mode = #tpu.pipeline_mode<synchronous>, transform_indices = @transform_1, window_bounds = array<i64: 16, 896>}, {pipeline_mode = #tpu.pipeline_mode<synchronous>, transform_indices = @transform_2, window_bounds = array<i64: 1, 896>}, {pipeline_mode = #tpu.pipeline_mode<synchronous>, transform_indices = @transform_3, window_bounds = array<i64: 896, 512>}, {pipeline_mode = #tpu.pipeline_mode<synchronous>, transform_indices = @transform_4, window_bounds = array<i64: 1, 512>}, {pipeline_mode = #tpu.pipeline_mode<synchronous>, transform_indices = @transform_5, window_bounds = array<i64: 512, 384>}, {pipeline_mode = #tpu.pipeline_mode<synchronous>, transform_indices = @transform_6, window_bounds = array<i64: 1, 384>}, {pipeline_mode = #tpu.pipeline_mode<synchronous>, transform_indices = @transform_7, window_bounds = array<i64: 384, 256>}, {pipeline_mode = #tpu.pipeline_mode<synchronous>, transform_indices = @transform_8, window_bounds = array<i64: 1, 256>}, {pipeline_mode = #tpu.pipeline_mode<synchronous>, transform_indices = @transform_9, window_bounds = array<i64: 256, 512>}, {pipeline_mode = #tpu.pipeline_mode<synchronous>, transform_indices = @transform_10, window_bounds = array<i64: 1, 512>}, {pipeline_mode = #tpu.pipeline_mode<synchronous>, transform_indices = @transform_11, window_bounds = array<i64: 512, 128>}, {pipeline_mode = #tpu.pipeline_mode<synchronous>, transform_indices = @transform_12, window_bounds = array<i64: 1, 128>}, {transform_indices = @transform_13, window_bounds = array<i64: 256, 128>}]} {
    %c0 = arith.constant 0 : index
    %c0_0 = arith.constant 0 : index
    %0 = vector.load %arg1[%c0, %c0_0] : memref<256x16xi32, #tpu.memory_space<vmem>>, vector<256x16xi32>
    %1 = arith.sitofp %0 : vector<256x16xi32> to vector<256x16xbf16>
    %c0_1 = arith.constant 0 : index
    %c0_2 = arith.constant 0 : index
    %2 = vector.load %arg2[%c0_1, %c0_2] : memref<16x896xbf16, #tpu.memory_space<vmem>>, vector<16x896xbf16>
    %cst = arith.constant dense<0.000000e+00> : vector<256x896xf32>
    %3 = tpu.matmul %1, %2, %cst {dimension_numbers = #tpu.dot_dimension_numbers<[1], [0], [0], [1], [0, 0, 1, 1], [], []>} : vector<256x16xbf16>, vector<16x896xbf16>, vector<256x896xf32> -> vector<256x896xf32>
    %c0_3 = arith.constant 0 : index
    %c0_4 = arith.constant 0 : index
    %4 = vector.load %arg3[%c0_3, %c0_4] : memref<1x896xf32, #tpu.memory_space<vmem>>, vector<1x896xf32>
    %5 = vector.broadcast %4 : vector<1x896xf32> to vector<256x896xf32>
    %6 = arith.subf %3, %5 : vector<256x896xf32>
    %7 = math.absf %6 : vector<256x896xf32>
    %cst_5 = arith.constant 5.000000e-01 : f32
    %8 = vector.broadcast %cst_5 : f32 to vector<256x896xf32>
    %9 = arith.cmpf olt, %7, %8 : vector<256x896xf32>
    %10 = arith.extui %9 : vector<256x896xi1> to vector<256x896xi32>
    %11 = arith.sitofp %10 : vector<256x896xi32> to vector<256x896xf32>
    %12 = arith.truncf %11 : vector<256x896xf32> to vector<256x896xbf16>
    %c0_6 = arith.constant 0 : index
    %c0_7 = arith.constant 0 : index
    %13 = vector.load %arg4[%c0_6, %c0_7] : memref<896x512xbf16, #tpu.memory_space<vmem>>, vector<896x512xbf16>
    %cst_8 = arith.constant dense<0.000000e+00> : vector<256x512xf32>
    %14 = tpu.matmul %12, %13, %cst_8 {dimension_numbers = #tpu.dot_dimension_numbers<[1], [0], [0], [1], [0, 0, 1, 1], [], []>} : vector<256x896xbf16>, vector<896x512xbf16>, vector<256x512xf32> -> vector<256x512xf32>
    %c0_9 = arith.constant 0 : index
    %c0_10 = arith.constant 0 : index
    %15 = vector.load %arg5[%c0_9, %c0_10] : memref<1x512xf32, #tpu.memory_space<vmem>>, vector<1x512xf32>
    %16 = vector.broadcast %15 : vector<1x512xf32> to vector<256x512xf32>
    %17 = arith.addf %14, %16 : vector<256x512xf32>
    %cst_11 = arith.constant 0.000000e+00 : f32
    %18 = vector.broadcast %cst_11 : f32 to vector<256x512xf32>
    %19 = arith.maximumf %17, %18 : vector<256x512xf32>
    %20 = arith.truncf %19 : vector<256x512xf32> to vector<256x512xbf16>
    %c0_12 = arith.constant 0 : index
    %c0_13 = arith.constant 0 : index
    %21 = vector.load %arg6[%c0_12, %c0_13] : memref<512x384xbf16, #tpu.memory_space<vmem>>, vector<512x384xbf16>
    %cst_14 = arith.constant dense<0.000000e+00> : vector<256x384xf32>
    %22 = tpu.matmul %20, %21, %cst_14 {dimension_numbers = #tpu.dot_dimension_numbers<[1], [0], [0], [1], [0, 0, 1, 1], [], []>} : vector<256x512xbf16>, vector<512x384xbf16>, vector<256x384xf32> -> vector<256x384xf32>
    %c0_15 = arith.constant 0 : index
    %c0_16 = arith.constant 0 : index
    %23 = vector.load %arg7[%c0_15, %c0_16] : memref<1x384xf32, #tpu.memory_space<vmem>>, vector<1x384xf32>
    %24 = vector.broadcast %23 : vector<1x384xf32> to vector<256x384xf32>
    %25 = arith.addf %22, %24 : vector<256x384xf32>
    %cst_17 = arith.constant 0.000000e+00 : f32
    %26 = vector.broadcast %cst_17 : f32 to vector<256x384xf32>
    %27 = arith.maximumf %25, %26 : vector<256x384xf32>
    %28 = arith.truncf %27 : vector<256x384xf32> to vector<256x384xbf16>
    %c0_18 = arith.constant 0 : index
    %c0_19 = arith.constant 0 : index
    %29 = vector.load %arg8[%c0_18, %c0_19] : memref<384x256xbf16, #tpu.memory_space<vmem>>, vector<384x256xbf16>
    %cst_20 = arith.constant dense<0.000000e+00> : vector<256x256xf32>
    %30 = tpu.matmul %28, %29, %cst_20 {dimension_numbers = #tpu.dot_dimension_numbers<[1], [0], [0], [1], [0, 0, 1, 1], [], []>} : vector<256x384xbf16>, vector<384x256xbf16>, vector<256x256xf32> -> vector<256x256xf32>
    %c0_21 = arith.constant 0 : index
    %c0_22 = arith.constant 0 : index
    %31 = vector.load %arg9[%c0_21, %c0_22] : memref<1x256xf32, #tpu.memory_space<vmem>>, vector<1x256xf32>
    %32 = vector.broadcast %31 : vector<1x256xf32> to vector<256x256xf32>
    %33 = arith.addf %30, %32 : vector<256x256xf32>
    %cst_23 = arith.constant 0.000000e+00 : f32
    %34 = vector.broadcast %cst_23 : f32 to vector<256x256xf32>
    %35 = arith.maximumf %33, %34 : vector<256x256xf32>
    %36 = arith.truncf %35 : vector<256x256xf32> to vector<256x256xbf16>
    %c0_24 = arith.constant 0 : index
    %c0_25 = arith.constant 0 : index
    %37 = vector.load %arg10[%c0_24, %c0_25] : memref<256x512xbf16, #tpu.memory_space<vmem>>, vector<256x512xbf16>
    %cst_26 = arith.constant dense<0.000000e+00> : vector<256x512xf32>
    %38 = tpu.matmul %36, %37, %cst_26 {dimension_numbers = #tpu.dot_dimension_numbers<[1], [0], [0], [1], [0, 0, 1, 1], [], []>} : vector<256x256xbf16>, vector<256x512xbf16>, vector<256x512xf32> -> vector<256x512xf32>
    %c0_27 = arith.constant 0 : index
    %c0_28 = arith.constant 0 : index
    %39 = vector.load %arg11[%c0_27, %c0_28] : memref<1x512xf32, #tpu.memory_space<vmem>>, vector<1x512xf32>
    %40 = vector.broadcast %39 : vector<1x512xf32> to vector<256x512xf32>
    %41 = arith.addf %38, %40 : vector<256x512xf32>
    %cst_29 = arith.constant 0.000000e+00 : f32
    %42 = vector.broadcast %cst_29 : f32 to vector<256x512xf32>
    %43 = arith.cmpf ogt, %41, %42 : vector<256x512xf32>
    %cst_30 = arith.constant 0.000000e+00 : f32
    %44 = vector.broadcast %cst_30 : f32 to vector<256x512xf32>
    %45 = arith.minimumf %41, %44 : vector<256x512xf32>
    %46 = math.exp %45 : vector<256x512xf32>
    %cst_31 = arith.constant 1.000000e+00 : f32
    %47 = vector.broadcast %cst_31 : f32 to vector<256x512xf32>
    %48 = arith.subf %46, %47 : vector<256x512xf32>
    %cst_32 = arith.constant 1.67326319 : f32
    %49 = vector.broadcast %cst_32 : f32 to vector<256x512xf32>
    %50 = arith.mulf %49, %48 : vector<256x512xf32>
    %51 = arith.select %43, %41, %50 : vector<256x512xi1>, vector<256x512xf32>
    %cst_33 = arith.constant 1.05070102 : f32
    %52 = vector.broadcast %cst_33 : f32 to vector<256x512xf32>
    %53 = arith.mulf %52, %51 : vector<256x512xf32>
    %54 = arith.truncf %53 : vector<256x512xf32> to vector<256x512xbf16>
    %c0_34 = arith.constant 0 : index
    %c0_35 = arith.constant 0 : index
    %55 = vector.load %arg12[%c0_34, %c0_35] : memref<512x128xbf16, #tpu.memory_space<vmem>>, vector<512x128xbf16>
    %cst_36 = arith.constant dense<0.000000e+00> : vector<256x128xf32>
    %56 = tpu.matmul %54, %55, %cst_36 {dimension_numbers = #tpu.dot_dimension_numbers<[1], [0], [0], [1], [0, 0, 1, 1], [], []>} : vector<256x512xbf16>, vector<512x128xbf16>, vector<256x128xf32> -> vector<256x128xf32>
    %c0_37 = arith.constant 0 : index
    %c0_38 = arith.constant 0 : index
    %57 = vector.load %arg13[%c0_37, %c0_38] : memref<1x128xf32, #tpu.memory_space<vmem>>, vector<1x128xf32>
    %58 = vector.broadcast %57 : vector<1x128xf32> to vector<256x128xf32>
    %59 = arith.addf %56, %58 : vector<256x128xf32>
    %c0_39 = arith.constant 0 : index
    %c0_40 = arith.constant 0 : index
    %60 = vector.load %arg14[%c0_39, %c0_40] : memref<256x128xf32, #tpu.memory_space<vmem>>, vector<256x128xf32>
    tpu.vector_store %arg14[%c0_39, %c0_40], %59 {strides = array<i32>} : memref<256x128xf32, #tpu.memory_space<vmem>>, vector<256x128xf32>,
    return
  }
  func.func @transform_0(%arg0: i32) -> (i32, i32) {
    %c0_i32 = arith.constant 0 : i32
    %c0_i32_0 = arith.constant 0 : i32
    return %arg0, %c0_i32 : i32, i32
  }
  func.func @transform_1(%arg0: i32) -> (i32, i32) {
    %c0_i32 = arith.constant 0 : i32
    %c0_i32_0 = arith.constant 0 : i32
    %c0_i32_1 = arith.constant 0 : i32
    return %c0_i32, %c0_i32_0 : i32, i32
  }
  func.func @transform_2(%arg0: i32) -> (i32, i32) {
    %c0_i32 = arith.constant 0 : i32
    %c0_i32_0 = arith.constant 0 : i32
    %c0_i32_1 = arith.constant 0 : i32
    return %c0_i32, %c0_i32_0 : i32, i32
  }
  func.func @transform_3(%arg0: i32) -> (i32, i32) {
    %c0_i32 = arith.constant 0 : i32
    %c0_i32_0 = arith.constant 0 : i32
    %c0_i32_1 = arith.constant 0 : i32
    return %c0_i32, %c0_i32_0 : i32, i32
  }
  func.func @transform_4(%arg0: i32) -> (i32, i32) {
    %c0_i32 = arith.constant 0 : i32
    %c0_i32_0 = arith.constant 0 : i32
    %c0_i32_1 = arith.constant 0 : i32
    return %c0_i32, %c0_i32_0 : i32, i32
  }
  func.func @transform_5(%arg0: i32) -> (i32, i32) {
    %c0_i32 = arith.constant 0 : i32
    %c0_i32_0 = arith.constant 0 : i32
    %c0_i32_1 = arith.constant 0 : i32
    return %c0_i32, %c0_i32_0 : i32, i32
  }
  func.func @transform_6(%arg0: i32) -> (i32, i32) {
    %c0_i32 = arith.constant 0 : i32
    %c0_i32_0 = arith.constant 0 : i32
    %c0_i32_1 = arith.constant 0 : i32
    return %c0_i32, %c0_i32_0 : i32, i32
  }
  func.func @transform_7(%arg0: i32) -> (i32, i32) {
    %c0_i32 = arith.constant 0 : i32
    %c0_i32_0 = arith.constant 0 : i32
    %c0_i32_1 = arith.constant 0 : i32
    return %c0_i32, %c0_i32_0 : i32, i32
  }
  func.func @transform_8(%arg0: i32) -> (i32, i32) {
    %c0_i32 = arith.constant 0 : i32
    %c0_i32_0 = arith.constant 0 : i32
    %c0_i32_1 = arith.constant 0 : i32
    return %c0_i32, %c0_i32_0 : i32, i32
  }
  func.func @transform_9(%arg0: i32) -> (i32, i32) {
    %c0_i32 = arith.constant 0 : i32
    %c0_i32_0 = arith.constant 0 : i32
    %c0_i32_1 = arith.constant 0 : i32
    return %c0_i32, %c0_i32_0 : i32, i32
  }
  func.func @transform_10(%arg0: i32) -> (i32, i32) {
    %c0_i32 = arith.constant 0 : i32
    %c0_i32_0 = arith.constant 0 : i32
    %c0_i32_1 = arith.constant 0 : i32
    return %c0_i32, %c0_i32_0 : i32, i32
  }
  func.func @transform_11(%arg0: i32) -> (i32, i32) {
    %c0_i32 = arith.constant 0 : i32
    %c0_i32_0 = arith.constant 0 : i32
    %c0_i32_1 = arith.constant 0 : i32
    return %c0_i32, %c0_i32_0 : i32, i32
  }
  func.func @transform_12(%arg0: i32) -> (i32, i32) {
    %c0_i32 = arith.constant 0 : i32
    %c0_i32_0 = arith.constant 0 : i32
    %c0_i32_1 = arith.constant 0 : i32
    return %c0_i32, %c0_i32_0 : i32, i32
  }
  func.func @transform_13(%arg0: i32) -> (i32, i32) {
    %c0_i32 = arith.constant 0 : i32
    %c0_i32_0 = arith.constant 0 : i32
    return %arg0, %c0_i32 : i32, i32
  }
}

</mosaic_0001>

<llo_original>
// kernel: tipd_encoder_forward.1
$region0: #{tipd_encoder_forward.1}
  #allocation0 [shape = 'u32[]', space=smem, size = 0x4, offset = 0x4, fixed_abs, tag = 'smem constant byte address 0x4 - core index']
  #allocation1 [shape = 'u32[144,128]{1,0:T(1,128)}', space=vmem, size = 0x12000, scoped, tag = 'internal scratch']
  %s0 = inlined_call_operand.vmem [shape: s32[512,16], index: 0, kind: input, shape index: {}]
  %s1 = inlined_call_operand.vmem [shape: bf16[16,896], index: 1, kind: input, shape index: {}]
  %s2 = inlined_call_operand.vmem [shape: f32[1,896], index: 2, kind: input, shape index: {}]
  %s3 = inlined_call_operand.vmem [shape: bf16[896,512], index: 3, kind: input, shape index: {}]
  %s4 = inlined_call_operand.vmem [shape: f32[1,512], index: 4, kind: input, shape index: {}]
  %s5 = inlined_call_operand.vmem [shape: bf16[512,384], index: 5, kind: input, shape index: {}]
  %s6 = inlined_call_operand.vmem [shape: f32[1,384], index: 6, kind: input, shape index: {}]
  %s7 = inlined_call_operand.vmem [shape: bf16[384,256], index: 7, kind: input, shape index: {}]
  %s8 = inlined_call_operand.vmem [shape: f32[1,256], index: 8, kind: input, shape index: {}]
  %s9 = inlined_call_operand.vmem [shape: bf16[256,512], index: 9, kind: input, shape index: {}]
  %s10 = inlined_call_operand.vmem [shape: f32[1,512], index: 10, kind: input, shape index: {}]
  %s11 = inlined_call_operand.vmem [shape: bf16[512,128], index: 11, kind: input, shape index: {}]
  %s12 = inlined_call_operand.vmem [shape: f32[1,128], index: 12, kind: input, shape index: {}]
  %s13 = inlined_call_operand.vmem [shape: f32[512,128], index: 13, kind: output, shape index: {}]
  %s14 = sld [smem:[#allocation0]]
  $region85: #{tipd_encoder_forward.1} parent=0
    _
  %s16 = ssub.s32 1, %s14
  %s17 = scalar_select 0, %s16, %s14
  loop: start=0, step=1, limit=4
  $region2: #{tipd_encoder_forward.1} parent=0 // loop_pre_header
    _
  $region3: #{tipd_encoder_forward.1} parent=0 // loop_header
    %s19 = sphi 0, %s23
    %p20 = scmp.ge.s32.totalorder %s19, 4
    %s29 = sphi 0, %s31
    %s32 = sphi 0, %s29
    %s33 = sphi 0, %s32
    %s49 = sphi 0, %s33
    %s53 = sphi 0, %s53
    %s55 = sphi 0, %s53
    %s56 = sphi 0, %s55
    %s70 = sphi 0, %s56
    %s74 = sphi 0, %s74
    %s76 = sphi 0, %s74
    %s77 = sphi 0, %s76
    %s91 = sphi 0, %s77
    %s95 = sphi 0, %s95
    %s97 = sphi 0, %s95
    %s98 = sphi 0, %s97
    %s112 = sphi 0, %s98
    %s116 = sphi 0, %s116
    %s118 = sphi 0, %s116
    %s119 = sphi 0, %s118
    %s133 = sphi 0, %s119
    %s137 = sphi 0, %s137
    %s139 = sphi 0, %s137
    %s140 = sphi 0, %s139
    %s154 = sphi 0, %s140
    %s158 = sphi 0, %s158
    %s160 = sphi 0, %s158
    %s161 = sphi 0, %s160
    %s175 = sphi 0, %s161
    %s179 = sphi 0, %s179
    %s181 = sphi 0, %s179
    %s182 = sphi 0, %s181
    %s196 = sphi 0, %s182
    %s200 = sphi 0, %s200
    %s202 = sphi 0, %s200
    %s203 = sphi 0, %s202
    %s217 = sphi 0, %s203
    %s221 = sphi 0, %s221
    %s223 = sphi 0, %s221
    %s224 = sphi 0, %s223
    %s238 = sphi 0, %s224
    %s242 = sphi 0, %s242
    %s244 = sphi 0, %s242
    %s245 = sphi 0, %s244
    %s259 = sphi 0, %s245
    %s263 = sphi 0, %s263
    %s265 = sphi 0, %s263
    %s266 = sphi 0, %s265
    %s280 = sphi 0, %s266
    %s284 = sphi 0, %s284
    %s286 = sphi 0, %s284
    %s287 = sphi 0, %s286
    %s301 = sphi 0, %s287
    %s307 = sphi 0, %s309
    %s310 = sphi 0, %s307
    %s311 = sphi 0, %s310
    %s327 = sphi 0, %s311
  $region4: #{tipd_encoder_forward.1} parent=0 // loop_header_branch
    %22 = sbr.rel (%p20) target = $region8
  $region5: #{tipd_encoder_forward.1} parent=0 // loop_body
    %s24 = ssub.s32 %s19, 1
    %s25 = ssub.s32 %s19, 2
    %s26 = sadd.s32 %s19, 1
    %s27 = ssub.s32 %s19, %s26
    %p28 = scmp.eq.s32.totalorder %s27, 0
    %s30 = sadd.s32 %s29, 1
    %s31 = scalar_select %p28, %s29, %s30
    %p34 = pneg %p28
    %p35 = scmp.eq.s32.totalorder %s19, 1
    %p36 = por %p34, %p35
    %p37 = scmp.ne.s32.totalorder %s29, %s32
    %p38 = scmp.eq.s32.totalorder %s19, 0
    %p39 = por %p37, %p38
    %p40 = scmp.ne.s32.totalorder %s29, %s32
    %p41 = scmp.eq.s32.totalorder %s24, 1
    %p42 = por %p40, %p41
    %p43 = scmp.ne.s32.totalorder %s32, %s33
    %p44 = scmp.eq.s32.totalorder %s24, 0
    %p45 = por %p43, %p44
    %p46 = scmp.ne.s32.totalorder %s32, %s33
    %p47 = scmp.eq.s32.totalorder %s25, 1
    %p48 = por %p46, %p47
    %p50 = scmp.ne.s32.totalorder %s33, %s49
    %p51 = scmp.eq.s32.totalorder %s25, 0
    %p52 = por %p50, %p51
    %s54 = sadd.s32 %s53, 1
    %p57 = scmp.eq.s32.totalorder %s19, 1
    %p58 = scmp.ne.s32.totalorder %s53, %s55
    %p59 = scmp.eq.s32.totalorder %s19, 0
    %p60 = por %p58, %p59
    %p61 = scmp.ne.s32.totalorder %s53, %s55
    %p62 = scmp.eq.s32.totalorder %s24, 1
    %p63 = por %p61, %p62
    %p64 = scmp.ne.s32.totalorder %s55, %s56
    %p65 = scmp.eq.s32.totalorder %s24, 0
    %p66 = por %p64, %p65
    %p67 = scmp.ne.s32.totalorder %s55, %s56
    %p68 = scmp.eq.s32.totalorder %s25, 1
    %p69 = por %p67, %p68
    %p71 = scmp.ne.s32.totalorder %s56, %s70
    %p72 = scmp.eq.s32.totalorder %s25, 0
    %p73 = por %p71, %p72
    %s75 = sadd.s32 %s74, 1
    %p78 = scmp.eq.s32.totalorder %s19, 1
    %p79 = scmp.ne.s32.totalorder %s74, %s76
    %p80 = scmp.eq.s32.totalorder %s19, 0
    %p81 = por %p79, %p80
    %p82 = scmp.ne.s32.totalorder %s74, %s76
    %p83 = scmp.eq.s32.totalorder %s24, 1
    %p84 = por %p82, %p83
    %p85 = scmp.ne.s32.totalorder %s76, %s77
    %p86 = scmp.eq.s32.totalorder %s24, 0
    %p87 = por %p85, %p86
    %p88 = scmp.ne.s32.totalorder %s76, %s77
    %p89 = scmp.eq.s32.totalorder %s25, 1
    %p90 = por %p88, %p89
    %p92 = scmp.ne.s32.totalorder %s77, %s91
    %p93 = scmp.eq.s32.totalorder %s25, 0
    %p94 = por %p92, %p93
    %s96 = sadd.s32 %s95, 1
    %p99 = scmp.eq.s32.totalorder %s19, 1
    %p100 = scmp.ne.s32.totalorder %s95, %s97
    %p101 = scmp.eq.s32.totalorder %s19, 0
    %p102 = por %p100, %p101
    %p103 = scmp.ne.s32.totalorder %s95, %s97
    %p104 = scmp.eq.s32.totalorder %s24, 1
    %p105 = por %p103, %p104
    %p106 = scmp.ne.s32.totalorder %s97, %s98
    %p107 = scmp.eq.s32.totalorder %s24, 0
    %p108 = por %p106, %p107
    %p109 = scmp.ne.s32.totalorder %s97, %s98
    %p110 = scmp.eq.s32.totalorder %s25, 1
    %p111 = por %p109, %p110
    %p113 = scmp.ne.s32.totalorder %s98, %s112
    %p114 = scmp.eq.s32.totalorder %s25, 0
    %p115 = por %p113, %p114
    %s117 = sadd.s32 %s116, 1
    %p120 = scmp.eq.s32.totalorder %s19, 1
    %p121 = scmp.ne.s32.totalorder %s116, %s118
    %p122 = scmp.eq.s32.totalorder %s19, 0
    %p123 = por %p121, %p122
    %p124 = scmp.ne.s32.totalorder %s116, %s118
    %p125 = scmp.eq.s32.totalorder %s24, 1
    %p126 = por %p124, %p125
    %p127 = scmp.ne.s32.totalorder %s118, %s119
    %p128 = scmp.eq.s32.totalorder %s24, 0
    %p129 = por %p127, %p128
    %p130 = scmp.ne.s32.totalorder %s118, %s119
    %p131 = scmp.eq.s32.totalorder %s25, 1
    %p132 = por %p130, %p131
    %p134 = scmp.ne.s32.totalorder %s119, %s133
    %p135 = scmp.eq.s32.totalorder %s25, 0
    %p136 = por %p134, %p135
    %s138 = sadd.s32 %s137, 1
    %p141 = scmp.eq.s32.totalorder %s19, 1
    %p142 = scmp.ne.s32.totalorder %s137, %s139
    %p143 = scmp.eq.s32.totalorder %s19, 0
    %p144 = por %p142, %p143
    %p145 = scmp.ne.s32.totalorder %s137, %s139
    %p146 = scmp.eq.s32.totalorder %s24, 1
    %p147 = por %p145, %p146
    %p148 = scmp.ne.s32.totalorder %s139, %s140
    %p149 = scmp.eq.s32.totalorder %s24, 0
    %p150 = por %p148, %p149
    %p151 = scmp.ne.s32.totalorder %s139, %s140
    %p152 = scmp.eq.s32.totalorder %s25, 1
    %p153 = por %p151, %p152
    %p155 = scmp.ne.s32.totalorder %s140, %s154
    %p156 = scmp.eq.s32.totalorder %s25, 0
    %p157 = por %p155, %p156
    %s159 = sadd.s32 %s158, 1
    %p162 = scmp.eq.s32.totalorder %s19, 1
    %p163 = scmp.ne.s32.totalorder %s158, %s160
    %p164 = scmp.eq.s32.totalorder %s19, 0
    %p165 = por %p163, %p164
    %p166 = scmp.ne.s32.totalorder %s158, %s160
    %p167 = scmp.eq.s32.totalorder %s24, 1
    %p168 = por %p166, %p167
    %p169 = scmp.ne.s32.totalorder %s160, %s161
    %p170 = scmp.eq.s32.totalorder %s24, 0
    %p171 = por %p169, %p170
    %p172 = scmp.ne.s32.totalorder %s160, %s161
    %p173 = scmp.eq.s32.totalorder %s25, 1
    %p174 = por %p172, %p173
    %p176 = scmp.ne.s32.totalorder %s161, %s175
    %p177 = scmp.eq.s32.totalorder %s25, 0
    %p178 = por %p176, %p177
    %s180 = sadd.s32 %s179, 1
    %p183 = scmp.eq.s32.totalorder %s19, 1
    %p184 = scmp.ne.s32.totalorder %s179, %s181
    %p185 = scmp.eq.s32.totalorder %s19, 0
    %p186 = por %p184, %p185
    %p187 = scmp.ne.s32.totalorder %s179, %s181
    %p188 = scmp.eq.s32.totalorder %s24, 1
    %p189 = por %p187, %p188
    %p190 = scmp.ne.s32.totalorder %s181, %s182
    %p191 = scmp.eq.s32.totalorder %s24, 0
    %p192 = por %p190, %p191
    %p193 = scmp.ne.s32.totalorder %s181, %s182
    %p194 = scmp.eq.s32.totalorder %s25, 1
    %p195 = por %p193, %p194
    %p197 = scmp.ne.s32.totalorder %s182, %s196
    %p198 = scmp.eq.s32.totalorder %s25, 0
    %p199 = por %p197, %p198
    %s201 = sadd.s32 %s200, 1
    %p204 = scmp.eq.s32.totalorder %s19, 1
    %p205 = scmp.ne.s32.totalorder %s200, %s202
    %p206 = scmp.eq.s32.totalorder %s19, 0
    %p207 = por %p205, %p206
    %p208 = scmp.ne.s32.totalorder %s200, %s202
    %p209 = scmp.eq.s32.totalorder %s24, 1
    %p210 = por %p208, %p209
    %p211 = scmp.ne.s32.totalorder %s202, %s203
    %p212 = scmp.eq.s32.totalorder %s24, 0
    %p213 = por %p211, %p212
    %p214 = scmp.ne.s32.totalorder %s202, %s203
    %p215 = scmp.eq.s32.totalorder %s25, 1
    %p216 = por %p214, %p215
    %p218 = scmp.ne.s32.totalorder %s203, %s217
    %p219 = scmp.eq.s32.totalorder %s25, 0
    %p220 = por %p218, %p219
    %s222 = sadd.s32 %s221, 1
    %p225 = scmp.eq.s32.totalorder %s19, 1
    %p226 = scmp.ne.s32.totalorder %s221, %s223
    %p227 = scmp.eq.s32.totalorder %s19, 0
    %p228 = por %p226, %p227
    %p229 = scmp.ne.s32.totalorder %s221, %s223
    %p230 = scmp.eq.s32.totalorder %s24, 1
    %p231 = por %p229, %p230
    %p232 = scmp.ne.s32.totalorder %s223, %s224
    %p233 = scmp.eq.s32.totalorder %s24, 0
    %p234 = por %p232, %p233
    %p235 = scmp.ne.s32.totalorder %s223, %s224
    %p236 = scmp.eq.s32.totalorder %s25, 1
    %p237 = por %p235, %p236
    %p239 = scmp.ne.s32.totalorder %s224, %s238
    %p240 = scmp.eq.s32.totalorder %s25, 0
    %p241 = por %p239, %p240
    %s243 = sadd.s32 %s242, 1
    %p246 = scmp.eq.s32.totalorder %s19, 1
    %p247 = scmp.ne.s32.totalorder %s242, %s244
    %p248 = scmp.eq.s32.totalorder %s19, 0
    %p249 = por %p247, %p248
    %p250 = scmp.ne.s32.totalorder %s242, %s244
    %p251 = scmp.eq.s32.totalorder %s24, 1
    %p252 = por %p250, %p251
    %p253 = scmp.ne.s32.totalorder %s244, %s245
    %p254 = scmp.eq.s32.totalorder %s24, 0
    %p255 = por %p253, %p254
    %p256 = scmp.ne.s32.totalorder %s244, %s245
    %p257 = scmp.eq.s32.totalorder %s25, 1
    %p258 = por %p256, %p257
    %p260 = scmp.ne.s32.totalorder %s245, %s259
    %p261 = scmp.eq.s32.totalorder %s25, 0
    %p262 = por %p260, %p261
    %s264 = sadd.s32 %s263, 1
    %p267 = scmp.eq.s32.totalorder %s19, 1
    %p268 = scmp.ne.s32.totalorder %s263, %s265
    %p269 = scmp.eq.s32.totalorder %s19, 0
    %p270 = por %p268, %p269
    %p271 = scmp.ne.s32.totalorder %s263, %s265
    %p272 = scmp.eq.s32.totalorder %s24, 1
    %p273 = por %p271, %p272
    %p274 = scmp.ne.s32.totalorder %s265, %s266
    %p275 = scmp.eq.s32.totalorder %s24, 0
    %p276 = por %p274, %p275
    %p277 = scmp.ne.s32.totalorder %s265, %s266
    %p278 = scmp.eq.s32.totalorder %s25, 1
    %p279 = por %p277, %p278
    %p281 = scmp.ne.s32.totalorder %s266, %s280
    %p282 = scmp.eq.s32.totalorder %s25, 0
    %p283 = por %p281, %p282
    %s285 = sadd.s32 %s284, 1
    %p288 = scmp.eq.s32.totalorder %s19, 1
    %p289 = scmp.ne.s32.totalorder %s284, %s286
    %p290 = scmp.eq.s32.totalorder %s19, 0
    %p291 = por %p289, %p290
    %p292 = scmp.ne.s32.totalorder %s284, %s286
    %p293 = scmp.eq.s32.totalorder %s24, 1
    %p294 = por %p292, %p293
    %p295 = scmp.ne.s32.totalorder %s286, %s287
    %p296 = scmp.eq.s32.totalorder %s24, 0
    %p297 = por %p295, %p296
    %p298 = scmp.ne.s32.totalorder %s286, %s287
    %p299 = scmp.eq.s32.totalorder %s25, 1
    %p300 = por %p298, %p299
    %p302 = scmp.ne.s32.totalorder %s287, %s301
    %p303 = scmp.eq.s32.totalorder %s25, 0
    %p304 = por %p302, %p303
    %s305 = ssub.s32 %s19, %s26
    %p306 = scmp.eq.s32.totalorder %s305, 0
    %s308 = sadd.s32 %s307, 1
    %s309 = scalar_select %p306, %s307, %s308
    %p312 = pneg %p306
    %p313 = scmp.eq.s32.totalorder %s19, 1
    %p314 = por %p312, %p313
    %p315 = scmp.ne.s32.totalorder %s307, %s310
    %p316 = scmp.eq.s32.totalorder %s19, 0
    %p317 = por %p315, %p316
    %p318 = scmp.ne.s32.totalorder %s307, %s310
    %p319 = scmp.eq.s32.totalorder %s24, 1
    %p320 = por %p318, %p319
    %p321 = scmp.ne.s32.totalorder %s310, %s311
    %p322 = scmp.eq.s32.totalorder %s24, 0
    %p323 = por %p321, %p322
    %p324 = scmp.ne.s32.totalorder %s310, %s311
    %p325 = scmp.eq.s32.totalorder %s25, 1
    %p326 = por %p324, %p325
    %p328 = scmp.ne.s32.totalorder %s311, %s327
    %p329 = scmp.eq.s32.totalorder %s25, 0
    %p330 = por %p328, %p329
    %p331 = scmp.le.s32.totalorder 1, %s19
    %p332 = scmp.lt.s32.totalorder %s19, 3
    %p333 = pnand %p331, %p332
    %p334 = pneg %p333
    // Predicated region
    $region9: #{tipd_encoder_forward.1} parent=5 // pred_check
      _
    $region10: #{tipd_encoder_forward.1} parent=5 // pred_check_branch
      %336 = sbr.rel (%p333) target = $region12
    $region11: #{tipd_encoder_forward.1} parent=5 // pred_region
      %s337 = ssub.s32 %s19, 1
      // Predicated region
      $region13: #{tipd_encoder_forward.1} parent=11 // pred_check
        %p338 = pneg %p66
      $region14: #{tipd_encoder_forward.1} parent=11 // pred_check_branch
        %340 = sbr.rel (%p338) target = $region16
      $region15: #{tipd_encoder_forward.1} parent=11 // pred_region
        _
      $region16: #{tipd_encoder_forward.1} parent=11 // pred_fallthru
        _
      // Predicated region
      $region17: #{tipd_encoder_forward.1} parent=11 // pred_check
        %p341 = pneg %p87
      $region18: #{tipd_encoder_forward.1} parent=11 // pred_check_branch
        %343 = sbr.rel (%p341) target = $region20
      $region19: #{tipd_encoder_forward.1} parent=11 // pred_region
        _
      $region20: #{tipd_encoder_forward.1} parent=11 // pred_fallthru
        _
      // Predicated region
      $region21: #{tipd_encoder_forward.1} parent=11 // pred_check
        %p344 = pneg %p108
      $region22: #{tipd_encoder_forward.1} parent=11 // pred_check_branch
        %346 = sbr.rel (%p344) target = $region24
      $region23: #{tipd_encoder_forward.1} parent=11 // pred_region
        _
      $region24: #{tipd_encoder_forward.1} parent=11 // pred_fallthru
        _
      // Predicated region
      $region25: #{tipd_encoder_forward.1} parent=11 // pred_check
        %p347 = pneg %p129
      $region26: #{tipd_encoder_forward.1} parent=11 // pred_check_branch
        %349 = sbr.rel (%p347) target = $region28
      $region27: #{tipd_encoder_forward.1} parent=11 // pred_region
        _
      $region28: #{tipd_encoder_forward.1} parent=11 // pred_fallthru
        _
      // Predicated region
      $region29: #{tipd_encoder_forward.1} parent=11 // pred_check
        %p350 = pneg %p150
      $region30: #{tipd_encoder_forward.1} parent=11 // pred_check_branch
        %352 = sbr.rel (%p350) target = $region32
      $region31: #{tipd_encoder_forward.1} parent=11 // pred_region
        _
      $region32: #{tipd_encoder_forward.1} parent=11 // pred_fallthru
        _
      // Predicated region
      $region33: #{tipd_encoder_forward.1} parent=11 // pred_check
        %p353 = pneg %p171
      $region34: #{tipd_encoder_forward.1} parent=11 // pred_check_branch
        %355 = sbr.rel (%p353) target = $region36
      $region35: #{tipd_encoder_forward.1} parent=11 // pred_region
        _
      $region36: #{tipd_encoder_forward.1} parent=11 // pred_fallthru
        _
      // Predicated region
      $region37: #{tipd_encoder_forward.1} parent=11 // pred_check
        %p356 = pneg %p192
      $region38: #{tipd_encoder_forward.1} parent=11 // pred_check_branch
        %358 = sbr.rel (%p356) target = $region40
      $region39: #{tipd_encoder_forward.1} parent=11 // pred_region
        _
      $region40: #{tipd_encoder_forward.1} parent=11 // pred_fallthru
        _
      // Predicated region
      $region41: #{tipd_encoder_forward.1} parent=11 // pred_check
        %p359 = pneg %p213
      $region42: #{tipd_encoder_forward.1} parent=11 // pred_check_branch
        %361 = sbr.rel (%p359) target = $region44
      $region43: #{tipd_encoder_forward.1} parent=11 // pred_region
        _
      $region44: #{tipd_encoder_forward.1} parent=11 // pred_fallthru
        _
      // Predicated region
      $region45: #{tipd_encoder_forward.1} parent=11 // pred_check
        %p362 = pneg %p234
      $region46: #{tipd_encoder_forward.1} parent=11 // pred_check_branch
        %364 = sbr.rel (%p362) target = $region48
      $region47: #{tipd_encoder_forward.1} parent=11 // pred_region
        _
      $region48: #{tipd_encoder_forward.1} parent=11 // pred_fallthru
        _
      // Predicated region
      $region49: #{tipd_encoder_forward.1} parent=11 // pred_check
        %p365 = pneg %p255
      $region50: #{tipd_encoder_forward.1} parent=11 // pred_check_branch
        %367 = sbr.rel (%p365) target = $region52
      $region51: #{tipd_encoder_forward.1} parent=11 // pred_region
        _
      $region52: #{tipd_encoder_forward.1} parent=11 // pred_fallthru
        _
      // Predicated region
      $region53: #{tipd_encoder_forward.1} parent=11 // pred_check
        %p368 = pneg %p276
      $region54: #{tipd_encoder_forward.1} parent=11 // pred_check_branch
        %370 = sbr.rel (%p368) target = $region56
      $region55: #{tipd_encoder_forward.1} parent=11 // pred_region
        _
      $region56: #{tipd_encoder_forward.1} parent=11 // pred_fallthru
        _
      // Predicated region
      $region57: #{tipd_encoder_forward.1} parent=11 // pred_check
        %p371 = pneg %p297
      $region58: #{tipd_encoder_forward.1} parent=11 // pred_check_branch
        %373 = sbr.rel (%p371) target = $region60
      $region59: #{tipd_encoder_forward.1} parent=11 // pred_region
        _
      $region60: #{tipd_encoder_forward.1} parent=11 // pred_fallthru
        _
    $region12: #{tipd_encoder_forward.1} parent=5 // pred_fallthru
      _
    %p374 = scmp.lt.s32.totalorder %s19, 2
    // Predicated region
    $region61: #{tipd_encoder_forward.1} parent=5 // pred_check
      %p375 = pneg %p374
    $region62: #{tipd_encoder_forward.1} parent=5 // pred_check_branch
      %377 = sbr.rel (%p375) target = $region64
    $region63: #{tipd_encoder_forward.1} parent=5 // pred_region
      // Predicated region
      $region65: #{tipd_encoder_forward.1} parent=63 // pred_check
        %p378 = pneg %p39
      $region66: #{tipd_encoder_forward.1} parent=63 // pred_check_branch
        %380 = sbr.rel (%p378) target = $region68
      $region67: #{tipd_encoder_forward.1} parent=63 // pred_region
        %s381 = smul.u32 32, %s19
        %p382 = scmp.lt.s32.totalorder %s381, 63
        %s383 = scalar_select %p382, %s381, 63
        %s384 = smul.addr %s383, 8
        %s385 = scalar_lea.vmem %s0, %s384
        %s386 = smul.u32 32, %s19
      $region68: #{tipd_encoder_forward.1} parent=63 // pred_fallthru
        _
    $region64: #{tipd_encoder_forward.1} parent=5 // pred_fallthru
      _
    %p387 = scmp.le.s32.totalorder 1, %s19
    %p388 = scmp.lt.s32.totalorder %s19, 3
    %p389 = pnand %p387, %p388
    %p390 = pneg %p389
    // Predicated region
    $region69: #{tipd_encoder_forward.1} parent=5 // pred_check
      _
    $region70: #{tipd_encoder_forward.1} parent=5 // pred_check_branch
      %392 = sbr.rel (%p389) target = $region72
    $region71: #{tipd_encoder_forward.1} parent=5 // pred_region
      %s393 = ssub.s32 %s19, 1
      %s394 = smul.u32 32, %s24
      %p395 = scmp.lt.s32.totalorder %s394, 63
      %s396 = scalar_select %p395, %s394, 63
      %s397 = smul.addr %s396, 8
      %s398 = scalar_lea.vmem %s0, %s397
      %p399 = pneg %p45
      %p400 = pneg %p42
      %p401 = pneg %p66
      %p402 = pneg %p63
      %p403 = pneg %p87
      %p404 = pneg %p84
      %p405 = pneg %p108
      %p406 = pneg %p105
      %p407 = pneg %p129
      %p408 = pneg %p126
      %p409 = pneg %p150
      %p410 = pneg %p147
      %p411 = pneg %p171
      %p412 = pneg %p168
      %p413 = pneg %p192
      %p414 = pneg %p189
      %p415 = pneg %p213
      %p416 = pneg %p210
      %p417 = pneg %p234
      %p418 = pneg %p231
      %p419 = pneg %p255
      %p420 = pneg %p252
      %p421 = pneg %p276
      %p422 = pneg %p273
      %p423 = pneg %p297
      %p424 = pneg %p294
      %p425 = pneg %p323
      %p426 = pneg %p320
      %s427 = smul.u32 32, %s24
      %p428 = scmp.lt.s32.totalorder %s427, 63
      %s429 = scalar_select %p428, %s427, 63
      %s430 = smul.addr %s429, 8
      %s431 = scalar_lea.vmem %s13, %s430
      %s432 = smul.u32 32, %s24
      %p433 = scmp.lt.s32.totalorder %s432, 63
      %s434 = scalar_select %p433, %s432, 63
      %s435 = smul.addr %s434, 8
      %s436 = scalar_lea.vmem %s0, %s435
      %s437 = smul.u32 32, %s24
      %s438 = smul.u32 32, %s24
      %p439 = scmp.lt.s32.totalorder %s438, 63
      %s440 = scalar_select %p439, %s438, 63
      %s441 = smul.addr %s440, 8
      %s442 = scalar_lea.vmem %s13, %s441
      %s443 = smul.u32 32, %s24
      %v445 = vld [vmem:[%s436] sm:$0xff]
      %v446 = vld [vmem:[%s436 + $0x8] sm:$0xff]
      %v447 = vld [vmem:[%s436 + $0x10] sm:$0xff]
      %v448 = vld [vmem:[%s436 + $0x18] sm:$0xff]
      %v449 = vld [vmem:[%s436 + $0x20] sm:$0xff]
      %v450 = vld [vmem:[%s436 + $0x28] sm:$0xff]
      %v451 = vld [vmem:[%s436 + $0x30] sm:$0xff]
      %v452 = vld [vmem:[%s436 + $0x38] sm:$0xff]
      %v453 = vld [vmem:[%s436 + $0x40] sm:$0xff]
      %v454 = vld [vmem:[%s436 + $0x48] sm:$0xff]
      %v455 = vld [vmem:[%s436 + $0x50] sm:$0xff]
      %v456 = vld [vmem:[%s436 + $0x58] sm:$0xff]
      %v457 = vld [vmem:[%s436 + $0x60] sm:$0xff]
      %v458 = vld [vmem:[%s436 + $0x68] sm:$0xff]
      %v459 = vld [vmem:[%s436 + $0x70] sm:$0xff]
      %v460 = vld [vmem:[%s436 + $0x78] sm:$0xff]
      %v461 = vld [vmem:[%s436 + $0x80] sm:$0xff]
      %v462 = vld [vmem:[%s436 + $0x88] sm:$0xff]
      %v463 = vld [vmem:[%s436 + $0x90] sm:$0xff]
      %v464 = vld [vmem:[%s436 + $0x98] sm:$0xff]
      %v465 = vld [vmem:[%s436 + $0xa0] sm:$0xff]
      %v466 = vld [vmem:[%s436 + $0xa8] sm:$0xff]
      %v467 = vld [vmem:[%s436 + $0xb0] sm:$0xff]
      %v468 = vld [vmem:[%s436 + $0xb8] sm:$0xff]
      %v469 = vld [vmem:[%s436 + $0xc0] sm:$0xff]
      %v470 = vld [vmem:[%s436 + $0xc8] sm:$0xff]
      %v471 = vld [vmem:[%s436 + $0xd0] sm:$0xff]
      %v472 = vld [vmem:[%s436 + $0xd8] sm:$0xff]
      %v473 = vld [vmem:[%s436 + $0xe0] sm:$0xff]
      %v474 = vld [vmem:[%s436 + $0xe8] sm:$0xff]
      %v475 = vld [vmem:[%s436 + $0xf0] sm:$0xff]
      %v476 = vld [vmem:[%s436 + $0xf8] sm:$0xff]
      %v477 = vcvt.s32.f32 %v445
      %v478 = vcvt.s32.f32 %v446
      %v479 = vcvt.s32.f32 %v447
      %v480 = vcvt.s32.f32 %v448
      %v481 = vcvt.s32.f32 %v449
      %v482 = vcvt.s32.f32 %v450
      %v483 = vcvt.s32.f32 %v451
      %v484 = vcvt.s32.f32 %v452
      %v485 = vcvt.s32.f32 %v453
      %v486 = vcvt.s32.f32 %v454
      %v487 = vcvt.s32.f32 %v455
      %v488 = vcvt.s32.f32 %v456
      %v489 = vcvt.s32.f32 %v457
      %v490 = vcvt.s32.f32 %v458
      %v491 = vcvt.s32.f32 %v459
      %v492 = vcvt.s32.f32 %v460
      %v493 = vcvt.s32.f32 %v461
      %v494 = vcvt.s32.f32 %v462
      %v495 = vcvt.s32.f32 %v463
      %v496 = vcvt.s32.f32 %v464
      %v497 = vcvt.s32.f32 %v465
      %v498 = vcvt.s32.f32 %v466
      %v499 = vcvt.s32.f32 %v467
      %v500 = vcvt.s32.f32 %v468
      %v501 = vcvt.s32.f32 %v469
      %v502 = vcvt.s32.f32 %v470
      %v503 = vcvt.s32.f32 %v471
      %v504 = vcvt.s32.f32 %v472
      %v505 = vcvt.s32.f32 %v473
      %v506 = vcvt.s32.f32 %v474
      %v507 = vcvt.s32.f32 %v475
      %v508 = vcvt.s32.f32 %v476
      %v509 = vpack.c.bf16 %v478, %v477
      %v510 = vpack.c.bf16 %v480, %v479
      %v511 = vpack.c.bf16 %v482, %v481
      %v512 = vpack.c.bf16 %v484, %v483
      %v513 = vpack.c.bf16 %v486, %v485
      %v514 = vpack.c.bf16 %v488, %v487
      %v515 = vpack.c.bf16 %v490, %v489
      %v516 = vpack.c.bf16 %v492, %v491
      %v517 = vpack.c.bf16 %v494, %v493
      %v518 = vpack.c.bf16 %v496, %v495
      %v519 = vpack.c.bf16 %v498, %v497
      %v520 = vpack.c.bf16 %v500, %v499
      %v521 = vpack.c.bf16 %v502, %v501
      %v522 = vpack.c.bf16 %v504, %v503
      %v523 = vpack.c.bf16 %v506, %v505
      %v524 = vpack.c.bf16 %v508, %v507
      %v525 = vld [vmem:[%s1] sm:$0xff]
      %v526 = vld [vmem:[%s1 + $0x8] sm:$0xff]
      %v527 = vld [vmem:[%s1 + $0x10] sm:$0xff]
      %v528 = vld [vmem:[%s1 + $0x18] sm:$0xf]
      %v529 = vld [vmem:[%s1 + $0x1c] sm:$0xff]
      %v530 = vld [vmem:[%s1 + $0x24] sm:$0xff]
      %v531 = vld [vmem:[%s1 + $0x2c] sm:$0xff]
      %v532 = vld [vmem:[%s1 + $0x34] sm:$0xf]
      %v541 = vunpack.c.l.b16 %v525
      %v542 = vunpack.c.h.b16 %v525
      %v543 = vunpack.c.l.b16 %v526
      %v544 = vunpack.c.h.b16 %v526
      %v545 = vunpack.c.l.b16 %v527
      %v546 = vunpack.c.h.b16 %v527
      %v547 = vunpack.c.l.b16 %v528
      %v548 = vunpack.c.l.b16 %v529
      %v549 = vunpack.c.h.b16 %v529
      %v550 = vunpack.c.l.b16 %v530
      %v551 = vunpack.c.h.b16 %v530
      %v552 = vunpack.c.l.b16 %v531
      %v553 = vunpack.c.h.b16 %v531
      %v554 = vunpack.c.l.b16 %v532
      %v555 = vpack.c.b16 %v548, %v541
      %v556 = vpack.c.b16 %v549, %v542
      %v557 = vpack.c.b16 %v550, %v543
      %v558 = vpack.c.b16 %v551, %v544
      %v559 = vpack.c.b16 %v552, %v545
      %v560 = vpack.c.b16 %v553, %v546
      %v561 = vpack.c.b16 %v554, %v547
      %vm569 = vcmask 130048
      %v571 = vsel %vm569, %v509, 0
      %v574 = vsel %vm569, %v510, 0
      %v577 = vsel %vm569, %v511, 0
      %v580 = vsel %vm569, %v512, 0
      %v583 = vsel %vm569, %v513, 0
      %v586 = vsel %vm569, %v514, 0
      %v589 = vsel %vm569, %v515, 0
      %v592 = vsel %vm569, %v516, 0
      %v595 = vsel %vm569, %v517, 0
      %v598 = vsel %vm569, %v518, 0
      %v601 = vsel %vm569, %v519, 0
      %v604 = vsel %vm569, %v520, 0
      %v607 = vsel %vm569, %v521, 0
      %v610 = vsel %vm569, %v522, 0
      %v613 = vsel %vm569, %v523, 0
      %v616 = vsel %vm569, %v524, 0
      %618 = vmatprep.subr.bf16.mxu0 %v556
      %619 = vmatpush1.bf16.msra.mxu0 %v555
      %620 = vmatprep.subr.bf16.mxu0 0
      %621 = vmatpush1.bf16.msra.mxu0 0
      %622 = vmatprep.subr.bf16.mxu0 0
      %623 = vmatpush1.bf16.msra.mxu0 0
      %624 = vmatprep.subr.bf16.mxu0 0
      %625 = vmatpush1.bf16.msra.mxu0 0
      %626 = vmatprep.subr.bf16.mxu0 0
      %627 = vmatpush1.bf16.msra.mxu0 0
      %628 = vmatprep.subr.bf16.mxu0 0
      %629 = vmatpush1.bf16.msra.mxu0 0
      %630 = vmatprep.subr.bf16.mxu0 0
      %631 = vmatpush1.bf16.msra.mxu0 0
      %632 = vmatprep.subr.bf16.mxu0 0
      %633 = vmatpush1.bf16.msra.mxu0 0
      %634 = vmatprep.subr.bf16.mxu0 0
      %635 = vmatpush1.bf16.msra.mxu0 0
      %636 = vmatprep.subr.bf16.mxu0 0
      %637 = vmatpush1.bf16.msra.mxu0 0
      %638 = vmatprep.subr.bf16.mxu0 0
      %639 = vmatpush1.bf16.msra.mxu0 0
      %640 = vmatprep.subr.bf16.mxu0 0
      %641 = vmatpush1.bf16.msra.mxu0 0
      %642 = vmatprep.subr.bf16.mxu0 0
      %643 = vmatpush1.bf16.msra.mxu0 0
      %644 = vmatprep.subr.bf16.mxu0 0
      %645 = vmatpush1.bf16.msra.mxu0 0
      %646 = vmatprep.subr.bf16.mxu0 0
      %647 = vmatpush1.bf16.msra.mxu0 0
      %648 = vmatprep.subr.bf16.mxu0 0
      %649 = vmatpush1.bf16.msra.mxu0 0
      %650 = vmatprep.mubr.bf16.mxu0 0
      %651 = vmatmul.mubr.bf16.gmra.mrb[0].mxu0 %v571
      %v652 = vpop.f32.mrb[0].mxu0
      %v653 = vadd.f32 0.0, %v652
      %v654 = vpop.f32.mrb[0].mxu0
      %v655 = vadd.f32 0.0, %v654
      %v656 = vpop.f32.mrb[0].mxu0
      %v657 = vadd.f32 0.0, %v656
      %v658 = vpop.f32.mrb[0].mxu0
      %v659 = vadd.f32 0.0, %v658
      %660 = vmatprep.mubr.bf16.mxu0 0
      %661 = vmatmul.mubr.bf16.gmra.mrb[0].mxu0 %v574
      %v662 = vpop.f32.mrb[0].mxu0
      %v663 = vadd.f32 0.0, %v662
      %v664 = vpop.f32.mrb[0].mxu0
      %v665 = vadd.f32 0.0, %v664
      %v666 = vpop.f32.mrb[0].mxu0
      %v667 = vadd.f32 0.0, %v666
      %v668 = vpop.f32.mrb[0].mxu0
      %v669 = vadd.f32 0.0, %v668
      %670 = vmatprep.mubr.bf16.mxu0 0
      %671 = vmatmul.mubr.bf16.gmra.mrb[0].mxu0 %v577
      %v672 = vpop.f32.mrb[0].mxu0
      %v673 = vadd.f32 0.0, %v672
      %v674 = vpop.f32.mrb[0].mxu0
      %v675 = vadd.f32 0.0, %v674
      %v676 = vpop.f32.mrb[0].mxu0
      %v677 = vadd.f32 0.0, %v676
      %v678 = vpop.f32.mrb[0].mxu0
      %v679 = vadd.f32 0.0, %v678
      %680 = vmatprep.mubr.bf16.mxu0 0
      %681 = vmatmul.mubr.bf16.gmra.mrb[0].mxu0 %v580
      %v682 = vpop.f32.mrb[0].mxu0
      %v683 = vadd.f32 0.0, %v682
      %v684 = vpop.f32.mrb[0].mxu0
      %v685 = vadd.f32 0.0, %v684
      %v686 = vpop.f32.mrb[0].mxu0
      %v687 = vadd.f32 0.0, %v686
      %v688 = vpop.f32.mrb[0].mxu0
      %v689 = vadd.f32 0.0, %v688
      %690 = vmatprep.mubr.bf16.mxu0 0
      %691 = vmatmul.mubr.bf16.gmra.mrb[0].mxu0 %v583
      %v692 = vpop.f32.mrb[0].mxu0
      %v693 = vadd.f32 0.0, %v692
      %v694 = vpop.f32.mrb[0].mxu0
      %v695 = vadd.f32 0.0, %v694
      %v696 = vpop.f32.mrb[0].mxu0
      %v697 = vadd.f32 0.0, %v696
      %v698 = vpop.f32.mrb[0].mxu0
      %v699 = vadd.f32 0.0, %v698
      %700 = vmatprep.mubr.bf16.mxu0 0
      %701 = vmatmul.mubr.bf16.gmra.mrb[0].mxu0 %v586
      %v702 = vpop.f32.mrb[0].mxu0
      %v703 = vadd.f32 0.0, %v702
      %v704 = vpop.f32.mrb[0].mxu0
      %v705 = vadd.f32 0.0, %v704
      %v706 = vpop.f32.mrb[0].mxu0
      %v707 = vadd.f32 0.0, %v706
      %v708 = vpop.f32.mrb[0].mxu0
      %v709 = vadd.f32 0.0, %v708
      %710 = vmatprep.mubr.bf16.mxu0 0
      %711 = vmatmul.mubr.bf16.gmra.mrb[0].mxu0 %v589
      %v712 = vpop.f32.mrb[0].mxu0
      %v713 = vadd.f32 0.0, %v712
      %v714 = vpop.f32.mrb[0].mxu0
      %v715 = vadd.f32 0.0, %v714
      %v716 = vpop.f32.mrb[0].mxu0
      %v717 = vadd.f32 0.0, %v716
      %v718 = vpop.f32.mrb[0].mxu0
      %v719 = vadd.f32 0.0, %v718
      %720 = vmatprep.mubr.bf16.mxu0 0
      %721 = vmatmul.mubr.bf16.gmra.mrb[0].mxu0 %v592
      %v722 = vpop.f32.mrb[0].mxu0
      %v723 = vadd.f32 0.0, %v722
      %v724 = vpop.f32.mrb[0].mxu0
      %v725 = vadd.f32 0.0, %v724
      %v726 = vpop.f32.mrb[0].mxu0
      %v727 = vadd.f32 0.0, %v726
      %v728 = vpop.f32.mrb[0].mxu0
      %v729 = vadd.f32 0.0, %v728
      %730 = vmatprep.mubr.bf16.mxu0 0
      %731 = vmatmul.mubr.bf16.gmra.mrb[0].mxu0 %v595
      %v732 = vpop.f32.mrb[0].mxu0
      %v733 = vadd.f32 0.0, %v732
      %v734 = vpop.f32.mrb[0].mxu0
      %v735 = vadd.f32 0.0, %v734
      %v736 = vpop.f32.mrb[0].mxu0
      %v737 = vadd.f32 0.0, %v736
      %v738 = vpop.f32.mrb[0].mxu0
      %v739 = vadd.f32 0.0, %v738
      %740 = vmatprep.mubr.bf16.mxu0 0
      %741 = vmatmul.mubr.bf16.gmra.mrb[0].mxu0 %v598
      %v742 = vpop.f32.mrb[0].mxu0
      %v743 = vadd.f32 0.0, %v742
      %v744 = vpop.f32.mrb[0].mxu0
      %v745 = vadd.f32 0.0, %v744
      %v746 = vpop.f32.mrb[0].mxu0
      %v747 = vadd.f32 0.0, %v746
      %v748 = vpop.f32.mrb[0].mxu0
      %v749 = vadd.f32 0.0, %v748
      %750 = vmatprep.mubr.bf16.mxu0 0
      %751 = vmatmul.mubr.bf16.gmra.mrb[0].mxu0 %v601
      %v752 = vpop.f32.mrb[0].mxu0
      %v753 = vadd.f32 0.0, %v752
      %v754 = vpop.f32.mrb[0].mxu0
      %v755 = vadd.f32 0.0, %v754
      %v756 = vpop.f32.mrb[0].mxu0
      %v757 = vadd.f32 0.0, %v756
      %v758 = vpop.f32.mrb[0].mxu0
      %v759 = vadd.f32 0.0, %v758
      %760 = vmatprep.mubr.bf16.mxu0 0
      %761 = vmatmul.mubr.bf16.gmra.mrb[0].mxu0 %v604
      %v762 = vpop.f32.mrb[0].mxu0
      %v763 = vadd.f32 0.0, %v762
      %v764 = vpop.f32.mrb[0].mxu0
      %v765 = vadd.f32 0.0, %v764
      %v766 = vpop.f32.mrb[0].mxu0
      %v767 = vadd.f32 0.0, %v766
      %v768 = vpop.f32.mrb[0].mxu0
      %v769 = vadd.f32 0.0, %v768
      %770 = vmatprep.mubr.bf16.mxu0 0
      %771 = vmatmul.mubr.bf16.gmra.mrb[0].mxu0 %v607
      %v772 = vpop.f32.mrb[0].mxu0
      %v773 = vadd.f32 0.0, %v772
      %v774 = vpop.f32.mrb[0].mxu0
      %v775 = vadd.f32 0.0, %v774
      %v776 = vpop.f32.mrb[0].mxu0
      %v777 = vadd.f32 0.0, %v776
      %v778 = vpop.f32.mrb[0].mxu0
      %v779 = vadd.f32 0.0, %v778
      %780 = vmatprep.mubr.bf16.mxu0 0
      %781 = vmatmul.mubr.bf16.gmra.mrb[0].mxu0 %v610
      %v782 = vpop.f32.mrb[0].mxu0
      %v783 = vadd.f32 0.0, %v782
      %v784 = vpop.f32.mrb[0].mxu0
      %v785 = vadd.f32 0.0, %v784
      %v786 = vpop.f32.mrb[0].mxu0
      %v787 = vadd.f32 0.0, %v786
      %v788 = vpop.f32.mrb[0].mxu0
      %v789 = vadd.f32 0.0, %v788
      %790 = vmatprep.mubr.bf16.mxu0 0
      %791 = vmatmul.mubr.bf16.gmra.mrb[0].mxu0 %v613
      %v792 = vpop.f32.mrb[0].mxu0
      %v793 = vadd.f32 0.0, %v792
      %v794 = vpop.f32.mrb[0].mxu0
      %v795 = vadd.f32 0.0, %v794
      %v796 = vpop.f32.mrb[0].mxu0
      %v797 = vadd.f32 0.0, %v796
      %v798 = vpop.f32.mrb[0].mxu0
      %v799 = vadd.f32 0.0, %v798
      %800 = vmatprep.mubr.bf16.mxu0 0
      %801 = vmatmul.mubr.bf16.gmra.mrb[0].mxu0 %v616
      %v802 = vpop.f32.mrb[0].mxu0
      %v803 = vadd.f32 0.0, %v802
      %v804 = vpop.f32.mrb[0].mxu0
      %v805 = vadd.f32 0.0, %v804
      %v806 = vpop.f32.mrb[0].mxu0
      %v807 = vadd.f32 0.0, %v806
      %v808 = vpop.f32.mrb[0].mxu0
      %v809 = vadd.f32 0.0, %v808
      %810 = vdwg.mxu0
      %811 = vmatprep.subr.bf16.mxu0 %v558
      %812 = vmatpush1.bf16.msra.mxu0 %v557
      %813 = vmatprep.subr.bf16.mxu0 0
      %814 = vmatpush1.bf16.msra.mxu0 0
      %815 = vmatprep.subr.bf16.mxu0 0
      %816 = vmatpush1.bf16.msra.mxu0 0
      %817 = vmatprep.subr.bf16.mxu0 0
      %818 = vmatpush1.bf16.msra.mxu0 0
      %819 = vmatprep.subr.bf16.mxu0 0
      %820 = vmatpush1.bf16.msra.mxu0 0
      %821 = vmatprep.subr.bf16.mxu0 0
      %822 = vmatpush1.bf16.msra.mxu0 0
      %823 = vmatprep.subr.bf16.mxu0 0
      %824 = vmatpush1.bf16.msra.mxu0 0
      %825 = vmatprep.subr.bf16.mxu0 0
      %826 = vmatpush1.bf16.msra.mxu0 0
      %827 = vmatprep.subr.bf16.mxu0 0
      %828 = vmatpush1.bf16.msra.mxu0 0
      %829 = vmatprep.subr.bf16.mxu0 0
      %830 = vmatpush1.bf16.msra.mxu0 0
      %831 = vmatprep.subr.bf16.mxu0 0
      %832 = vmatpush1.bf16.msra.mxu0 0
      %833 = vmatprep.subr.bf16.mxu0 0
      %834 = vmatpush1.bf16.msra.mxu0 0
      %835 = vmatprep.subr.bf16.mxu0 0
      %836 = vmatpush1.bf16.msra.mxu0 0
      %837 = vmatprep.subr.bf16.mxu0 0
      %838 = vmatpush1.bf16.msra.mxu0 0
      %839 = vmatprep.subr.bf16.mxu0 0
      %840 = vmatpush1.bf16.msra.mxu0 0
      %841 = vmatprep.subr.bf16.mxu0 0
      %842 = vmatpush1.bf16.msra.mxu0 0
      %843 = vmatprep.mubr.bf16.mxu0 0
      %844 = vmatmul.mubr.bf16.gmra.mrb[0].mxu0 %v571
      %v845 = vpop.f32.mrb[0].mxu0
      %v846 = vadd.f32 0.0, %v845
      %v847 = vpop.f32.mrb[0].mxu0
      %v848 = vadd.f32 0.0, %v847
      %v849 = vpop.f32.mrb[0].mxu0
      %v850 = vadd.f32 0.0, %v849
      %v851 = vpop.f32.mrb[0].mxu0
      %v852 = vadd.f32 0.0, %v851
      %853 = vmatprep.mubr.bf16.mxu0 0
      %854 = vmatmul.mubr.bf16.gmra.mrb[0].mxu0 %v574
      %v855 = vpop.f32.mrb[0].mxu0
      %v856 = vadd.f32 0.0, %v855
      %v857 = vpop.f32.mrb[0].mxu0
      %v858 = vadd.f32 0.0, %v857
      %v859 = vpop.f32.mrb[0].mxu0
      %v860 = vadd.f32 0.0, %v859
      %v861 = vpop.f32.mrb[0].mxu0
      %v862 = vadd.f32 0.0, %v861
      %863 = vmatprep.mubr.bf16.mxu0 0
      %864 = vmatmul.mubr.bf16.gmra.mrb[0].mxu0 %v577
      %v865 = vpop.f32.mrb[0].mxu0
      %v866 = vadd.f32 0.0, %v865
      %v867 = vpop.f32.mrb[0].mxu0
      %v868 = vadd.f32 0.0, %v867
      %v869 = vpop.f32.mrb[0].mxu0
      %v870 = vadd.f32 0.0, %v869
      %v871 = vpop.f32.mrb[0].mxu0
      %v872 = vadd.f32 0.0, %v871
      %873 = vmatprep.mubr.bf16.mxu0 0
      %874 = vmatmul.mubr.bf16.gmra.mrb[0].mxu0 %v580
      %v875 = vpop.f32.mrb[0].mxu0
      %v876 = vadd.f32 0.0, %v875
      %v877 = vpop.f32.mrb[0].mxu0
      %v878 = vadd.f32 0.0, %v877
      %v879 = vpop.f32.mrb[0].mxu0
      %v880 = vadd.f32 0.0, %v879
      %v881 = vpop.f32.mrb[0].mxu0
      %v882 = vadd.f32 0.0, %v881
      %883 = vmatprep.mubr.bf16.mxu0 0
      %884 = vmatmul.mubr.bf16.gmra.mrb[0].mxu0 %v583
      %v885 = vpop.f32.mrb[0].mxu0
      %v886 = vadd.f32 0.0, %v885
      %v887 = vpop.f32.mrb[0].mxu0
      %v888 = vadd.f32 0.0, %v887
      %v889 = vpop.f32.mrb[0].mxu0
      %v890 = vadd.f32 0.0, %v889
      %v891 = vpop.f32.mrb[0].mxu0
      %v892 = vadd.f32 0.0, %v891
      %893 = vmatprep.mubr.bf16.mxu0 0
      %894 = vmatmul.mubr.bf16.gmra.mrb[0].mxu0 %v586
      %v895 = vpop.f32.mrb[0].mxu0
      %v896 = vadd.f32 0.0, %v895
      %v897 = vpop.f32.mrb[0].mxu0
      %v898 = vadd.f32 0.0, %v897
      %v899 = vpop.f32.mrb[0].mxu0
      %v900 = vadd.f32 0.0, %v899
      %v901 = vpop.f32.mrb[0].mxu0
      %v902 = vadd.f32 0.0, %v901
      %903 = vmatprep.mubr.bf16.mxu0 0
      %904 = vmatmul.mubr.bf16.gmra.mrb[0].mxu0 %v589
      %v905 = vpop.f32.mrb[0].mxu0
      %v906 = vadd.f32 0.0, %v905
      %v907 = vpop.f32.mrb[0].mxu0
      %v908 = vadd.f32 0.0, %v907
      %v909 = vpop.f32.mrb[0].mxu0
      %v910 = vadd.f32 0.0, %v909
      %v911 = vpop.f32.mrb[0].mxu0
      %v912 = vadd.f32 0.0, %v911
      %913 = vmatprep.mubr.bf16.mxu0 0
      %914 = vmatmul.mubr.bf16.gmra.mrb[0].mxu0 %v592
      %v915 = vpop.f32.mrb[0].mxu0
      %v916 = vadd.f32 0.0, %v915
      %v917 = vpop.f32.mrb[0].mxu0
      %v918 = vadd.f32 0.0, %v917
      %v919 = vpop.f32.mrb[0].mxu0
      %v920 = vadd.f32 0.0, %v919
      %v921 = vpop.f32.mrb[0].mxu0
      %v922 = vadd.f32 0.0, %v921
      %923 = vmatprep.mubr.bf16.mxu0 0
      %924 = vmatmul.mubr.bf16.gmra.mrb[0].mxu0 %v595
      %v925 = vpop.f32.mrb[0].mxu0
      %v926 = vadd.f32 0.0, %v925
      %v927 = vpop.f32.mrb[0].mxu0
      %v928 = vadd.f32 0.0, %v927
      %v929 = vpop.f32.mrb[0].mxu0
      %v930 = vadd.f32 0.0, %v929
      %v931 = vpop.f32.mrb[0].mxu0
      %v932 = vadd.f32 0.0, %v931
      %933 = vmatprep.mubr.bf16.mxu0 0
      %934 = vmatmul.mubr.bf16.gmra.mrb[0].mxu0 %v598
      %v935 = vpop.f32.mrb[0].mxu0
      %v936 = vadd.f32 0.0, %v935
      %v937 = vpop.f32.mrb[0].mxu0
      %v938 = vadd.f32 0.0, %v937
      %v939 = vpop.f32.mrb[0].mxu0
      %v940 = vadd.f32 0.0, %v939
      %v941 = vpop.f32.mrb[0].mxu0
      %v942 = vadd.f32 0.0, %v941
      %943 = vmatprep.mubr.bf16.mxu0 0
      %944 = vmatmul.mubr.bf16.gmra.mrb[0].mxu0 %v601
      %v945 = vpop.f32.mrb[0].mxu0
      %v946 = vadd.f32 0.0, %v945
      %v947 = vpop.f32.mrb[0].mxu0
      %v948 = vadd.f32 0.0, %v947
      %v949 = vpop.f32.mrb[0].mxu0
      %v950 = vadd.f32 0.0, %v949
      %v951 = vpop.f32.mrb[0].mxu0
      %v952 = vadd.f32 0.0, %v951
      %953 = vmatprep.mubr.bf16.mxu0 0
      %954 = vmatmul.mubr.bf16.gmra.mrb[0].mxu0 %v604
      %v955 = vpop.f32.mrb[0].mxu0
      %v956 = vadd.f32 0.0, %v955
      %v957 = vpop.f32.mrb[0].mxu0
      %v958 = vadd.f32 0.0, %v957
      %v959 = vpop.f32.mrb[0].mxu0
      %v960 = vadd.f32 0.0, %v959
      %v961 = vpop.f32.mrb[0].mxu0
      %v962 = vadd.f32 0.0, %v961
      %963 = vmatprep.mubr.bf16.mxu0 0
      %964 = vmatmul.mubr.bf16.gmra.mrb[0].mxu0 %v607
      %v965 = vpop.f32.mrb[0].mxu0
      %v966 = vadd.f32 0.0, %v965
      %v967 = vpop.f32.mrb[0].mxu0
      %v968 = vadd.f32 0.0, %v967
      %v969 = vpop.f32.mrb[0].mxu0
      %v970 = vadd.f32 0.0, %v969
      %v971 = vpop.f32.mrb[0].mxu0
      %v972 = vadd.f32 0.0, %v971
      %973 = vmatprep.mubr.bf16.mxu0 0
      %974 = vmatmul.mubr.bf16.gmra.mrb[0].mxu0 %v610
      %v975 = vpop.f32.mrb[0].mxu0
      %v976 = vadd.f32 0.0, %v975
      %v977 = vpop.f32.mrb[0].mxu0
      %v978 = vadd.f32 0.0, %v977
      %v979 = vpop.f32.mrb[0].mxu0
      %v980 = vadd.f32 0.0, %v979
      %v981 = vpop.f32.mrb[0].mxu0
      %v982 = vadd.f32 0.0, %v981
      %983 = vmatprep.mubr.bf16.mxu0 0
      %984 = vmatmul.mubr.bf16.gmra.mrb[0].mxu0 %v613
      %v985 = vpop.f32.mrb[0].mxu0
      %v986 = vadd.f32 0.0, %v985
      %v987 = vpop.f32.mrb[0].mxu0
      %v988 = vadd.f32 0.0, %v987
      %v989 = vpop.f32.mrb[0].mxu0
      %v990 = vadd.f32 0.0, %v989
      %v991 = vpop.f32.mrb[0].mxu0
      %v992 = vadd.f32 0.0, %v991
      %993 = vmatprep.mubr.bf16.mxu0 0
      %994 = vmatmul.mubr.bf16.gmra.mrb[0].mxu0 %v616
      %v995 = vpop.f32.mrb[0].mxu0
      %v996 = vadd.f32 0.0, %v995
      %v997 = vpop.f32.mrb[0].mxu0
      %v998 = vadd.f32 0.0, %v997
      %v999 = vpop.f32.mrb[0].mxu0
      %v1000 = vadd.f32 0.0, %v999
      %v1001 = vpop.f32.mrb[0].mxu0
      %v1002 = vadd.f32 0.0, %v1001
      %1003 = vdwg.mxu0
      %1004 = vmatprep.subr.bf16.mxu0 %v560
      %1005 = vmatpush1.bf16.msra.mxu0 %v559
      %1006 = vmatprep.subr.bf16.mxu0 0
      %1007 = vmatpush1.bf16.msra.mxu0 0
      %1008 = vmatprep.subr.bf16.mxu0 0
      %1009 = vmatpush1.bf16.msra.mxu0 0
      %1010 = vmatprep.subr.bf16.mxu0 0
      %1011 = vmatpush1.bf16.msra.mxu0 0
      %1012 = vmatprep.subr.bf16.mxu0 0
      %1013 = vmatpush1.bf16.msra.mxu0 0
      %1014 = vmatprep.subr.bf16.mxu0 0
      %1015 = vmatpush1.bf16.msra.mxu0 0
      %1016 = vmatprep.subr.bf16.mxu0 0
      %1017 = vmatpush1.bf16.msra.mxu0 0
      %1018 = vmatprep.subr.bf16.mxu0 0
      %1019 = vmatpush1.bf16.msra.mxu0 0
      %1020 = vmatprep.subr.bf16.mxu0 0
      %1021 = vmatpush1.bf16.msra.mxu0 0
      %1022 = vmatprep.subr.bf16.mxu0 0
      %1023 = vmatpush1.bf16.msra.mxu0 0
      %1024 = vmatprep.subr.bf16.mxu0 0
      %1025 = vmatpush1.bf16.msra.mxu0 0
      %1026 = vmatprep.subr.bf16.mxu0 0
      %1027 = vmatpush1.bf16.msra.mxu0 0
      %1028 = vmatprep.subr.bf16.mxu0 0
      %1029 = vmatpush1.bf16.msra.mxu0 0
      %1030 = vmatprep.subr.bf16.mxu0 0
      %1031 = vmatpush1.bf16.msra.mxu0 0
      %1032 = vmatprep.subr.bf16.mxu0 0
      %1033 = vmatpush1.bf16.msra.mxu0 0
      %1034 = vmatprep.subr.bf16.mxu0 0
      %1035 = vmatpush1.bf16.msra.mxu0 0
      %1036 = vmatprep.mubr.bf16.mxu0 0
      %1037 = vmatmul.mubr.bf16.gmra.mrb[0].mxu0 %v571
      %v1038 = vpop.f32.mrb[0].mxu0
      %v1039 = vadd.f32 0.0, %v1038
      %v1040 = vpop.f32.mrb[0].mxu0
      %v1041 = vadd.f32 0.0, %v1040
      %v1042 = vpop.f32.mrb[0].mxu0
      %v1043 = vadd.f32 0.0, %v1042
      %v1044 = vpop.f32.mrb[0].mxu0
      %v1045 = vadd.f32 0.0, %v1044
      %1046 = vmatprep.mubr.bf16.mxu0 0
      %1047 = vmatmul.mubr.bf16.gmra.mrb[0].mxu0 %v574
      %v1048 = vpop.f32.mrb[0].mxu0
      %v1049 = vadd.f32 0.0, %v1048
      %v1050 = vpop.f32.mrb[0].mxu0
      %v1051 = vadd.f32 0.0, %v1050
      %v1052 = vpop.f32.mrb[0].mxu0
      %v1053 = vadd.f32 0.0, %v1052
      %v1054 = vpop.f32.mrb[0].mxu0
      %v1055 = vadd.f32 0.0, %v1054
      %1056 = vmatprep.mubr.bf16.mxu0 0
      %1057 = vmatmul.mubr.bf16.gmra.mrb[0].mxu0 %v577
      %v1058 = vpop.f32.mrb[0].mxu0
      %v1059 = vadd.f32 0.0, %v1058
      %v1060 = vpop.f32.mrb[0].mxu0
      %v1061 = vadd.f32 0.0, %v1060
      %v1062 = vpop.f32.mrb[0].mxu0
      %v1063 = vadd.f32 0.0, %v1062
      %v1064 = vpop.f32.mrb[0].mxu0
      %v1065 = vadd.f32 0.0, %v1064
      %1066 = vmatprep.mubr.bf16.mxu0 0
      %1067 = vmatmul.mubr.bf16.gmra.mrb[0].mxu0 %v580
      %v1068 = vpop.f32.mrb[0].mxu0
      %v1069 = vadd.f32 0.0, %v1068
      %v1070 = vpop.f32.mrb[0].mxu0
      %v1071 = vadd.f32 0.0, %v1070
      %v1072 = vpop.f32.mrb[0].mxu0
      %v1073 = vadd.f32 0.0, %v1072
      %v1074 = vpop.f32.mrb[0].mxu0
      %v1075 = vadd.f32 0.0, %v1074
      %1076 = vmatprep.mubr.bf16.mxu0 0
      %1077 = vmatmul.mubr.bf16.gmra.mrb[0].mxu0 %v583
      %v1078 = vpop.f32.mrb[0].mxu0
      %v1079 = vadd.f32 0.0, %v1078
      %v1080 = vpop.f32.mrb[0].mxu0
      %v1081 = vadd.f32 0.0, %v1080
      %v1082 = vpop.f32.mrb[0].mxu0
      %v1083 = vadd.f32 0.0, %v1082
      %v1084 = vpop.f32.mrb[0].mxu0
      %v1085 = vadd.f32 0.0, %v1084
      %1086 = vmatprep.mubr.bf16.mxu0 0
      %1087 = vmatmul.mubr.bf16.gmra.mrb[0].mxu0 %v586
      %v1088 = vpop.f32.mrb[0].mxu0
      %v1089 = vadd.f32 0.0, %v1088
      %v1090 = vpop.f32.mrb[0].mxu0
      %v1091 = vadd.f32 0.0, %v1090
      %v1092 = vpop.f32.mrb[0].mxu0
      %v1093 = vadd.f32 0.0, %v1092
      %v1094 = vpop.f32.mrb[0].mxu0
      %v1095 = vadd.f32 0.0, %v1094
      %1096 = vmatprep.mubr.bf16.mxu0 0
      %1097 = vmatmul.mubr.bf16.gmra.mrb[0].mxu0 %v589
      %v1098 = vpop.f32.mrb[0].mxu0
      %v1099 = vadd.f32 0.0, %v1098
      %v1100 = vpop.f32.mrb[0].mxu0
      %v1101 = vadd.f32 0.0, %v1100
      %v1102 = vpop.f32.mrb[0].mxu0
      %v1103 = vadd.f32 0.0, %v1102
      %v1104 = vpop.f32.mrb[0].mxu0
      %v1105 = vadd.f32 0.0, %v1104
      %1106 = vmatprep.mubr.bf16.mxu0 0
      %1107 = vmatmul.mubr.bf16.gmra.mrb[0].mxu0 %v592
      %v1108 = vpop.f32.mrb[0].mxu0
      %v1109 = vadd.f32 0.0, %v1108
      %v1110 = vpop.f32.mrb[0].mxu0
      %v1111 = vadd.f32 0.0, %v1110
      %v1112 = vpop.f32.mrb[0].mxu0
      %v1113 = vadd.f32 0.0, %v1112
      %v1114 = vpop.f32.mrb[0].mxu0
      %v1115 = vadd.f32 0.0, %v1114
      %1116 = vmatprep.mubr.bf16.mxu0 0
      %1117 = vmatmul.mubr.bf16.gmra.mrb[0].mxu0 %v595
      %v1118 = vpop.f32.mrb[0].mxu0
      %v1119 = vadd.f32 0.0, %v1118
      %v1120 = vpop.f32.mrb[0].mxu0
      %v1121 = vadd.f32 0.0, %v1120
      %v1122 = vpop.f32.mrb[0].mxu0
      %v1123 = vadd.f32 0.0, %v1122
      %v1124 = vpop.f32.mrb[0].mxu0
      %v1125 = vadd.f32 0.0, %v1124
      %1126 = vmatprep.mubr.bf16.mxu0 0
      %1127 = vmatmul.mubr.bf16.gmra.mrb[0].mxu0 %v598
      %v1128 = vpop.f32.mrb[0].mxu0
      %v1129 = vadd.f32 0.0, %v1128
      %v1130 = vpop.f32.mrb[0].mxu0
      %v1131 = vadd.f32 0.0, %v1130
      %v1132 = vpop.f32.mrb[0].mxu0
      %v1133 = vadd.f32 0.0, %v1132
      %v1134 = vpop.f32.mrb[0].mxu0
      %v1135 = vadd.f32 0.0, %v1134
      %1136 = vmatprep.mubr.bf16.mxu0 0
      %1137 = vmatmul.mubr.bf16.gmra.mrb[0].mxu0 %v601
      %v1138 = vpop.f32.mrb[0].mxu0
      %v1139 = vadd.f32 0.0, %v1138
      %v1140 = vpop.f32.mrb[0].mxu0
      %v1141 = vadd.f32 0.0, %v1140
      %v1142 = vpop.f32.mrb[0].mxu0
      %v1143 = vadd.f32 0.0, %v1142
      %v1144 = vpop.f32.mrb[0].mxu0
      %v1145 = vadd.f32 0.0, %v1144
      %1146 = vmatprep.mubr.bf16.mxu0 0
      %1147 = vmatmul.mubr.bf16.gmra.mrb[0].mxu0 %v604
      %v1148 = vpop.f32.mrb[0].mxu0
      %v1149 = vadd.f32 0.0, %v1148
      %v1150 = vpop.f32.mrb[0].mxu0
      %v1151 = vadd.f32 0.0, %v1150
      %v1152 = vpop.f32.mrb[0].mxu0
      %v1153 = vadd.f32 0.0, %v1152
      %v1154 = vpop.f32.mrb[0].mxu0
      %v1155 = vadd.f32 0.0, %v1154
      %1156 = vmatprep.mubr.bf16.mxu0 0
      %1157 = vmatmul.mubr.bf16.gmra.mrb[0].mxu0 %v607
      %v1158 = vpop.f32.mrb[0].mxu0
      %v1159 = vadd.f32 0.0, %v1158
      %v1160 = vpop.f32.mrb[0].mxu0
      %v1161 = vadd.f32 0.0, %v1160
      %v1162 = vpop.f32.mrb[0].mxu0
      %v1163 = vadd.f32 0.0, %v1162
      %v1164 = vpop.f32.mrb[0].mxu0
      %v1165 = vadd.f32 0.0, %v1164
      %1166 = vmatprep.mubr.bf16.mxu0 0
      %1167 = vmatmul.mubr.bf16.gmra.mrb[0].mxu0 %v610
      %v1168 = vpop.f32.mrb[0].mxu0
      %v1169 = vadd.f32 0.0, %v1168
      %v1170 = vpop.f32.mrb[0].mxu0
      %v1171 = vadd.f32 0.0, %v1170
      %v1172 = vpop.f32.mrb[0].mxu0
      %v1173 = vadd.f32 0.0, %v1172
      %v1174 = vpop.f32.mrb[0].mxu0
      %v1175 = vadd.f32 0.0, %v1174
      %1176 = vmatprep.mubr.bf16.mxu0 0
      %1177 = vmatmul.mubr.bf16.gmra.mrb[0].mxu0 %v613
      %v1178 = vpop.f32.mrb[0].mxu0
      %v1179 = vadd.f32 0.0, %v1178
      %v1180 = vpop.f32.mrb[0].mxu0
      %v1181 = vadd.f32 0.0, %v1180
      %v1182 = vpop.f32.mrb[0].mxu0
      %v1183 = vadd.f32 0.0, %v1182
      %v1184 = vpop.f32.mrb[0].mxu0
      %v1185 = vadd.f32 0.0, %v1184
      %1186 = vmatprep.mubr.bf16.mxu0 0
      %1187 = vmatmul.mubr.bf16.gmra.mrb[0].mxu0 %v616
      %v1188 = vpop.f32.mrb[0].mxu0
      %v1189 = vadd.f32 0.0, %v1188
      %v1190 = vpop.f32.mrb[0].mxu0
      %v1191 = vadd.f32 0.0, %v1190
      %v1192 = vpop.f32.mrb[0].mxu0
      %v1193 = vadd.f32 0.0, %v1192
      %v1194 = vpop.f32.mrb[0].mxu0
      %v1195 = vadd.f32 0.0, %v1194
      %1196 = vdwg.mxu0
      %1197 = vmatprep.subr.bf16.mxu0 0
      %1198 = vmatpush1.bf16.msra.mxu0 %v561
      %1199 = vmatprep.subr.bf16.mxu0 0
      %1200 = vmatpush1.bf16.msra.mxu0 0
      %1201 = vmatprep.subr.bf16.mxu0 0
      %1202 = vmatpush1.bf16.msra.mxu0 0
      %1203 = vmatprep.subr.bf16.mxu0 0
      %1204 = vmatpush1.bf16.msra.mxu0 0
      %1205 = vmatprep.subr.bf16.mxu0 0
      %1206 = vmatpush1.bf16.msra.mxu0 0
      %1207 = vmatprep.subr.bf16.mxu0 0
      %1208 = vmatpush1.bf16.msra.mxu0 0
      %1209 = vmatprep.subr.bf16.mxu0 0
      %1210 = vmatpush1.bf16.msra.mxu0 0
      %1211 = vmatprep.subr.bf16.mxu0 0
      %1212 = vmatpush1.bf16.msra.mxu0 0
      %1213 = vmatprep.subr.bf16.mxu0 0
      %1214 = vmatpush1.bf16.msra.mxu0 0
      %1215 = vmatprep.subr.bf16.mxu0 0
      %1216 = vmatpush1.bf16.msra.mxu0 0
      %1217 = vmatprep.subr.bf16.mxu0 0
      %1218 = vmatpush1.bf16.msra.mxu0 0
      %1219 = vmatprep.subr.bf16.mxu0 0
      %1220 = vmatpush1.bf16.msra.mxu0 0
      %1221 = vmatprep.subr.bf16.mxu0 0
      %1222 = vmatpush1.bf16.msra.mxu0 0
      %1223 = vmatprep.subr.bf16.mxu0 0
      %1224 = vmatpush1.bf16.msra.mxu0 0
      %1225 = vmatprep.subr.bf16.mxu0 0
      %1226 = vmatpush1.bf16.msra.mxu0 0
      %1227 = vmatprep.subr.bf16.mxu0 0
      %1228 = vmatpush1.bf16.msra.mxu0 0
      %1229 = vmatprep.mubr.bf16.mxu0 0
      %1230 = vmatmul.mubr.bf16.gmra.mrb[0].mxu0 %v571
      %v1231 = vpop.f32.mrb[0].mxu0
      %v1232 = vadd.f32 0.0, %v1231
      %v1233 = vpop.f32.mrb[0].mxu0
      %v1234 = vpop.f32.mrb[0].mxu0
      %v1235 = vadd.f32 0.0, %v1234
      %v1236 = vpop.f32.mrb[0].mxu0
      %1237 = vmatprep.mubr.bf16.mxu0 0
      %1238 = vmatmul.mubr.bf16.gmra.mrb[0].mxu0 %v574
      %v1239 = vpop.f32.mrb[0].mxu0
      %v1240 = vadd.f32 0.0, %v1239
      %v1241 = vpop.f32.mrb[0].mxu0
      %v1242 = vpop.f32.mrb[0].mxu0
      %v1243 = vadd.f32 0.0, %v1242
      %v1244 = vpop.f32.mrb[0].mxu0
      %1245 = vmatprep.mubr.bf16.mxu0 0
      %1246 = vmatmul.mubr.bf16.gmra.mrb[0].mxu0 %v577
      %v1247 = vpop.f32.mrb[0].mxu0
      %v1248 = vadd.f32 0.0, %v1247
      %v1249 = vpop.f32.mrb[0].mxu0
      %v1250 = vpop.f32.mrb[0].mxu0
      %v1251 = vadd.f32 0.0, %v1250
      %v1252 = vpop.f32.mrb[0].mxu0
      %1253 = vmatprep.mubr.bf16.mxu0 0
      %1254 = vmatmul.mubr.bf16.gmra.mrb[0].mxu0 %v580
      %v1255 = vpop.f32.mrb[0].mxu0
      %v1256 = vadd.f32 0.0, %v1255
      %v1257 = vpop.f32.mrb[0].mxu0
      %v1258 = vpop.f32.mrb[0].mxu0
      %v1259 = vadd.f32 0.0, %v1258
      %v1260 = vpop.f32.mrb[0].mxu0
      %1261 = vmatprep.mubr.bf16.mxu0 0
      %1262 = vmatmul.mubr.bf16.gmra.mrb[0].mxu0 %v583
      %v1263 = vpop.f32.mrb[0].mxu0
      %v1264 = vadd.f32 0.0, %v1263
      %v1265 = vpop.f32.mrb[0].mxu0
      %v1266 = vpop.f32.mrb[0].mxu0
      %v1267 = vadd.f32 0.0, %v1266
      %v1268 = vpop.f32.mrb[0].mxu0
      %1269 = vmatprep.mubr.bf16.mxu0 0
      %1270 = vmatmul.mubr.bf16.gmra.mrb[0].mxu0 %v586
      %v1271 = vpop.f32.mrb[0].mxu0
      %v1272 = vadd.f32 0.0, %v1271
      %v1273 = vpop.f32.mrb[0].mxu0
      %v1274 = vpop.f32.mrb[0].mxu0
      %v1275 = vadd.f32 0.0, %v1274
      %v1276 = vpop.f32.mrb[0].mxu0
      %1277 = vmatprep.mubr.bf16.mxu0 0
      %1278 = vmatmul.mubr.bf16.gmra.mrb[0].mxu0 %v589
      %v1279 = vpop.f32.mrb[0].mxu0
      %v1280 = vadd.f32 0.0, %v1279
      %v1281 = vpop.f32.mrb[0].mxu0
      %v1282 = vpop.f32.mrb[0].mxu0
      %v1283 = vadd.f32 0.0, %v1282
      %v1284 = vpop.f32.mrb[0].mxu0
      %1285 = vmatprep.mubr.bf16.mxu0 0
      %1286 = vmatmul.mubr.bf16.gmra.mrb[0].mxu0 %v592
      %v1287 = vpop.f32.mrb[0].mxu0
      %v1288 = vadd.f32 0.0, %v1287
      %v1289 = vpop.f32.mrb[0].mxu0
      %v1290 = vpop.f32.mrb[0].mxu0
      %v1291 = vadd.f32 0.0, %v1290
      %v1292 = vpop.f32.mrb[0].mxu0
      %1293 = vmatprep.mubr.bf16.mxu0 0
      %1294 = vmatmul.mubr.bf16.gmra.mrb[0].mxu0 %v595
      %v1295 = vpop.f32.mrb[0].mxu0
      %v1296 = vadd.f32 0.0, %v1295
      %v1297 = vpop.f32.mrb[0].mxu0
      %v1298 = vpop.f32.mrb[0].mxu0
      %v1299 = vadd.f32 0.0, %v1298
      %v1300 = vpop.f32.mrb[0].mxu0
      %1301 = vmatprep.mubr.bf16.mxu0 0
      %1302 = vmatmul.mubr.bf16.gmra.mrb[0].mxu0 %v598
      %v1303 = vpop.f32.mrb[0].mxu0
      %v1304 = vadd.f32 0.0, %v1303
      %v1305 = vpop.f32.mrb[0].mxu0
      %v1306 = vpop.f32.mrb[0].mxu0
      %v1307 = vadd.f32 0.0, %v1306
      %v1308 = vpop.f32.mrb[0].mxu0
      %1309 = vmatprep.mubr.bf16.mxu0 0
      %1310 = vmatmul.mubr.bf16.gmra.mrb[0].mxu0 %v601
      %v1311 = vpop.f32.mrb[0].mxu0
      %v1312 = vadd.f32 0.0, %v1311
      %v1313 = vpop.f32.mrb[0].mxu0
      %v1314 = vpop.f32.mrb[0].mxu0
      %v1315 = vadd.f32 0.0, %v1314
      %v1316 = vpop.f32.mrb[0].mxu0
      %1317 = vmatprep.mubr.bf16.mxu0 0
      %1318 = vmatmul.mubr.bf16.gmra.mrb[0].mxu0 %v604
      %v1319 = vpop.f32.mrb[0].mxu0
      %v1320 = vadd.f32 0.0, %v1319
      %v1321 = vpop.f32.mrb[0].mxu0
      %v1322 = vpop.f32.mrb[0].mxu0
      %v1323 = vadd.f32 0.0, %v1322
      %v1324 = vpop.f32.mrb[0].mxu0
      %1325 = vmatprep.mubr.bf16.mxu0 0
      %1326 = vmatmul.mubr.bf16.gmra.mrb[0].mxu0 %v607
      %v1327 = vpop.f32.mrb[0].mxu0
      %v1328 = vadd.f32 0.0, %v1327
      %v1329 = vpop.f32.mrb[0].mxu0
      %v1330 = vpop.f32.mrb[0].mxu0
      %v1331 = vadd.f32 0.0, %v1330
      %v1332 = vpop.f32.mrb[0].mxu0
      %1333 = vmatprep.mubr.bf16.mxu0 0
      %1334 = vmatmul.mubr.bf16.gmra.mrb[0].mxu0 %v610
      %v1335 = vpop.f32.mrb[0].mxu0
      %v1336 = vadd.f32 0.0, %v1335
      %v1337 = vpop.f32.mrb[0].mxu0
      %v1338 = vpop.f32.mrb[0].mxu0
      %v1339 = vadd.f32 0.0, %v1338
      %v1340 = vpop.f32.mrb[0].mxu0
      %1341 = vmatprep.mubr.bf16.mxu0 0
      %1342 = vmatmul.mubr.bf16.gmra.mrb[0].mxu0 %v613
      %v1343 = vpop.f32.mrb[0].mxu0
      %v1344 = vadd.f32 0.0, %v1343
      %v1345 = vpop.f32.mrb[0].mxu0
      %v1346 = vpop.f32.mrb[0].mxu0
      %v1347 = vadd.f32 0.0, %v1346
      %v1348 = vpop.f32.mrb[0].mxu0
      %1349 = vmatprep.mubr.bf16.mxu0 0
      %1350 = vmatmul.mubr.bf16.gmra.mrb[0].mxu0 %v616
      %v1351 = vpop.f32.mrb[0].mxu0
      %v1352 = vadd.f32 0.0, %v1351
      %v1353 = vpop.f32.mrb[0].mxu0
      %v1354 = vpop.f32.mrb[0].mxu0
      %v1355 = vadd.f32 0.0, %v1354
      %v1356 = vpop.f32.mrb[0].mxu0
      %1357 = vdwg.mxu0
      %v1358 = vld [vmem:[%s2] sm:$0xff]
      %v1360 = vlaneseq
      %v1361 = vshrl.u32 %v1360, 7
      %v1362 = vsub.s32 0, %v1361
      %v1363 = vrot.slane %v1358, %v1362
      %v1364 = vlaneseq
      %v1365 = vshrl.u32 %v1364, 7
      %v1366 = vsub.s32 1, %v1365
      %v1367 = vrot.slane %v1358, %v1366
      %v1368 = vlaneseq
      %v1369 = vshrl.u32 %v1368, 7
      %v1370 = vsub.s32 2, %v1369
      %v1371 = vrot.slane %v1358, %v1370
      %v1372 = vlaneseq
      %v1373 = vshrl.u32 %v1372, 7
      %v1374 = vsub.s32 3, %v1373
      %v1375 = vrot.slane %v1358, %v1374
      %v1376 = vlaneseq
      %v1377 = vshrl.u32 %v1376, 7
      %v1378 = vsub.s32 4, %v1377
      %v1379 = vrot.slane %v1358, %v1378
      %v1380 = vlaneseq
      %v1381 = vshrl.u32 %v1380, 7
      %v1382 = vsub.s32 5, %v1381
      %v1383 = vrot.slane %v1358, %v1382
      %v1384 = vlaneseq
      %v1385 = vshrl.u32 %v1384, 7
      %v1386 = vsub.s32 6, %v1385
      %v1387 = vrot.slane %v1358, %v1386
      %v1395 = vsub.f32 %v653, %v1363
      %v1396 = vsub.f32 %v655, %v1367
      %v1397 = vsub.f32 %v846, %v1371
      %v1398 = vsub.f32 %v848, %v1375
      %v1399 = vsub.f32 %v1039, %v1379
      %v1400 = vsub.f32 %v1041, %v1383
      %v1401 = vsub.f32 %v1232, %v1387
      %v1402 = vsub.f32 %v657, %v1363
      %v1403 = vsub.f32 %v659, %v1367
      %v1404 = vsub.f32 %v850, %v1371
      %v1405 = vsub.f32 %v852, %v1375
      %v1406 = vsub.f32 %v1043, %v1379
      %v1407 = vsub.f32 %v1045, %v1383
      %v1408 = vsub.f32 %v1235, %v1387
      %v1409 = vsub.f32 %v663, %v1363
      %v1410 = vsub.f32 %v665, %v1367
      %v1411 = vsub.f32 %v856, %v1371
      %v1412 = vsub.f32 %v858, %v1375
      %v1413 = vsub.f32 %v1049, %v1379
      %v1414 = vsub.f32 %v1051, %v1383
      %v1415 = vsub.f32 %v1240, %v1387
      %v1416 = vsub.f32 %v667, %v1363
      %v1417 = vsub.f32 %v669, %v1367
      %v1418 = vsub.f32 %v860, %v1371
      %v1419 = vsub.f32 %v862, %v1375
      %v1420 = vsub.f32 %v1053, %v1379
      %v1421 = vsub.f32 %v1055, %v1383
      %v1422 = vsub.f32 %v1243, %v1387
      %v1423 = vsub.f32 %v673, %v1363
      %v1424 = vsub.f32 %v675, %v1367
      %v1425 = vsub.f32 %v866, %v1371
      %v1426 = vsub.f32 %v868, %v1375
      %v1427 = vsub.f32 %v1059, %v1379
      %v1428 = vsub.f32 %v1061, %v1383
      %v1429 = vsub.f32 %v1248, %v1387
      %v1430 = vsub.f32 %v677, %v1363
      %v1431 = vsub.f32 %v679, %v1367
      %v1432 = vsub.f32 %v870, %v1371
      %v1433 = vsub.f32 %v872, %v1375
      %v1434 = vsub.f32 %v1063, %v1379
      %v1435 = vsub.f32 %v1065, %v1383
      %v1436 = vsub.f32 %v1251, %v1387
      %v1437 = vsub.f32 %v683, %v1363
      %v1438 = vsub.f32 %v685, %v1367
      %v1439 = vsub.f32 %v876, %v1371
      %v1440 = vsub.f32 %v878, %v1375
      %v1441 = vsub.f32 %v1069, %v1379
      %v1442 = vsub.f32 %v1071, %v1383
      %v1443 = vsub.f32 %v1256, %v1387
      %v1444 = vsub.f32 %v687, %v1363
      %v1445 = vsub.f32 %v689, %v1367
      %v1446 = vsub.f32 %v880, %v1371
      %v1447 = vsub.f32 %v882, %v1375
      %v1448 = vsub.f32 %v1073, %v1379
      %v1449 = vsub.f32 %v1075, %v1383
      %v1450 = vsub.f32 %v1259, %v1387
      %v1451 = vsub.f32 %v693, %v1363
      %v1452 = vsub.f32 %v695, %v1367
      %v1453 = vsub.f32 %v886, %v1371
      %v1454 = vsub.f32 %v888, %v1375
      %v1455 = vsub.f32 %v1079, %v1379
      %v1456 = vsub.f32 %v1081, %v1383
      %v1457 = vsub.f32 %v1264, %v1387
      %v1458 = vsub.f32 %v697, %v1363
      %v1459 = vsub.f32 %v699, %v1367
      %v1460 = vsub.f32 %v890, %v1371
      %v1461 = vsub.f32 %v892, %v1375
      %v1462 = vsub.f32 %v1083, %v1379
      %v1463 = vsub.f32 %v1085, %v1383
      %v1464 = vsub.f32 %v1267, %v1387
      %v1465 = vsub.f32 %v703, %v1363
      %v1466 = vsub.f32 %v705, %v1367
      %v1467 = vsub.f32 %v896, %v1371
      %v1468 = vsub.f32 %v898, %v1375
      %v1469 = vsub.f32 %v1089, %v1379
      %v1470 = vsub.f32 %v1091, %v1383
      %v1471 = vsub.f32 %v1272, %v1387
      %v1472 = vsub.f32 %v707, %v1363
      %v1473 = vsub.f32 %v709, %v1367
      %v1474 = vsub.f32 %v900, %v1371
      %v1475 = vsub.f32 %v902, %v1375
      %v1476 = vsub.f32 %v1093, %v1379
      %v1477 = vsub.f32 %v1095, %v1383
      %v1478 = vsub.f32 %v1275, %v1387
      %v1479 = vsub.f32 %v713, %v1363
      %v1480 = vsub.f32 %v715, %v1367
      %v1481 = vsub.f32 %v906, %v1371
      %v1482 = vsub.f32 %v908, %v1375
      %v1483 = vsub.f32 %v1099, %v1379
      %v1484 = vsub.f32 %v1101, %v1383
      %v1485 = vsub.f32 %v1280, %v1387
      %v1486 = vsub.f32 %v717, %v1363
      %v1487 = vsub.f32 %v719, %v1367
      %v1488 = vsub.f32 %v910, %v1371
      %v1489 = vsub.f32 %v912, %v1375
      %v1490 = vsub.f32 %v1103, %v1379
      %v1491 = vsub.f32 %v1105, %v1383
      %v1492 = vsub.f32 %v1283, %v1387
      %v1493 = vsub.f32 %v723, %v1363
      %v1494 = vsub.f32 %v725, %v1367
      %v1495 = vsub.f32 %v916, %v1371
      %v1496 = vsub.f32 %v918, %v1375
      %v1497 = vsub.f32 %v1109, %v1379
      %v1498 = vsub.f32 %v1111, %v1383
      %v1499 = vsub.f32 %v1288, %v1387
      %v1500 = vsub.f32 %v727, %v1363
      %v1501 = vsub.f32 %v729, %v1367
      %v1502 = vsub.f32 %v920, %v1371
      %v1503 = vsub.f32 %v922, %v1375
      %v1504 = vsub.f32 %v1113, %v1379
      %v1505 = vsub.f32 %v1115, %v1383
      %v1506 = vsub.f32 %v1291, %v1387
      %v1507 = vsub.f32 %v733, %v1363
      %v1508 = vsub.f32 %v735, %v1367
      %v1509 = vsub.f32 %v926, %v1371
      %v1510 = vsub.f32 %v928, %v1375
      %v1511 = vsub.f32 %v1119, %v1379
      %v1512 = vsub.f32 %v1121, %v1383
      %v1513 = vsub.f32 %v1296, %v1387
      %v1514 = vsub.f32 %v737, %v1363
      %v1515 = vsub.f32 %v739, %v1367
      %v1516 = vsub.f32 %v930, %v1371
      %v1517 = vsub.f32 %v932, %v1375
      %v1518 = vsub.f32 %v1123, %v1379
      %v1519 = vsub.f32 %v1125, %v1383
      %v1520 = vsub.f32 %v1299, %v1387
      %v1521 = vsub.f32 %v743, %v1363
      %v1522 = vsub.f32 %v745, %v1367
      %v1523 = vsub.f32 %v936, %v1371
      %v1524 = vsub.f32 %v938, %v1375
      %v1525 = vsub.f32 %v1129, %v1379
      %v1526 = vsub.f32 %v1131, %v1383
      %v1527 = vsub.f32 %v1304, %v1387
      %v1528 = vsub.f32 %v747, %v1363
      %v1529 = vsub.f32 %v749, %v1367
      %v1530 = vsub.f32 %v940, %v1371
      %v1531 = vsub.f32 %v942, %v1375
      %v1532 = vsub.f32 %v1133, %v1379
      %v1533 = vsub.f32 %v1135, %v1383
      %v1534 = vsub.f32 %v1307, %v1387
      %v1535 = vsub.f32 %v753, %v1363
      %v1536 = vsub.f32 %v755, %v1367
      %v1537 = vsub.f32 %v946, %v1371
      %v1538 = vsub.f32 %v948, %v1375
      %v1539 = vsub.f32 %v1139, %v1379
      %v1540 = vsub.f32 %v1141, %v1383
      %v1541 = vsub.f32 %v1312, %v1387
      %v1542 = vsub.f32 %v757, %v1363
      %v1543 = vsub.f32 %v759, %v1367
      %v1544 = vsub.f32 %v950, %v1371
      %v1545 = vsub.f32 %v952, %v1375
      %v1546 = vsub.f32 %v1143, %v1379
      %v1547 = vsub.f32 %v1145, %v1383
      %v1548 = vsub.f32 %v1315, %v1387
      %v1549 = vsub.f32 %v763, %v1363
      %v1550 = vsub.f32 %v765, %v1367
      %v1551 = vsub.f32 %v956, %v1371
      %v1552 = vsub.f32 %v958, %v1375
      %v1553 = vsub.f32 %v1149, %v1379
      %v1554 = vsub.f32 %v1151, %v1383
      %v1555 = vsub.f32 %v1320, %v1387
      %v1556 = vsub.f32 %v767, %v1363
      %v1557 = vsub.f32 %v769, %v1367
      %v1558 = vsub.f32 %v960, %v1371
      %v1559 = vsub.f32 %v962, %v1375
      %v1560 = vsub.f32 %v1153, %v1379
      %v1561 = vsub.f32 %v1155, %v1383
      %v1562 = vsub.f32 %v1323, %v1387
      %v1563 = vsub.f32 %v773, %v1363
      %v1564 = vsub.f32 %v775, %v1367
      %v1565 = vsub.f32 %v966, %v1371
      %v1566 = vsub.f32 %v968, %v1375
      %v1567 = vsub.f32 %v1159, %v1379
      %v1568 = vsub.f32 %v1161, %v1383
      %v1569 = vsub.f32 %v1328, %v1387
      %v1570 = vsub.f32 %v777, %v1363
      %v1571 = vsub.f32 %v779, %v1367
      %v1572 = vsub.f32 %v970, %v1371
      %v1573 = vsub.f32 %v972, %v1375
      %v1574 = vsub.f32 %v1163, %v1379
      %v1575 = vsub.f32 %v1165, %v1383
      %v1576 = vsub.f32 %v1331, %v1387
      %v1577 = vsub.f32 %v783, %v1363
      %v1578 = vsub.f32 %v785, %v1367
      %v1579 = vsub.f32 %v976, %v1371
      %v1580 = vsub.f32 %v978, %v1375
      %v1581 = vsub.f32 %v1169, %v1379
      %v1582 = vsub.f32 %v1171, %v1383
      %v1583 = vsub.f32 %v1336, %v1387
      %v1584 = vsub.f32 %v787, %v1363
      %v1585 = vsub.f32 %v789, %v1367
      %v1586 = vsub.f32 %v980, %v1371
      %v1587 = vsub.f32 %v982, %v1375
      %v1588 = vsub.f32 %v1173, %v1379
      %v1589 = vsub.f32 %v1175, %v1383
      %v1590 = vsub.f32 %v1339, %v1387
      %v1591 = vsub.f32 %v793, %v1363
      %v1592 = vsub.f32 %v795, %v1367
      %v1593 = vsub.f32 %v986, %v1371
      %v1594 = vsub.f32 %v988, %v1375
      %v1595 = vsub.f32 %v1179, %v1379
      %v1596 = vsub.f32 %v1181, %v1383
      %v1597 = vsub.f32 %v1344, %v1387
      %v1598 = vsub.f32 %v797, %v1363
      %v1599 = vsub.f32 %v799, %v1367
      %v1600 = vsub.f32 %v990, %v1371
      %v1601 = vsub.f32 %v992, %v1375
      %v1602 = vsub.f32 %v1183, %v1379
      %v1603 = vsub.f32 %v1185, %v1383
      %v1604 = vsub.f32 %v1347, %v1387
      %v1605 = vsub.f32 %v803, %v1363
      %v1606 = vsub.f32 %v805, %v1367
      %v1607 = vsub.f32 %v996, %v1371
      %v1608 = vsub.f32 %v998, %v1375
      %v1609 = vsub.f32 %v1189, %v1379
      %v1610 = vsub.f32 %v1191, %v1383
      %v1611 = vsub.f32 %v1352, %v1387
      %v1612 = vsub.f32 %v807, %v1363
      %v1613 = vsub.f32 %v809, %v1367
      %v1614 = vsub.f32 %v1000, %v1371
      %v1615 = vsub.f32 %v1002, %v1375
      %v1616 = vsub.f32 %v1193, %v1379
      %v1617 = vsub.f32 %v1195, %v1383
      %v1618 = vsub.f32 %v1355, %v1387
      %v1619 = vand.u32 2147483647, %v1395
      %v1620 = vand.u32 2147483647, %v1396
      %v1621 = vand.u32 2147483647, %v1397
      %v1622 = vand.u32 2147483647, %v1398
      %v1623 = vand.u32 2147483647, %v1399
      %v1624 = vand.u32 2147483647, %v1400
      %v1625 = vand.u32 2147483647, %v1401
      %v1626 = vand.u32 2147483647, %v1402
      %v1627 = vand.u32 2147483647, %v1403
      %v1628 = vand.u32 2147483647, %v1404
      %v1629 = vand.u32 2147483647, %v1405
      %v1630 = vand.u32 2147483647, %v1406
      %v1631 = vand.u32 2147483647, %v1407
      %v1632 = vand.u32 2147483647, %v1408
      %v1633 = vand.u32 2147483647, %v1409
      %v1634 = vand.u32 2147483647, %v1410
      %v1635 = vand.u32 2147483647, %v1411
      %v1636 = vand.u32 2147483647, %v1412
      %v1637 = vand.u32 2147483647, %v1413
      %v1638 = vand.u32 2147483647, %v1414
      %v1639 = vand.u32 2147483647, %v1415
      %v1640 = vand.u32 2147483647, %v1416
      %v1641 = vand.u32 2147483647, %v1417
      %v1642 = vand.u32 2147483647, %v1418
      %v1643 = vand.u32 2147483647, %v1419
      %v1644 = vand.u32 2147483647, %v1420
      %v1645 = vand.u32 2147483647, %v1421
      %v1646 = vand.u32 2147483647, %v1422
      %v1647 = vand.u32 2147483647, %v1423
      %v1648 = vand.u32 2147483647, %v1424
      %v1649 = vand.u32 2147483647, %v1425
      %v1650 = vand.u32 2147483647, %v1426
      %v1651 = vand.u32 2147483647, %v1427
      %v1652 = vand.u32 2147483647, %v1428
      %v1653 = vand.u32 2147483647, %v1429
      %v1654 = vand.u32 2147483647, %v1430
      %v1655 = vand.u32 2147483647, %v1431
      %v1656 = vand.u32 2147483647, %v1432
      %v1657 = vand.u32 2147483647, %v1433
      %v1658 = vand.u32 2147483647, %v1434
      %v1659 = vand.u32 2147483647, %v1435
      %v1660 = vand.u32 2147483647, %v1436
      %v1661 = vand.u32 2147483647, %v1437
      %v1662 = vand.u32 2147483647, %v1438
      %v1663 = vand.u32 2147483647, %v1439
      %v1664 = vand.u32 2147483647, %v1440
      %v1665 = vand.u32 2147483647, %v1441
      %v1666 = vand.u32 2147483647, %v1442
      %v1667 = vand.u32 2147483647, %v1443
      %v1668 = vand.u32 2147483647, %v1444
      %v1669 = vand.u32 2147483647, %v1445
      %v1670 = vand.u32 2147483647, %v1446
      %v1671 = vand.u32 2147483647, %v1447
      %v1672 = vand.u32 2147483647, %v1448
      %v1673 = vand.u32 2147483647, %v1449
      %v1674 = vand.u32 2147483647, %v1450
      %v1675 = vand.u32 2147483647, %v1451
      %v1676 = vand.u32 2147483647, %v1452
      %v1677 = vand.u32 2147483647, %v1453
      %v1678 = vand.u32 2147483647, %v1454
      %v1679 = vand.u32 2147483647, %v1455
      %v1680 = vand.u32 2147483647, %v1456
      %v1681 = vand.u32 2147483647, %v1457
      %v1682 = vand.u32 2147483647, %v1458
      %v1683 = vand.u32 2147483647, %v1459
      %v1684 = vand.u32 2147483647, %v1460
      %v1685 = vand.u32 2147483647, %v1461
      %v1686 = vand.u32 2147483647, %v1462
      %v1687 = vand.u32 2147483647, %v1463
      %v1688 = vand.u32 2147483647, %v1464
      %v1689 = vand.u32 2147483647, %v1465
      %v1690 = vand.u32 2147483647, %v1466
      %v1691 = vand.u32 2147483647, %v1467
      %v1692 = vand.u32 2147483647, %v1468
      %v1693 = vand.u32 2147483647, %v1469
      %v1694 = vand.u32 2147483647, %v1470
      %v1695 = vand.u32 2147483647, %v1471
      %v1696 = vand.u32 2147483647, %v1472
      %v1697 = vand.u32 2147483647, %v1473
      %v1698 = vand.u32 2147483647, %v1474
      %v1699 = vand.u32 2147483647, %v1475
      %v1700 = vand.u32 2147483647, %v1476
      %v1701 = vand.u32 2147483647, %v1477
      %v1702 = vand.u32 2147483647, %v1478
      %v1703 = vand.u32 2147483647, %v1479
      %v1704 = vand.u32 2147483647, %v1480
      %v1705 = vand.u32 2147483647, %v1481
      %v1706 = vand.u32 2147483647, %v1482
      %v1707 = vand.u32 2147483647, %v1483
      %v1708 = vand.u32 2147483647, %v1484
      %v1709 = vand.u32 2147483647, %v1485
      %v1710 = vand.u32 2147483647, %v1486
      %v1711 = vand.u32 2147483647, %v1487
      %v1712 = vand.u32 2147483647, %v1488
      %v1713 = vand.u32 2147483647, %v1489
      %v1714 = vand.u32 2147483647, %v1490
      %v1715 = vand.u32 2147483647, %v1491
      %v1716 = vand.u32 2147483647, %v1492
      %v1717 = vand.u32 2147483647, %v1493
      %v1718 = vand.u32 2147483647, %v1494
      %v1719 = vand.u32 2147483647, %v1495
      %v1720 = vand.u32 2147483647, %v1496
      %v1721 = vand.u32 2147483647, %v1497
      %v1722 = vand.u32 2147483647, %v1498
      %v1723 = vand.u32 2147483647, %v1499
      %v1724 = vand.u32 2147483647, %v1500
      %v1725 = vand.u32 2147483647, %v1501
      %v1726 = vand.u32 2147483647, %v1502
      %v1727 = vand.u32 2147483647, %v1503
      %v1728 = vand.u32 2147483647, %v1504
      %v1729 = vand.u32 2147483647, %v1505
      %v1730 = vand.u32 2147483647, %v1506
      %v1731 = vand.u32 2147483647, %v1507
      %v1732 = vand.u32 2147483647, %v1508
      %v1733 = vand.u32 2147483647, %v1509
      %v1734 = vand.u32 2147483647, %v1510
      %v1735 = vand.u32 2147483647, %v1511
      %v1736 = vand.u32 2147483647, %v1512
      %v1737 = vand.u32 2147483647, %v1513
      %v1738 = vand.u32 2147483647, %v1514
      %v1739 = vand.u32 2147483647, %v1515
      %v1740 = vand.u32 2147483647, %v1516
      %v1741 = vand.u32 2147483647, %v1517
      %v1742 = vand.u32 2147483647, %v1518
      %v1743 = vand.u32 2147483647, %v1519
      %v1744 = vand.u32 2147483647, %v1520
      %v1745 = vand.u32 2147483647, %v1521
      %v1746 = vand.u32 2147483647, %v1522
      %v1747 = vand.u32 2147483647, %v1523
      %v1748 = vand.u32 2147483647, %v1524
      %v1749 = vand.u32 2147483647, %v1525
      %v1750 = vand.u32 2147483647, %v1526
      %v1751 = vand.u32 2147483647, %v1527
      %v1752 = vand.u32 2147483647, %v1528
      %v1753 = vand.u32 2147483647, %v1529
      %v1754 = vand.u32 2147483647, %v1530
      %v1755 = vand.u32 2147483647, %v1531
      %v1756 = vand.u32 2147483647, %v1532
      %v1757 = vand.u32 2147483647, %v1533
      %v1758 = vand.u32 2147483647, %v1534
      %v1759 = vand.u32 2147483647, %v1535
      %v1760 = vand.u32 2147483647, %v1536
      %v1761 = vand.u32 2147483647, %v1537
      %v1762 = vand.u32 2147483647, %v1538
      %v1763 = vand.u32 2147483647, %v1539
      %v1764 = vand.u32 2147483647, %v1540
      %v1765 = vand.u32 2147483647, %v1541
      %v1766 = vand.u32 2147483647, %v1542
      %v1767 = vand.u32 2147483647, %v1543
      %v1768 = vand.u32 2147483647, %v1544
      %v1769 = vand.u32 2147483647, %v1545
      %v1770 = vand.u32 2147483647, %v1546
      %v1771 = vand.u32 2147483647, %v1547
      %v1772 = vand.u32 2147483647, %v1548
      %v1773 = vand.u32 2147483647, %v1549
      %v1774 = vand.u32 2147483647, %v1550
      %v1775 = vand.u32 2147483647, %v1551
      %v1776 = vand.u32 2147483647, %v1552
      %v1777 = vand.u32 2147483647, %v1553
      %v1778 = vand.u32 2147483647, %v1554
      %v1779 = vand.u32 2147483647, %v1555
      %v1780 = vand.u32 2147483647, %v1556
      %v1781 = vand.u32 2147483647, %v1557
      %v1782 = vand.u32 2147483647, %v1558
      %v1783 = vand.u32 2147483647, %v1559
      %v1784 = vand.u32 2147483647, %v1560
      %v1785 = vand.u32 2147483647, %v1561
      %v1786 = vand.u32 2147483647, %v1562
      %v1787 = vand.u32 2147483647, %v1563
      %v1788 = vand.u32 2147483647, %v1564
      %v1789 = vand.u32 2147483647, %v1565
      %v1790 = vand.u32 2147483647, %v1566
      %v1791 = vand.u32 2147483647, %v1567
      %v1792 = vand.u32 2147483647, %v1568
      %v1793 = vand.u32 2147483647, %v1569
      %v1794 = vand.u32 2147483647, %v1570
      %v1795 = vand.u32 2147483647, %v1571
      %v1796 = vand.u32 2147483647, %v1572
      %v1797 = vand.u32 2147483647, %v1573
      %v1798 = vand.u32 2147483647, %v1574
      %v1799 = vand.u32 2147483647, %v1575
      %v1800 = vand.u32 2147483647, %v1576
      %v1801 = vand.u32 2147483647, %v1577
      %v1802 = vand.u32 2147483647, %v1578
      %v1803 = vand.u32 2147483647, %v1579
      %v1804 = vand.u32 2147483647, %v1580
      %v1805 = vand.u32 2147483647, %v1581
      %v1806 = vand.u32 2147483647, %v1582
      %v1807 = vand.u32 2147483647, %v1583
      %v1808 = vand.u32 2147483647, %v1584
      %v1809 = vand.u32 2147483647, %v1585
      %v1810 = vand.u32 2147483647, %v1586
      %v1811 = vand.u32 2147483647, %v1587
      %v1812 = vand.u32 2147483647, %v1588
      %v1813 = vand.u32 2147483647, %v1589
      %v1814 = vand.u32 2147483647, %v1590
      %v1815 = vand.u32 2147483647, %v1591
      %v1816 = vand.u32 2147483647, %v1592
      %v1817 = vand.u32 2147483647, %v1593
      %v1818 = vand.u32 2147483647, %v1594
      %v1819 = vand.u32 2147483647, %v1595
      %v1820 = vand.u32 2147483647, %v1596
      %v1821 = vand.u32 2147483647, %v1597
      %v1822 = vand.u32 2147483647, %v1598
      %v1823 = vand.u32 2147483647, %v1599
      %v1824 = vand.u32 2147483647, %v1600
      %v1825 = vand.u32 2147483647, %v1601
      %v1826 = vand.u32 2147483647, %v1602
      %v1827 = vand.u32 2147483647, %v1603
      %v1828 = vand.u32 2147483647, %v1604
      %v1829 = vand.u32 2147483647, %v1605
      %v1830 = vand.u32 2147483647, %v1606
      %v1831 = vand.u32 2147483647, %v1607
      %v1832 = vand.u32 2147483647, %v1608
      %v1833 = vand.u32 2147483647, %v1609
      %v1834 = vand.u32 2147483647, %v1610
      %v1835 = vand.u32 2147483647, %v1611
      %v1836 = vand.u32 2147483647, %v1612
      %v1837 = vand.u32 2147483647, %v1613
      %v1838 = vand.u32 2147483647, %v1614
      %v1839 = vand.u32 2147483647, %v1615
      %v1840 = vand.u32 2147483647, %v1616
      %v1841 = vand.u32 2147483647, %v1617
      %v1842 = vand.u32 2147483647, %v1618
      %vm1843 = vcmp.lt.f32.partialorder %v1619, 0.5
      %vm1844 = vcmp.lt.f32.partialorder %v1620, 0.5
      %vm1845 = vcmp.lt.f32.partialorder %v1621, 0.5
      %vm1846 = vcmp.lt.f32.partialorder %v1622, 0.5
      %vm1847 = vcmp.lt.f32.partialorder %v1623, 0.5
      %vm1848 = vcmp.lt.f32.partialorder %v1624, 0.5
      %vm1849 = vcmp.lt.f32.partialorder %v1625, 0.5
      %vm1850 = vcmp.lt.f32.partialorder %v1626, 0.5
      %vm1851 = vcmp.lt.f32.partialorder %v1627, 0.5
      %vm1852 = vcmp.lt.f32.partialorder %v1628, 0.5
      %vm1853 = vcmp.lt.f32.partialorder %v1629, 0.5
      %vm1854 = vcmp.lt.f32.partialorder %v1630, 0.5
      %vm1855 = vcmp.lt.f32.partialorder %v1631, 0.5
      %vm1856 = vcmp.lt.f32.partialorder %v1632, 0.5
      %vm1857 = vcmp.lt.f32.partialorder %v1633, 0.5
      %vm1858 = vcmp.lt.f32.partialorder %v1634, 0.5
      %vm1859 = vcmp.lt.f32.partialorder %v1635, 0.5
      %vm1860 = vcmp.lt.f32.partialorder %v1636, 0.5
      %vm1861 = vcmp.lt.f32.partialorder %v1637, 0.5
      %vm1862 = vcmp.lt.f32.partialorder %v1638, 0.5
      %vm1863 = vcmp.lt.f32.partialorder %v1639, 0.5
      %vm1864 = vcmp.lt.f32.partialorder %v1640, 0.5
      %vm1865 = vcmp.lt.f32.partialorder %v1641, 0.5
      %vm1866 = vcmp.lt.f32.partialorder %v1642, 0.5
      %vm1867 = vcmp.lt.f32.partialorder %v1643, 0.5
      %vm1868 = vcmp.lt.f32.partialorder %v1644, 0.5
      %vm1869 = vcmp.lt.f32.partialorder %v1645, 0.5
      %vm1870 = vcmp.lt.f32.partialorder %v1646, 0.5
      %vm1871 = vcmp.lt.f32.partialorder %v1647, 0.5
      %vm1872 = vcmp.lt.f32.partialorder %v1648, 0.5
      %vm1873 = vcmp.lt.f32.partialorder %v1649, 0.5
      %vm1874 = vcmp.lt.f32.partialorder %v1650, 0.5
      %vm1875 = vcmp.lt.f32.partialorder %v1651, 0.5
      %vm1876 = vcmp.lt.f32.partialorder %v1652, 0.5
      %vm1877 = vcmp.lt.f32.partialorder %v1653, 0.5
      %vm1878 = vcmp.lt.f32.partialorder %v1654, 0.5
      %vm1879 = vcmp.lt.f32.partialorder %v1655, 0.5
      %vm1880 = vcmp.lt.f32.partialorder %v1656, 0.5
      %vm1881 = vcmp.lt.f32.partialorder %v1657, 0.5
      %vm1882 = vcmp.lt.f32.partialorder %v1658, 0.5
      %vm1883 = vcmp.lt.f32.partialorder %v1659, 0.5
      %vm1884 = vcmp.lt.f32.partialorder %v1660, 0.5
      %vm1885 = vcmp.lt.f32.partialorder %v1661, 0.5
      %vm1886 = vcmp.lt.f32.partialorder %v1662, 0.5
      %vm1887 = vcmp.lt.f32.partialorder %v1663, 0.5
      %vm1888 = vcmp.lt.f32.partialorder %v1664, 0.5
      %vm1889 = vcmp.lt.f32.partialorder %v1665, 0.5
      %vm1890 = vcmp.lt.f32.partialorder %v1666, 0.5
      %vm1891 = vcmp.lt.f32.partialorder %v1667, 0.5
      %vm1892 = vcmp.lt.f32.partialorder %v1668, 0.5
      %vm1893 = vcmp.lt.f32.partialorder %v1669, 0.5
      %vm1894 = vcmp.lt.f32.partialorder %v1670, 0.5
      %vm1895 = vcmp.lt.f32.partialorder %v1671, 0.5
      %vm1896 = vcmp.lt.f32.partialorder %v1672, 0.5
      %vm1897 = vcmp.lt.f32.partialorder %v1673, 0.5
      %vm1898 = vcmp.lt.f32.partialorder %v1674, 0.5
      %vm1899 = vcmp.lt.f32.partialorder %v1675, 0.5
      %vm1900 = vcmp.lt.f32.partialorder %v1676, 0.5
      %vm1901 = vcmp.lt.f32.partialorder %v1677, 0.5
      %vm1902 = vcmp.lt.f32.partialorder %v1678, 0.5
      %vm1903 = vcmp.lt.f32.partialorder %v1679, 0.5
      %vm1904 = vcmp.lt.f32.partialorder %v1680, 0.5
      %vm1905 = vcmp.lt.f32.partialorder %v1681, 0.5
      %vm1906 = vcmp.lt.f32.partialorder %v1682, 0.5
      %vm1907 = vcmp.lt.f32.partialorder %v1683, 0.5
      %vm1908 = vcmp.lt.f32.partialorder %v1684, 0.5
      %vm1909 = vcmp.lt.f32.partialorder %v1685, 0.5
      %vm1910 = vcmp.lt.f32.partialorder %v1686, 0.5
      %vm1911 = vcmp.lt.f32.partialorder %v1687, 0.5
      %vm1912 = vcmp.lt.f32.partialorder %v1688, 0.5
      %vm1913 = vcmp.lt.f32.partialorder %v1689, 0.5
      %vm1914 = vcmp.lt.f32.partialorder %v1690, 0.5
      %vm1915 = vcmp.lt.f32.partialorder %v1691, 0.5
      %vm1916 = vcmp.lt.f32.partialorder %v1692, 0.5
      %vm1917 = vcmp.lt.f32.partialorder %v1693, 0.5
      %vm1918 = vcmp.lt.f32.partialorder %v1694, 0.5
      %vm1919 = vcmp.lt.f32.partialorder %v1695, 0.5
      %vm1920 = vcmp.lt.f32.partialorder %v1696, 0.5
      %vm1921 = vcmp.lt.f32.partialorder %v1697, 0.5
      %vm1922 = vcmp.lt.f32.partialorder %v1698, 0.5
      %vm1923 = vcmp.lt.f32.partialorder %v1699, 0.5
      %vm1924 = vcmp.lt.f32.partialorder %v1700, 0.5
      %vm1925 = vcmp.lt.f32.partialorder %v1701, 0.5
      %vm1926 = vcmp.lt.f32.partialorder %v1702, 0.5
      %vm1927 = vcmp.lt.f32.partialorder %v1703, 0.5
      %vm1928 = vcmp.lt.f32.partialorder %v1704, 0.5
      %vm1929 = vcmp.lt.f32.partialorder %v1705, 0.5
      %vm1930 = vcmp.lt.f32.partialorder %v1706, 0.5
      %vm1931 = vcmp.lt.f32.partialorder %v1707, 0.5
      %vm1932 = vcmp.lt.f32.partialorder %v1708, 0.5
      %vm1933 = vcmp.lt.f32.partialorder %v1709, 0.5
      %vm1934 = vcmp.lt.f32.partialorder %v1710, 0.5
      %vm1935 = vcmp.lt.f32.partialorder %v1711, 0.5
      %vm1936 = vcmp.lt.f32.partialorder %v1712, 0.5
      %vm1937 = vcmp.lt.f32.partialorder %v1713, 0.5
      %vm1938 = vcmp.lt.f32.partialorder %v1714, 0.5
      %vm1939 = vcmp.lt.f32.partialorder %v1715, 0.5
      %vm1940 = vcmp.lt.f32.partialorder %v1716, 0.5
      %vm1941 = vcmp.lt.f32.partialorder %v1717, 0.5
      %vm1942 = vcmp.lt.f32.partialorder %v1718, 0.5
      %vm1943 = vcmp.lt.f32.partialorder %v1719, 0.5
      %vm1944 = vcmp.lt.f32.partialorder %v1720, 0.5
      %vm1945 = vcmp.lt.f32.partialorder %v1721, 0.5
      %vm1946 = vcmp.lt.f32.partialorder %v1722, 0.5
      %vm1947 = vcmp.lt.f32.partialorder %v1723, 0.5
      %vm1948 = vcmp.lt.f32.partialorder %v1724, 0.5
      %vm1949 = vcmp.lt.f32.partialorder %v1725, 0.5
      %vm1950 = vcmp.lt.f32.partialorder %v1726, 0.5
      %vm1951 = vcmp.lt.f32.partialorder %v1727, 0.5
      %vm1952 = vcmp.lt.f32.partialorder %v1728, 0.5
      %vm1953 = vcmp.lt.f32.partialorder %v1729, 0.5
      %vm1954 = vcmp.lt.f32.partialorder %v1730, 0.5
      %vm1955 = vcmp.lt.f32.partialorder %v1731, 0.5
      %vm1956 = vcmp.lt.f32.partialorder %v1732, 0.5
      %vm1957 = vcmp.lt.f32.partialorder %v1733, 0.5
      %vm1958 = vcmp.lt.f32.partialorder %v1734, 0.5
      %vm1959 = vcmp.lt.f32.partialorder %v1735, 0.5
      %vm1960 = vcmp.lt.f32.partialorder %v1736, 0.5
      %vm1961 = vcmp.lt.f32.partialorder %v1737, 0.5
      %vm1962 = vcmp.lt.f32.partialorder %v1738, 0.5
      %vm1963 = vcmp.lt.f32.partialorder %v1739, 0.5
      %vm1964 = vcmp.lt.f32.partialorder %v1740, 0.5
      %vm1965 = vcmp.lt.f32.partialorder %v1741, 0.5
      %vm1966 = vcmp.lt.f32.partialorder %v1742, 0.5
      %vm1967 = vcmp.lt.f32.partialorder %v1743, 0.5
      %vm1968 = vcmp.lt.f32.partialorder %v1744, 0.5
      %vm1969 = vcmp.lt.f32.partialorder %v1745, 0.5
      %vm1970 = vcmp.lt.f32.partialorder %v1746, 0.5
      %vm1971 = vcmp.lt.f32.partialorder %v1747, 0.5
      %vm1972 = vcmp.lt.f32.partialorder %v1748, 0.5
      %vm1973 = vcmp.lt.f32.partialorder %v1749, 0.5
      %vm1974 = vcmp.lt.f32.partialorder %v1750, 0.5
      %vm1975 = vcmp.lt.f32.partialorder %v1751, 0.5
      %vm1976 = vcmp.lt.f32.partialorder %v1752, 0.5
      %vm1977 = vcmp.lt.f32.partialorder %v1753, 0.5
      %vm1978 = vcmp.lt.f32.partialorder %v1754, 0.5
      %vm1979 = vcmp.lt.f32.partialorder %v1755, 0.5
      %vm1980 = vcmp.lt.f32.partialorder %v1756, 0.5
      %vm1981 = vcmp.lt.f32.partialorder %v1757, 0.5
      %vm1982 = vcmp.lt.f32.partialorder %v1758, 0.5
      %vm1983 = vcmp.lt.f32.partialorder %v1759, 0.5
      %vm1984 = vcmp.lt.f32.partialorder %v1760, 0.5
      %vm1985 = vcmp.lt.f32.partialorder %v1761, 0.5
      %vm1986 = vcmp.lt.f32.partialorder %v1762, 0.5
      %vm1987 = vcmp.lt.f32.partialorder %v1763, 0.5
      %vm1988 = vcmp.lt.f32.partialorder %v1764, 0.5
      %vm1989 = vcmp.lt.f32.partialorder %v1765, 0.5
      %vm1990 = vcmp.lt.f32.partialorder %v1766, 0.5
      %vm1991 = vcmp.lt.f32.partialorder %v1767, 0.5
      %vm1992 = vcmp.lt.f32.partialorder %v1768, 0.5
      %vm1993 = vcmp.lt.f32.partialorder %v1769, 0.5
      %vm1994 = vcmp.lt.f32.partialorder %v1770, 0.5
      %vm1995 = vcmp.lt.f32.partialorder %v1771, 0.5
      %vm1996 = vcmp.lt.f32.partialorder %v1772, 0.5
      %vm1997 = vcmp.lt.f32.partialorder %v1773, 0.5
      %vm1998 = vcmp.lt.f32.partialorder %v1774, 0.5
      %vm1999 = vcmp.lt.f32.partialorder %v1775, 0.5
      %vm2000 = vcmp.lt.f32.partialorder %v1776, 0.5
      %vm2001 = vcmp.lt.f32.partialorder %v1777, 0.5
      %vm2002 = vcmp.lt.f32.partialorder %v1778, 0.5
      %vm2003 = vcmp.lt.f32.partialorder %v1779, 0.5
      %vm2004 = vcmp.lt.f32.partialorder %v1780, 0.5
      %vm2005 = vcmp.lt.f32.partialorder %v1781, 0.5
      %vm2006 = vcmp.lt.f32.partialorder %v1782, 0.5
      %vm2007 = vcmp.lt.f32.partialorder %v1783, 0.5
      %vm2008 = vcmp.lt.f32.partialorder %v1784, 0.5
      %vm2009 = vcmp.lt.f32.partialorder %v1785, 0.5
      %vm2010 = vcmp.lt.f32.partialorder %v1786, 0.5
      %vm2011 = vcmp.lt.f32.partialorder %v1787, 0.5
      %vm2012 = vcmp.lt.f32.partialorder %v1788, 0.5
      %vm2013 = vcmp.lt.f32.partialorder %v1789, 0.5
      %vm2014 = vcmp.lt.f32.partialorder %v1790, 0.5
      %vm2015 = vcmp.lt.f32.partialorder %v1791, 0.5
      %vm2016 = vcmp.lt.f32.partialorder %v1792, 0.5
      %vm2017 = vcmp.lt.f32.partialorder %v1793, 0.5
      %vm2018 = vcmp.lt.f32.partialorder %v1794, 0.5
      %vm2019 = vcmp.lt.f32.partialorder %v1795, 0.5
      %vm2020 = vcmp.lt.f32.partialorder %v1796, 0.5
      %vm2021 = vcmp.lt.f32.partialorder %v1797, 0.5
      %vm2022 = vcmp.lt.f32.partialorder %v1798, 0.5
      %vm2023 = vcmp.lt.f32.partialorder %v1799, 0.5
      %vm2024 = vcmp.lt.f32.partialorder %v1800, 0.5
      %vm2025 = vcmp.lt.f32.partialorder %v1801, 0.5
      %vm2026 = vcmp.lt.f32.partialorder %v1802, 0.5
      %vm2027 = vcmp.lt.f32.partialorder %v1803, 0.5
      %vm2028 = vcmp.lt.f32.partialorder %v1804, 0.5
      %vm2029 = vcmp.lt.f32.partialorder %v1805, 0.5
      %vm2030 = vcmp.lt.f32.partialorder %v1806, 0.5
      %vm2031 = vcmp.lt.f32.partialorder %v1807, 0.5
      %vm2032 = vcmp.lt.f32.partialorder %v1808, 0.5
      %vm2033 = vcmp.lt.f32.partialorder %v1809, 0.5
      %vm2034 = vcmp.lt.f32.partialorder %v1810, 0.5
      %vm2035 = vcmp.lt.f32.partialorder %v1811, 0.5
      %vm2036 = vcmp.lt.f32.partialorder %v1812, 0.5
      %vm2037 = vcmp.lt.f32.partialorder %v1813, 0.5
      %vm2038 = vcmp.lt.f32.partialorder %v1814, 0.5
      %vm2039 = vcmp.lt.f32.partialorder %v1815, 0.5
      %vm2040 = vcmp.lt.f32.partialorder %v1816, 0.5
      %vm2041 = vcmp.lt.f32.partialorder %v1817, 0.5
      %vm2042 = vcmp.lt.f32.partialorder %v1818, 0.5
      %vm2043 = vcmp.lt.f32.partialorder %v1819, 0.5
      %vm2044 = vcmp.lt.f32.partialorder %v1820, 0.5
      %vm2045 = vcmp.lt.f32.partialorder %v1821, 0.5
      %vm2046 = vcmp.lt.f32.partialorder %v1822, 0.5
      %vm2047 = vcmp.lt.f32.partialorder %v1823, 0.5
      %vm2048 = vcmp.lt.f32.partialorder %v1824, 0.5
      %vm2049 = vcmp.lt.f32.partialorder %v1825, 0.5
      %vm2050 = vcmp.lt.f32.partialorder %v1826, 0.5
      %vm2051 = vcmp.lt.f32.partialorder %v1827, 0.5
      %vm2052 = vcmp.lt.f32.partialorder %v1828, 0.5
      %vm2053 = vcmp.lt.f32.partialorder %v1829, 0.5
      %vm2054 = vcmp.lt.f32.partialorder %v1830, 0.5
      %vm2055 = vcmp.lt.f32.partialorder %v1831, 0.5
      %vm2056 = vcmp.lt.f32.partialorder %v1832, 0.5
      %vm2057 = vcmp.lt.f32.partialorder %v1833, 0.5
      %vm2058 = vcmp.lt.f32.partialorder %v1834, 0.5
      %vm2059 = vcmp.lt.f32.partialorder %v1835, 0.5
      %vm2060 = vcmp.lt.f32.partialorder %v1836, 0.5
      %vm2061 = vcmp.lt.f32.partialorder %v1837, 0.5
      %vm2062 = vcmp.lt.f32.partialorder %v1838, 0.5
      %vm2063 = vcmp.lt.f32.partialorder %v1839, 0.5
      %vm2064 = vcmp.lt.f32.partialorder %v1840, 0.5
      %vm2065 = vcmp.lt.f32.partialorder %v1841, 0.5
      %vm2066 = vcmp.lt.f32.partialorder %v1842, 0.5
      %v2067 = vsel %vm1843, 1, 0
      %v2068 = vsel %vm1844, 1, 0
      %v2069 = vsel %vm1845, 1, 0
      %v2070 = vsel %vm1846, 1, 0
      %v2071 = vsel %vm1847, 1, 0
      %v2072 = vsel %vm1848, 1, 0
      %v2073 = vsel %vm1849, 1, 0
      %v2074 = vsel %vm1850, 1, 0
      %v2075 = vsel %vm1851, 1, 0
      %v2076 = vsel %vm1852, 1, 0
      %v2077 = vsel %vm1853, 1, 0
      %v2078 = vsel %vm1854, 1, 0
      %v2079 = vsel %vm1855, 1, 0
      %v2080 = vsel %vm1856, 1, 0
      %v2081 = vsel %vm1857, 1, 0
      %v2082 = vsel %vm1858, 1, 0
      %v2083 = vsel %vm1859, 1, 0
      %v2084 = vsel %vm1860, 1, 0
      %v2085 = vsel %vm1861, 1, 0
      %v2086 = vsel %vm1862, 1, 0
      %v2087 = vsel %vm1863, 1, 0
      %v2088 = vsel %vm1864, 1, 0
      %v2089 = vsel %vm1865, 1, 0
      %v2090 = vsel %vm1866, 1, 0
      %v2091 = vsel %vm1867, 1, 0
      %v2092 = vsel %vm1868, 1, 0
      %v2093 = vsel %vm1869, 1, 0
      %v2094 = vsel %vm1870, 1, 0
      %v2095 = vsel %vm1871, 1, 0
      %v2096 = vsel %vm1872, 1, 0
      %v2097 = vsel %vm1873, 1, 0
      %v2098 = vsel %vm1874, 1, 0
      %v2099 = vsel %vm1875, 1, 0
      %v2100 = vsel %vm1876, 1, 0
      %v2101 = vsel %vm1877, 1, 0
      %v2102 = vsel %vm1878, 1, 0
      %v2103 = vsel %vm1879, 1, 0
      %v2104 = vsel %vm1880, 1, 0
      %v2105 = vsel %vm1881, 1, 0
      %v2106 = vsel %vm1882, 1, 0
      %v2107 = vsel %vm1883, 1, 0
      %v2108 = vsel %vm1884, 1, 0
      %v2109 = vsel %vm1885, 1, 0
      %v2110 = vsel %vm1886, 1, 0
      %v2111 = vsel %vm1887, 1, 0
      %v2112 = vsel %vm1888, 1, 0
      %v2113 = vsel %vm1889, 1, 0
      %v2114 = vsel %vm1890, 1, 0
      %v2115 = vsel %vm1891, 1, 0
      %v2116 = vsel %vm1892, 1, 0
      %v2117 = vsel %vm1893, 1, 0
      %v2118 = vsel %vm1894, 1, 0
      %v2119 = vsel %vm1895, 1, 0
      %v2120 = vsel %vm1896, 1, 0
      %v2121 = vsel %vm1897, 1, 0
      %v2122 = vsel %vm1898, 1, 0
      %v2123 = vsel %vm1899, 1, 0
      %v2124 = vsel %vm1900, 1, 0
      %v2125 = vsel %vm1901, 1, 0
      %v2126 = vsel %vm1902, 1, 0
      %v2127 = vsel %vm1903, 1, 0
      %v2128 = vsel %vm1904, 1, 0
      %v2129 = vsel %vm1905, 1, 0
      %v2130 = vsel %vm1906, 1, 0
      %v2131 = vsel %vm1907, 1, 0
      %v2132 = vsel %vm1908, 1, 0
      %v2133 = vsel %vm1909, 1, 0
      %v2134 = vsel %vm1910, 1, 0
      %v2135 = vsel %vm1911, 1, 0
      %v2136 = vsel %vm1912, 1, 0
      %v2137 = vsel %vm1913, 1, 0
      %v2138 = vsel %vm1914, 1, 0
      %v2139 = vsel %vm1915, 1, 0
      %v2140 = vsel %vm1916, 1, 0
      %v2141 = vsel %vm1917, 1, 0
      %v2142 = vsel %vm1918, 1, 0
      %v2143 = vsel %vm1919, 1, 0
      %v2144 = vsel %vm1920, 1, 0
      %v2145 = vsel %vm1921, 1, 0
      %v2146 = vsel %vm1922, 1, 0
      %v2147 = vsel %vm1923, 1, 0
      %v2148 = vsel %vm1924, 1, 0
      %v2149 = vsel %vm1925, 1, 0
      %v2150 = vsel %vm1926, 1, 0
      %v2151 = vsel %vm1927, 1, 0
      %v2152 = vsel %vm1928, 1, 0
      %v2153 = vsel %vm1929, 1, 0
      %v2154 = vsel %vm1930, 1, 0
      %v2155 = vsel %vm1931, 1, 0
      %v2156 = vsel %vm1932, 1, 0
      %v2157 = vsel %vm1933, 1, 0
      %v2158 = vsel %vm1934, 1, 0
      %v2159 = vsel %vm1935, 1, 0
      %v2160 = vsel %vm1936, 1, 0
      %v2161 = vsel %vm1937, 1, 0
      %v2162 = vsel %vm1938, 1, 0
      %v2163 = vsel %vm1939, 1, 0
      %v2164 = vsel %vm1940, 1, 0
      %v2165 = vsel %vm1941, 1, 0
      %v2166 = vsel %vm1942, 1, 0
      %v2167 = vsel %vm1943, 1, 0
      %v2168 = vsel %vm1944, 1, 0
      %v2169 = vsel %vm1945, 1, 0
      %v2170 = vsel %vm1946, 1, 0
      %v2171 = vsel %vm1947, 1, 0
      %v2172 = vsel %vm1948, 1, 0
      %v2173 = vsel %vm1949, 1, 0
      %v2174 = vsel %vm1950, 1, 0
      %v2175 = vsel %vm1951, 1, 0
      %v2176 = vsel %vm1952, 1, 0
      %v2177 = vsel %vm1953, 1, 0
      %v2178 = vsel %vm1954, 1, 0
      %v2179 = vsel %vm1955, 1, 0
      %v2180 = vsel %vm1956, 1, 0
      %v2181 = vsel %vm1957, 1, 0
      %v2182 = vsel %vm1958, 1, 0
      %v2183 = vsel %vm1959, 1, 0
      %v2184 = vsel %vm1960, 1, 0
      %v2185 = vsel %vm1961, 1, 0
      %v2186 = vsel %vm1962, 1, 0
      %v2187 = vsel %vm1963, 1, 0
      %v2188 = vsel %vm1964, 1, 0
      %v2189 = vsel %vm1965, 1, 0
      %v2190 = vsel %vm1966, 1, 0
      %v2191 = vsel %vm1967, 1, 0
      %v2192 = vsel %vm1968, 1, 0
      %v2193 = vsel %vm1969, 1, 0
      %v2194 = vsel %vm1970, 1, 0
      %v2195 = vsel %vm1971, 1, 0
      %v2196 = vsel %vm1972, 1, 0
      %v2197 = vsel %vm1973, 1, 0
      %v2198 = vsel %vm1974, 1, 0
      %v2199 = vsel %vm1975, 1, 0
      %v2200 = vsel %vm1976, 1, 0
      %v2201 = vsel %vm1977, 1, 0
      %v2202 = vsel %vm1978, 1, 0
      %v2203 = vsel %vm1979, 1, 0
      %v2204 = vsel %vm1980, 1, 0
      %v2205 = vsel %vm1981, 1, 0
      %v2206 = vsel %vm1982, 1, 0
      %v2207 = vsel %vm1983, 1, 0
      %v2208 = vsel %vm1984, 1, 0
      %v2209 = vsel %vm1985, 1, 0
      %v2210 = vsel %vm1986, 1, 0
      %v2211 = vsel %vm1987, 1, 0
      %v2212 = vsel %vm1988, 1, 0
      %v2213 = vsel %vm1989, 1, 0
      %v2214 = vsel %vm1990, 1, 0
      %v2215 = vsel %vm1991, 1, 0
      %v2216 = vsel %vm1992, 1, 0
      %v2217 = vsel %vm1993, 1, 0
      %v2218 = vsel %vm1994, 1, 0
      %v2219 = vsel %vm1995, 1, 0
      %v2220 = vsel %vm1996, 1, 0
      %v2221 = vsel %vm1997, 1, 0
      %v2222 = vsel %vm1998, 1, 0
      %v2223 = vsel %vm1999, 1, 0
      %v2224 = vsel %vm2000, 1, 0
      %v2225 = vsel %vm2001, 1, 0
      %v2226 = vsel %vm2002, 1, 0
      %v2227 = vsel %vm2003, 1, 0
      %v2228 = vsel %vm2004, 1, 0
      %v2229 = vsel %vm2005, 1, 0
      %v2230 = vsel %vm2006, 1, 0
      %v2231 = vsel %vm2007, 1, 0
      %v2232 = vsel %vm2008, 1, 0
      %v2233 = vsel %vm2009, 1, 0
      %v2234 = vsel %vm2010, 1, 0
      %v2235 = vsel %vm2011, 1, 0
      %v2236 = vsel %vm2012, 1, 0
      %v2237 = vsel %vm2013, 1, 0
      %v2238 = vsel %vm2014, 1, 0
      %v2239 = vsel %vm2015, 1, 0
      %v2240 = vsel %vm2016, 1, 0
      %v2241 = vsel %vm2017, 1, 0
      %v2242 = vsel %vm2018, 1, 0
      %v2243 = vsel %vm2019, 1, 0
      %v2244 = vsel %vm2020, 1, 0
      %v2245 = vsel %vm2021, 1, 0
      %v2246 = vsel %vm2022, 1, 0
      %v2247 = vsel %vm2023, 1, 0
      %v2248 = vsel %vm2024, 1, 0
      %v2249 = vsel %vm2025, 1, 0
      %v2250 = vsel %vm2026, 1, 0
      %v2251 = vsel %vm2027, 1, 0
      %v2252 = vsel %vm2028, 1, 0
      %v2253 = vsel %vm2029, 1, 0
      %v2254 = vsel %vm2030, 1, 0
      %v2255 = vsel %vm2031, 1, 0
      %v2256 = vsel %vm2032, 1, 0
      %v2257 = vsel %vm2033, 1, 0
      %v2258 = vsel %vm2034, 1, 0
      %v2259 = vsel %vm2035, 1, 0
      %v2260 = vsel %vm2036, 1, 0
      %v2261 = vsel %vm2037, 1, 0
      %v2262 = vsel %vm2038, 1, 0
      %v2263 = vsel %vm2039, 1, 0
      %v2264 = vsel %vm2040, 1, 0
      %v2265 = vsel %vm2041, 1, 0
      %v2266 = vsel %vm2042, 1, 0
      %v2267 = vsel %vm2043, 1, 0
      %v2268 = vsel %vm2044, 1, 0
      %v2269 = vsel %vm2045, 1, 0
      %v2270 = vsel %vm2046, 1, 0
      %v2271 = vsel %vm2047, 1, 0
      %v2272 = vsel %vm2048, 1, 0
      %v2273 = vsel %vm2049, 1, 0
      %v2274 = vsel %vm2050, 1, 0
      %v2275 = vsel %vm2051, 1, 0
      %v2276 = vsel %vm2052, 1, 0
      %v2277 = vsel %vm2053, 1, 0
      %v2278 = vsel %vm2054, 1, 0
      %v2279 = vsel %vm2055, 1, 0
      %v2280 = vsel %vm2056, 1, 0
      %v2281 = vsel %vm2057, 1, 0
      %v2282 = vsel %vm2058, 1, 0
      %v2283 = vsel %vm2059, 1, 0
      %v2284 = vsel %vm2060, 1, 0
      %v2285 = vsel %vm2061, 1, 0
      %v2286 = vsel %vm2062, 1, 0
      %v2287 = vsel %vm2063, 1, 0
      %v2288 = vsel %vm2064, 1, 0
      %v2289 = vsel %vm2065, 1, 0
      %v2290 = vsel %vm2066, 1, 0
      %v2291 = vcvt.s32.f32 %v2067
      %v2292 = vcvt.s32.f32 %v2068
      %v2293 = vcvt.s32.f32 %v2069
      %v2294 = vcvt.s32.f32 %v2070
      %v2295 = vcvt.s32.f32 %v2071
      %v2296 = vcvt.s32.f32 %v2072
      %v2297 = vcvt.s32.f32 %v2073
      %v2298 = vcvt.s32.f32 %v2074
      %v2299 = vcvt.s32.f32 %v2075
      %v2300 = vcvt.s32.f32 %v2076
      %v2301 = vcvt.s32.f32 %v2077
      %v2302 = vcvt.s32.f32 %v2078
      %v2303 = vcvt.s32.f32 %v2079
      %v2304 = vcvt.s32.f32 %v2080
      %v2305 = vcvt.s32.f32 %v2081
      %v2306 = vcvt.s32.f32 %v2082
      %v2307 = vcvt.s32.f32 %v2083
      %v2308 = vcvt.s32.f32 %v2084
      %v2309 = vcvt.s32.f32 %v2085
      %v2310 = vcvt.s32.f32 %v2086
      %v2311 = vcvt.s32.f32 %v2087
      %v2312 = vcvt.s32.f32 %v2088
      %v2313 = vcvt.s32.f32 %v2089
      %v2314 = vcvt.s32.f32 %v2090
      %v2315 = vcvt.s32.f32 %v2091
      %v2316 = vcvt.s32.f32 %v2092
      %v2317 = vcvt.s32.f32 %v2093
      %v2318 = vcvt.s32.f32 %v2094
      %v2319 = vcvt.s32.f32 %v2095
      %v2320 = vcvt.s32.f32 %v2096
      %v2321 = vcvt.s32.f32 %v2097
      %v2322 = vcvt.s32.f32 %v2098
      %v2323 = vcvt.s32.f32 %v2099
      %v2324 = vcvt.s32.f32 %v2100
      %v2325 = vcvt.s32.f32 %v2101
      %v2326 = vcvt.s32.f32 %v2102
      %v2327 = vcvt.s32.f32 %v2103
      %v2328 = vcvt.s32.f32 %v2104
      %v2329 = vcvt.s32.f32 %v2105
      %v2330 = vcvt.s32.f32 %v2106
      %v2331 = vcvt.s32.f32 %v2107
      %v2332 = vcvt.s32.f32 %v2108
      %v2333 = vcvt.s32.f32 %v2109
      %v2334 = vcvt.s32.f32 %v2110
      %v2335 = vcvt.s32.f32 %v2111
      %v2336 = vcvt.s32.f32 %v2112
      %v2337 = vcvt.s32.f32 %v2113
      %v2338 = vcvt.s32.f32 %v2114
      %v2339 = vcvt.s32.f32 %v2115
      %v2340 = vcvt.s32.f32 %v2116
      %v2341 = vcvt.s32.f32 %v2117
      %v2342 = vcvt.s32.f32 %v2118
      %v2343 = vcvt.s32.f32 %v2119
      %v2344 = vcvt.s32.f32 %v2120
      %v2345 = vcvt.s32.f32 %v2121
      %v2346 = vcvt.s32.f32 %v2122
      %v2347 = vcvt.s32.f32 %v2123
      %v2348 = vcvt.s32.f32 %v2124
      %v2349 = vcvt.s32.f32 %v2125
      %v2350 = vcvt.s32.f32 %v2126
      %v2351 = vcvt.s32.f32 %v2127
      %v2352 = vcvt.s32.f32 %v2128
      %v2353 = vcvt.s32.f32 %v2129
      %v2354 = vcvt.s32.f32 %v2130
      %v2355 = vcvt.s32.f32 %v2131
      %v2356 = vcvt.s32.f32 %v2132
      %v2357 = vcvt.s32.f32 %v2133
      %v2358 = vcvt.s32.f32 %v2134
      %v2359 = vcvt.s32.f32 %v2135
      %v2360 = vcvt.s32.f32 %v2136
      %v2361 = vcvt.s32.f32 %v2137
      %v2362 = vcvt.s32.f32 %v2138
      %v2363 = vcvt.s32.f32 %v2139
      %v2364 = vcvt.s32.f32 %v2140
      %v2365 = vcvt.s32.f32 %v2141
      %v2366 = vcvt.s32.f32 %v2142
      %v2367 = vcvt.s32.f32 %v2143
      %v2368 = vcvt.s32.f32 %v2144
      %v2369 = vcvt.s32.f32 %v2145
      %v2370 = vcvt.s32.f32 %v2146
      %v2371 = vcvt.s32.f32 %v2147
      %v2372 = vcvt.s32.f32 %v2148
      %v2373 = vcvt.s32.f32 %v2149
      %v2374 = vcvt.s32.f32 %v2150
      %v2375 = vcvt.s32.f32 %v2151
      %v2376 = vcvt.s32.f32 %v2152
      %v2377 = vcvt.s32.f32 %v2153
      %v2378 = vcvt.s32.f32 %v2154
      %v2379 = vcvt.s32.f32 %v2155
      %v2380 = vcvt.s32.f32 %v2156
      %v2381 = vcvt.s32.f32 %v2157
      %v2382 = vcvt.s32.f32 %v2158
      %v2383 = vcvt.s32.f32 %v2159
      %v2384 = vcvt.s32.f32 %v2160
      %v2385 = vcvt.s32.f32 %v2161
      %v2386 = vcvt.s32.f32 %v2162
      %v2387 = vcvt.s32.f32 %v2163
      %v2388 = vcvt.s32.f32 %v2164
      %v2389 = vcvt.s32.f32 %v2165
      %v2390 = vcvt.s32.f32 %v2166
      %v2391 = vcvt.s32.f32 %v2167
      %v2392 = vcvt.s32.f32 %v2168
      %v2393 = vcvt.s32.f32 %v2169
      %v2394 = vcvt.s32.f32 %v2170
      %v2395 = vcvt.s32.f32 %v2171
      %v2396 = vcvt.s32.f32 %v2172
      %v2397 = vcvt.s32.f32 %v2173
      %v2398 = vcvt.s32.f32 %v2174
      %v2399 = vcvt.s32.f32 %v2175
      %v2400 = vcvt.s32.f32 %v2176
      %v2401 = vcvt.s32.f32 %v2177
      %v2402 = vcvt.s32.f32 %v2178
      %v2403 = vcvt.s32.f32 %v2179
      %v2404 = vcvt.s32.f32 %v2180
      %v2405 = vcvt.s32.f32 %v2181
      %v2406 = vcvt.s32.f32 %v2182
      %v2407 = vcvt.s32.f32 %v2183
      %v2408 = vcvt.s32.f32 %v2184
      %v2409 = vcvt.s32.f32 %v2185
      %v2410 = vcvt.s32.f32 %v2186
      %v2411 = vcvt.s32.f32 %v2187
      %v2412 = vcvt.s32.f32 %v2188
      %v2413 = vcvt.s32.f32 %v2189
      %v2414 = vcvt.s32.f32 %v2190
      %v2415 = vcvt.s32.f32 %v2191
      %v2416 = vcvt.s32.f32 %v2192
      %v2417 = vcvt.s32.f32 %v2193
      %v2418 = vcvt.s32.f32 %v2194
      %v2419 = vcvt.s32.f32 %v2195
      %v2420 = vcvt.s32.f32 %v2196
      %v2421 = vcvt.s32.f32 %v2197
      %v2422 = vcvt.s32.f32 %v2198
      %v2423 = vcvt.s32.f32 %v2199
      %v2424 = vcvt.s32.f32 %v2200
      %v2425 = vcvt.s32.f32 %v2201
      %v2426 = vcvt.s32.f32 %v2202
      %v2427 = vcvt.s32.f32 %v2203
      %v2428 = vcvt.s32.f32 %v2204
      %v2429 = vcvt.s32.f32 %v2205
      %v2430 = vcvt.s32.f32 %v2206
      %v2431 = vcvt.s32.f32 %v2207
      %v2432 = vcvt.s32.f32 %v2208
      %v2433 = vcvt.s32.f32 %v2209
      %v2434 = vcvt.s32.f32 %v2210
      %v2435 = vcvt.s32.f32 %v2211
      %v2436 = vcvt.s32.f32 %v2212
      %v2437 = vcvt.s32.f32 %v2213
      %v2438 = vcvt.s32.f32 %v2214
      %v2439 = vcvt.s32.f32 %v2215
      %v2440 = vcvt.s32.f32 %v2216
      %v2441 = vcvt.s32.f32 %v2217
      %v2442 = vcvt.s32.f32 %v2218
      %v2443 = vcvt.s32.f32 %v2219
      %v2444 = vcvt.s32.f32 %v2220
      %v2445 = vcvt.s32.f32 %v2221
      %v2446 = vcvt.s32.f32 %v2222
      %v2447 = vcvt.s32.f32 %v2223
      %v2448 = vcvt.s32.f32 %v2224
      %v2449 = vcvt.s32.f32 %v2225
      %v2450 = vcvt.s32.f32 %v2226
      %v2451 = vcvt.s32.f32 %v2227
      %v2452 = vcvt.s32.f32 %v2228
      %v2453 = vcvt.s32.f32 %v2229
      %v2454 = vcvt.s32.f32 %v2230
      %v2455 = vcvt.s32.f32 %v2231
      %v2456 = vcvt.s32.f32 %v2232
      %v2457 = vcvt.s32.f32 %v2233
      %v2458 = vcvt.s32.f32 %v2234
      %v2459 = vcvt.s32.f32 %v2235
      %v2460 = vcvt.s32.f32 %v2236
      %v2461 = vcvt.s32.f32 %v2237
      %v2462 = vcvt.s32.f32 %v2238
      %v2463 = vcvt.s32.f32 %v2239
      %v2464 = vcvt.s32.f32 %v2240
      %v2465 = vcvt.s32.f32 %v2241
      %v2466 = vcvt.s32.f32 %v2242
      %v2467 = vcvt.s32.f32 %v2243
      %v2468 = vcvt.s32.f32 %v2244
      %v2469 = vcvt.s32.f32 %v2245
      %v2470 = vcvt.s32.f32 %v2246
      %v2471 = vcvt.s32.f32 %v2247
      %v2472 = vcvt.s32.f32 %v2248
      %v2473 = vcvt.s32.f32 %v2249
      %v2474 = vcvt.s32.f32 %v2250
      %v2475 = vcvt.s32.f32 %v2251
      %v2476 = vcvt.s32.f32 %v2252
      %v2477 = vcvt.s32.f32 %v2253
      %v2478 = vcvt.s32.f32 %v2254
      %v2479 = vcvt.s32.f32 %v2255
      %v2480 = vcvt.s32.f32 %v2256
      %v2481 = vcvt.s32.f32 %v2257
      %v2482 = vcvt.s32.f32 %v2258
      %v2483 = vcvt.s32.f32 %v2259
      %v2484 = vcvt.s32.f32 %v2260
      %v2485 = vcvt.s32.f32 %v2261
      %v2486 = vcvt.s32.f32 %v2262
      %v2487 = vcvt.s32.f32 %v2263
      %v2488 = vcvt.s32.f32 %v2264
      %v2489 = vcvt.s32.f32 %v2265
      %v2490 = vcvt.s32.f32 %v2266
      %v2491 = vcvt.s32.f32 %v2267
      %v2492 = vcvt.s32.f32 %v2268
      %v2493 = vcvt.s32.f32 %v2269
      %v2494 = vcvt.s32.f32 %v2270
      %v2495 = vcvt.s32.f32 %v2271
      %v2496 = vcvt.s32.f32 %v2272
      %v2497 = vcvt.s32.f32 %v2273
      %v2498 = vcvt.s32.f32 %v2274
      %v2499 = vcvt.s32.f32 %v2275
      %v2500 = vcvt.s32.f32 %v2276
      %v2501 = vcvt.s32.f32 %v2277
      %v2502 = vcvt.s32.f32 %v2278
      %v2503 = vcvt.s32.f32 %v2279
      %v2504 = vcvt.s32.f32 %v2280
      %v2505 = vcvt.s32.f32 %v2281
      %v2506 = vcvt.s32.f32 %v2282
      %v2507 = vcvt.s32.f32 %v2283
      %v2508 = vcvt.s32.f32 %v2284
      %v2509 = vcvt.s32.f32 %v2285
      %v2510 = vcvt.s32.f32 %v2286
      %v2511 = vcvt.s32.f32 %v2287
      %v2512 = vcvt.s32.f32 %v2288
      %v2513 = vcvt.s32.f32 %v2289
      %v2514 = vcvt.s32.f32 %v2290
      %v2515 = vpack.c.bf16 %v2298, %v2291
      %v2516 = vpack.c.bf16 %v2299, %v2292
      %v2517 = vpack.c.bf16 %v2300, %v2293
      %v2518 = vpack.c.bf16 %v2301, %v2294
      %v2519 = vpack.c.bf16 %v2302, %v2295
      %v2520 = vpack.c.bf16 %v2303, %v2296
      %v2521 = vpack.c.bf16 %v2304, %v2297
      %v2522 = vpack.c.bf16 %v2312, %v2305
      %v2523 = vpack.c.bf16 %v2313, %v2306
      %v2524 = vpack.c.bf16 %v2314, %v2307
      %v2525 = vpack.c.bf16 %v2315, %v2308
      %v2526 = vpack.c.bf16 %v2316, %v2309
      %v2527 = vpack.c.bf16 %v2317, %v2310
      %v2528 = vpack.c.bf16 %v2318, %v2311
      %v2529 = vpack.c.bf16 %v2326, %v2319
      %v2530 = vpack.c.bf16 %v2327, %v2320
      %v2531 = vpack.c.bf16 %v2328, %v2321
      %v2532 = vpack.c.bf16 %v2329, %v2322
      %v2533 = vpack.c.bf16 %v2330, %v2323
      %v2534 = vpack.c.bf16 %v2331, %v2324
      %v2535 = vpack.c.bf16 %v2332, %v2325
      %v2536 = vpack.c.bf16 %v2340, %v2333
      %v2537 = vpack.c.bf16 %v2341, %v2334
      %v2538 = vpack.c.bf16 %v2342, %v2335
      %v2539 = vpack.c.bf16 %v2343, %v2336
      %v2540 = vpack.c.bf16 %v2344, %v2337
      %v2541 = vpack.c.bf16 %v2345, %v2338
      %v2542 = vpack.c.bf16 %v2346, %v2339
      %v2543 = vpack.c.bf16 %v2354, %v2347
      %v2544 = vpack.c.bf16 %v2355, %v2348
      %v2545 = vpack.c.bf16 %v2356, %v2349
      %v2546 = vpack.c.bf16 %v2357, %v2350
      %v2547 = vpack.c.bf16 %v2358, %v2351
      %v2548 = vpack.c.bf16 %v2359, %v2352
      %v2549 = vpack.c.bf16 %v2360, %v2353
      %v2550 = vpack.c.bf16 %v2368, %v2361
      %v2551 = vpack.c.bf16 %v2369, %v2362
      %v2552 = vpack.c.bf16 %v2370, %v2363
      %v2553 = vpack.c.bf16 %v2371, %v2364
      %v2554 = vpack.c.bf16 %v2372, %v2365
      %v2555 = vpack.c.bf16 %v2373, %v2366
      %v2556 = vpack.c.bf16 %v2374, %v2367
      %v2557 = vpack.c.bf16 %v2382, %v2375
      %v2558 = vpack.c.bf16 %v2383, %v2376
      %v2559 = vpack.c.bf16 %v2384, %v2377
      %v2560 = vpack.c.bf16 %v2385, %v2378
      %v2561 = vpack.c.bf16 %v2386, %v2379
      %v2562 = vpack.c.bf16 %v2387, %v2380
      %v2563 = vpack.c.bf16 %v2388, %v2381
      %v2564 = vpack.c.bf16 %v2396, %v2389
      %v2565 = vpack.c.bf16 %v2397, %v2390
      %v2566 = vpack.c.bf16 %v2398, %v2391
      %v2567 = vpack.c.bf16 %v2399, %v2392
      %v2568 = vpack.c.bf16 %v2400, %v2393
      %v2569 = vpack.c.bf16 %v2401, %v2394
      %v2570 = vpack.c.bf16 %v2402, %v2395
      %v2571 = vpack.c.bf16 %v2410, %v2403
      %v2572 = vpack.c.bf16 %v2411, %v2404
      %v2573 = vpack.c.bf16 %v2412, %v2405
      %v2574 = vpack.c.bf16 %v2413, %v2406
      %v2575 = vpack.c.bf16 %v2414, %v2407
      %v2576 = vpack.c.bf16 %v2415, %v2408
      %v2577 = vpack.c.bf16 %v2416, %v2409
      %v2578 = vpack.c.bf16 %v2424, %v2417
      %v2579 = vpack.c.bf16 %v2425, %v2418
      %v2580 = vpack.c.bf16 %v2426, %v2419
      %v2581 = vpack.c.bf16 %v2427, %v2420
      %v2582 = vpack.c.bf16 %v2428, %v2421
      %v2583 = vpack.c.bf16 %v2429, %v2422
      %v2584 = vpack.c.bf16 %v2430, %v2423
      %v2585 = vpack.c.bf16 %v2438, %v2431
      %v2586 = vpack.c.bf16 %v2439, %v2432
      %v2587 = vpack.c.bf16 %v2440, %v2433
      %v2588 = vpack.c.bf16 %v2441, %v2434
      %v2589 = vpack.c.bf16 %v2442, %v2435
      %v2590 = vpack.c.bf16 %v2443, %v2436
      %v2591 = vpack.c.bf16 %v2444, %v2437
      %v2592 = vpack.c.bf16 %v2452, %v2445
      %v2593 = vpack.c.bf16 %v2453, %v2446
      %v2594 = vpack.c.bf16 %v2454, %v2447
      %v2595 = vpack.c.bf16 %v2455, %v2448
      %v2596 = vpack.c.bf16 %v2456, %v2449
      %v2597 = vpack.c.bf16 %v2457, %v2450
      %v2598 = vpack.c.bf16 %v2458, %v2451
      %v2599 = vpack.c.bf16 %v2466, %v2459
      %v2600 = vpack.c.bf16 %v2467, %v2460
      %v2601 = vpack.c.bf16 %v2468, %v2461
      %v2602 = vpack.c.bf16 %v2469, %v2462
      %v2603 = vpack.c.bf16 %v2470, %v2463
      %v2604 = vpack.c.bf16 %v2471, %v2464
      %v2605 = vpack.c.bf16 %v2472, %v2465
      %v2606 = vpack.c.bf16 %v2480, %v2473
      %v2607 = vpack.c.bf16 %v2481, %v2474
      %v2608 = vpack.c.bf16 %v2482, %v2475
      %v2609 = vpack.c.bf16 %v2483, %v2476
      %v2610 = vpack.c.bf16 %v2484, %v2477
      %v2611 = vpack.c.bf16 %v2485, %v2478
      %v2612 = vpack.c.bf16 %v2486, %v2479
      %v2613 = vpack.c.bf16 %v2494, %v2487
      %v2614 = vpack.c.bf16 %v2495, %v2488
      %v2615 = vpack.c.bf16 %v2496, %v2489
      %v2616 = vpack.c.bf16 %v2497, %v2490
      %v2617 = vpack.c.bf16 %v2498, %v2491
      %v2618 = vpack.c.bf16 %v2499, %v2492
      %v2619 = vpack.c.bf16 %v2500, %v2493
      %v2620 = vpack.c.bf16 %v2508, %v2501
      %v2621 = vpack.c.bf16 %v2509, %v2502
      %v2622 = vpack.c.bf16 %v2510, %v2503
      %v2623 = vpack.c.bf16 %v2511, %v2504
      %v2624 = vpack.c.bf16 %v2512, %v2505
      %v2625 = vpack.c.bf16 %v2513, %v2506
      %v2626 = vpack.c.bf16 %v2514, %v2507
      %v2627 = vld [vmem:[%s3] sm:$0xff]
      %v2628 = vld [vmem:[%s3 + $0x8] sm:$0xff]
      %v2629 = vld [vmem:[%s3 + $0x10] sm:$0xff]
      %v2630 = vld [vmem:[%s3 + $0x18] sm:$0xff]
      %v2631 = vld [vmem:[%s3 + $0x20] sm:$0xff]
      %v2632 = vld [vmem:[%s3 + $0x28] sm:$0xff]
      %v2633 = vld [vmem:[%s3 + $0x30] sm:$0xff]
      %v2634 = vld [vmem:[%s3 + $0x38] sm:$0xff]
      %v2635 = vld [vmem:[%s3 + $0x40] sm:$0xff]
      %v2636 = vld [vmem:[%s3 + $0x48] sm:$0xff]
      %v2637 = vld [vmem:[%s3 + $0x50] sm:$0xff]
      %v2638 = vld [vmem:[%s3 + $0x58] sm:$0xff]
      %v2639 = vld [vmem:[%s3 + $0x60] sm:$0xff]
      %v2640 = vld [vmem:[%s3 + $0x68] sm:$0xff]
      %v2641 = vld [vmem:[%s3 + $0x70] sm:$0xff]
      %v2642 = vld [vmem:[%s3 + $0x78] sm:$0xff]
      %v2643 = vld [vmem:[%s3 + $0x80] sm:$0xff]
      %v2644 = vld [vmem:[%s3 + $0x88] sm:$0xff]
      %v2645 = vld [vmem:[%s3 + $0x90] sm:$0xff]
      %v2646 = vld [vmem:[%s3 + $0x98] sm:$0xff]
      %v2647 = vld [vmem:[%s3 + $0xa0] sm:$0xff]
      %v2648 = vld [vmem:[%s3 + $0xa8] sm:$0xff]
      %v2649 = vld [vmem:[%s3 + $0xb0] sm:$0xff]
      %v2650 = vld [vmem:[%s3 + $0xb8] sm:$0xff]
      %v2651 = vld [vmem:[%s3 + $0xc0] sm:$0xff]
      %v2652 = vld [vmem:[%s3 + $0xc8] sm:$0xff]
      %v2653 = vld [vmem:[%s3 + $0xd0] sm:$0xff]
      %v2654 = vld [vmem:[%s3 + $0xd8] sm:$0xff]
      %v2655 = vld [vmem:[%s3 + $0xe0] sm:$0xff]
      %v2656 = vld [vmem:[%s3 + $0xe8] sm:$0xff]
      %v2657 = vld [vmem:[%s3 + $0xf0] sm:$0xff]
      %v2658 = vld [vmem:[%s3 + $0xf8] sm:$0xff]
      %v2659 = vld [vmem:[%s3 + $0x100] sm:$0xff]
      %v2660 = vld [vmem:[%s3 + $0x108] sm:$0xff]
      %v2661 = vld [vmem:[%s3 + $0x110] sm:$0xff]
      %v2662 = vld [vmem:[%s3 + $0x118] sm:$0xff]
      %v2663 = vld [vmem:[%s3 + $0x120] sm:$0xff]
      %v2664 = vld [vmem:[%s3 + $0x128] sm:$0xff]
      %v2665 = vld [vmem:[%s3 + $0x130] sm:$0xff]
      %v2666 = vld [vmem:[%s3 + $0x138] sm:$0xff]
      %v2667 = vld [vmem:[%s3 + $0x140] sm:$0xff]
      %v2668 = vld [vmem:[%s3 + $0x148] sm:$0xff]
      %v2669 = vld [vmem:[%s3 + $0x150] sm:$0xff]
      %v2670 = vld [vmem:[%s3 + $0x158] sm:$0xff]
      %v2671 = vld [vmem:[%s3 + $0x160] sm:$0xff]
      %v2672 = vld [vmem:[%s3 + $0x168] sm:$0xff]
      %v2673 = vld [vmem:[%s3 + $0x170] sm:$0xff]
      %v2674 = vld [vmem:[%s3 + $0x178] sm:$0xff]
      %v2675 = vld [vmem:[%s3 + $0x180] sm:$0xff]
      %v2676 = vld [vmem:[%s3 + $0x188] sm:$0xff]
      %v2677 = vld [vmem:[%s3 + $0x190] sm:$0xff]
      %v2678 = vld [vmem:[%s3 + $0x198] sm:$0xff]
      %v2679 = vld [vmem:[%s3 + $0x1a0] sm:$0xff]
      %v2680 = vld [vmem:[%s3 + $0x1a8] sm:$0xff]
      %v2681 = vld [vmem:[%s3 + $0x1b0] sm:$0xff]
      %v2682 = vld [vmem:[%s3 + $0x1b8] sm:$0xff]
      %v2683 = vld [vmem:[%s3 + $0x1c0] sm:$0xff]
      %v2684 = vld [vmem:[%s3 + $0x1c8] sm:$0xff]
      %v2685 = vld [vmem:[%s3 + $0x1d0] sm:$0xff]
      %v2686 = vld [vmem:[%s3 + $0x1d8] sm:$0xff]
      %v2687 = vld [vmem:[%s3 + $0x1e0] sm:$0xff]
      %v2688 = vld [vmem:[%s3 + $0x1e8] sm:$0xff]
      %v2689 = vld [vmem:[%s3 + $0x1f0] sm:$0xff]
      %v2690 = vld [vmem:[%s3 + $0x1f8] sm:$0xff]
      %v2691 = vld [vmem:[%s3 + $0x200] sm:$0xff]
      %v2692 = vld [vmem:[%s3 + $0x208] sm:$0xff]
      %v2693 = vld [vmem:[%s3 + $0x210] sm:$0xff]
      %v2694 = vld [vmem:[%s3 + $0x218] sm:$0xff]
      %v2695 = vld [vmem:[%s3 + $0x220] sm:$0xff]
      %v2696 = vld [vmem:[%s3 + $0x228] sm:$0xff]
      %v2697 = vld [vmem:[%s3 + $0x230] sm:$0xff]
      %v2698 = vld [vmem:[%s3 + $0x238] sm:$0xff]
      %v2699 = vld [vmem:[%s3 + $0x240] sm:$0xff]
      %v2700 = vld [vmem:[%s3 + $0x248] sm:$0xff]
      %v2701 = vld [vmem:[%s3 + $0x250] sm:$0xff]
      %v2702 = vld [vmem:[%s3 + $0x258] sm:$0xff]
      %v2703 = vld [vmem:[%s3 + $0x260] sm:$0xff]
      %v2704 = vld [vmem:[%s3 + $0x268] sm:$0xff]
      %v2705 = vld [vmem:[%s3 + $0x270] sm:$0xff]
      %v2706 = vld [vmem:[%s3 + $0x278] sm:$0xff]
      %v2707 = vld [vmem:[%s3 + $0x280] sm:$0xff]
      %v2708 = vld [vmem:[%s3 + $0x288] sm:$0xff]
      %v2709 = vld [vmem:[%s3 + $0x290] sm:$0xff]
      %v2710 = vld [vmem:[%s3 + $0x298] sm:$0xff]
      %v2711 = vld [vmem:[%s3 + $0x2a0] sm:$0xff]
      %v2712 = vld [vmem:[%s3 + $0x2a8] sm:$0xff]
      %v2713 = vld [vmem:[%s3 + $0x2b0] sm:$0xff]
      %v2714 = vld [vmem:[%s3 + $0x2b8] sm:$0xff]
      %v2715 = vld [vmem:[%s3 + $0x2c0] sm:$0xff]
      %v2716 = vld [vmem:[%s3 + $0x2c8] sm:$0xff]
      %v2717 = vld [vmem:[%s3 + $0x2d0] sm:$0xff]
      %v2718 = vld [vmem:[%s3 + $0x2d8] sm:$0xff]
      %v2719 = vld [vmem:[%s3 + $0x2e0] sm:$0xff]
      %v2720 = vld [vmem:[%s3 + $0x2e8] sm:$0xff]
      %v2721 = vld [vmem:[%s3 + $0x2f0] sm:$0xff]
      %v2722 = vld [vmem:[%s3 + $0x2f8] sm:$0xff]
      %v2723 = vld [vmem:[%s3 + $0x300] sm:$0xff]
      %v2724 = vld [vmem:[%s3 + $0x308] sm:$0xff]
      %v2725 = vld [vmem:[%s3 + $0x310] sm:$0xff]
      %v2726 = vld [vmem:[%s3 + $0x318] sm:$0xff]
      %v2727 = vld [vmem:[%s3 + $0x320] sm:$0xff]
      %v2728 = vld [vmem:[%s3 + $0x328] sm:$0xff]
      %v2729 = vld [vmem:[%s3 + $0x330] sm:$0xff]
      %v2730 = vld [vmem:[%s3 + $0x338] sm:$0xff]
      %v2731 = vld [vmem:[%s3 + $0x340] sm:$0xff]
      %v2732 = vld [vmem:[%s3 + $0x348] sm:$0xff]
      %v2733 = vld [vmem:[%s3 + $0x350] sm:$0xff]
      %v2734 = vld [vmem:[%s3 + $0x358] sm:$0xff]
      %v2735 = vld [vmem:[%s3 + $0x360] sm:$0xff]
      %v2736 = vld [vmem:[%s3 + $0x368] sm:$0xff]
      %v2737 = vld [vmem:[%s3 + $0x370] sm:$0xff]
      %v2738 = vld [vmem:[%s3 + $0x378] sm:$0xff]
      %v2739 = vld [vmem:[%s3 + $0x380] sm:$0xff]
      %v2740 = vld [vmem:[%s3 + $0x388] sm:$0xff]
      %v2741 = vld [vmem:[%s3 + $0x390] sm:$0xff]
      %v2742 = vld [vmem:[%s3 + $0x398] sm:$0xff]
      %v2743 = vld [vmem:[%s3 + $0x3a0] sm:$0xff]
      %v2744 = vld [vmem:[%s3 + $0x3a8] sm:$0xff]
      %v2745 = vld [vmem:[%s3 + $0x3b0] sm:$0xff]
      %v2746 = vld [vmem:[%s3 + $0x3b8] sm:$0xff]
      %v2747 = vld [vmem:[%s3 + $0x3c0] sm:$0xff]
      %v2748 = vld [vmem:[%s3 + $0x3c8] sm:$0xff]
      %v2749 = vld [vmem:[%s3 + $0x3d0] sm:$0xff]
      %v2750 = vld [vmem:[%s3 + $0x3d8] sm:$0xff]
      %v2751 = vld [vmem:[%s3 + $0x3e0] sm:$0xff]
      %v2752 = vld [vmem:[%s3 + $0x3e8] sm:$0xff]
      %v2753 = vld [vmem:[%s3 + $0x3f0] sm:$0xff]
      %v2754 = vld [vmem:[%s3 + $0x3f8] sm:$0xff]
      %v2755 = vld [vmem:[%s3 + $0x400] sm:$0xff]
      %v2756 = vld [vmem:[%s3 + $0x408] sm:$0xff]
      %v2757 = vld [vmem:[%s3 + $0x410] sm:$0xff]
      %v2758 = vld [vmem:[%s3 + $0x418] sm:$0xff]
      %v2759 = vld [vmem:[%s3 + $0x420] sm:$0xff]
      %v2760 = vld [vmem:[%s3 + $0x428] sm:$0xff]
      %v2761 = vld [vmem:[%s3 + $0x430] sm:$0xff]
      %v2762 = vld [vmem:[%s3 + $0x438] sm:$0xff]
      %v2763 = vld [vmem:[%s3 + $0x440] sm:$0xff]
      %v2764 = vld [vmem:[%s3 + $0x448] sm:$0xff]
      %v2765 = vld [vmem:[%s3 + $0x450] sm:$0xff]
      %v2766 = vld [vmem:[%s3 + $0x458] sm:$0xff]
      %v2767 = vld [vmem:[%s3 + $0x460] sm:$0xff]
      %v2768 = vld [vmem:[%s3 + $0x468] sm:$0xff]
      %v2769 = vld [vmem:[%s3 + $0x470] sm:$0xff]
      %v2770 = vld [vmem:[%s3 + $0x478] sm:$0xff]
      %v2771 = vld [vmem:[%s3 + $0x480] sm:$0xff]
      %v2772 = vld [vmem:[%s3 + $0x488] sm:$0xff]
      %v2773 = vld [vmem:[%s3 + $0x490] sm:$0xff]
      %v2774 = vld [vmem:[%s3 + $0x498] sm:$0xff]
      %v2775 = vld [vmem:[%s3 + $0x4a0] sm:$0xff]
      %v2776 = vld [vmem:[%s3 + $0x4a8] sm:$0xff]
      %v2777 = vld [vmem:[%s3 + $0x4b0] sm:$0xff]
      %v2778 = vld [vmem:[%s3 + $0x4b8] sm:$0xff]
      %v2779 = vld [vmem:[%s3 + $0x4c0] sm:$0xff]
      %v2780 = vld [vmem:[%s3 + $0x4c8] sm:$0xff]
      %v2781 = vld [vmem:[%s3 + $0x4d0] sm:$0xff]
      %v2782 = vld [vmem:[%s3 + $0x4d8] sm:$0xff]
      %v2783 = vld [vmem:[%s3 + $0x4e0] sm:$0xff]
      %v2784 = vld [vmem:[%s3 + $0x4e8] sm:$0xff]
      %v2785 = vld [vmem:[%s3 + $0x4f0] sm:$0xff]
      %v2786 = vld [vmem:[%s3 + $0x4f8] sm:$0xff]
      %v2787 = vld [vmem:[%s3 + $0x500] sm:$0xff]
      %v2788 = vld [vmem:[%s3 + $0x508] sm:$0xff]
      %v2789 = vld [vmem:[%s3 + $0x510] sm:$0xff]
      %v2790 = vld [vmem:[%s3 + $0x518] sm:$0xff]
      %v2791 = vld [vmem:[%s3 + $0x520] sm:$0xff]
      %v2792 = vld [vmem:[%s3 + $0x528] sm:$0xff]
      %v2793 = vld [vmem:[%s3 + $0x530] sm:$0xff]
      %v2794 = vld [vmem:[%s3 + $0x538] sm:$0xff]
      %v2795 = vld [vmem:[%s3 + $0x540] sm:$0xff]
      %v2796 = vld [vmem:[%s3 + $0x548] sm:$0xff]
      %v2797 = vld [vmem:[%s3 + $0x550] sm:$0xff]
      %v2798 = vld [vmem:[%s3 + $0x558] sm:$0xff]
      %v2799 = vld [vmem:[%s3 + $0x560] sm:$0xff]
      %v2800 = vld [vmem:[%s3 + $0x568] sm:$0xff]
      %v2801 = vld [vmem:[%s3 + $0x570] sm:$0xff]
      %v2802 = vld [vmem:[%s3 + $0x578] sm:$0xff]
      %v2803 = vld [vmem:[%s3 + $0x580] sm:$0xff]
      %v2804 = vld [vmem:[%s3 + $0x588] sm:$0xff]
      %v2805 = vld [vmem:[%s3 + $0x590] sm:$0xff]
      %v2806 = vld [vmem:[%s3 + $0x598] sm:$0xff]
      %v2807 = vld [vmem:[%s3 + $0x5a0] sm:$0xff]
      %v2808 = vld [vmem:[%s3 + $0x5a8] sm:$0xff]
      %v2809 = vld [vmem:[%s3 + $0x5b0] sm:$0xff]
      %v2810 = vld [vmem:[%s3 + $0x5b8] sm:$0xff]
      %v2811 = vld [vmem:[%s3 + $0x5c0] sm:$0xff]
      %v2812 = vld [vmem:[%s3 + $0x5c8] sm:$0xff]
      %v2813 = vld [vmem:[%s3 + $0x5d0] sm:$0xff]
      %v2814 = vld [vmem:[%s3 + $0x5d8] sm:$0xff]
      %v2815 = vld [vmem:[%s3 + $0x5e0] sm:$0xff]
      %v2816 = vld [vmem:[%s3 + $0x5e8] sm:$0xff]
      %v2817 = vld [vmem:[%s3 + $0x5f0] sm:$0xff]
      %v2818 = vld [vmem:[%s3 + $0x5f8] sm:$0xff]
      %v2819 = vld [vmem:[%s3 + $0x600] sm:$0xff]
      %v2820 = vld [vmem:[%s3 + $0x608] sm:$0xff]
      %v2821 = vld [vmem:[%s3 + $0x610] sm:$0xff]
      %v2822 = vld [vmem:[%s3 + $0x618] sm:$0xff]
      %v2823 = vld [vmem:[%s3 + $0x620] sm:$0xff]
      %v2824 = vld [vmem:[%s3 + $0x628] sm:$0xff]
      %v2825 = vld [vmem:[%s3 + $0x630] sm:$0xff]
      %v2826 = vld [vmem:[%s3 + $0x638] sm:$0xff]
      %v2827 = vld [vmem:[%s3 + $0x640] sm:$0xff]
      %v2828 = vld [vmem:[%s3 + $0x648] sm:$0xff]
      %v2829 = vld [vmem:[%s3 + $0x650] sm:$0xff]
      %v2830 = vld [vmem:[%s3 + $0x658] sm:$0xff]
      %v2831 = vld [vmem:[%s3 + $0x660] sm:$0xff]
      %v2832 = vld [vmem:[%s3 + $0x668] sm:$0xff]
      %v2833 = vld [vmem:[%s3 + $0x670] sm:$0xff]
      %v2834 = vld [vmem:[%s3 + $0x678] sm:$0xff]
      %v2835 = vld [vmem:[%s3 + $0x680] sm:$0xff]
      %v2836 = vld [vmem:[%s3 + $0x688] sm:$0xff]
      %v2837 = vld [vmem:[%s3 + $0x690] sm:$0xff]
      %v2838 = vld [vmem:[%s3 + $0x698] sm:$0xff]
      %v2839 = vld [vmem:[%s3 + $0x6a0] sm:$0xff]
      %v2840 = vld [vmem:[%s3 + $0x6a8] sm:$0xff]
      %v2841 = vld [vmem:[%s3 + $0x6b0] sm:$0xff]
      %v2842 = vld [vmem:[%s3 + $0x6b8] sm:$0xff]
      %v2843 = vld [vmem:[%s3 + $0x6c0] sm:$0xff]
      %v2844 = vld [vmem:[%s3 + $0x6c8] sm:$0xff]
      %v2845 = vld [vmem:[%s3 + $0x6d0] sm:$0xff]
      %v2846 = vld [vmem:[%s3 + $0x6d8] sm:$0xff]
      %v2847 = vld [vmem:[%s3 + $0x6e0] sm:$0xff]
      %v2848 = vld [vmem:[%s3 + $0x6e8] sm:$0xff]
      %v2849 = vld [vmem:[%s3 + $0x6f0] sm:$0xff]
      %v2850 = vld [vmem:[%s3 + $0x6f8] sm:$0xff]
      %v2851 = vld [vmem:[%s4] sm:$0xf]
      %v2853 = vlaneseq
      %v2854 = vshrl.u32 %v2853, 7
      %v2855 = vsub.s32 0, %v2854
      %v2856 = vrot.slane %v2851, %v2855
      %v2857 = vlaneseq
      %v2858 = vshrl.u32 %v2857, 7
      %v2859 = vsub.s32 1, %v2858
      %v2860 = vrot.slane %v2851, %v2859
      %v2861 = vlaneseq
      %v2862 = vshrl.u32 %v2861, 7
      %v2863 = vsub.s32 2, %v2862
      %v2864 = vrot.slane %v2851, %v2863
      %v2865 = vlaneseq
      %v2866 = vshrl.u32 %v2865, 7
      %v2867 = vsub.s32 3, %v2866
      %v2868 = vrot.slane %v2851, %v2867
      %v3097 = vunpack.c.l.b16 %v2627
      %v3098 = vunpack.c.h.b16 %v2627
      %v3099 = vunpack.c.l.b16 %v2628
      %v3100 = vunpack.c.h.b16 %v2628
      %v3101 = vunpack.c.l.b16 %v2629
      %v3102 = vunpack.c.h.b16 %v2629
      %v3103 = vunpack.c.l.b16 %v2630
      %v3104 = vunpack.c.h.b16 %v2630
      %v3105 = vunpack.c.l.b16 %v2631
      %v3106 = vunpack.c.h.b16 %v2631
      %v3107 = vunpack.c.l.b16 %v2632
      %v3108 = vunpack.c.h.b16 %v2632
      %v3109 = vunpack.c.l.b16 %v2633
      %v3110 = vunpack.c.h.b16 %v2633
      %v3111 = vunpack.c.l.b16 %v2634
      %v3112 = vunpack.c.h.b16 %v2634
      %v3113 = vunpack.c.l.b16 %v2635
      %v3114 = vunpack.c.h.b16 %v2635
      %v3115 = vunpack.c.l.b16 %v2636
      %v3116 = vunpack.c.h.b16 %v2636
      %v3117 = vunpack.c.l.b16 %v2637
      %v3118 = vunpack.c.h.b16 %v2637
      %v3119 = vunpack.c.l.b16 %v2638
      %v3120 = vunpack.c.h.b16 %v2638
      %v3121 = vunpack.c.l.b16 %v2639
      %v3122 = vunpack.c.h.b16 %v2639
      %v3123 = vunpack.c.l.b16 %v2640
      %v3124 = vunpack.c.h.b16 %v2640
      %v3125 = vunpack.c.l.b16 %v2641
      %v3126 = vunpack.c.h.b16 %v2641
      %v3127 = vunpack.c.l.b16 %v2642
      %v3128 = vunpack.c.h.b16 %v2642
      %v3129 = vunpack.c.l.b16 %v2643
      %v3130 = vunpack.c.h.b16 %v2643
      %v3131 = vunpack.c.l.b16 %v2644
      %v3132 = vunpack.c.h.b16 %v2644
      %v3133 = vunpack.c.l.b16 %v2645
      %v3134 = vunpack.c.h.b16 %v2645
      %v3135 = vunpack.c.l.b16 %v2646
      %v3136 = vunpack.c.h.b16 %v2646
      %v3137 = vunpack.c.l.b16 %v2647
      %v3138 = vunpack.c.h.b16 %v2647
      %v3139 = vunpack.c.l.b16 %v2648
      %v3140 = vunpack.c.h.b16 %v2648
      %v3141 = vunpack.c.l.b16 %v2649
      %v3142 = vunpack.c.h.b16 %v2649
      %v3143 = vunpack.c.l.b16 %v2650
      %v3144 = vunpack.c.h.b16 %v2650
      %v3145 = vunpack.c.l.b16 %v2651
      %v3146 = vunpack.c.h.b16 %v2651
      %v3147 = vunpack.c.l.b16 %v2652
      %v3148 = vunpack.c.h.b16 %v2652
      %v3149 = vunpack.c.l.b16 %v2653
      %v3150 = vunpack.c.h.b16 %v2653
      %v3151 = vunpack.c.l.b16 %v2654
      %v3152 = vunpack.c.h.b16 %v2654
      %v3153 = vunpack.c.l.b16 %v2655
      %v3154 = vunpack.c.h.b16 %v2655
      %v3155 = vunpack.c.l.b16 %v2656
      %v3156 = vunpack.c.h.b16 %v2656
      %v3157 = vunpack.c.l.b16 %v2657
      %v3158 = vunpack.c.h.b16 %v2657
      %v3159 = vunpack.c.l.b16 %v2658
      %v3160 = vunpack.c.h.b16 %v2658
      %v3161 = vunpack.c.l.b16 %v2659
      %v3162 = vunpack.c.h.b16 %v2659
      %v3163 = vunpack.c.l.b16 %v2660
      %v3164 = vunpack.c.h.b16 %v2660
      %v3165 = vunpack.c.l.b16 %v2661
      %v3166 = vunpack.c.h.b16 %v2661
      %v3167 = vunpack.c.l.b16 %v2662
      %v3168 = vunpack.c.h.b16 %v2662
      %v3169 = vunpack.c.l.b16 %v2663
      %v3170 = vunpack.c.h.b16 %v2663
      %v3171 = vunpack.c.l.b16 %v2664
      %v3172 = vunpack.c.h.b16 %v2664
      %v3173 = vunpack.c.l.b16 %v2665
      %v3174 = vunpack.c.h.b16 %v2665
      %v3175 = vunpack.c.l.b16 %v2666
      %v3176 = vunpack.c.h.b16 %v2666
      %v3177 = vunpack.c.l.b16 %v2667
      %v3178 = vunpack.c.h.b16 %v2667
      %v3179 = vunpack.c.l.b16 %v2668
      %v3180 = vunpack.c.h.b16 %v2668
      %v3181 = vunpack.c.l.b16 %v2669
      %v3182 = vunpack.c.h.b16 %v2669
      %v3183 = vunpack.c.l.b16 %v2670
      %v3184 = vunpack.c.h.b16 %v2670
      %v3185 = vunpack.c.l.b16 %v2671
      %v3186 = vunpack.c.h.b16 %v2671
      %v3187 = vunpack.c.l.b16 %v2672
      %v3188 = vunpack.c.h.b16 %v2672
      %v3189 = vunpack.c.l.b16 %v2673
      %v3190 = vunpack.c.h.b16 %v2673
      %v3191 = vunpack.c.l.b16 %v2674
      %v3192 = vunpack.c.h.b16 %v2674
      %v3193 = vunpack.c.l.b16 %v2675
      %v3194 = vunpack.c.h.b16 %v2675
      %v3195 = vunpack.c.l.b16 %v2676
      %v3196 = vunpack.c.h.b16 %v2676
      %v3197 = vunpack.c.l.b16 %v2677
      %v3198 = vunpack.c.h.b16 %v2677
      %v3199 = vunpack.c.l.b16 %v2678
      %v3200 = vunpack.c.h.b16 %v2678
      %v3201 = vunpack.c.l.b16 %v2679
      %v3202 = vunpack.c.h.b16 %v2679
      %v3203 = vunpack.c.l.b16 %v2680
      %v3204 = vunpack.c.h.b16 %v2680
      %v3205 = vunpack.c.l.b16 %v2681
      %v3206 = vunpack.c.h.b16 %v2681
      %v3207 = vunpack.c.l.b16 %v2682
      %v3208 = vunpack.c.h.b16 %v2682
      %v3209 = vunpack.c.l.b16 %v2683
      %v3210 = vunpack.c.h.b16 %v2683
      %v3211 = vunpack.c.l.b16 %v2684
      %v3212 = vunpack.c.h.b16 %v2684
      %v3213 = vunpack.c.l.b16 %v2685
      %v3214 = vunpack.c.h.b16 %v2685
      %v3215 = vunpack.c.l.b16 %v2686
      %v3216 = vunpack.c.h.b16 %v2686
      %v3217 = vunpack.c.l.b16 %v2687
      %v3218 = vunpack.c.h.b16 %v2687
      %v3219 = vunpack.c.l.b16 %v2688
      %v3220 = vunpack.c.h.b16 %v2688
      %v3221 = vunpack.c.l.b16 %v2689
      %v3222 = vunpack.c.h.b16 %v2689
      %v3223 = vunpack.c.l.b16 %v2690
      %v3224 = vunpack.c.h.b16 %v2690
      %v3225 = vunpack.c.l.b16 %v2691
      %v3226 = vunpack.c.h.b16 %v2691
      %v3227 = vunpack.c.l.b16 %v2692
      %v3228 = vunpack.c.h.b16 %v2692
      %v3229 = vunpack.c.l.b16 %v2693
      %v3230 = vunpack.c.h.b16 %v2693
      %v3231 = vunpack.c.l.b16 %v2694
      %v3232 = vunpack.c.h.b16 %v2694
      %v3233 = vunpack.c.l.b16 %v2695
      %v3234 = vunpack.c.h.b16 %v2695
      %v3235 = vunpack.c.l.b16 %v2696
      %v3236 = vunpack.c.h.b16 %v2696
      %v3237 = vunpack.c.l.b16 %v2697
      %v3238 = vunpack.c.h.b16 %v2697
      %v3239 = vunpack.c.l.b16 %v2698
      %v3240 = vunpack.c.h.b16 %v2698
      %v3241 = vunpack.c.l.b16 %v2699
      %v3242 = vunpack.c.h.b16 %v2699
      %v3243 = vunpack.c.l.b16 %v2700
      %v3244 = vunpack.c.h.b16 %v2700
      %v3245 = vunpack.c.l.b16 %v2701
      %v3246 = vunpack.c.h.b16 %v2701
      %v3247 = vunpack.c.l.b16 %v2702
      %v3248 = vunpack.c.h.b16 %v2702
      %v3249 = vunpack.c.l.b16 %v2703
      %v3250 = vunpack.c.h.b16 %v2703
      %v3251 = vunpack.c.l.b16 %v2704
      %v3252 = vunpack.c.h.b16 %v2704
      %v3253 = vunpack.c.l.b16 %v2705
      %v3254 = vunpack.c.h.b16 %v2705
      %v3255 = vunpack.c.l.b16 %v2706
      %v3256 = vunpack.c.h.b16 %v2706
      %v3257 = vunpack.c.l.b16 %v2707
      %v3258 = vunpack.c.h.b16 %v2707
      %v3259 = vunpack.c.l.b16 %v2708
      %v3260 = vunpack.c.h.b16 %v2708
      %v3261 = vunpack.c.l.b16 %v2709
      %v3262 = vunpack.c.h.b16 %v2709
      %v3263 = vunpack.c.l.b16 %v2710
      %v3264 = vunpack.c.h.b16 %v2710
      %v3265 = vunpack.c.l.b16 %v2711
      %v3266 = vunpack.c.h.b16 %v2711
      %v3267 = vunpack.c.l.b16 %v2712
      %v3268 = vunpack.c.h.b16 %v2712
      %v3269 = vunpack.c.l.b16 %v2713
      %v3270 = vunpack.c.h.b16 %v2713
      %v3271 = vunpack.c.l.b16 %v2714
      %v3272 = vunpack.c.h.b16 %v2714
      %v3273 = vunpack.c.l.b16 %v2715
      %v3274 = vunpack.c.h.b16 %v2715
      %v3275 = vunpack.c.l.b16 %v2716
      %v3276 = vunpack.c.h.b16 %v2716
      %v3277 = vunpack.c.l.b16 %v2717
      %v3278 = vunpack.c.h.b16 %v2717
      %v3279 = vunpack.c.l.b16 %v2718
      %v3280 = vunpack.c.h.b16 %v2718
      %v3281 = vunpack.c.l.b16 %v2719
      %v3282 = vunpack.c.h.b16 %v2719
      %v3283 = vunpack.c.l.b16 %v2720
      %v3284 = vunpack.c.h.b16 %v2720
      %v3285 = vunpack.c.l.b16 %v2721
      %v3286 = vunpack.c.h.b16 %v2721
      %v3287 = vunpack.c.l.b16 %v2722
      %v3288 = vunpack.c.h.b16 %v2722
      %v3289 = vunpack.c.l.b16 %v2723
      %v3290 = vunpack.c.h.b16 %v2723
      %v3291 = vunpack.c.l.b16 %v2724
      %v3292 = vunpack.c.h.b16 %v2724
      %v3293 = vunpack.c.l.b16 %v2725
      %v3294 = vunpack.c.h.b16 %v2725
      %v3295 = vunpack.c.l.b16 %v2726
      %v3296 = vunpack.c.h.b16 %v2726
      %v3297 = vunpack.c.l.b16 %v2727
      %v3298 = vunpack.c.h.b16 %v2727
      %v3299 = vunpack.c.l.b16 %v2728
      %v3300 = vunpack.c.h.b16 %v2728
      %v3301 = vunpack.c.l.b16 %v2729
      %v3302 = vunpack.c.h.b16 %v2729
      %v3303 = vunpack.c.l.b16 %v2730
      %v3304 = vunpack.c.h.b16 %v2730
      %v3305 = vunpack.c.l.b16 %v2731
      %v3306 = vunpack.c.h.b16 %v2731
      %v3307 = vunpack.c.l.b16 %v2732
      %v3308 = vunpack.c.h.b16 %v2732
      %v3309 = vunpack.c.l.b16 %v2733
      %v3310 = vunpack.c.h.b16 %v2733
      %v3311 = vunpack.c.l.b16 %v2734
      %v3312 = vunpack.c.h.b16 %v2734
      %v3313 = vunpack.c.l.b16 %v2735
      %v3314 = vunpack.c.h.b16 %v2735
      %v3315 = vunpack.c.l.b16 %v2736
      %v3316 = vunpack.c.h.b16 %v2736
      %v3317 = vunpack.c.l.b16 %v2737
      %v3318 = vunpack.c.h.b16 %v2737
      %v3319 = vunpack.c.l.b16 %v2738
      %v3320 = vunpack.c.h.b16 %v2738
      %v3321 = vunpack.c.l.b16 %v2739
      %v3322 = vunpack.c.h.b16 %v2739
      %v3323 = vunpack.c.l.b16 %v2740
      %v3324 = vunpack.c.h.b16 %v2740
      %v3325 = vunpack.c.l.b16 %v2741
      %v3326 = vunpack.c.h.b16 %v2741
      %v3327 = vunpack.c.l.b16 %v2742
      %v3328 = vunpack.c.h.b16 %v2742
      %v3329 = vunpack.c.l.b16 %v2743
      %v3330 = vunpack.c.h.b16 %v2743
      %v3331 = vunpack.c.l.b16 %v2744
      %v3332 = vunpack.c.h.b16 %v2744
      %v3333 = vunpack.c.l.b16 %v2745
      %v3334 = vunpack.c.h.b16 %v2745
      %v3335 = vunpack.c.l.b16 %v2746
      %v3336 = vunpack.c.h.b16 %v2746
      %v3337 = vunpack.c.l.b16 %v2747
      %v3338 = vunpack.c.h.b16 %v2747
      %v3339 = vunpack.c.l.b16 %v2748
      %v3340 = vunpack.c.h.b16 %v2748
      %v3341 = vunpack.c.l.b16 %v2749
      %v3342 = vunpack.c.h.b16 %v2749
      %v3343 = vunpack.c.l.b16 %v2750
      %v3344 = vunpack.c.h.b16 %v2750
      %v3345 = vunpack.c.l.b16 %v2751
      %v3346 = vunpack.c.h.b16 %v2751
      %v3347 = vunpack.c.l.b16 %v2752
      %v3348 = vunpack.c.h.b16 %v2752
      %v3349 = vunpack.c.l.b16 %v2753
      %v3350 = vunpack.c.h.b16 %v2753
      %v3351 = vunpack.c.l.b16 %v2754
      %v3352 = vunpack.c.h.b16 %v2754
      %v3353 = vunpack.c.l.b16 %v2755
      %v3354 = vunpack.c.h.b16 %v2755
      %v3355 = vunpack.c.l.b16 %v2756
      %v3356 = vunpack.c.h.b16 %v2756
      %v3357 = vunpack.c.l.b16 %v2757
      %v3358 = vunpack.c.h.b16 %v2757
      %v3359 = vunpack.c.l.b16 %v2758
      %v3360 = vunpack.c.h.b16 %v2758
      %v3361 = vunpack.c.l.b16 %v2759
      %v3362 = vunpack.c.h.b16 %v2759
      %v3363 = vunpack.c.l.b16 %v2760
      %v3364 = vunpack.c.h.b16 %v2760
      %v3365 = vunpack.c.l.b16 %v2761
      %v3366 = vunpack.c.h.b16 %v2761
      %v3367 = vunpack.c.l.b16 %v2762
      %v3368 = vunpack.c.h.b16 %v2762
      %v3369 = vunpack.c.l.b16 %v2763
      %v3370 = vunpack.c.h.b16 %v2763
      %v3371 = vunpack.c.l.b16 %v2764
      %v3372 = vunpack.c.h.b16 %v2764
      %v3373 = vunpack.c.l.b16 %v2765
      %v3374 = vunpack.c.h.b16 %v2765
      %v3375 = vunpack.c.l.b16 %v2766
      %v3376 = vunpack.c.h.b16 %v2766
      %v3377 = vunpack.c.l.b16 %v2767
      %v3378 = vunpack.c.h.b16 %v2767
      %v3379 = vunpack.c.l.b16 %v2768
      %v3380 = vunpack.c.h.b16 %v2768
      %v3381 = vunpack.c.l.b16 %v2769
      %v3382 = vunpack.c.h.b16 %v2769
      %v3383 = vunpack.c.l.b16 %v2770
      %v3384 = vunpack.c.h.b16 %v2770
      %v3385 = vunpack.c.l.b16 %v2771
      %v3386 = vunpack.c.h.b16 %v2771
      %v3387 = vunpack.c.l.b16 %v2772
      %v3388 = vunpack.c.h.b16 %v2772
      %v3389 = vunpack.c.l.b16 %v2773
      %v3390 = vunpack.c.h.b16 %v2773
      %v3391 = vunpack.c.l.b16 %v2774
      %v3392 = vunpack.c.h.b16 %v2774
      %v3393 = vunpack.c.l.b16 %v2775
      %v3394 = vunpack.c.h.b16 %v2775
      %v3395 = vunpack.c.l.b16 %v2776
      %v3396 = vunpack.c.h.b16 %v2776
      %v3397 = vunpack.c.l.b16 %v2777
      %v3398 = vunpack.c.h.b16 %v2777
      %v3399 = vunpack.c.l.b16 %v2778
      %v3400 = vunpack.c.h.b16 %v2778
      %v3401 = vunpack.c.l.b16 %v2779
      %v3402 = vunpack.c.h.b16 %v2779
      %v3403 = vunpack.c.l.b16 %v2780
      %v3404 = vunpack.c.h.b16 %v2780
      %v3405 = vunpack.c.l.b16 %v2781
      %v3406 = vunpack.c.h.b16 %v2781
      %v3407 = vunpack.c.l.b16 %v2782
      %v3408 = vunpack.c.h.b16 %v2782
      %v3409 = vunpack.c.l.b16 %v2783
      %v3410 = vunpack.c.h.b16 %v2783
      %v3411 = vunpack.c.l.b16 %v2784
      %v3412 = vunpack.c.h.b16 %v2784
      %v3413 = vunpack.c.l.b16 %v2785
      %v3414 = vunpack.c.h.b16 %v2785
      %v3415 = vunpack.c.l.b16 %v2786
      %v3416 = vunpack.c.h.b16 %v2786
      %v3417 = vunpack.c.l.b16 %v2787
      %v3418 = vunpack.c.h.b16 %v2787
      %v3419 = vunpack.c.l.b16 %v2788
      %v3420 = vunpack.c.h.b16 %v2788
      %v3421 = vunpack.c.l.b16 %v2789
      %v3422 = vunpack.c.h.b16 %v2789
      %v3423 = vunpack.c.l.b16 %v2790
      %v3424 = vunpack.c.h.b16 %v2790
      %v3425 = vunpack.c.l.b16 %v2791
      %v3426 = vunpack.c.h.b16 %v2791
      %v3427 = vunpack.c.l.b16 %v2792
      %v3428 = vunpack.c.h.b16 %v2792
      %v3429 = vunpack.c.l.b16 %v2793
      %v3430 = vunpack.c.h.b16 %v2793
      %v3431 = vunpack.c.l.b16 %v2794
      %v3432 = vunpack.c.h.b16 %v2794
      %v3433 = vunpack.c.l.b16 %v2795
      %v3434 = vunpack.c.h.b16 %v2795
      %v3435 = vunpack.c.l.b16 %v2796
      %v3436 = vunpack.c.h.b16 %v2796
      %v3437 = vunpack.c.l.b16 %v2797
      %v3438 = vunpack.c.h.b16 %v2797
      %v3439 = vunpack.c.l.b16 %v2798
      %v3440 = vunpack.c.h.b16 %v2798
      %v3441 = vunpack.c.l.b16 %v2799
      %v3442 = vunpack.c.h.b16 %v2799
      %v3443 = vunpack.c.l.b16 %v2800
      %v3444 = vunpack.c.h.b16 %v2800
      %v3445 = vunpack.c.l.b16 %v2801
      %v3446 = vunpack.c.h.b16 %v2801
      %v3447 = vunpack.c.l.b16 %v2802
      %v3448 = vunpack.c.h.b16 %v2802
      %v3449 = vunpack.c.l.b16 %v2803
      %v3450 = vunpack.c.h.b16 %v2803
      %v3451 = vunpack.c.l.b16 %v2804
      %v3452 = vunpack.c.h.b16 %v2804
      %v3453 = vunpack.c.l.b16 %v2805
      %v3454 = vunpack.c.h.b16 %v2805
      %v3455 = vunpack.c.l.b16 %v2806
      %v3456 = vunpack.c.h.b16 %v2806
      %v3457 = vunpack.c.l.b16 %v2807
      %v3458 = vunpack.c.h.b16 %v2807
      %v3459 = vunpack.c.l.b16 %v2808
      %v3460 = vunpack.c.h.b16 %v2808
      %v3461 = vunpack.c.l.b16 %v2809
      %v3462 = vunpack.c.h.b16 %v2809
      %v3463 = vunpack.c.l.b16 %v2810
      %v3464 = vunpack.c.h.b16 %v2810
      %v3465 = vunpack.c.l.b16 %v2811
      %v3466 = vunpack.c.h.b16 %v2811
      %v3467 = vunpack.c.l.b16 %v2812
      %v3468 = vunpack.c.h.b16 %v2812
      %v3469 = vunpack.c.l.b16 %v2813
      %v3470 = vunpack.c.h.b16 %v2813
      %v3471 = vunpack.c.l.b16 %v2814
      %v3472 = vunpack.c.h.b16 %v2814
      %v3473 = vunpack.c.l.b16 %v2815
      %v3474 = vunpack.c.h.b16 %v2815
      %v3475 = vunpack.c.l.b16 %v2816
      %v3476 = vunpack.c.h.b16 %v2816
      %v3477 = vunpack.c.l.b16 %v2817
      %v3478 = vunpack.c.h.b16 %v2817
      %v3479 = vunpack.c.l.b16 %v2818
      %v3480 = vunpack.c.h.b16 %v2818
      %v3481 = vunpack.c.l.b16 %v2819
      %v3482 = vunpack.c.h.b16 %v2819
      %v3483 = vunpack.c.l.b16 %v2820
      %v3484 = vunpack.c.h.b16 %v2820
      %v3485 = vunpack.c.l.b16 %v2821
      %v3486 = vunpack.c.h.b16 %v2821
      %v3487 = vunpack.c.l.b16 %v2822
      %v3488 = vunpack.c.h.b16 %v2822
      %v3489 = vunpack.c.l.b16 %v2823
      %v3490 = vunpack.c.h.b16 %v2823
      %v3491 = vunpack.c.l.b16 %v2824
      %v3492 = vunpack.c.h.b16 %v2824
      %v3493 = vunpack.c.l.b16 %v2825
      %v3494 = vunpack.c.h.b16 %v2825
      %v3495 = vunpack.c.l.b16 %v2826
      %v3496 = vunpack.c.h.b16 %v2826
      %v3497 = vunpack.c.l.b16 %v2827
      %v3498 = vunpack.c.h.b16 %v2827
      %v3499 = vunpack.c.l.b16 %v2828
      %v3500 = vunpack.c.h.b16 %v2828
      %v3501 = vunpack.c.l.b16 %v2829
      %v3502 = vunpack.c.h.b16 %v2829
      %v3503 = vunpack.c.l.b16 %v2830
      %v3504 = vunpack.c.h.b16 %v2830
      %v3505 = vunpack.c.l.b16 %v2831
      %v3506 = vunpack.c.h.b16 %v2831
      %v3507 = vunpack.c.l.b16 %v2832
      %v3508 = vunpack.c.h.b16 %v2832
      %v3509 = vunpack.c.l.b16 %v2833
      %v3510 = vunpack.c.h.b16 %v2833
      %v3511 = vunpack.c.l.b16 %v2834
      %v3512 = vunpack.c.h.b16 %v2834
      %v3513 = vunpack.c.l.b16 %v2835
      %v3514 = vunpack.c.h.b16 %v2835
      %v3515 = vunpack.c.l.b16 %v2836
      %v3516 = vunpack.c.h.b16 %v2836
      %v3517 = vunpack.c.l.b16 %v2837
      %v3518 = vunpack.c.h.b16 %v2837
      %v3519 = vunpack.c.l.b16 %v2838
      %v3520 = vunpack.c.h.b16 %v2838
      %v3521 = vunpack.c.l.b16 %v2839
      %v3522 = vunpack.c.h.b16 %v2839
      %v3523 = vunpack.c.l.b16 %v2840
      %v3524 = vunpack.c.h.b16 %v2840
      %v3525 = vunpack.c.l.b16 %v2841
      %v3526 = vunpack.c.h.b16 %v2841
      %v3527 = vunpack.c.l.b16 %v2842
      %v3528 = vunpack.c.h.b16 %v2842
      %v3529 = vunpack.c.l.b16 %v2843
      %v3530 = vunpack.c.h.b16 %v2843
      %v3531 = vunpack.c.l.b16 %v2844
      %v3532 = vunpack.c.h.b16 %v2844
      %v3533 = vunpack.c.l.b16 %v2845
      %v3534 = vunpack.c.h.b16 %v2845
      %v3535 = vunpack.c.l.b16 %v2846
      %v3536 = vunpack.c.h.b16 %v2846
      %v3537 = vunpack.c.l.b16 %v2847
      %v3538 = vunpack.c.h.b16 %v2847
      %v3539 = vunpack.c.l.b16 %v2848
      %v3540 = vunpack.c.h.b16 %v2848
      %v3541 = vunpack.c.l.b16 %v2849
      %v3542 = vunpack.c.h.b16 %v2849
      %v3543 = vunpack.c.l.b16 %v2850
      %v3544 = vunpack.c.h.b16 %v2850
      %v3545 = vpack.c.b16 %v3101, %v3097
      %v3546 = vpack.c.b16 %v3102, %v3098
      %v3547 = vpack.c.b16 %v3103, %v3099
      %v3548 = vpack.c.b16 %v3104, %v3100
      %v3549 = vpack.c.b16 %v3109, %v3105
      %v3550 = vpack.c.b16 %v3110, %v3106
      %v3551 = vpack.c.b16 %v3111, %v3107
      %v3552 = vpack.c.b16 %v3112, %v3108
      %v3553 = vpack.c.b16 %v3117, %v3113
      %v3554 = vpack.c.b16 %v3118, %v3114
      %v3555 = vpack.c.b16 %v3119, %v3115
      %v3556 = vpack.c.b16 %v3120, %v3116
      %v3557 = vpack.c.b16 %v3125, %v3121
      %v3558 = vpack.c.b16 %v3126, %v3122
      %v3559 = vpack.c.b16 %v3127, %v3123
      %v3560 = vpack.c.b16 %v3128, %v3124
      %v3561 = vpack.c.b16 %v3133, %v3129
      %v3562 = vpack.c.b16 %v3134, %v3130
      %v3563 = vpack.c.b16 %v3135, %v3131
      %v3564 = vpack.c.b16 %v3136, %v3132
      %v3565 = vpack.c.b16 %v3141, %v3137
      %v3566 = vpack.c.b16 %v3142, %v3138
      %v3567 = vpack.c.b16 %v3143, %v3139
      %v3568 = vpack.c.b16 %v3144, %v3140
      %v3569 = vpack.c.b16 %v3149, %v3145
      %v3570 = vpack.c.b16 %v3150, %v3146
      %v3571 = vpack.c.b16 %v3151, %v3147
      %v3572 = vpack.c.b16 %v3152, %v3148
      %v3573 = vpack.c.b16 %v3157, %v3153
      %v3574 = vpack.c.b16 %v3158, %v3154
      %v3575 = vpack.c.b16 %v3159, %v3155
      %v3576 = vpack.c.b16 %v3160, %v3156
      %v3577 = vpack.c.b16 %v3165, %v3161
      %v3578 = vpack.c.b16 %v3166, %v3162
      %v3579 = vpack.c.b16 %v3167, %v3163
      %v3580 = vpack.c.b16 %v3168, %v3164
      %v3581 = vpack.c.b16 %v3173, %v3169
      %v3582 = vpack.c.b16 %v3174, %v3170
      %v3583 = vpack.c.b16 %v3175, %v3171
      %v3584 = vpack.c.b16 %v3176, %v3172
      %v3585 = vpack.c.b16 %v3181, %v3177
      %v3586 = vpack.c.b16 %v3182, %v3178
      %v3587 = vpack.c.b16 %v3183, %v3179
      %v3588 = vpack.c.b16 %v3184, %v3180
      %v3589 = vpack.c.b16 %v3189, %v3185
      %v3590 = vpack.c.b16 %v3190, %v3186
      %v3591 = vpack.c.b16 %v3191, %v3187
      %v3592 = vpack.c.b16 %v3192, %v3188
      %v3593 = vpack.c.b16 %v3197, %v3193
      %v3594 = vpack.c.b16 %v3198, %v3194
      %v3595 = vpack.c.b16 %v3199, %v3195
      %v3596 = vpack.c.b16 %v3200, %v3196
      %v3597 = vpack.c.b16 %v3205, %v3201
      %v3598 = vpack.c.b16 %v3206, %v3202
      %v3599 = vpack.c.b16 %v3207, %v3203
      %v3600 = vpack.c.b16 %v3208, %v3204
      %v3601 = vpack.c.b16 %v3213, %v3209
      %v3602 = vpack.c.b16 %v3214, %v3210
      %v3603 = vpack.c.b16 %v3215, %v3211
      %v3604 = vpack.c.b16 %v3216, %v3212
      %v3605 = vpack.c.b16 %v3221, %v3217
      %v3606 = vpack.c.b16 %v3222, %v3218
      %v3607 = vpack.c.b16 %v3223, %v3219
      %v3608 = vpack.c.b16 %v3224, %v3220
      %v3609 = vpack.c.b16 %v3229, %v3225
      %v3610 = vpack.c.b16 %v3230, %v3226
      %v3611 = vpack.c.b16 %v3231, %v3227
      %v3612 = vpack.c.b16 %v3232, %v3228
      %v3613 = vpack.c.b16 %v3237, %v3233
      %v3614 = vpack.c.b16 %v3238, %v3234
      %v3615 = vpack.c.b16 %v3239, %v3235
      %v3616 = vpack.c.b16 %v3240, %v3236
      %v3617 = vpack.c.b16 %v3245, %v3241
      %v3618 = vpack.c.b16 %v3246, %v3242
      %v3619 = vpack.c.b16 %v3247, %v3243
      %v3620 = vpack.c.b16 %v3248, %v3244
      %v3621 = vpack.c.b16 %v3253, %v3249
      %v3622 = vpack.c.b16 %v3254, %v3250
      %v3623 = vpack.c.b16 %v3255, %v3251
      %v3624 = vpack.c.b16 %v3256, %v3252
      %v3625 = vpack.c.b16 %v3261, %v3257
      %v3626 = vpack.c.b16 %v3262, %v3258
      %v3627 = vpack.c.b16 %v3263, %v3259
      %v3628 = vpack.c.b16 %v3264, %v3260
      %v3629 = vpack.c.b16 %v3269, %v3265
      %v3630 = vpack.c.b16 %v3270, %v3266
      %v3631 = vpack.c.b16 %v3271, %v3267
      %v3632 = vpack.c.b16 %v3272, %v3268
      %v3633 = vpack.c.b16 %v3277, %v3273
      %v3634 = vpack.c.b16 %v3278, %v3274
      %v3635 = vpack.c.b16 %v3279, %v3275
      %v3636 = vpack.c.b16 %v3280, %v3276
      %v3637 = vpack.c.b16 %v3285, %v3281
      %v3638 = vpack.c.b16 %v3286, %v3282
      %v3639 = vpack.c.b16 %v3287, %v3283
      %v3640 = vpack.c.b16 %v3288, %v3284
      %v3641 = vpack.c.b16 %v3293, %v3289
      %v3642 = vpack.c.b16 %v3294, %v3290
      %v3643 = vpack.c.b16 %v3295, %v3291
      %v3644 = vpack.c.b16 %v3296, %v3292
      %v3645 = vpack.c.b16 %v3301, %v3297
      %v3646 = vpack.c.b16 %v3302, %v3298
      %v3647 = vpack.c.b16 %v3303, %v3299
      %v3648 = vpack.c.b16 %v3304, %v3300
      %v3649 = vpack.c.b16 %v3309, %v3305
      %v3650 = vpack.c.b16 %v3310, %v3306
      %v3651 = vpack.c.b16 %v3311, %v3307
      %v3652 = vpack.c.b16 %v3312, %v3308
      %v3653 = vpack.c.b16 %v3317, %v3313
      %v3654 = vpack.c.b16 %v3318, %v3314
      %v3655 = vpack.c.b16 %v3319, %v3315
      %v3656 = vpack.c.b16 %v3320, %v3316
      %v3657 = vpack.c.b16 %v3325, %v3321
      %v3658 = vpack.c.b16 %v3326, %v3322
      %v3659 = vpack.c.b16 %v3327, %v3323
      %v3660 = vpack.c.b16 %v3328, %v3324
      %v3661 = vpack.c.b16 %v3333, %v3329
      %v3662 = vpack.c.b16 %v3334, %v3330
      %v3663 = vpack.c.b16 %v3335, %v3331
      %v3664 = vpack.c.b16 %v3336, %v3332
      %v3665 = vpack.c.b16 %v3341, %v3337
      %v3666 = vpack.c.b16 %v3342, %v3338
      %v3667 = vpack.c.b16 %v3343, %v3339
      %v3668 = vpack.c.b16 %v3344, %v3340
      %v3669 = vpack.c.b16 %v3349, %v3345
      %v3670 = vpack.c.b16 %v3350, %v3346
      %v3671 = vpack.c.b16 %v3351, %v3347
      %v3672 = vpack.c.b16 %v3352, %v3348
      %v3673 = vpack.c.b16 %v3357, %v3353
      %v3674 = vpack.c.b16 %v3358, %v3354
      %v3675 = vpack.c.b16 %v3359, %v3355
      %v3676 = vpack.c.b16 %v3360, %v3356
      %v3677 = vpack.c.b16 %v3365, %v3361
      %v3678 = vpack.c.b16 %v3366, %v3362
      %v3679 = vpack.c.b16 %v3367, %v3363
      %v3680 = vpack.c.b16 %v3368, %v3364
      %v3681 = vpack.c.b16 %v3373, %v3369
      %v3682 = vpack.c.b16 %v3374, %v3370
      %v3683 = vpack.c.b16 %v3375, %v3371
      %v3684 = vpack.c.b16 %v3376, %v3372
      %v3685 = vpack.c.b16 %v3381, %v3377
      %v3686 = vpack.c.b16 %v3382, %v3378
      %v3687 = vpack.c.b16 %v3383, %v3379
      %v3688 = vpack.c.b16 %v3384, %v3380
      %v3689 = vpack.c.b16 %v3389, %v3385
      %v3690 = vpack.c.b16 %v3390, %v3386
      %v3691 = vpack.c.b16 %v3391, %v3387
      %v3692 = vpack.c.b16 %v3392, %v3388
      %v3693 = vpack.c.b16 %v3397, %v3393
      %v3694 = vpack.c.b16 %v3398, %v3394
      %v3695 = vpack.c.b16 %v3399, %v3395
      %v3696 = vpack.c.b16 %v3400, %v3396
      %v3697 = vpack.c.b16 %v3405, %v3401
      %v3698 = vpack.c.b16 %v3406, %v3402
      %v3699 = vpack.c.b16 %v3407, %v3403
      %v3700 = vpack.c.b16 %v3408, %v3404
      %v3701 = vpack.c.b16 %v3413, %v3409
      %v3702 = vpack.c.b16 %v3414, %v3410
      %v3703 = vpack.c.b16 %v3415, %v3411
      %v3704 = vpack.c.b16 %v3416, %v3412
      %v3705 = vpack.c.b16 %v3421, %v3417
      %v3706 = vpack.c.b16 %v3422, %v3418
      %v3707 = vpack.c.b16 %v3423, %v3419
      %v3708 = vpack.c.b16 %v3424, %v3420
      %v3709 = vpack.c.b16 %v3429, %v3425
      %v3710 = vpack.c.b16 %v3430, %v3426
      %v3711 = vpack.c.b16 %v3431, %v3427
      %v3712 = vpack.c.b16 %v3432, %v3428
      %v3713 = vpack.c.b16 %v3437, %v3433
      %v3714 = vpack.c.b16 %v3438, %v3434
      %v3715 = vpack.c.b16 %v3439, %v3435
      %v3716 = vpack.c.b16 %v3440, %v3436
      %v3717 = vpack.c.b16 %v3445, %v3441
      %v3718 = vpack.c.b16 %v3446, %v3442
      %v3719 = vpack.c.b16 %v3447, %v3443
      %v3720 = vpack.c.b16 %v3448, %v3444
      %v3721 = vpack.c.b16 %v3453, %v3449
      %v3722 = vpack.c.b16 %v3454, %v3450
      %v3723 = vpack.c.b16 %v3455, %v3451
      %v3724 = vpack.c.b16 %v3456, %v3452
      %v3725 = vpack.c.b16 %v3461, %v3457
      %v3726 = vpack.c.b16 %v3462, %v3458
      %v3727 = vpack.c.b16 %v3463, %v3459
      %v3728 = vpack.c.b16 %v3464, %v3460
      %v3729 = vpack.c.b16 %v3469, %v3465
      %v3730 = vpack.c.b16 %v3470, %v3466
      %v3731 = vpack.c.b16 %v3471, %v3467
      %v3732 = vpack.c.b16 %v3472, %v3468
      %v3733 = vpack.c.b16 %v3477, %v3473
      %v3734 = vpack.c.b16 %v3478, %v3474
      %v3735 = vpack.c.b16 %v3479, %v3475
      %v3736 = vpack.c.b16 %v3480, %v3476
      %v3737 = vpack.c.b16 %v3485, %v3481
      %v3738 = vpack.c.b16 %v3486, %v3482
      %v3739 = vpack.c.b16 %v3487, %v3483
      %v3740 = vpack.c.b16 %v3488, %v3484
      %v3741 = vpack.c.b16 %v3493, %v3489
      %v3742 = vpack.c.b16 %v3494, %v3490
      %v3743 = vpack.c.b16 %v3495, %v3491
      %v3744 = vpack.c.b16 %v3496, %v3492
      %v3745 = vpack.c.b16 %v3501, %v3497
      %v3746 = vpack.c.b16 %v3502, %v3498
      %v3747 = vpack.c.b16 %v3503, %v3499
      %v3748 = vpack.c.b16 %v3504, %v3500
      %v3749 = vpack.c.b16 %v3509, %v3505
      %v3750 = vpack.c.b16 %v3510, %v3506
      %v3751 = vpack.c.b16 %v3511, %v3507
      %v3752 = vpack.c.b16 %v3512, %v3508
      %v3753 = vpack.c.b16 %v3517, %v3513
      %v3754 = vpack.c.b16 %v3518, %v3514
      %v3755 = vpack.c.b16 %v3519, %v3515
      %v3756 = vpack.c.b16 %v3520, %v3516
      %v3757 = vpack.c.b16 %v3525, %v3521
      %v3758 = vpack.c.b16 %v3526, %v3522
      %v3759 = vpack.c.b16 %v3527, %v3523
      %v3760 = vpack.c.b16 %v3528, %v3524
      %v3761 = vpack.c.b16 %v3533, %v3529
      %v3762 = vpack.c.b16 %v3534, %v3530
      %v3763 = vpack.c.b16 %v3535, %v3531
      %v3764 = vpack.c.b16 %v3536, %v3532
      %v3765 = vpack.c.b16 %v3541, %v3537
      %v3766 = vpack.c.b16 %v3542, %v3538
      %v3767 = vpack.c.b16 %v3543, %v3539
      %v3768 = vpack.c.b16 %v3544, %v3540
      %3993 = vmatprep.subr.bf16.mxu0 %v3546
      %3994 = vmatpush1.bf16.msra.mxu0 %v3545
      %3995 = vmatprep.subr.bf16.mxu0 %v3550
      %3996 = vmatpush1.bf16.msra.mxu0 %v3549
      %3997 = vmatprep.subr.bf16.mxu0 %v3554
      %3998 = vmatpush1.bf16.msra.mxu0 %v3553
      %3999 = vmatprep.subr.bf16.mxu0 %v3558
      %4000 = vmatpush1.bf16.msra.mxu0 %v3557
      %4001 = vmatprep.subr.bf16.mxu0 %v3562
      %4002 = vmatpush1.bf16.msra.mxu0 %v3561
      %4003 = vmatprep.subr.bf16.mxu0 %v3566
      %4004 = vmatpush1.bf16.msra.mxu0 %v3565
      %4005 = vmatprep.subr.bf16.mxu0 %v3570
      %4006 = vmatpush1.bf16.msra.mxu0 %v3569
      %4007 = vmatprep.subr.bf16.mxu0 %v3574
      %4008 = vmatpush1.bf16.msra.mxu0 %v3573
      %4009 = vmatprep.subr.bf16.mxu0 %v3578
      %4010 = vmatpush1.bf16.msra.mxu0 %v3577
      %4011 = vmatprep.subr.bf16.mxu0 %v3582
      %4012 = vmatpush1.bf16.msra.mxu0 %v3581
      %4013 = vmatprep.subr.bf16.mxu0 %v3586
      %4014 = vmatpush1.bf16.msra.mxu0 %v3585
      %4015 = vmatprep.subr.bf16.mxu0 %v3590
      %4016 = vmatpush1.bf16.msra.mxu0 %v3589
      %4017 = vmatprep.subr.bf16.mxu0 %v3594
      %4018 = vmatpush1.bf16.msra.mxu0 %v3593
      %4019 = vmatprep.subr.bf16.mxu0 %v3598
      %4020 = vmatpush1.bf16.msra.mxu0 %v3597
      %4021 = vmatprep.subr.bf16.mxu0 %v3602
      %4022 = vmatpush1.bf16.msra.mxu0 %v3601
      %4023 = vmatprep.subr.bf16.mxu0 %v3606
      %4024 = vmatpush1.bf16.msra.mxu0 %v3605
      %4025 = vmatprep.mubr.bf16.mxu0 %v2516
      %4026 = vmatmul.mubr.bf16.gmra.mrb[0].mxu0 %v2515
      %v4027 = vpop.f32.mrb[0].mxu0
      %v4028 = vadd.f32 %v2856, %v4027
      %v4029 = vpop.f32.mrb[0].mxu0
      %v4030 = vadd.f32 %v2860, %v4029
      %v4031 = vpop.f32.mrb[0].mxu0
      %v4032 = vadd.f32 %v2856, %v4031
      %v4033 = vpop.f32.mrb[0].mxu0
      %v4034 = vadd.f32 %v2860, %v4033
      %4035 = vmatprep.mubr.bf16.mxu0 %v2523
      %4036 = vmatmul.mubr.bf16.gmra.mrb[0].mxu0 %v2522
      %v4037 = vpop.f32.mrb[0].mxu0
      %v4038 = vadd.f32 %v2856, %v4037
      %v4039 = vpop.f32.mrb[0].mxu0
      %v4040 = vadd.f32 %v2860, %v4039
      %v4041 = vpop.f32.mrb[0].mxu0
      %v4042 = vadd.f32 %v2856, %v4041
      %v4043 = vpop.f32.mrb[0].mxu0
      %v4044 = vadd.f32 %v2860, %v4043
      %4045 = vmatprep.mubr.bf16.mxu0 %v2530
      %4046 = vmatmul.mubr.bf16.gmra.mrb[0].mxu0 %v2529
      %v4047 = vpop.f32.mrb[0].mxu0
      %v4048 = vadd.f32 %v2856, %v4047
      %v4049 = vpop.f32.mrb[0].mxu0
      %v4050 = vadd.f32 %v2860, %v4049
      %v4051 = vpop.f32.mrb[0].mxu0
      %v4052 = vadd.f32 %v2856, %v4051
      %v4053 = vpop.f32.mrb[0].mxu0
      %v4054 = vadd.f32 %v2860, %v4053
      %4055 = vmatprep.mubr.bf16.mxu0 %v2537
      %4056 = vmatmul.mubr.bf16.gmra.mrb[0].mxu0 %v2536
      %v4057 = vpop.f32.mrb[0].mxu0
      %v4058 = vadd.f32 %v2856, %v4057
      %v4059 = vpop.f32.mrb[0].mxu0
      %v4060 = vadd.f32 %v2860, %v4059
      %v4061 = vpop.f32.mrb[0].mxu0
      %v4062 = vadd.f32 %v2856, %v4061
      %v4063 = vpop.f32.mrb[0].mxu0
      %v4064 = vadd.f32 %v2860, %v4063
      %4065 = vmatprep.mubr.bf16.mxu0 %v2544
      %4066 = vmatmul.mubr.bf16.gmra.mrb[0].mxu0 %v2543
      %v4067 = vpop.f32.mrb[0].mxu0
      %v4068 = vadd.f32 %v2856, %v4067
      %v4069 = vpop.f32.mrb[0].mxu0
      %v4070 = vadd.f32 %v2860, %v4069
      %v4071 = vpop.f32.mrb[0].mxu0
      %v4072 = vadd.f32 %v2856, %v4071
      %v4073 = vpop.f32.mrb[0].mxu0
      %v4074 = vadd.f32 %v2860, %v4073
      %4075 = vmatprep.mubr.bf16.mxu0 %v2551
      %4076 = vmatmul.mubr.bf16.gmra.mrb[0].mxu0 %v2550
      %v4077 = vpop.f32.mrb[0].mxu0
      %v4078 = vadd.f32 %v2856, %v4077
      %v4079 = vpop.f32.mrb[0].mxu0
      %v4080 = vadd.f32 %v2860, %v4079
      %v4081 = vpop.f32.mrb[0].mxu0
      %v4082 = vadd.f32 %v2856, %v4081
      %v4083 = vpop.f32.mrb[0].mxu0
      %v4084 = vadd.f32 %v2860, %v4083
      %4085 = vmatprep.mubr.bf16.mxu0 %v2558
      %4086 = vmatmul.mubr.bf16.gmra.mrb[0].mxu0 %v2557
      %v4087 = vpop.f32.mrb[0].mxu0
      %v4088 = vadd.f32 %v2856, %v4087
      %v4089 = vpop.f32.mrb[0].mxu0
      %v4090 = vadd.f32 %v2860, %v4089
      %v4091 = vpop.f32.mrb[0].mxu0
      %v4092 = vadd.f32 %v2856, %v4091
      %v4093 = vpop.f32.mrb[0].mxu0
      %v4094 = vadd.f32 %v2860, %v4093
      %4095 = vmatprep.mubr.bf16.mxu0 %v2565
      %4096 = vmatmul.mubr.bf16.gmra.mrb[0].mxu0 %v2564
      %v4097 = vpop.f32.mrb[0].mxu0
      %v4098 = vadd.f32 %v2856, %v4097
      %v4099 = vpop.f32.mrb[0].mxu0
      %v4100 = vadd.f32 %v2860, %v4099
      %v4101 = vpop.f32.mrb[0].mxu0
      %v4102 = vadd.f32 %v2856, %v4101
      %v4103 = vpop.f32.mrb[0].mxu0
      %v4104 = vadd.f32 %v2860, %v4103
      %4105 = vmatprep.mubr.bf16.mxu0 %v2572
      %4106 = vmatmul.mubr.bf16.gmra.mrb[0].mxu0 %v2571
      %v4107 = vpop.f32.mrb[0].mxu0
      %v4108 = vadd.f32 %v2856, %v4107
      %v4109 = vpop.f32.mrb[0].mxu0
      %v4110 = vadd.f32 %v2860, %v4109
      %v4111 = vpop.f32.mrb[0].mxu0
      %v4112 = vadd.f32 %v2856, %v4111
      %v4113 = vpop.f32.mrb[0].mxu0
      %v4114 = vadd.f32 %v2860, %v4113
      %4115 = vmatprep.mubr.bf16.mxu0 %v2579
      %4116 = vmatmul.mubr.bf16.gmra.mrb[0].mxu0 %v2578
      %v4117 = vpop.f32.mrb[0].mxu0
      %v4118 = vadd.f32 %v2856, %v4117
      %v4119 = vpop.f32.mrb[0].mxu0
      %v4120 = vadd.f32 %v2860, %v4119
      %v4121 = vpop.f32.mrb[0].mxu0
      %v4122 = vadd.f32 %v2856, %v4121
      %v4123 = vpop.f32.mrb[0].mxu0
      %v4124 = vadd.f32 %v2860, %v4123
      %4125 = vmatprep.mubr.bf16.mxu0 %v2586
      %4126 = vmatmul.mubr.bf16.gmra.mrb[0].mxu0 %v2585
      %v4127 = vpop.f32.mrb[0].mxu0
      %v4128 = vadd.f32 %v2856, %v4127
      %v4129 = vpop.f32.mrb[0].mxu0
      %v4130 = vadd.f32 %v2860, %v4129
      %v4131 = vpop.f32.mrb[0].mxu0
      %v4132 = vadd.f32 %v2856, %v4131
      %v4133 = vpop.f32.mrb[0].mxu0
      %v4134 = vadd.f32 %v2860, %v4133
      %4135 = vmatprep.mubr.bf16.mxu0 %v2593
      %4136 = vmatmul.mubr.bf16.gmra.mrb[0].mxu0 %v2592
      %v4137 = vpop.f32.mrb[0].mxu0
      %v4138 = vadd.f32 %v2856, %v4137
      %v4139 = vpop.f32.mrb[0].mxu0
      %v4140 = vadd.f32 %v2860, %v4139
      %v4141 = vpop.f32.mrb[0].mxu0
      %v4142 = vadd.f32 %v2856, %v4141
      %v4143 = vpop.f32.mrb[0].mxu0
      %v4144 = vadd.f32 %v2860, %v4143
      %4145 = vmatprep.mubr.bf16.mxu0 %v2600
      %4146 = vmatmul.mubr.bf16.gmra.mrb[0].mxu0 %v2599
      %v4147 = vpop.f32.mrb[0].mxu0
      %v4148 = vadd.f32 %v2856, %v4147
      %v4149 = vpop.f32.mrb[0].mxu0
      %v4150 = vadd.f32 %v2860, %v4149
      %v4151 = vpop.f32.mrb[0].mxu0
      %v4152 = vadd.f32 %v2856, %v4151
      %v4153 = vpop.f32.mrb[0].mxu0
      %v4154 = vadd.f32 %v2860, %v4153
      %4155 = vmatprep.mubr.bf16.mxu0 %v2607
      %4156 = vmatmul.mubr.bf16.gmra.mrb[0].mxu0 %v2606
      %v4157 = vpop.f32.mrb[0].mxu0
      %v4158 = vadd.f32 %v2856, %v4157
      %v4159 = vpop.f32.mrb[0].mxu0
      %v4160 = vadd.f32 %v2860, %v4159
      %v4161 = vpop.f32.mrb[0].mxu0
      %v4162 = vadd.f32 %v2856, %v4161
      %v4163 = vpop.f32.mrb[0].mxu0
      %v4164 = vadd.f32 %v2860, %v4163
      %4165 = vmatprep.mubr.bf16.mxu0 %v2614
      %4166 = vmatmul.mubr.bf16.gmra.mrb[0].mxu0 %v2613
      %v4167 = vpop.f32.mrb[0].mxu0
      %v4168 = vadd.f32 %v2856, %v4167
      %v4169 = vpop.f32.mrb[0].mxu0
      %v4170 = vadd.f32 %v2860, %v4169
      %v4171 = vpop.f32.mrb[0].mxu0
      %v4172 = vadd.f32 %v2856, %v4171
      %v4173 = vpop.f32.mrb[0].mxu0
      %v4174 = vadd.f32 %v2860, %v4173
      %4175 = vmatprep.mubr.bf16.mxu0 %v2621
      %4176 = vmatmul.mubr.bf16.gmra.mrb[0].mxu0 %v2620
      %v4177 = vpop.f32.mrb[0].mxu0
      %v4178 = vadd.f32 %v2856, %v4177
      %v4179 = vpop.f32.mrb[0].mxu0
      %v4180 = vadd.f32 %v2860, %v4179
      %v4181 = vpop.f32.mrb[0].mxu0
      %v4182 = vadd.f32 %v2856, %v4181
      %v4183 = vpop.f32.mrb[0].mxu0
      %v4184 = vadd.f32 %v2860, %v4183
      %4185 = vdwg.mxu0
      %4186 = vmatprep.subr.bf16.mxu0 %v3610
      %4187 = vmatpush1.bf16.msra.mxu0 %v3609
      %4188 = vmatprep.subr.bf16.mxu0 %v3614
      %4189 = vmatpush1.bf16.msra.mxu0 %v3613
      %4190 = vmatprep.subr.bf16.mxu0 %v3618
      %4191 = vmatpush1.bf16.msra.mxu0 %v3617
      %4192 = vmatprep.subr.bf16.mxu0 %v3622
      %4193 = vmatpush1.bf16.msra.mxu0 %v3621
      %4194 = vmatprep.subr.bf16.mxu0 %v3626
      %4195 = vmatpush1.bf16.msra.mxu0 %v3625
      %4196 = vmatprep.subr.bf16.mxu0 %v3630
      %4197 = vmatpush1.bf16.msra.mxu0 %v3629
      %4198 = vmatprep.subr.bf16.mxu0 %v3634
      %4199 = vmatpush1.bf16.msra.mxu0 %v3633
      %4200 = vmatprep.subr.bf16.mxu0 %v3638
      %4201 = vmatpush1.bf16.msra.mxu0 %v3637
      %4202 = vmatprep.subr.bf16.mxu0 %v3642
      %4203 = vmatpush1.bf16.msra.mxu0 %v3641
      %4204 = vmatprep.subr.bf16.mxu0 %v3646
      %4205 = vmatpush1.bf16.msra.mxu0 %v3645
      %4206 = vmatprep.subr.bf16.mxu0 %v3650
      %4207 = vmatpush1.bf16.msra.mxu0 %v3649
      %4208 = vmatprep.subr.bf16.mxu0 %v3654
      %4209 = vmatpush1.bf16.msra.mxu0 %v3653
      %4210 = vmatprep.subr.bf16.mxu0 %v3658
      %4211 = vmatpush1.bf16.msra.mxu0 %v3657
      %4212 = vmatprep.subr.bf16.mxu0 %v3662
      %4213 = vmatpush1.bf16.msra.mxu0 %v3661
      %4214 = vmatprep.subr.bf16.mxu0 %v3666
      %4215 = vmatpush1.bf16.msra.mxu0 %v3665
      %4216 = vmatprep.subr.bf16.mxu0 %v3670
      %4217 = vmatpush1.bf16.msra.mxu0 %v3669
      %4218 = vmatprep.mubr.bf16.mxu0 %v2518
      %4219 = vmatmul.mubr.bf16.gmra.mrb[0].mxu0 %v2517
      %v4220 = vpop.f32.mrb[0].mxu0
      %v4221 = vadd.f32 %v4028, %v4220
      %v4222 = vpop.f32.mrb[0].mxu0
      %v4223 = vadd.f32 %v4030, %v4222
      %v4224 = vpop.f32.mrb[0].mxu0
      %v4225 = vadd.f32 %v4032, %v4224
      %v4226 = vpop.f32.mrb[0].mxu0
      %v4227 = vadd.f32 %v4034, %v4226
      %4228 = vmatprep.mubr.bf16.mxu0 %v2525
      %4229 = vmatmul.mubr.bf16.gmra.mrb[0].mxu0 %v2524
      %v4230 = vpop.f32.mrb[0].mxu0
      %v4231 = vadd.f32 %v4038, %v4230
      %v4232 = vpop.f32.mrb[0].mxu0
      %v4233 = vadd.f32 %v4040, %v4232
      %v4234 = vpop.f32.mrb[0].mxu0
      %v4235 = vadd.f32 %v4042, %v4234
      %v4236 = vpop.f32.mrb[0].mxu0
      %v4237 = vadd.f32 %v4044, %v4236
      %4238 = vmatprep.mubr.bf16.mxu0 %v2532
      %4239 = vmatmul.mubr.bf16.gmra.mrb[0].mxu0 %v2531
      %v4240 = vpop.f32.mrb[0].mxu0
      %v4241 = vadd.f32 %v4048, %v4240
      %v4242 = vpop.f32.mrb[0].mxu0
      %v4243 = vadd.f32 %v4050, %v4242
      %v4244 = vpop.f32.mrb[0].mxu0
      %v4245 = vadd.f32 %v4052, %v4244
      %v4246 = vpop.f32.mrb[0].mxu0
      %v4247 = vadd.f32 %v4054, %v4246
      %4248 = vmatprep.mubr.bf16.mxu0 %v2539
      %4249 = vmatmul.mubr.bf16.gmra.mrb[0].mxu0 %v2538
      %v4250 = vpop.f32.mrb[0].mxu0
      %v4251 = vadd.f32 %v4058, %v4250
      %v4252 = vpop.f32.mrb[0].mxu0
      %v4253 = vadd.f32 %v4060, %v4252
      %v4254 = vpop.f32.mrb[0].mxu0
      %v4255 = vadd.f32 %v4062, %v4254
      %v4256 = vpop.f32.mrb[0].mxu0
      %v4257 = vadd.f32 %v4064, %v4256
      %4258 = vmatprep.mubr.bf16.mxu0 %v2546
      %4259 = vmatmul.mubr.bf16.gmra.mrb[0].mxu0 %v2545
      %v4260 = vpop.f32.mrb[0].mxu0
      %v4261 = vadd.f32 %v4068, %v4260
      %v4262 = vpop.f32.mrb[0].mxu0
      %v4263 = vadd.f32 %v4070, %v4262
      %v4264 = vpop.f32.mrb[0].mxu0
      %v4265 = vadd.f32 %v4072, %v4264
      %v4266 = vpop.f32.mrb[0].mxu0
      %v4267 = vadd.f32 %v4074, %v4266
      %4268 = vmatprep.mubr.bf16.mxu0 %v2553
      %4269 = vmatmul.mubr.bf16.gmra.mrb[0].mxu0 %v2552
      %v4270 = vpop.f32.mrb[0].mxu0
      %v4271 = vadd.f32 %v4078, %v4270
      %v4272 = vpop.f32.mrb[0].mxu0
      %v4273 = vadd.f32 %v4080, %v4272
      %v4274 = vpop.f32.mrb[0].mxu0
      %v4275 = vadd.f32 %v4082, %v4274
      %v4276 = vpop.f32.mrb[0].mxu0
      %v4277 = vadd.f32 %v4084, %v4276
      %4278 = vmatprep.mubr.bf16.mxu0 %v2560
      %4279 = vmatmul.mubr.bf16.gmra.mrb[0].mxu0 %v2559
      %v4280 = vpop.f32.mrb[0].mxu0
      %v4281 = vadd.f32 %v4088, %v4280
      %v4282 = vpop.f32.mrb[0].mxu0
      %v4283 = vadd.f32 %v4090, %v4282
      %v4284 = vpop.f32.mrb[0].mxu0
      %v4285 = vadd.f32 %v4092, %v4284
      %v4286 = vpop.f32.mrb[0].mxu0
      %v4287 = vadd.f32 %v4094, %v4286
      %4288 = vmatprep.mubr.bf16.mxu0 %v2567
      %4289 = vmatmul.mubr.bf16.gmra.mrb[0].mxu0 %v2566
      %v4290 = vpop.f32.mrb[0].mxu0
      %v4291 = vadd.f32 %v4098, %v4290
      %v4292 = vpop.f32.mrb[0].mxu0
      %v4293 = vadd.f32 %v4100, %v4292
      %v4294 = vpop.f32.mrb[0].mxu0
      %v4295 = vadd.f32 %v4102, %v4294
      %v4296 = vpop.f32.mrb[0].mxu0
      %v4297 = vadd.f32 %v4104, %v4296
      %4298 = vmatprep.mubr.bf16.mxu0 %v2574
      %4299 = vmatmul.mubr.bf16.gmra.mrb[0].mxu0 %v2573
      %v4300 = vpop.f32.mrb[0].mxu0
      %v4301 = vadd.f32 %v4108, %v4300
      %v4302 = vpop.f32.mrb[0].mxu0
      %v4303 = vadd.f32 %v4110, %v4302
      %v4304 = vpop.f32.mrb[0].mxu0
      %v4305 = vadd.f32 %v4112, %v4304
      %v4306 = vpop.f32.mrb[0].mxu0
      %v4307 = vadd.f32 %v4114, %v4306
      %4308 = vmatprep.mubr.bf16.mxu0 %v2581
      %4309 = vmatmul.mubr.bf16.gmra.mrb[0].mxu0 %v2580
      %v4310 = vpop.f32.mrb[0].mxu0
      %v4311 = vadd.f32 %v4118, %v4310
      %v4312 = vpop.f32.mrb[0].mxu0
      %v4313 = vadd.f32 %v4120, %v4312
      %v4314 = vpop.f32.mrb[0].mxu0
      %v4315 = vadd.f32 %v4122, %v4314
      %v4316 = vpop.f32.mrb[0].mxu0
      %v4317 = vadd.f32 %v4124, %v4316
      %4318 = vmatprep.mubr.bf16.mxu0 %v2588
      %4319 = vmatmul.mubr.bf16.gmra.mrb[0].mxu0 %v2587
      %v4320 = vpop.f32.mrb[0].mxu0
      %v4321 = vadd.f32 %v4128, %v4320
      %v4322 = vpop.f32.mrb[0].mxu0
      %v4323 = vadd.f32 %v4130, %v4322
      %v4324 = vpop.f32.mrb[0].mxu0
      %v4325 = vadd.f32 %v4132, %v4324
      %v4326 = vpop.f32.mrb[0].mxu0
      %v4327 = vadd.f32 %v4134, %v4326
      %4328 = vmatprep.mubr.bf16.mxu0 %v2595
      %4329 = vmatmul.mubr.bf16.gmra.mrb[0].mxu0 %v2594
      %v4330 = vpop.f32.mrb[0].mxu0
      %v4331 = vadd.f32 %v4138, %v4330
      %v4332 = vpop.f32.mrb[0].mxu0
      %v4333 = vadd.f32 %v4140, %v4332
      %v4334 = vpop.f32.mrb[0].mxu0
      %v4335 = vadd.f32 %v4142, %v4334
      %v4336 = vpop.f32.mrb[0].mxu0
      %v4337 = vadd.f32 %v4144, %v4336
      %4338 = vmatprep.mubr.bf16.mxu0 %v2602
      %4339 = vmatmul.mubr.bf16.gmra.mrb[0].mxu0 %v2601
      %v4340 = vpop.f32.mrb[0].mxu0
      %v4341 = vadd.f32 %v4148, %v4340
      %v4342 = vpop.f32.mrb[0].mxu0
      %v4343 = vadd.f32 %v4150, %v4342
      %v4344 = vpop.f32.mrb[0].mxu0
      %v4345 = vadd.f32 %v4152, %v4344
      %v4346 = vpop.f32.mrb[0].mxu0
      %v4347 = vadd.f32 %v4154, %v4346
      %4348 = vmatprep.mubr.bf16.mxu0 %v2609
      %4349 = vmatmul.mubr.bf16.gmra.mrb[0].mxu0 %v2608
      %v4350 = vpop.f32.mrb[0].mxu0
      %v4351 = vadd.f32 %v4158, %v4350
      %v4352 = vpop.f32.mrb[0].mxu0
      %v4353 = vadd.f32 %v4160, %v4352
      %v4354 = vpop.f32.mrb[0].mxu0
      %v4355 = vadd.f32 %v4162, %v4354
      %v4356 = vpop.f32.mrb[0].mxu0
      %v4357 = vadd.f32 %v4164, %v4356
      %4358 = vmatprep.mubr.bf16.mxu0 %v2616
      %4359 = vmatmul.mubr.bf16.gmra.mrb[0].mxu0 %v2615
      %v4360 = vpop.f32.mrb[0].mxu0
      %v4361 = vadd.f32 %v4168, %v4360
      %v4362 = vpop.f32.mrb[0].mxu0
      %v4363 = vadd.f32 %v4170, %v4362
      %v4364 = vpop.f32.mrb[0].mxu0
      %v4365 = vadd.f32 %v4172, %v4364
      %v4366 = vpop.f32.mrb[0].mxu0
      %v4367 = vadd.f32 %v4174, %v4366
      %4368 = vmatprep.mubr.bf16.mxu0 %v2623
      %4369 = vmatmul.mubr.bf16.gmra.mrb[0].mxu0 %v2622
      %v4370 = vpop.f32.mrb[0].mxu0
      %v4371 = vadd.f32 %v4178, %v4370
      %v4372 = vpop.f32.mrb[0].mxu0
      %v4373 = vadd.f32 %v4180, %v4372
      %v4374 = vpop.f32.mrb[0].mxu0
      %v4375 = vadd.f32 %v4182, %v4374
      %v4376 = vpop.f32.mrb[0].mxu0
      %v4377 = vadd.f32 %v4184, %v4376
      %4378 = vdwg.mxu0
      %4379 = vmatprep.subr.bf16.mxu0 %v3674
      %4380 = vmatpush1.bf16.msra.mxu0 %v3673
      %4381 = vmatprep.subr.bf16.mxu0 %v3678
      %4382 = vmatpush1.bf16.msra.mxu0 %v3677
      %4383 = vmatprep.subr.bf16.mxu0 %v3682
      %4384 = vmatpush1.bf16.msra.mxu0 %v3681
      %4385 = vmatprep.subr.bf16.mxu0 %v3686
      %4386 = vmatpush1.bf16.msra.mxu0 %v3685
      %4387 = vmatprep.subr.bf16.mxu0 %v3690
      %4388 = vmatpush1.bf16.msra.mxu0 %v3689
      %4389 = vmatprep.subr.bf16.mxu0 %v3694
      %4390 = vmatpush1.bf16.msra.mxu0 %v3693
      %4391 = vmatprep.subr.bf16.mxu0 %v3698
      %4392 = vmatpush1.bf16.msra.mxu0 %v3697
      %4393 = vmatprep.subr.bf16.mxu0 %v3702
      %4394 = vmatpush1.bf16.msra.mxu0 %v3701
      %4395 = vmatprep.subr.bf16.mxu0 %v3706
      %4396 = vmatpush1.bf16.msra.mxu0 %v3705
      %4397 = vmatprep.subr.bf16.mxu0 %v3710
      %4398 = vmatpush1.bf16.msra.mxu0 %v3709
      %4399 = vmatprep.subr.bf16.mxu0 %v3714
      %4400 = vmatpush1.bf16.msra.mxu0 %v3713
      %4401 = vmatprep.subr.bf16.mxu0 %v3718
      %4402 = vmatpush1.bf16.msra.mxu0 %v3717
      %4403 = vmatprep.subr.bf16.mxu0 %v3722
      %4404 = vmatpush1.bf16.msra.mxu0 %v3721
      %4405 = vmatprep.subr.bf16.mxu0 %v3726
      %4406 = vmatpush1.bf16.msra.mxu0 %v3725
      %4407 = vmatprep.subr.bf16.mxu0 %v3730
      %4408 = vmatpush1.bf16.msra.mxu0 %v3729
      %4409 = vmatprep.subr.bf16.mxu0 %v3734
      %4410 = vmatpush1.bf16.msra.mxu0 %v3733
      %4411 = vmatprep.mubr.bf16.mxu0 %v2520
      %4412 = vmatmul.mubr.bf16.gmra.mrb[0].mxu0 %v2519
      %v4413 = vpop.f32.mrb[0].mxu0
      %v4414 = vadd.f32 %v4221, %v4413
      %v4415 = vpop.f32.mrb[0].mxu0
      %v4416 = vadd.f32 %v4223, %v4415
      %v4417 = vpop.f32.mrb[0].mxu0
      %v4418 = vadd.f32 %v4225, %v4417
      %v4419 = vpop.f32.mrb[0].mxu0
      %v4420 = vadd.f32 %v4227, %v4419
      %4421 = vmatprep.mubr.bf16.mxu0 %v2527
      %4422 = vmatmul.mubr.bf16.gmra.mrb[0].mxu0 %v2526
      %v4423 = vpop.f32.mrb[0].mxu0
      %v4424 = vadd.f32 %v4231, %v4423
      %v4425 = vpop.f32.mrb[0].mxu0
      %v4426 = vadd.f32 %v4233, %v4425
      %v4427 = vpop.f32.mrb[0].mxu0
      %v4428 = vadd.f32 %v4235, %v4427
      %v4429 = vpop.f32.mrb[0].mxu0
      %v4430 = vadd.f32 %v4237, %v4429
      %4431 = vmatprep.mubr.bf16.mxu0 %v2534
      %4432 = vmatmul.mubr.bf16.gmra.mrb[0].mxu0 %v2533
      %v4433 = vpop.f32.mrb[0].mxu0
      %v4434 = vadd.f32 %v4241, %v4433
      %v4435 = vpop.f32.mrb[0].mxu0
      %v4436 = vadd.f32 %v4243, %v4435
      %v4437 = vpop.f32.mrb[0].mxu0
      %v4438 = vadd.f32 %v4245, %v4437
      %v4439 = vpop.f32.mrb[0].mxu0
      %v4440 = vadd.f32 %v4247, %v4439
      %4441 = vmatprep.mubr.bf16.mxu0 %v2541
      %4442 = vmatmul.mubr.bf16.gmra.mrb[0].mxu0 %v2540
      %v4443 = vpop.f32.mrb[0].mxu0
      %v4444 = vadd.f32 %v4251, %v4443
      %v4445 = vpop.f32.mrb[0].mxu0
      %v4446 = vadd.f32 %v4253, %v4445
      %v4447 = vpop.f32.mrb[0].mxu0
      %v4448 = vadd.f32 %v4255, %v4447
      %v4449 = vpop.f32.mrb[0].mxu0
      %v4450 = vadd.f32 %v4257, %v4449
      %4451 = vmatprep.mubr.bf16.mxu0 %v2548
      %4452 = vmatmul.mubr.bf16.gmra.mrb[0].mxu0 %v2547
      %v4453 = vpop.f32.mrb[0].mxu0
      %v4454 = vadd.f32 %v4261, %v4453
      %v4455 = vpop.f32.mrb[0].mxu0
      %v4456 = vadd.f32 %v4263, %v4455
      %v4457 = vpop.f32.mrb[0].mxu0
      %v4458 = vadd.f32 %v4265, %v4457
      %v4459 = vpop.f32.mrb[0].mxu0
      %v4460 = vadd.f32 %v4267, %v4459
      %4461 = vmatprep.mubr.bf16.mxu0 %v2555
      %4462 = vmatmul.mubr.bf16.gmra.mrb[0].mxu0 %v2554
      %v4463 = vpop.f32.mrb[0].mxu0
      %v4464 = vadd.f32 %v4271, %v4463
      %v4465 = vpop.f32.mrb[0].mxu0
      %v4466 = vadd.f32 %v4273, %v4465
      %v4467 = vpop.f32.mrb[0].mxu0
      %v4468 = vadd.f32 %v4275, %v4467
      %v4469 = vpop.f32.mrb[0].mxu0
      %v4470 = vadd.f32 %v4277, %v4469
      %4471 = vmatprep.mubr.bf16.mxu0 %v2562
      %4472 = vmatmul.mubr.bf16.gmra.mrb[0].mxu0 %v2561
      %v4473 = vpop.f32.mrb[0].mxu0
      %v4474 = vadd.f32 %v4281, %v4473
      %v4475 = vpop.f32.mrb[0].mxu0
      %v4476 = vadd.f32 %v4283, %v4475
      %v4477 = vpop.f32.mrb[0].mxu0
      %v4478 = vadd.f32 %v4285, %v4477
      %v4479 = vpop.f32.mrb[0].mxu0
      %v4480 = vadd.f32 %v4287, %v4479
      %4481 = vmatprep.mubr.bf16.mxu0 %v2569
      %4482 = vmatmul.mubr.bf16.gmra.mrb[0].mxu0 %v2568
      %v4483 = vpop.f32.mrb[0].mxu0
      %v4484 = vadd.f32 %v4291, %v4483
      %v4485 = vpop.f32.mrb[0].mxu0
      %v4486 = vadd.f32 %v4293, %v4485
      %v4487 = vpop.f32.mrb[0].mxu0
      %v4488 = vadd.f32 %v4295, %v4487
      %v4489 = vpop.f32.mrb[0].mxu0
      %v4490 = vadd.f32 %v4297, %v4489
      %4491 = vmatprep.mubr.bf16.mxu0 %v2576
      %4492 = vmatmul.mubr.bf16.gmra.mrb[0].mxu0 %v2575
      %v4493 = vpop.f32.mrb[0].mxu0
      %v4494 = vadd.f32 %v4301, %v4493
      %v4495 = vpop.f32.mrb[0].mxu0
      %v4496 = vadd.f32 %v4303, %v4495
      %v4497 = vpop.f32.mrb[0].mxu0
      %v4498 = vadd.f32 %v4305, %v4497
      %v4499 = vpop.f32.mrb[0].mxu0
      %v4500 = vadd.f32 %v4307, %v4499
      %4501 = vmatprep.mubr.bf16.mxu0 %v2583
      %4502 = vmatmul.mubr.bf16.gmra.mrb[0].mxu0 %v2582
      %v4503 = vpop.f32.mrb[0].mxu0
      %v4504 = vadd.f32 %v4311, %v4503
      %v4505 = vpop.f32.mrb[0].mxu0
      %v4506 = vadd.f32 %v4313, %v4505
      %v4507 = vpop.f32.mrb[0].mxu0
      %v4508 = vadd.f32 %v4315, %v4507
      %v4509 = vpop.f32.mrb[0].mxu0
      %v4510 = vadd.f32 %v4317, %v4509
      %4511 = vmatprep.mubr.bf16.mxu0 %v2590
      %4512 = vmatmul.mubr.bf16.gmra.mrb[0].mxu0 %v2589
      %v4513 = vpop.f32.mrb[0].mxu0
      %v4514 = vadd.f32 %v4321, %v4513
      %v4515 = vpop.f32.mrb[0].mxu0
      %v4516 = vadd.f32 %v4323, %v4515
      %v4517 = vpop.f32.mrb[0].mxu0
      %v4518 = vadd.f32 %v4325, %v4517
      %v4519 = vpop.f32.mrb[0].mxu0
      %v4520 = vadd.f32 %v4327, %v4519
      %4521 = vmatprep.mubr.bf16.mxu0 %v2597
      %4522 = vmatmul.mubr.bf16.gmra.mrb[0].mxu0 %v2596
      %v4523 = vpop.f32.mrb[0].mxu0
      %v4524 = vadd.f32 %v4331, %v4523
      %v4525 = vpop.f32.mrb[0].mxu0
      %v4526 = vadd.f32 %v4333, %v4525
      %v4527 = vpop.f32.mrb[0].mxu0
      %v4528 = vadd.f32 %v4335, %v4527
      %v4529 = vpop.f32.mrb[0].mxu0
      %v4530 = vadd.f32 %v4337, %v4529
      %4531 = vmatprep.mubr.bf16.mxu0 %v2604
      %4532 = vmatmul.mubr.bf16.gmra.mrb[0].mxu0 %v2603
      %v4533 = vpop.f32.mrb[0].mxu0
      %v4534 = vadd.f32 %v4341, %v4533
      %v4535 = vpop.f32.mrb[0].mxu0
      %v4536 = vadd.f32 %v4343, %v4535
      %v4537 = vpop.f32.mrb[0].mxu0
      %v4538 = vadd.f32 %v4345, %v4537
      %v4539 = vpop.f32.mrb[0].mxu0
      %v4540 = vadd.f32 %v4347, %v4539
      %4541 = vmatprep.mubr.bf16.mxu0 %v2611
      %4542 = vmatmul.mubr.bf16.gmra.mrb[0].mxu0 %v2610
      %v4543 = vpop.f32.mrb[0].mxu0
      %v4544 = vadd.f32 %v4351, %v4543
      %v4545 = vpop.f32.mrb[0].mxu0
      %v4546 = vadd.f32 %v4353, %v4545
      %v4547 = vpop.f32.mrb[0].mxu0
      %v4548 = vadd.f32 %v4355, %v4547
      %v4549 = vpop.f32.mrb[0].mxu0
      %v4550 = vadd.f32 %v4357, %v4549
      %4551 = vmatprep.mubr.bf16.mxu0 %v2618
      %4552 = vmatmul.mubr.bf16.gmra.mrb[0].mxu0 %v2617
      %v4553 = vpop.f32.mrb[0].mxu0
      %v4554 = vadd.f32 %v4361, %v4553
      %v4555 = vpop.f32.mrb[0].mxu0
      %v4556 = vadd.f32 %v4363, %v4555
      %v4557 = vpop.f32.mrb[0].mxu0
      %v4558 = vadd.f32 %v4365, %v4557
      %v4559 = vpop.f32.mrb[0].mxu0
      %v4560 = vadd.f32 %v4367, %v4559
      %4561 = vmatprep.mubr.bf16.mxu0 %v2625
      %4562 = vmatmul.mubr.bf16.gmra.mrb[0].mxu0 %v2624
      %v4563 = vpop.f32.mrb[0].mxu0
      %v4564 = vadd.f32 %v4371, %v4563
      %v4565 = vpop.f32.mrb[0].mxu0
      %v4566 = vadd.f32 %v4373, %v4565
      %v4567 = vpop.f32.mrb[0].mxu0
      %v4568 = vadd.f32 %v4375, %v4567
      %v4569 = vpop.f32.mrb[0].mxu0
      %v4570 = vadd.f32 %v4377, %v4569
      %4571 = vdwg.mxu0
      %4572 = vmatprep.subr.bf16.mxu0 %v3738
      %4573 = vmatpush1.bf16.msra.mxu0 %v3737
      %4574 = vmatprep.subr.bf16.mxu0 %v3742
      %4575 = vmatpush1.bf16.msra.mxu0 %v3741
      %4576 = vmatprep.subr.bf16.mxu0 %v3746
      %4577 = vmatpush1.bf16.msra.mxu0 %v3745
      %4578 = vmatprep.subr.bf16.mxu0 %v3750
      %4579 = vmatpush1.bf16.msra.mxu0 %v3749
      %4580 = vmatprep.subr.bf16.mxu0 %v3754
      %4581 = vmatpush1.bf16.msra.mxu0 %v3753
      %4582 = vmatprep.subr.bf16.mxu0 %v3758
      %4583 = vmatpush1.bf16.msra.mxu0 %v3757
      %4584 = vmatprep.subr.bf16.mxu0 %v3762
      %4585 = vmatpush1.bf16.msra.mxu0 %v3761
      %4586 = vmatprep.subr.bf16.mxu0 %v3766
      %4587 = vmatpush1.bf16.msra.mxu0 %v3765
      %4588 = vmatprep.subr.bf16.mxu0 0
      %4589 = vmatpush1.bf16.msra.mxu0 0
      %4590 = vmatprep.subr.bf16.mxu0 0
      %4591 = vmatpush1.bf16.msra.mxu0 0
      %4592 = vmatprep.subr.bf16.mxu0 0
      %4593 = vmatpush1.bf16.msra.mxu0 0
      %4594 = vmatprep.subr.bf16.mxu0 0
      %4595 = vmatpush1.bf16.msra.mxu0 0
      %4596 = vmatprep.subr.bf16.mxu0 0
      %4597 = vmatpush1.bf16.msra.mxu0 0
      %4598 = vmatprep.subr.bf16.mxu0 0
      %4599 = vmatpush1.bf16.msra.mxu0 0
      %4600 = vmatprep.subr.bf16.mxu0 0
      %4601 = vmatpush1.bf16.msra.mxu0 0
      %4602 = vmatprep.subr.bf16.mxu0 0
      %4603 = vmatpush1.bf16.msra.mxu0 0
      %4604 = vmatprep.mubr.bf16.mxu0 0
      %4605 = vmatmul.mubr.bf16.gmra.mrb[0].mxu0 %v2521
      %v4606 = vpop.f32.mrb[0].mxu0
      %v4607 = vadd.f32 %v4414, %v4606
      %v4608 = vpop.f32.mrb[0].mxu0
      %v4609 = vadd.f32 %v4416, %v4608
      %v4610 = vpop.f32.mrb[0].mxu0
      %v4611 = vadd.f32 %v4418, %v4610
      %v4612 = vpop.f32.mrb[0].mxu0
      %v4613 = vadd.f32 %v4420, %v4612
      %4614 = vmatprep.mubr.bf16.mxu0 0
      %4615 = vmatmul.mubr.bf16.gmra.mrb[0].mxu0 %v2528
      %v4616 = vpop.f32.mrb[0].mxu0
      %v4617 = vadd.f32 %v4424, %v4616
      %v4618 = vpop.f32.mrb[0].mxu0
      %v4619 = vadd.f32 %v4426, %v4618
      %v4620 = vpop.f32.mrb[0].mxu0
      %v4621 = vadd.f32 %v4428, %v4620
      %v4622 = vpop.f32.mrb[0].mxu0
      %v4623 = vadd.f32 %v4430, %v4622
      %4624 = vmatprep.mubr.bf16.mxu0 0
      %4625 = vmatmul.mubr.bf16.gmra.mrb[0].mxu0 %v2535
      %v4626 = vpop.f32.mrb[0].mxu0
      %v4627 = vadd.f32 %v4434, %v4626
      %v4628 = vpop.f32.mrb[0].mxu0
      %v4629 = vadd.f32 %v4436, %v4628
      %v4630 = vpop.f32.mrb[0].mxu0
      %v4631 = vadd.f32 %v4438, %v4630
      %v4632 = vpop.f32.mrb[0].mxu0
      %v4633 = vadd.f32 %v4440, %v4632
      %4634 = vmatprep.mubr.bf16.mxu0 0
      %4635 = vmatmul.mubr.bf16.gmra.mrb[0].mxu0 %v2542
      %v4636 = vpop.f32.mrb[0].mxu0
      %v4637 = vadd.f32 %v4444, %v4636
      %v4638 = vpop.f32.mrb[0].mxu0
      %v4639 = vadd.f32 %v4446, %v4638
      %v4640 = vpop.f32.mrb[0].mxu0
      %v4641 = vadd.f32 %v4448, %v4640
      %v4642 = vpop.f32.mrb[0].mxu0
      %v4643 = vadd.f32 %v4450, %v4642
      %4644 = vmatprep.mubr.bf16.mxu0 0
      %4645 = vmatmul.mubr.bf16.gmra.mrb[0].mxu0 %v2549
      %v4646 = vpop.f32.mrb[0].mxu0
      %v4647 = vadd.f32 %v4454, %v4646
      %v4648 = vpop.f32.mrb[0].mxu0
      %v4649 = vadd.f32 %v4456, %v4648
      %v4650 = vpop.f32.mrb[0].mxu0
      %v4651 = vadd.f32 %v4458, %v4650
      %v4652 = vpop.f32.mrb[0].mxu0
      %v4653 = vadd.f32 %v4460, %v4652
      %4654 = vmatprep.mubr.bf16.mxu0 0
      %4655 = vmatmul.mubr.bf16.gmra.mrb[0].mxu0 %v2556
      %v4656 = vpop.f32.mrb[0].mxu0
      %v4657 = vadd.f32 %v4464, %v4656
      %v4658 = vpop.f32.mrb[0].mxu0
      %v4659 = vadd.f32 %v4466, %v4658
      %v4660 = vpop.f32.mrb[0].mxu0
      %v4661 = vadd.f32 %v4468, %v4660
      %v4662 = vpop.f32.mrb[0].mxu0
      %v4663 = vadd.f32 %v4470, %v4662
      %4664 = vmatprep.mubr.bf16.mxu0 0
      %4665 = vmatmul.mubr.bf16.gmra.mrb[0].mxu0 %v2563
      %v4666 = vpop.f32.mrb[0].mxu0
      %v4667 = vadd.f32 %v4474, %v4666
      %v4668 = vpop.f32.mrb[0].mxu0
      %v4669 = vadd.f32 %v4476, %v4668
      %v4670 = vpop.f32.mrb[0].mxu0
      %v4671 = vadd.f32 %v4478, %v4670
      %v4672 = vpop.f32.mrb[0].mxu0
      %v4673 = vadd.f32 %v4480, %v4672
      %4674 = vmatprep.mubr.bf16.mxu0 0
      %4675 = vmatmul.mubr.bf16.gmra.mrb[0].mxu0 %v2570
      %v4676 = vpop.f32.mrb[0].mxu0
      %v4677 = vadd.f32 %v4484, %v4676
      %v4678 = vpop.f32.mrb[0].mxu0
      %v4679 = vadd.f32 %v4486, %v4678
      %v4680 = vpop.f32.mrb[0].mxu0
      %v4681 = vadd.f32 %v4488, %v4680
      %v4682 = vpop.f32.mrb[0].mxu0
      %v4683 = vadd.f32 %v4490, %v4682
      %4684 = vmatprep.mubr.bf16.mxu0 0
      %4685 = vmatmul.mubr.bf16.gmra.mrb[0].mxu0 %v2577
      %v4686 = vpop.f32.mrb[0].mxu0
      %v4687 = vadd.f32 %v4494, %v4686
      %v4688 = vpop.f32.mrb[0].mxu0
      %v4689 = vadd.f32 %v4496, %v4688
      %v4690 = vpop.f32.mrb[0].mxu0
      %v4691 = vadd.f32 %v4498, %v4690
      %v4692 = vpop.f32.mrb[0].mxu0
      %v4693 = vadd.f32 %v4500, %v4692
      %4694 = vmatprep.mubr.bf16.mxu0 0
      %4695 = vmatmul.mubr.bf16.gmra.mrb[0].mxu0 %v2584
      %v4696 = vpop.f32.mrb[0].mxu0
      %v4697 = vadd.f32 %v4504, %v4696
      %v4698 = vpop.f32.mrb[0].mxu0
      %v4699 = vadd.f32 %v4506, %v4698
      %v4700 = vpop.f32.mrb[0].mxu0
      %v4701 = vadd.f32 %v4508, %v4700
      %v4702 = vpop.f32.mrb[0].mxu0
      %v4703 = vadd.f32 %v4510, %v4702
      %4704 = vmatprep.mubr.bf16.mxu0 0
      %4705 = vmatmul.mubr.bf16.gmra.mrb[0].mxu0 %v2591
      %v4706 = vpop.f32.mrb[0].mxu0
      %v4707 = vadd.f32 %v4514, %v4706
      %v4708 = vpop.f32.mrb[0].mxu0
      %v4709 = vadd.f32 %v4516, %v4708
      %v4710 = vpop.f32.mrb[0].mxu0
      %v4711 = vadd.f32 %v4518, %v4710
      %v4712 = vpop.f32.mrb[0].mxu0
      %v4713 = vadd.f32 %v4520, %v4712
      %4714 = vmatprep.mubr.bf16.mxu0 0
      %4715 = vmatmul.mubr.bf16.gmra.mrb[0].mxu0 %v2598
      %v4716 = vpop.f32.mrb[0].mxu0
      %v4717 = vadd.f32 %v4524, %v4716
      %v4718 = vpop.f32.mrb[0].mxu0
      %v4719 = vadd.f32 %v4526, %v4718
      %v4720 = vpop.f32.mrb[0].mxu0
      %v4721 = vadd.f32 %v4528, %v4720
      %v4722 = vpop.f32.mrb[0].mxu0
      %v4723 = vadd.f32 %v4530, %v4722
      %4724 = vmatprep.mubr.bf16.mxu0 0
      %4725 = vmatmul.mubr.bf16.gmra.mrb[0].mxu0 %v2605
      %v4726 = vpop.f32.mrb[0].mxu0
      %v4727 = vadd.f32 %v4534, %v4726
      %v4728 = vpop.f32.mrb[0].mxu0
      %v4729 = vadd.f32 %v4536, %v4728
      %v4730 = vpop.f32.mrb[0].mxu0
      %v4731 = vadd.f32 %v4538, %v4730
      %v4732 = vpop.f32.mrb[0].mxu0
      %v4733 = vadd.f32 %v4540, %v4732
      %4734 = vmatprep.mubr.bf16.mxu0 0
      %4735 = vmatmul.mubr.bf16.gmra.mrb[0].mxu0 %v2612
      %v4736 = vpop.f32.mrb[0].mxu0
      %v4737 = vadd.f32 %v4544, %v4736
      %v4738 = vpop.f32.mrb[0].mxu0
      %v4739 = vadd.f32 %v4546, %v4738
      %v4740 = vpop.f32.mrb[0].mxu0
      %v4741 = vadd.f32 %v4548, %v4740
      %v4742 = vpop.f32.mrb[0].mxu0
      %v4743 = vadd.f32 %v4550, %v4742
      %4744 = vmatprep.mubr.bf16.mxu0 0
      %4745 = vmatmul.mubr.bf16.gmra.mrb[0].mxu0 %v2619
      %v4746 = vpop.f32.mrb[0].mxu0
      %v4747 = vadd.f32 %v4554, %v4746
      %v4748 = vpop.f32.mrb[0].mxu0
      %v4749 = vadd.f32 %v4556, %v4748
      %v4750 = vpop.f32.mrb[0].mxu0
      %v4751 = vadd.f32 %v4558, %v4750
      %v4752 = vpop.f32.mrb[0].mxu0
      %v4753 = vadd.f32 %v4560, %v4752
      %4754 = vmatprep.mubr.bf16.mxu0 0
      %4755 = vmatmul.mubr.bf16.gmra.mrb[0].mxu0 %v2626
      %v4756 = vpop.f32.mrb[0].mxu0
      %v4757 = vadd.f32 %v4564, %v4756
      %v4758 = vpop.f32.mrb[0].mxu0
      %v4759 = vadd.f32 %v4566, %v4758
      %v4760 = vpop.f32.mrb[0].mxu0
      %v4761 = vadd.f32 %v4568, %v4760
      %v4762 = vpop.f32.mrb[0].mxu0
      %v4763 = vadd.f32 %v4570, %v4762
      %4764 = vdwg.mxu0
      %4765 = vmatprep.subr.bf16.mxu0 %v3548
      %4766 = vmatpush1.bf16.msra.mxu0 %v3547
      %4767 = vmatprep.subr.bf16.mxu0 %v3552
      %4768 = vmatpush1.bf16.msra.mxu0 %v3551
      %4769 = vmatprep.subr.bf16.mxu0 %v3556
      %4770 = vmatpush1.bf16.msra.mxu0 %v3555
      %4771 = vmatprep.subr.bf16.mxu0 %v3560
      %4772 = vmatpush1.bf16.msra.mxu0 %v3559
      %4773 = vmatprep.subr.bf16.mxu0 %v3564
      %4774 = vmatpush1.bf16.msra.mxu0 %v3563
      %4775 = vmatprep.subr.bf16.mxu0 %v3568
      %4776 = vmatpush1.bf16.msra.mxu0 %v3567
      %4777 = vmatprep.subr.bf16.mxu0 %v3572
      %4778 = vmatpush1.bf16.msra.mxu0 %v3571
      %4779 = vmatprep.subr.bf16.mxu0 %v3576
      %4780 = vmatpush1.bf16.msra.mxu0 %v3575
      %4781 = vmatprep.subr.bf16.mxu0 %v3580
      %4782 = vmatpush1.bf16.msra.mxu0 %v3579
      %4783 = vmatprep.subr.bf16.mxu0 %v3584
      %4784 = vmatpush1.bf16.msra.mxu0 %v3583
      %4785 = vmatprep.subr.bf16.mxu0 %v3588
      %4786 = vmatpush1.bf16.msra.mxu0 %v3587
      %4787 = vmatprep.subr.bf16.mxu0 %v3592
      %4788 = vmatpush1.bf16.msra.mxu0 %v3591
      %4789 = vmatprep.subr.bf16.mxu0 %v3596
      %4790 = vmatpush1.bf16.msra.mxu0 %v3595
      %4791 = vmatprep.subr.bf16.mxu0 %v3600
      %4792 = vmatpush1.bf16.msra.mxu0 %v3599
      %4793 = vmatprep.subr.bf16.mxu0 %v3604
      %4794 = vmatpush1.bf16.msra.mxu0 %v3603
      %4795 = vmatprep.subr.bf16.mxu0 %v3608
      %4796 = vmatpush1.bf16.msra.mxu0 %v3607
      %4797 = vmatprep.mubr.bf16.mxu0 %v2516
      %4798 = vmatmul.mubr.bf16.gmra.mrb[0].mxu0 %v2515
      %v4799 = vpop.f32.mrb[0].mxu0
      %v4800 = vadd.f32 %v2864, %v4799
      %v4801 = vpop.f32.mrb[0].mxu0
      %v4802 = vadd.f32 %v2868, %v4801
      %v4803 = vpop.f32.mrb[0].mxu0
      %v4804 = vadd.f32 %v2864, %v4803
      %v4805 = vpop.f32.mrb[0].mxu0
      %v4806 = vadd.f32 %v2868, %v4805
      %4807 = vmatprep.mubr.bf16.mxu0 %v2523
      %4808 = vmatmul.mubr.bf16.gmra.mrb[0].mxu0 %v2522
      %v4809 = vpop.f32.mrb[0].mxu0
      %v4810 = vadd.f32 %v2864, %v4809
      %v4811 = vpop.f32.mrb[0].mxu0
      %v4812 = vadd.f32 %v2868, %v4811
      %v4813 = vpop.f32.mrb[0].mxu0
      %v4814 = vadd.f32 %v2864, %v4813
      %v4815 = vpop.f32.mrb[0].mxu0
      %v4816 = vadd.f32 %v2868, %v4815
      %4817 = vmatprep.mubr.bf16.mxu0 %v2530
      %4818 = vmatmul.mubr.bf16.gmra.mrb[0].mxu0 %v2529
      %v4819 = vpop.f32.mrb[0].mxu0
      %v4820 = vadd.f32 %v2864, %v4819
      %v4821 = vpop.f32.mrb[0].mxu0
      %v4822 = vadd.f32 %v2868, %v4821
      %v4823 = vpop.f32.mrb[0].mxu0
      %v4824 = vadd.f32 %v2864, %v4823
      %v4825 = vpop.f32.mrb[0].mxu0
      %v4826 = vadd.f32 %v2868, %v4825
      %4827 = vmatprep.mubr.bf16.mxu0 %v2537
      %4828 = vmatmul.mubr.bf16.gmra.mrb[0].mxu0 %v2536
      %v4829 = vpop.f32.mrb[0].mxu0
      %v4830 = vadd.f32 %v2864, %v4829
      %v4831 = vpop.f32.mrb[0].mxu0
      %v4832 = vadd.f32 %v2868, %v4831
      %v4833 = vpop.f32.mrb[0].mxu0
      %v4834 = vadd.f32 %v2864, %v4833
      %v4835 = vpop.f32.mrb[0].mxu0
      %v4836 = vadd.f32 %v2868, %v4835
      %4837 = vmatprep.mubr.bf16.mxu0 %v2544
      %4838 = vmatmul.mubr.bf16.gmra.mrb[0].mxu0 %v2543
      %v4839 = vpop.f32.mrb[0].mxu0
      %v4840 = vadd.f32 %v2864, %v4839
      %v4841 = vpop.f32.mrb[0].mxu0
      %v4842 = vadd.f32 %v2868, %v4841
      %v4843 = vpop.f32.mrb[0].mxu0
      %v4844 = vadd.f32 %v2864, %v4843
      %v4845 = vpop.f32.mrb[0].mxu0
      %v4846 = vadd.f32 %v2868, %v4845
      %4847 = vmatprep.mubr.bf16.mxu0 %v2551
      %4848 = vmatmul.mubr.bf16.gmra.mrb[0].mxu0 %v2550
      %v4849 = vpop.f32.mrb[0].mxu0
      %v4850 = vadd.f32 %v2864, %v4849
      %v4851 = vpop.f32.mrb[0].mxu0
      %v4852 = vadd.f32 %v2868, %v4851
      %v4853 = vpop.f32.mrb[0].mxu0
      %v4854 = vadd.f32 %v2864, %v4853
      %v4855 = vpop.f32.mrb[0].mxu0
      %v4856 = vadd.f32 %v2868, %v4855
      %4857 = vmatprep.mubr.bf16.mxu0 %v2558
      %4858 = vmatmul.mubr.bf16.gmra.mrb[0].mxu0 %v2557
      %v4859 = vpop.f32.mrb[0].mxu0
      %v4860 = vadd.f32 %v2864, %v4859
      %v4861 = vpop.f32.mrb[0].mxu0
      %v4862 = vadd.f32 %v2868, %v4861
      %v4863 = vpop.f32.mrb[0].mxu0
      %v4864 = vadd.f32 %v2864, %v4863
      %v4865 = vpop.f32.mrb[0].mxu0
      %v4866 = vadd.f32 %v2868, %v4865
      %4867 = vmatprep.mubr.bf16.mxu0 %v2565
      %4868 = vmatmul.mubr.bf16.gmra.mrb[0].mxu0 %v2564
      %v4869 = vpop.f32.mrb[0].mxu0
      %v4870 = vadd.f32 %v2864, %v4869
      %v4871 = vpop.f32.mrb[0].mxu0
      %v4872 = vadd.f32 %v2868, %v4871
      %v4873 = vpop.f32.mrb[0].mxu0
      %v4874 = vadd.f32 %v2864, %v4873
      %v4875 = vpop.f32.mrb[0].mxu0
      %v4876 = vadd.f32 %v2868, %v4875
      %4877 = vmatprep.mubr.bf16.mxu0 %v2572
      %4878 = vmatmul.mubr.bf16.gmra.mrb[0].mxu0 %v2571
      %v4879 = vpop.f32.mrb[0].mxu0
      %v4880 = vadd.f32 %v2864, %v4879
      %v4881 = vpop.f32.mrb[0].mxu0
      %v4882 = vadd.f32 %v2868, %v4881
      %v4883 = vpop.f32.mrb[0].mxu0
      %v4884 = vadd.f32 %v2864, %v4883
      %v4885 = vpop.f32.mrb[0].mxu0
      %v4886 = vadd.f32 %v2868, %v4885
      %4887 = vmatprep.mubr.bf16.mxu0 %v2579
      %4888 = vmatmul.mubr.bf16.gmra.mrb[0].mxu0 %v2578
      %v4889 = vpop.f32.mrb[0].mxu0
      %v4890 = vadd.f32 %v2864, %v4889
      %v4891 = vpop.f32.mrb[0].mxu0
      %v4892 = vadd.f32 %v2868, %v4891
      %v4893 = vpop.f32.mrb[0].mxu0
      %v4894 = vadd.f32 %v2864, %v4893
      %v4895 = vpop.f32.mrb[0].mxu0
      %v4896 = vadd.f32 %v2868, %v4895
      %4897 = vmatprep.mubr.bf16.mxu0 %v2586
      %4898 = vmatmul.mubr.bf16.gmra.mrb[0].mxu0 %v2585
      %v4899 = vpop.f32.mrb[0].mxu0
      %v4900 = vadd.f32 %v2864, %v4899
      %v4901 = vpop.f32.mrb[0].mxu0
      %v4902 = vadd.f32 %v2868, %v4901
      %v4903 = vpop.f32.mrb[0].mxu0
      %v4904 = vadd.f32 %v2864, %v4903
      %v4905 = vpop.f32.mrb[0].mxu0
      %v4906 = vadd.f32 %v2868, %v4905
      %4907 = vmatprep.mubr.bf16.mxu0 %v2593
      %4908 = vmatmul.mubr.bf16.gmra.mrb[0].mxu0 %v2592
      %v4909 = vpop.f32.mrb[0].mxu0
      %v4910 = vadd.f32 %v2864, %v4909
      %v4911 = vpop.f32.mrb[0].mxu0
      %v4912 = vadd.f32 %v2868, %v4911
      %v4913 = vpop.f32.mrb[0].mxu0
      %v4914 = vadd.f32 %v2864, %v4913
      %v4915 = vpop.f32.mrb[0].mxu0
      %v4916 = vadd.f32 %v2868, %v4915
      %4917 = vmatprep.mubr.bf16.mxu0 %v2600
      %4918 = vmatmul.mubr.bf16.gmra.mrb[0].mxu0 %v2599
      %v4919 = vpop.f32.mrb[0].mxu0
      %v4920 = vadd.f32 %v2864, %v4919
      %v4921 = vpop.f32.mrb[0].mxu0
      %v4922 = vadd.f32 %v2868, %v4921
      %v4923 = vpop.f32.mrb[0].mxu0
      %v4924 = vadd.f32 %v2864, %v4923
      %v4925 = vpop.f32.mrb[0].mxu0
      %v4926 = vadd.f32 %v2868, %v4925
      %4927 = vmatprep.mubr.bf16.mxu0 %v2607
      %4928 = vmatmul.mubr.bf16.gmra.mrb[0].mxu0 %v2606
      %v4929 = vpop.f32.mrb[0].mxu0
      %v4930 = vadd.f32 %v2864, %v4929
      %v4931 = vpop.f32.mrb[0].mxu0
      %v4932 = vadd.f32 %v2868, %v4931
      %v4933 = vpop.f32.mrb[0].mxu0
      %v4934 = vadd.f32 %v2864, %v4933
      %v4935 = vpop.f32.mrb[0].mxu0
      %v4936 = vadd.f32 %v2868, %v4935
      %4937 = vmatprep.mubr.bf16.mxu0 %v2614
      %4938 = vmatmul.mubr.bf16.gmra.mrb[0].mxu0 %v2613
      %v4939 = vpop.f32.mrb[0].mxu0
      %v4940 = vadd.f32 %v2864, %v4939
      %v4941 = vpop.f32.mrb[0].mxu0
      %v4942 = vadd.f32 %v2868, %v4941
      %v4943 = vpop.f32.mrb[0].mxu0
      %v4944 = vadd.f32 %v2864, %v4943
      %v4945 = vpop.f32.mrb[0].mxu0
      %v4946 = vadd.f32 %v2868, %v4945
      %4947 = vmatprep.mubr.bf16.mxu0 %v2621
      %4948 = vmatmul.mubr.bf16.gmra.mrb[0].mxu0 %v2620
      %v4949 = vpop.f32.mrb[0].mxu0
      %v4950 = vadd.f32 %v2864, %v4949
      %v4951 = vpop.f32.mrb[0].mxu0
      %v4952 = vadd.f32 %v2868, %v4951
      %v4953 = vpop.f32.mrb[0].mxu0
      %v4954 = vadd.f32 %v2864, %v4953
      %v4955 = vpop.f32.mrb[0].mxu0
      %v4956 = vadd.f32 %v2868, %v4955
      %4957 = vdwg.mxu0
      %4958 = vmatprep.subr.bf16.mxu0 %v3612
      %4959 = vmatpush1.bf16.msra.mxu0 %v3611
      %4960 = vmatprep.subr.bf16.mxu0 %v3616
      %4961 = vmatpush1.bf16.msra.mxu0 %v3615
      %4962 = vmatprep.subr.bf16.mxu0 %v3620
      %4963 = vmatpush1.bf16.msra.mxu0 %v3619
      %4964 = vmatprep.subr.bf16.mxu0 %v3624
      %4965 = vmatpush1.bf16.msra.mxu0 %v3623
      %4966 = vmatprep.subr.bf16.mxu0 %v3628
      %4967 = vmatpush1.bf16.msra.mxu0 %v3627
      %4968 = vmatprep.subr.bf16.mxu0 %v3632
      %4969 = vmatpush1.bf16.msra.mxu0 %v3631
      %4970 = vmatprep.subr.bf16.mxu0 %v3636
      %4971 = vmatpush1.bf16.msra.mxu0 %v3635
      %4972 = vmatprep.subr.bf16.mxu0 %v3640
      %4973 = vmatpush1.bf16.msra.mxu0 %v3639
      %4974 = vmatprep.subr.bf16.mxu0 %v3644
      %4975 = vmatpush1.bf16.msra.mxu0 %v3643
      %4976 = vmatprep.subr.bf16.mxu0 %v3648
      %4977 = vmatpush1.bf16.msra.mxu0 %v3647
      %4978 = vmatprep.subr.bf16.mxu0 %v3652
      %4979 = vmatpush1.bf16.msra.mxu0 %v3651
      %4980 = vmatprep.subr.bf16.mxu0 %v3656
      %4981 = vmatpush1.bf16.msra.mxu0 %v3655
      %4982 = vmatprep.subr.bf16.mxu0 %v3660
      %4983 = vmatpush1.bf16.msra.mxu0 %v3659
      %4984 = vmatprep.subr.bf16.mxu0 %v3664
      %4985 = vmatpush1.bf16.msra.mxu0 %v3663
      %4986 = vmatprep.subr.bf16.mxu0 %v3668
      %4987 = vmatpush1.bf16.msra.mxu0 %v3667
      %4988 = vmatprep.subr.bf16.mxu0 %v3672
      %4989 = vmatpush1.bf16.msra.mxu0 %v3671
      %4990 = vmatprep.mubr.bf16.mxu0 %v2518
      %4991 = vmatmul.mubr.bf16.gmra.mrb[0].mxu0 %v2517
      %v4992 = vpop.f32.mrb[0].mxu0
      %v4993 = vadd.f32 %v4800, %v4992
      %v4994 = vpop.f32.mrb[0].mxu0
      %v4995 = vadd.f32 %v4802, %v4994
      %v4996 = vpop.f32.mrb[0].mxu0
      %v4997 = vadd.f32 %v4804, %v4996
      %v4998 = vpop.f32.mrb[0].mxu0
      %v4999 = vadd.f32 %v4806, %v4998
      %5000 = vmatprep.mubr.bf16.mxu0 %v2525
      %5001 = vmatmul.mubr.bf16.gmra.mrb[0].mxu0 %v2524
      %v5002 = vpop.f32.mrb[0].mxu0
      %v5003 = vadd.f32 %v4810, %v5002
      %v5004 = vpop.f32.mrb[0].mxu0
      %v5005 = vadd.f32 %v4812, %v5004
      %v5006 = vpop.f32.mrb[0].mxu0
      %v5007 = vadd.f32 %v4814, %v5006
      %v5008 = vpop.f32.mrb[0].mxu0
      %v5009 = vadd.f32 %v4816, %v5008
      %5010 = vmatprep.mubr.bf16.mxu0 %v2532
      %5011 = vmatmul.mubr.bf16.gmra.mrb[0].mxu0 %v2531
      %v5012 = vpop.f32.mrb[0].mxu0
      %v5013 = vadd.f32 %v4820, %v5012
      %v5014 = vpop.f32.mrb[0].mxu0
      %v5015 = vadd.f32 %v4822, %v5014
      %v5016 = vpop.f32.mrb[0].mxu0
      %v5017 = vadd.f32 %v4824, %v5016
      %v5018 = vpop.f32.mrb[0].mxu0
      %v5019 = vadd.f32 %v4826, %v5018
      %5020 = vmatprep.mubr.bf16.mxu0 %v2539
      %5021 = vmatmul.mubr.bf16.gmra.mrb[0].mxu0 %v2538
      %v5022 = vpop.f32.mrb[0].mxu0
      %v5023 = vadd.f32 %v4830, %v5022
      %v5024 = vpop.f32.mrb[0].mxu0
      %v5025 = vadd.f32 %v4832, %v5024
      %v5026 = vpop.f32.mrb[0].mxu0
      %v5027 = vadd.f32 %v4834, %v5026
      %v5028 = vpop.f32.mrb[0].mxu0
      %v5029 = vadd.f32 %v4836, %v5028
      %5030 = vmatprep.mubr.bf16.mxu0 %v2546
      %5031 = vmatmul.mubr.bf16.gmra.mrb[0].mxu0 %v2545
      %v5032 = vpop.f32.mrb[0].mxu0
      %v5033 = vadd.f32 %v4840, %v5032
      %v5034 = vpop.f32.mrb[0].mxu0
      %v5035 = vadd.f32 %v4842, %v5034
      %v5036 = vpop.f32.mrb[0].mxu0
      %v5037 = vadd.f32 %v4844, %v5036
      %v5038 = vpop.f32.mrb[0].mxu0
      %v5039 = vadd.f32 %v4846, %v5038
      %5040 = vmatprep.mubr.bf16.mxu0 %v2553
      %5041 = vmatmul.mubr.bf16.gmra.mrb[0].mxu0 %v2552
      %v5042 = vpop.f32.mrb[0].mxu0
      %v5043 = vadd.f32 %v4850, %v5042
      %v5044 = vpop.f32.mrb[0].mxu0
      %v5045 = vadd.f32 %v4852, %v5044
      %v5046 = vpop.f32.mrb[0].mxu0
      %v5047 = vadd.f32 %v4854, %v5046
      %v5048 = vpop.f32.mrb[0].mxu0
      %v5049 = vadd.f32 %v4856, %v5048
      %5050 = vmatprep.mubr.bf16.mxu0 %v2560
      %5051 = vmatmul.mubr.bf16.gmra.mrb[0].mxu0 %v2559
      %v5052 = vpop.f32.mrb[0].mxu0
      %v5053 = vadd.f32 %v4860, %v5052
      %v5054 = vpop.f32.mrb[0].mxu0
      %v5055 = vadd.f32 %v4862, %v5054
      %v5056 = vpop.f32.mrb[0].mxu0
      %v5057 = vadd.f32 %v4864, %v5056
      %v5058 = vpop.f32.mrb[0].mxu0
      %v5059 = vadd.f32 %v4866, %v5058
      %5060 = vmatprep.mubr.bf16.mxu0 %v2567
      %5061 = vmatmul.mubr.bf16.gmra.mrb[0].mxu0 %v2566
      %v5062 = vpop.f32.mrb[0].mxu0
      %v5063 = vadd.f32 %v4870, %v5062
      %v5064 = vpop.f32.mrb[0].mxu0
      %v5065 = vadd.f32 %v4872, %v5064
      %v5066 = vpop.f32.mrb[0].mxu0
      %v5067 = vadd.f32 %v4874, %v5066
      %v5068 = vpop.f32.mrb[0].mxu0
      %v5069 = vadd.f32 %v4876, %v5068
      %5070 = vmatprep.mubr.bf16.mxu0 %v2574
      %5071 = vmatmul.mubr.bf16.gmra.mrb[0].mxu0 %v2573
      %v5072 = vpop.f32.mrb[0].mxu0
      %v5073 = vadd.f32 %v4880, %v5072
      %v5074 = vpop.f32.mrb[0].mxu0
      %v5075 = vadd.f32 %v4882, %v5074
      %v5076 = vpop.f32.mrb[0].mxu0
      %v5077 = vadd.f32 %v4884, %v5076
      %v5078 = vpop.f32.mrb[0].mxu0
      %v5079 = vadd.f32 %v4886, %v5078
      %5080 = vmatprep.mubr.bf16.mxu0 %v2581
      %5081 = vmatmul.mubr.bf16.gmra.mrb[0].mxu0 %v2580
      %v5082 = vpop.f32.mrb[0].mxu0
      %v5083 = vadd.f32 %v4890, %v5082
      %v5084 = vpop.f32.mrb[0].mxu0
      %v5085 = vadd.f32 %v4892, %v5084
      %v5086 = vpop.f32.mrb[0].mxu0
      %v5087 = vadd.f32 %v4894, %v5086
      %v5088 = vpop.f32.mrb[0].mxu0
      %v5089 = vadd.f32 %v4896, %v5088
      %5090 = vmatprep.mubr.bf16.mxu0 %v2588
      %5091 = vmatmul.mubr.bf16.gmra.mrb[0].mxu0 %v2587
      %v5092 = vpop.f32.mrb[0].mxu0
      %v5093 = vadd.f32 %v4900, %v5092
      %v5094 = vpop.f32.mrb[0].mxu0
      %v5095 = vadd.f32 %v4902, %v5094
      %v5096 = vpop.f32.mrb[0].mxu0
      %v5097 = vadd.f32 %v4904, %v5096
      %v5098 = vpop.f32.mrb[0].mxu0
      %v5099 = vadd.f32 %v4906, %v5098
      %5100 = vmatprep.mubr.bf16.mxu0 %v2595
      %5101 = vmatmul.mubr.bf16.gmra.mrb[0].mxu0 %v2594
      %v5102 = vpop.f32.mrb[0].mxu0
      %v5103 = vadd.f32 %v4910, %v5102
      %v5104 = vpop.f32.mrb[0].mxu0
      %v5105 = vadd.f32 %v4912, %v5104
      %v5106 = vpop.f32.mrb[0].mxu0
      %v5107 = vadd.f32 %v4914, %v5106
      %v5108 = vpop.f32.mrb[0].mxu0
      %v5109 = vadd.f32 %v4916, %v5108
      %5110 = vmatprep.mubr.bf16.mxu0 %v2602
      %5111 = vmatmul.mubr.bf16.gmra.mrb[0].mxu0 %v2601
      %v5112 = vpop.f32.mrb[0].mxu0
      %v5113 = vadd.f32 %v4920, %v5112
      %v5114 = vpop.f32.mrb[0].mxu0
      %v5115 = vadd.f32 %v4922, %v5114
      %v5116 = vpop.f32.mrb[0].mxu0
      %v5117 = vadd.f32 %v4924, %v5116
      %v5118 = vpop.f32.mrb[0].mxu0
      %v5119 = vadd.f32 %v4926, %v5118
      %5120 = vmatprep.mubr.bf16.mxu0 %v2609
      %5121 = vmatmul.mubr.bf16.gmra.mrb[0].mxu0 %v2608
      %v5122 = vpop.f32.mrb[0].mxu0
      %v5123 = vadd.f32 %v4930, %v5122
      %v5124 = vpop.f32.mrb[0].mxu0
      %v5125 = vadd.f32 %v4932, %v5124
      %v5126 = vpop.f32.mrb[0].mxu0
      %v5127 = vadd.f32 %v4934, %v5126
      %v5128 = vpop.f32.mrb[0].mxu0
      %v5129 = vadd.f32 %v4936, %v5128
      %5130 = vmatprep.mubr.bf16.mxu0 %v2616
      %5131 = vmatmul.mubr.bf16.gmra.mrb[0].mxu0 %v2615
      %v5132 = vpop.f32.mrb[0].mxu0
      %v5133 = vadd.f32 %v4940, %v5132
      %v5134 = vpop.f32.mrb[0].mxu0
      %v5135 = vadd.f32 %v4942, %v5134
      %v5136 = vpop.f32.mrb[0].mxu0
      %v5137 = vadd.f32 %v4944, %v5136
      %v5138 = vpop.f32.mrb[0].mxu0
      %v5139 = vadd.f32 %v4946, %v5138
      %5140 = vmatprep.mubr.bf16.mxu0 %v2623
      %5141 = vmatmul.mubr.bf16.gmra.mrb[0].mxu0 %v2622
      %v5142 = vpop.f32.mrb[0].mxu0
      %v5143 = vadd.f32 %v4950, %v5142
      %v5144 = vpop.f32.mrb[0].mxu0
      %v5145 = vadd.f32 %v4952, %v5144
      %v5146 = vpop.f32.mrb[0].mxu0
      %v5147 = vadd.f32 %v4954, %v5146
      %v5148 = vpop.f32.mrb[0].mxu0
      %v5149 = vadd.f32 %v4956, %v5148
      %5150 = vdwg.mxu0
      %5151 = vmatprep.subr.bf16.mxu0 %v3676
      %5152 = vmatpush1.bf16.msra.mxu0 %v3675
      %5153 = vmatprep.subr.bf16.mxu0 %v3680
      %5154 = vmatpush1.bf16.msra.mxu0 %v3679
      %5155 = vmatprep.subr.bf16.mxu0 %v3684
      %5156 = vmatpush1.bf16.msra.mxu0 %v3683
      %5157 = vmatprep.subr.bf16.mxu0 %v3688
      %5158 = vmatpush1.bf16.msra.mxu0 %v3687
      %5159 = vmatprep.subr.bf16.mxu0 %v3692
      %5160 = vmatpush1.bf16.msra.mxu0 %v3691
      %5161 = vmatprep.subr.bf16.mxu0 %v3696
      %5162 = vmatpush1.bf16.msra.mxu0 %v3695
      %5163 = vmatprep.subr.bf16.mxu0 %v3700
      %5164 = vmatpush1.bf16.msra.mxu0 %v3699
      %5165 = vmatprep.subr.bf16.mxu0 %v3704
      %5166 = vmatpush1.bf16.msra.mxu0 %v3703
      %5167 = vmatprep.subr.bf16.mxu0 %v3708
      %5168 = vmatpush1.bf16.msra.mxu0 %v3707
      %5169 = vmatprep.subr.bf16.mxu0 %v3712
      %5170 = vmatpush1.bf16.msra.mxu0 %v3711
      %5171 = vmatprep.subr.bf16.mxu0 %v3716
      %5172 = vmatpush1.bf16.msra.mxu0 %v3715
      %5173 = vmatprep.subr.bf16.mxu0 %v3720
      %5174 = vmatpush1.bf16.msra.mxu0 %v3719
      %5175 = vmatprep.subr.bf16.mxu0 %v3724
      %5176 = vmatpush1.bf16.msra.mxu0 %v3723
      %5177 = vmatprep.subr.bf16.mxu0 %v3728
      %5178 = vmatpush1.bf16.msra.mxu0 %v3727
      %5179 = vmatprep.subr.bf16.mxu0 %v3732
      %5180 = vmatpush1.bf16.msra.mxu0 %v3731
      %5181 = vmatprep.subr.bf16.mxu0 %v3736
      %5182 = vmatpush1.bf16.msra.mxu0 %v3735
      %5183 = vmatprep.mubr.bf16.mxu0 %v2520
      %5184 = vmatmul.mubr.bf16.gmra.mrb[0].mxu0 %v2519
      %v5185 = vpop.f32.mrb[0].mxu0
      %v5186 = vadd.f32 %v4993, %v5185
      %v5187 = vpop.f32.mrb[0].mxu0
      %v5188 = vadd.f32 %v4995, %v5187
      %v5189 = vpop.f32.mrb[0].mxu0
      %v5190 = vadd.f32 %v4997, %v5189
      %v5191 = vpop.f32.mrb[0].mxu0
      %v5192 = vadd.f32 %v4999, %v5191
      %5193 = vmatprep.mubr.bf16.mxu0 %v2527
      %5194 = vmatmul.mubr.bf16.gmra.mrb[0].mxu0 %v2526
      %v5195 = vpop.f32.mrb[0].mxu0
      %v5196 = vadd.f32 %v5003, %v5195
      %v5197 = vpop.f32.mrb[0].mxu0
      %v5198 = vadd.f32 %v5005, %v5197
      %v5199 = vpop.f32.mrb[0].mxu0
      %v5200 = vadd.f32 %v5007, %v5199
      %v5201 = vpop.f32.mrb[0].mxu0
      %v5202 = vadd.f32 %v5009, %v5201
      %5203 = vmatprep.mubr.bf16.mxu0 %v2534
      %5204 = vmatmul.mubr.bf16.gmra.mrb[0].mxu0 %v2533
      %v5205 = vpop.f32.mrb[0].mxu0
      %v5206 = vadd.f32 %v5013, %v5205
      %v5207 = vpop.f32.mrb[0].mxu0
      %v5208 = vadd.f32 %v5015, %v5207
      %v5209 = vpop.f32.mrb[0].mxu0
      %v5210 = vadd.f32 %v5017, %v5209
      %v5211 = vpop.f32.mrb[0].mxu0
      %v5212 = vadd.f32 %v5019, %v5211
      %5213 = vmatprep.mubr.bf16.mxu0 %v2541
      %5214 = vmatmul.mubr.bf16.gmra.mrb[0].mxu0 %v2540
      %v5215 = vpop.f32.mrb[0].mxu0
      %v5216 = vadd.f32 %v5023, %v5215
      %v5217 = vpop.f32.mrb[0].mxu0
      %v5218 = vadd.f32 %v5025, %v5217
      %v5219 = vpop.f32.mrb[0].mxu0
      %v5220 = vadd.f32 %v5027, %v5219
      %v5221 = vpop.f32.mrb[0].mxu0
      %v5222 = vadd.f32 %v5029, %v5221
      %5223 = vmatprep.mubr.bf16.mxu0 %v2548
      %5224 = vmatmul.mubr.bf16.gmra.mrb[0].mxu0 %v2547
      %v5225 = vpop.f32.mrb[0].mxu0
      %v5226 = vadd.f32 %v5033, %v5225
      %v5227 = vpop.f32.mrb[0].mxu0
      %v5228 = vadd.f32 %v5035, %v5227
      %v5229 = vpop.f32.mrb[0].mxu0
      %v5230 = vadd.f32 %v5037, %v5229
      %v5231 = vpop.f32.mrb[0].mxu0
      %v5232 = vadd.f32 %v5039, %v5231
      %5233 = vmatprep.mubr.bf16.mxu0 %v2555
      %5234 = vmatmul.mubr.bf16.gmra.mrb[0].mxu0 %v2554
      %v5235 = vpop.f32.mrb[0].mxu0
      %v5236 = vadd.f32 %v5043, %v5235
      %v5237 = vpop.f32.mrb[0].mxu0
      %v5238 = vadd.f32 %v5045, %v5237
      %v5239 = vpop.f32.mrb[0].mxu0
      %v5240 = vadd.f32 %v5047, %v5239
      %v5241 = vpop.f32.mrb[0].mxu0
      %v5242 = vadd.f32 %v5049, %v5241
      %5243 = vmatprep.mubr.bf16.mxu0 %v2562
      %5244 = vmatmul.mubr.bf16.gmra.mrb[0].mxu0 %v2561
      %v5245 = vpop.f32.mrb[0].mxu0
      %v5246 = vadd.f32 %v5053, %v5245
      %v5247 = vpop.f32.mrb[0].mxu0
      %v5248 = vadd.f32 %v5055, %v5247
      %v5249 = vpop.f32.mrb[0].mxu0
      %v5250 = vadd.f32 %v5057, %v5249
      %v5251 = vpop.f32.mrb[0].mxu0
      %v5252 = vadd.f32 %v5059, %v5251
      %5253 = vmatprep.mubr.bf16.mxu0 %v2569
      %5254 = vmatmul.mubr.bf16.gmra.mrb[0].mxu0 %v2568
      %v5255 = vpop.f32.mrb[0].mxu0
      %v5256 = vadd.f32 %v5063, %v5255
      %v5257 = vpop.f32.mrb[0].mxu0
      %v5258 = vadd.f32 %v5065, %v5257
      %v5259 = vpop.f32.mrb[0].mxu0
      %v5260 = vadd.f32 %v5067, %v5259
      %v5261 = vpop.f32.mrb[0].mxu0
      %v5262 = vadd.f32 %v5069, %v5261
      %5263 = vmatprep.mubr.bf16.mxu0 %v2576
      %5264 = vmatmul.mubr.bf16.gmra.mrb[0].mxu0 %v2575
      %v5265 = vpop.f32.mrb[0].mxu0
      %v5266 = vadd.f32 %v5073, %v5265
      %v5267 = vpop.f32.mrb[0].mxu0
      %v5268 = vadd.f32 %v5075, %v5267
      %v5269 = vpop.f32.mrb[0].mxu0
      %v5270 = vadd.f32 %v5077, %v5269
      %v5271 = vpop.f32.mrb[0].mxu0
      %v5272 = vadd.f32 %v5079, %v5271
      %5273 = vmatprep.mubr.bf16.mxu0 %v2583
      %5274 = vmatmul.mubr.bf16.gmra.mrb[0].mxu0 %v2582
      %v5275 = vpop.f32.mrb[0].mxu0
      %v5276 = vadd.f32 %v5083, %v5275
      %v5277 = vpop.f32.mrb[0].mxu0
      %v5278 = vadd.f32 %v5085, %v5277
      %v5279 = vpop.f32.mrb[0].mxu0
      %v5280 = vadd.f32 %v5087, %v5279
      %v5281 = vpop.f32.mrb[0].mxu0
      %v5282 = vadd.f32 %v5089, %v5281
      %5283 = vmatprep.mubr.bf16.mxu0 %v2590
      %5284 = vmatmul.mubr.bf16.gmra.mrb[0].mxu0 %v2589
      %v5285 = vpop.f32.mrb[0].mxu0
      %v5286 = vadd.f32 %v5093, %v5285
      %v5287 = vpop.f32.mrb[0].mxu0
      %v5288 = vadd.f32 %v5095, %v5287
      %v5289 = vpop.f32.mrb[0].mxu0
      %v5290 = vadd.f32 %v5097, %v5289
      %v5291 = vpop.f32.mrb[0].mxu0
      %v5292 = vadd.f32 %v5099, %v5291
      %5293 = vmatprep.mubr.bf16.mxu0 %v2597
      %5294 = vmatmul.mubr.bf16.gmra.mrb[0].mxu0 %v2596
      %v5295 = vpop.f32.mrb[0].mxu0
      %v5296 = vadd.f32 %v5103, %v5295
      %v5297 = vpop.f32.mrb[0].mxu0
      %v5298 = vadd.f32 %v5105, %v5297
      %v5299 = vpop.f32.mrb[0].mxu0
      %v5300 = vadd.f32 %v5107, %v5299
      %v5301 = vpop.f32.mrb[0].mxu0
      %v5302 = vadd.f32 %v5109, %v5301
      %5303 = vmatprep.mubr.bf16.mxu0 %v2604
      %5304 = vmatmul.mubr.bf16.gmra.mrb[0].mxu0 %v2603
      %v5305 = vpop.f32.mrb[0].mxu0
      %v5306 = vadd.f32 %v5113, %v5305
      %v5307 = vpop.f32.mrb[0].mxu0
      %v5308 = vadd.f32 %v5115, %v5307
      %v5309 = vpop.f32.mrb[0].mxu0
      %v5310 = vadd.f32 %v5117, %v5309
      %v5311 = vpop.f32.mrb[0].mxu0
      %v5312 = vadd.f32 %v5119, %v5311
      %5313 = vmatprep.mubr.bf16.mxu0 %v2611
      %5314 = vmatmul.mubr.bf16.gmra.mrb[0].mxu0 %v2610
      %v5315 = vpop.f32.mrb[0].mxu0
      %v5316 = vadd.f32 %v5123, %v5315
      %v5317 = vpop.f32.mrb[0].mxu0
      %v5318 = vadd.f32 %v5125, %v5317
      %v5319 = vpop.f32.mrb[0].mxu0
      %v5320 = vadd.f32 %v5127, %v5319
      %v5321 = vpop.f32.mrb[0].mxu0
      %v5322 = vadd.f32 %v5129, %v5321
      %5323 = vmatprep.mubr.bf16.mxu0 %v2618
      %5324 = vmatmul.mubr.bf16.gmra.mrb[0].mxu0 %v2617
      %v5325 = vpop.f32.mrb[0].mxu0
      %v5326 = vadd.f32 %v5133, %v5325
      %v5327 = vpop.f32.mrb[0].mxu0
      %v5328 = vadd.f32 %v5135, %v5327
      %v5329 = vpop.f32.mrb[0].mxu0
      %v5330 = vadd.f32 %v5137, %v5329
      %v5331 = vpop.f32.mrb[0].mxu0
      %v5332 = vadd.f32 %v5139, %v5331
      %5333 = vmatprep.mubr.bf16.mxu0 %v2625
      %5334 = vmatmul.mubr.bf16.gmra.mrb[0].mxu0 %v2624
      %v5335 = vpop.f32.mrb[0].mxu0
      %v5336 = vadd.f32 %v5143, %v5335
      %v5337 = vpop.f32.mrb[0].mxu0
      %v5338 = vadd.f32 %v5145, %v5337
      %v5339 = vpop.f32.mrb[0].mxu0
      %v5340 = vadd.f32 %v5147, %v5339
      %v5341 = vpop.f32.mrb[0].mxu0
      %v5342 = vadd.f32 %v5149, %v5341
      %5343 = vdwg.mxu0
      %5344 = vmatprep.subr.bf16.mxu0 %v3740
      %5345 = vmatpush1.bf16.msra.mxu0 %v3739
      %5346 = vmatprep.subr.bf16.mxu0 %v3744
      %5347 = vmatpush1.bf16.msra.mxu0 %v3743
      %5348 = vmatprep.subr.bf16.mxu0 %v3748
      %5349 = vmatpush1.bf16.msra.mxu0 %v3747
      %5350 = vmatprep.subr.bf16.mxu0 %v3752
      %5351 = vmatpush1.bf16.msra.mxu0 %v3751
      %5352 = vmatprep.subr.bf16.mxu0 %v3756
      %5353 = vmatpush1.bf16.msra.mxu0 %v3755
      %5354 = vmatprep.subr.bf16.mxu0 %v3760
      %5355 = vmatpush1.bf16.msra.mxu0 %v3759
      %5356 = vmatprep.subr.bf16.mxu0 %v3764
      %5357 = vmatpush1.bf16.msra.mxu0 %v3763
      %5358 = vmatprep.subr.bf16.mxu0 %v3768
      %5359 = vmatpush1.bf16.msra.mxu0 %v3767
      %5360 = vmatprep.subr.bf16.mxu0 0
      %5361 = vmatpush1.bf16.msra.mxu0 0
      %5362 = vmatprep.subr.bf16.mxu0 0
      %5363 = vmatpush1.bf16.msra.mxu0 0
      %5364 = vmatprep.subr.bf16.mxu0 0
      %5365 = vmatpush1.bf16.msra.mxu0 0
      %5366 = vmatprep.subr.bf16.mxu0 0
      %5367 = vmatpush1.bf16.msra.mxu0 0
      %5368 = vmatprep.subr.bf16.mxu0 0
      %5369 = vmatpush1.bf16.msra.mxu0 0
      %5370 = vmatprep.subr.bf16.mxu0 0
      %5371 = vmatpush1.bf16.msra.mxu0 0
      %5372 = vmatprep.subr.bf16.mxu0 0
      %5373 = vmatpush1.bf16.msra.mxu0 0
      %5374 = vmatprep.subr.bf16.mxu0 0
      %5375 = vmatpush1.bf16.msra.mxu0 0
      %5376 = vmatprep.mubr.bf16.mxu0 0
      %5377 = vmatmul.mubr.bf16.gmra.mrb[0].mxu0 %v2521
      %v5378 = vpop.f32.mrb[0].mxu0
      %v5379 = vadd.f32 %v5186, %v5378
      %v5380 = vpop.f32.mrb[0].mxu0
      %v5381 = vadd.f32 %v5188, %v5380
      %v5382 = vpop.f32.mrb[0].mxu0
      %v5383 = vadd.f32 %v5190, %v5382
      %v5384 = vpop.f32.mrb[0].mxu0
      %v5385 = vadd.f32 %v5192, %v5384
      %5386 = vmatprep.mubr.bf16.mxu0 0
      %5387 = vmatmul.mubr.bf16.gmra.mrb[0].mxu0 %v2528
      %v5388 = vpop.f32.mrb[0].mxu0
      %v5389 = vadd.f32 %v5196, %v5388
      %v5390 = vpop.f32.mrb[0].mxu0
      %v5391 = vadd.f32 %v5198, %v5390
      %v5392 = vpop.f32.mrb[0].mxu0
      %v5393 = vadd.f32 %v5200, %v5392
      %v5394 = vpop.f32.mrb[0].mxu0
      %v5395 = vadd.f32 %v5202, %v5394
      %5396 = vmatprep.mubr.bf16.mxu0 0
      %5397 = vmatmul.mubr.bf16.gmra.mrb[0].mxu0 %v2535
      %v5398 = vpop.f32.mrb[0].mxu0
      %v5399 = vadd.f32 %v5206, %v5398
      %v5400 = vpop.f32.mrb[0].mxu0
      %v5401 = vadd.f32 %v5208, %v5400
      %v5402 = vpop.f32.mrb[0].mxu0
      %v5403 = vadd.f32 %v5210, %v5402
      %v5404 = vpop.f32.mrb[0].mxu0
      %v5405 = vadd.f32 %v5212, %v5404
      %5406 = vmatprep.mubr.bf16.mxu0 0
      %5407 = vmatmul.mubr.bf16.gmra.mrb[0].mxu0 %v2542
      %v5408 = vpop.f32.mrb[0].mxu0
      %v5409 = vadd.f32 %v5216, %v5408
      %v5410 = vpop.f32.mrb[0].mxu0
      %v5411 = vadd.f32 %v5218, %v5410
      %v5412 = vpop.f32.mrb[0].mxu0
      %v5413 = vadd.f32 %v5220, %v5412
      %v5414 = vpop.f32.mrb[0].mxu0
      %v5415 = vadd.f32 %v5222, %v5414
      %5416 = vmatprep.mubr.bf16.mxu0 0
      %5417 = vmatmul.mubr.bf16.gmra.mrb[0].mxu0 %v2549
      %v5418 = vpop.f32.mrb[0].mxu0
      %v5419 = vadd.f32 %v5226, %v5418
      %v5420 = vpop.f32.mrb[0].mxu0
      %v5421 = vadd.f32 %v5228, %v5420
      %v5422 = vpop.f32.mrb[0].mxu0
      %v5423 = vadd.f32 %v5230, %v5422
      %v5424 = vpop.f32.mrb[0].mxu0
      %v5425 = vadd.f32 %v5232, %v5424
      %5426 = vmatprep.mubr.bf16.mxu0 0
      %5427 = vmatmul.mubr.bf16.gmra.mrb[0].mxu0 %v2556
      %v5428 = vpop.f32.mrb[0].mxu0
      %v5429 = vadd.f32 %v5236, %v5428
      %v5430 = vpop.f32.mrb[0].mxu0
      %v5431 = vadd.f32 %v5238, %v5430
      %v5432 = vpop.f32.mrb[0].mxu0
      %v5433 = vadd.f32 %v5240, %v5432
      %v5434 = vpop.f32.mrb[0].mxu0
      %v5435 = vadd.f32 %v5242, %v5434
      %5436 = vmatprep.mubr.bf16.mxu0 0
      %5437 = vmatmul.mubr.bf16.gmra.mrb[0].mxu0 %v2563
      %v5438 = vpop.f32.mrb[0].mxu0
      %v5439 = vadd.f32 %v5246, %v5438
      %v5440 = vpop.f32.mrb[0].mxu0
      %v5441 = vadd.f32 %v5248, %v5440
      %v5442 = vpop.f32.mrb[0].mxu0
      %v5443 = vadd.f32 %v5250, %v5442
      %v5444 = vpop.f32.mrb[0].mxu0
      %v5445 = vadd.f32 %v5252, %v5444
      %5446 = vmatprep.mubr.bf16.mxu0 0
      %5447 = vmatmul.mubr.bf16.gmra.mrb[0].mxu0 %v2570
      %v5448 = vpop.f32.mrb[0].mxu0
      %v5449 = vadd.f32 %v5256, %v5448
      %v5450 = vpop.f32.mrb[0].mxu0
      %v5451 = vadd.f32 %v5258, %v5450
      %v5452 = vpop.f32.mrb[0].mxu0
      %v5453 = vadd.f32 %v5260, %v5452
      %v5454 = vpop.f32.mrb[0].mxu0
      %v5455 = vadd.f32 %v5262, %v5454
      %5456 = vmatprep.mubr.bf16.mxu0 0
      %5457 = vmatmul.mubr.bf16.gmra.mrb[0].mxu0 %v2577
      %v5458 = vpop.f32.mrb[0].mxu0
      %v5459 = vadd.f32 %v5266, %v5458
      %v5460 = vpop.f32.mrb[0].mxu0
      %v5461 = vadd.f32 %v5268, %v5460
      %v5462 = vpop.f32.mrb[0].mxu0
      %v5463 = vadd.f32 %v5270, %v5462
      %v5464 = vpop.f32.mrb[0].mxu0
      %v5465 = vadd.f32 %v5272, %v5464
      %5466 = vmatprep.mubr.bf16.mxu0 0
      %5467 = vmatmul.mubr.bf16.gmra.mrb[0].mxu0 %v2584
      %v5468 = vpop.f32.mrb[0].mxu0
      %v5469 = vadd.f32 %v5276, %v5468
      %v5470 = vpop.f32.mrb[0].mxu0
      %v5471 = vadd.f32 %v5278, %v5470
      %v5472 = vpop.f32.mrb[0].mxu0
      %v5473 = vadd.f32 %v5280, %v5472
      %v5474 = vpop.f32.mrb[0].mxu0
      %v5475 = vadd.f32 %v5282, %v5474
      %5476 = vmatprep.mubr.bf16.mxu0 0
      %5477 = vmatmul.mubr.bf16.gmra.mrb[0].mxu0 %v2591
      %v5478 = vpop.f32.mrb[0].mxu0
      %v5479 = vadd.f32 %v5286, %v5478
      %v5480 = vpop.f32.mrb[0].mxu0
      %v5481 = vadd.f32 %v5288, %v5480
      %v5482 = vpop.f32.mrb[0].mxu0
      %v5483 = vadd.f32 %v5290, %v5482
      %v5484 = vpop.f32.mrb[0].mxu0
      %v5485 = vadd.f32 %v5292, %v5484
      %5486 = vmatprep.mubr.bf16.mxu0 0
      %5487 = vmatmul.mubr.bf16.gmra.mrb[0].mxu0 %v2598
      %v5488 = vpop.f32.mrb[0].mxu0
      %v5489 = vadd.f32 %v5296, %v5488
      %v5490 = vpop.f32.mrb[0].mxu0
      %v5491 = vadd.f32 %v5298, %v5490
      %v5492 = vpop.f32.mrb[0].mxu0
      %v5493 = vadd.f32 %v5300, %v5492
      %v5494 = vpop.f32.mrb[0].mxu0
      %v5495 = vadd.f32 %v5302, %v5494
      %5496 = vmatprep.mubr.bf16.mxu0 0
      %5497 = vmatmul.mubr.bf16.gmra.mrb[0].mxu0 %v2605
      %v5498 = vpop.f32.mrb[0].mxu0
      %v5499 = vadd.f32 %v5306, %v5498
      %v5500 = vpop.f32.mrb[0].mxu0
      %v5501 = vadd.f32 %v5308, %v5500
      %v5502 = vpop.f32.mrb[0].mxu0
      %v5503 = vadd.f32 %v5310, %v5502
      %v5504 = vpop.f32.mrb[0].mxu0
      %v5505 = vadd.f32 %v5312, %v5504
      %5506 = vmatprep.mubr.bf16.mxu0 0
      %5507 = vmatmul.mubr.bf16.gmra.mrb[0].mxu0 %v2612
      %v5508 = vpop.f32.mrb[0].mxu0
      %v5509 = vadd.f32 %v5316, %v5508
      %v5510 = vpop.f32.mrb[0].mxu0
      %v5511 = vadd.f32 %v5318, %v5510
      %v5512 = vpop.f32.mrb[0].mxu0
      %v5513 = vadd.f32 %v5320, %v5512
      %v5514 = vpop.f32.mrb[0].mxu0
      %v5515 = vadd.f32 %v5322, %v5514
      %5516 = vmatprep.mubr.bf16.mxu0 0
      %5517 = vmatmul.mubr.bf16.gmra.mrb[0].mxu0 %v2619
      %v5518 = vpop.f32.mrb[0].mxu0
      %v5519 = vadd.f32 %v5326, %v5518
      %v5520 = vpop.f32.mrb[0].mxu0
      %v5521 = vadd.f32 %v5328, %v5520
      %v5522 = vpop.f32.mrb[0].mxu0
      %v5523 = vadd.f32 %v5330, %v5522
      %v5524 = vpop.f32.mrb[0].mxu0
      %v5525 = vadd.f32 %v5332, %v5524
      %5526 = vmatprep.mubr.bf16.mxu0 0
      %5527 = vmatmul.mubr.bf16.gmra.mrb[0].mxu0 %v2626
      %v5528 = vpop.f32.mrb[0].mxu0
      %v5529 = vadd.f32 %v5336, %v5528
      %v5530 = vpop.f32.mrb[0].mxu0
      %v5531 = vadd.f32 %v5338, %v5530
      %v5532 = vpop.f32.mrb[0].mxu0
      %v5533 = vadd.f32 %v5340, %v5532
      %v5534 = vpop.f32.mrb[0].mxu0
      %v5535 = vadd.f32 %v5342, %v5534
      %5536 = vdwg.mxu0
      %v5537 = vmax.f32 %v4607, 0.0
      %v5538 = vmax.f32 %v4609, 0.0
      %v5539 = vmax.f32 %v5379, 0.0
      %v5540 = vmax.f32 %v5381, 0.0
      %v5541 = vmax.f32 %v4611, 0.0
      %v5542 = vmax.f32 %v4613, 0.0
      %v5543 = vmax.f32 %v5383, 0.0
      %v5544 = vmax.f32 %v5385, 0.0
      %v5545 = vmax.f32 %v4617, 0.0
      %v5546 = vmax.f32 %v4619, 0.0
      %v5547 = vmax.f32 %v5389, 0.0
      %v5548 = vmax.f32 %v5391, 0.0
      %v5549 = vmax.f32 %v4621, 0.0
      %v5550 = vmax.f32 %v4623, 0.0
      %v5551 = vmax.f32 %v5393, 0.0
      %v5552 = vmax.f32 %v5395, 0.0
      %v5553 = vmax.f32 %v4627, 0.0
      %v5554 = vmax.f32 %v4629, 0.0
      %v5555 = vmax.f32 %v5399, 0.0
      %v5556 = vmax.f32 %v5401, 0.0
      %v5557 = vmax.f32 %v4631, 0.0
      %v5558 = vmax.f32 %v4633, 0.0
      %v5559 = vmax.f32 %v5403, 0.0
      %v5560 = vmax.f32 %v5405, 0.0
      %v5561 = vmax.f32 %v4637, 0.0
      %v5562 = vmax.f32 %v4639, 0.0
      %v5563 = vmax.f32 %v5409, 0.0
      %v5564 = vmax.f32 %v5411, 0.0
      %v5565 = vmax.f32 %v4641, 0.0
      %v5566 = vmax.f32 %v4643, 0.0
      %v5567 = vmax.f32 %v5413, 0.0
      %v5568 = vmax.f32 %v5415, 0.0
      %v5569 = vmax.f32 %v4647, 0.0
      %v5570 = vmax.f32 %v4649, 0.0
      %v5571 = vmax.f32 %v5419, 0.0
      %v5572 = vmax.f32 %v5421, 0.0
      %v5573 = vmax.f32 %v4651, 0.0
      %v5574 = vmax.f32 %v4653, 0.0
      %v5575 = vmax.f32 %v5423, 0.0
      %v5576 = vmax.f32 %v5425, 0.0
      %v5577 = vmax.f32 %v4657, 0.0
      %v5578 = vmax.f32 %v4659, 0.0
      %v5579 = vmax.f32 %v5429, 0.0
      %v5580 = vmax.f32 %v5431, 0.0
      %v5581 = vmax.f32 %v4661, 0.0
      %v5582 = vmax.f32 %v4663, 0.0
      %v5583 = vmax.f32 %v5433, 0.0
      %v5584 = vmax.f32 %v5435, 0.0
      %v5585 = vmax.f32 %v4667, 0.0
      %v5586 = vmax.f32 %v4669, 0.0
      %v5587 = vmax.f32 %v5439, 0.0
      %v5588 = vmax.f32 %v5441, 0.0
      %v5589 = vmax.f32 %v4671, 0.0
      %v5590 = vmax.f32 %v4673, 0.0
      %v5591 = vmax.f32 %v5443, 0.0
      %v5592 = vmax.f32 %v5445, 0.0
      %v5593 = vmax.f32 %v4677, 0.0
      %v5594 = vmax.f32 %v4679, 0.0
      %v5595 = vmax.f32 %v5449, 0.0
      %v5596 = vmax.f32 %v5451, 0.0
      %v5597 = vmax.f32 %v4681, 0.0
      %v5598 = vmax.f32 %v4683, 0.0
      %v5599 = vmax.f32 %v5453, 0.0
      %v5600 = vmax.f32 %v5455, 0.0
      %v5601 = vmax.f32 %v4687, 0.0
      %v5602 = vmax.f32 %v4689, 0.0
      %v5603 = vmax.f32 %v5459, 0.0
      %v5604 = vmax.f32 %v5461, 0.0
      %v5605 = vmax.f32 %v4691, 0.0
      %v5606 = vmax.f32 %v4693, 0.0
      %v5607 = vmax.f32 %v5463, 0.0
      %v5608 = vmax.f32 %v5465, 0.0
      %v5609 = vmax.f32 %v4697, 0.0
      %v5610 = vmax.f32 %v4699, 0.0
      %v5611 = vmax.f32 %v5469, 0.0
      %v5612 = vmax.f32 %v5471, 0.0
      %v5613 = vmax.f32 %v4701, 0.0
      %v5614 = vmax.f32 %v4703, 0.0
      %v5615 = vmax.f32 %v5473, 0.0
      %v5616 = vmax.f32 %v5475, 0.0
      %v5617 = vmax.f32 %v4707, 0.0
      %v5618 = vmax.f32 %v4709, 0.0
      %v5619 = vmax.f32 %v5479, 0.0
      %v5620 = vmax.f32 %v5481, 0.0
      %v5621 = vmax.f32 %v4711, 0.0
      %v5622 = vmax.f32 %v4713, 0.0
      %v5623 = vmax.f32 %v5483, 0.0
      %v5624 = vmax.f32 %v5485, 0.0
      %v5625 = vmax.f32 %v4717, 0.0
      %v5626 = vmax.f32 %v4719, 0.0
      %v5627 = vmax.f32 %v5489, 0.0
      %v5628 = vmax.f32 %v5491, 0.0
      %v5629 = vmax.f32 %v4721, 0.0
      %v5630 = vmax.f32 %v4723, 0.0
      %v5631 = vmax.f32 %v5493, 0.0
      %v5632 = vmax.f32 %v5495, 0.0
      %v5633 = vmax.f32 %v4727, 0.0
      %v5634 = vmax.f32 %v4729, 0.0
      %v5635 = vmax.f32 %v5499, 0.0
      %v5636 = vmax.f32 %v5501, 0.0
      %v5637 = vmax.f32 %v4731, 0.0
      %v5638 = vmax.f32 %v4733, 0.0
      %v5639 = vmax.f32 %v5503, 0.0
      %v5640 = vmax.f32 %v5505, 0.0
      %v5641 = vmax.f32 %v4737, 0.0
      %v5642 = vmax.f32 %v4739, 0.0
      %v5643 = vmax.f32 %v5509, 0.0
      %v5644 = vmax.f32 %v5511, 0.0
      %v5645 = vmax.f32 %v4741, 0.0
      %v5646 = vmax.f32 %v4743, 0.0
      %v5647 = vmax.f32 %v5513, 0.0
      %v5648 = vmax.f32 %v5515, 0.0
      %v5649 = vmax.f32 %v4747, 0.0
      %v5650 = vmax.f32 %v4749, 0.0
      %v5651 = vmax.f32 %v5519, 0.0
      %v5652 = vmax.f32 %v5521, 0.0
      %v5653 = vmax.f32 %v4751, 0.0
      %v5654 = vmax.f32 %v4753, 0.0
      %v5655 = vmax.f32 %v5523, 0.0
      %v5656 = vmax.f32 %v5525, 0.0
      %v5657 = vmax.f32 %v4757, 0.0
      %v5658 = vmax.f32 %v4759, 0.0
      %v5659 = vmax.f32 %v5529, 0.0
      %v5660 = vmax.f32 %v5531, 0.0
      %v5661 = vmax.f32 %v4761, 0.0
      %v5662 = vmax.f32 %v4763, 0.0
      %v5663 = vmax.f32 %v5533, 0.0
      %v5664 = vmax.f32 %v5535, 0.0
      %v5665 = vpack.c.bf16 %v5541, %v5537
      %v5666 = vpack.c.bf16 %v5542, %v5538
      %v5667 = vpack.c.bf16 %v5543, %v5539
      %v5668 = vpack.c.bf16 %v5544, %v5540
      %v5669 = vpack.c.bf16 %v5549, %v5545
      %v5670 = vpack.c.bf16 %v5550, %v5546
      %v5671 = vpack.c.bf16 %v5551, %v5547
      %v5672 = vpack.c.bf16 %v5552, %v5548
      %v5673 = vpack.c.bf16 %v5557, %v5553
      %v5674 = vpack.c.bf16 %v5558, %v5554
      %v5675 = vpack.c.bf16 %v5559, %v5555
      %v5676 = vpack.c.bf16 %v5560, %v5556
      %v5677 = vpack.c.bf16 %v5565, %v5561
      %v5678 = vpack.c.bf16 %v5566, %v5562
      %v5679 = vpack.c.bf16 %v5567, %v5563
      %v5680 = vpack.c.bf16 %v5568, %v5564
      %v5681 = vpack.c.bf16 %v5573, %v5569
      %v5682 = vpack.c.bf16 %v5574, %v5570
      %v5683 = vpack.c.bf16 %v5575, %v5571
      %v5684 = vpack.c.bf16 %v5576, %v5572
      %v5685 = vpack.c.bf16 %v5581, %v5577
      %v5686 = vpack.c.bf16 %v5582, %v5578
      %v5687 = vpack.c.bf16 %v5583, %v5579
      %v5688 = vpack.c.bf16 %v5584, %v5580
      %v5689 = vpack.c.bf16 %v5589, %v5585
      %v5690 = vpack.c.bf16 %v5590, %v5586
      %v5691 = vpack.c.bf16 %v5591, %v5587
      %v5692 = vpack.c.bf16 %v5592, %v5588
      %v5693 = vpack.c.bf16 %v5597, %v5593
      %v5694 = vpack.c.bf16 %v5598, %v5594
      %v5695 = vpack.c.bf16 %v5599, %v5595
      %v5696 = vpack.c.bf16 %v5600, %v5596
      %v5697 = vpack.c.bf16 %v5605, %v5601
      %v5698 = vpack.c.bf16 %v5606, %v5602
      %v5699 = vpack.c.bf16 %v5607, %v5603
      %v5700 = vpack.c.bf16 %v5608, %v5604
      %v5701 = vpack.c.bf16 %v5613, %v5609
      %v5702 = vpack.c.bf16 %v5614, %v5610
      %v5703 = vpack.c.bf16 %v5615, %v5611
      %v5704 = vpack.c.bf16 %v5616, %v5612
      %v5705 = vpack.c.bf16 %v5621, %v5617
      %v5706 = vpack.c.bf16 %v5622, %v5618
      %v5707 = vpack.c.bf16 %v5623, %v5619
      %v5708 = vpack.c.bf16 %v5624, %v5620
      %v5709 = vpack.c.bf16 %v5629, %v5625
      %v5710 = vpack.c.bf16 %v5630, %v5626
      %v5711 = vpack.c.bf16 %v5631, %v5627
      %v5712 = vpack.c.bf16 %v5632, %v5628
      %v5713 = vpack.c.bf16 %v5637, %v5633
      %v5714 = vpack.c.bf16 %v5638, %v5634
      %v5715 = vpack.c.bf16 %v5639, %v5635
      %v5716 = vpack.c.bf16 %v5640, %v5636
      %v5717 = vpack.c.bf16 %v5645, %v5641
      %v5718 = vpack.c.bf16 %v5646, %v5642
      %v5719 = vpack.c.bf16 %v5647, %v5643
      %v5720 = vpack.c.bf16 %v5648, %v5644
      %v5721 = vpack.c.bf16 %v5653, %v5649
      %v5722 = vpack.c.bf16 %v5654, %v5650
      %v5723 = vpack.c.bf16 %v5655, %v5651
      %v5724 = vpack.c.bf16 %v5656, %v5652
      %v5725 = vpack.c.bf16 %v5661, %v5657
      %v5726 = vpack.c.bf16 %v5662, %v5658
      %v5727 = vpack.c.bf16 %v5663, %v5659
      %v5728 = vpack.c.bf16 %v5664, %v5660
      %v5729 = vld [vmem:[%s5] sm:$0xff]
      %v5730 = vld [vmem:[%s5 + $0x8] sm:$0xf]
      %v5731 = vld [vmem:[%s5 + $0xc] sm:$0xff]
      %v5732 = vld [vmem:[%s5 + $0x14] sm:$0xf]
      %v5733 = vld [vmem:[%s5 + $0x18] sm:$0xff]
      %v5734 = vld [vmem:[%s5 + $0x20] sm:$0xf]
      %v5735 = vld [vmem:[%s5 + $0x24] sm:$0xff]
      %v5736 = vld [vmem:[%s5 + $0x2c] sm:$0xf]
      %v5737 = vld [vmem:[%s5 + $0x30] sm:$0xff]
      %v5738 = vld [vmem:[%s5 + $0x38] sm:$0xf]
      %v5739 = vld [vmem:[%s5 + $0x3c] sm:$0xff]
      %v5740 = vld [vmem:[%s5 + $0x44] sm:$0xf]
      %v5741 = vld [vmem:[%s5 + $0x48] sm:$0xff]
      %v5742 = vld [vmem:[%s5 + $0x50] sm:$0xf]
      %v5743 = vld [vmem:[%s5 + $0x54] sm:$0xff]
      %v5744 = vld [vmem:[%s5 + $0x5c] sm:$0xf]
      %v5745 = vld [vmem:[%s5 + $0x60] sm:$0xff]
      %v5746 = vld [vmem:[%s5 + $0x68] sm:$0xf]
      %v5747 = vld [vmem:[%s5 + $0x6c] sm:$0xff]
      %v5748 = vld [vmem:[%s5 + $0x74] sm:$0xf]
      %v5749 = vld [vmem:[%s5 + $0x78] sm:$0xff]
      %v5750 = vld [vmem:[%s5 + $0x80] sm:$0xf]
      %v5751 = vld [vmem:[%s5 + $0x84] sm:$0xff]
      %v5752 = vld [vmem:[%s5 + $0x8c] sm:$0xf]
      %v5753 = vld [vmem:[%s5 + $0x90] sm:$0xff]
      %v5754 = vld [vmem:[%s5 + $0x98] sm:$0xf]
      %v5755 = vld [vmem:[%s5 + $0x9c] sm:$0xff]
      %v5756 = vld [vmem:[%s5 + $0xa4] sm:$0xf]
      %v5757 = vld [vmem:[%s5 + $0xa8] sm:$0xff]
      %v5758 = vld [vmem:[%s5 + $0xb0] sm:$0xf]
      %v5759 = vld [vmem:[%s5 + $0xb4] sm:$0xff]
      %v5760 = vld [vmem:[%s5 + $0xbc] sm:$0xf]
      %v5761 = vld [vmem:[%s5 + $0xc0] sm:$0xff]
      %v5762 = vld [vmem:[%s5 + $0xc8] sm:$0xf]
      %v5763 = vld [vmem:[%s5 + $0xcc] sm:$0xff]
      %v5764 = vld [vmem:[%s5 + $0xd4] sm:$0xf]
      %v5765 = vld [vmem:[%s5 + $0xd8] sm:$0xff]
      %v5766 = vld [vmem:[%s5 + $0xe0] sm:$0xf]
      %v5767 = vld [vmem:[%s5 + $0xe4] sm:$0xff]
      %v5768 = vld [vmem:[%s5 + $0xec] sm:$0xf]
      %v5769 = vld [vmem:[%s5 + $0xf0] sm:$0xff]
      %v5770 = vld [vmem:[%s5 + $0xf8] sm:$0xf]
      %v5771 = vld [vmem:[%s5 + $0xfc] sm:$0xff]
      %v5772 = vld [vmem:[%s5 + $0x104] sm:$0xf]
      %v5773 = vld [vmem:[%s5 + $0x108] sm:$0xff]
      %v5774 = vld [vmem:[%s5 + $0x110] sm:$0xf]
      %v5775 = vld [vmem:[%s5 + $0x114] sm:$0xff]
      %v5776 = vld [vmem:[%s5 + $0x11c] sm:$0xf]
      %v5777 = vld [vmem:[%s5 + $0x120] sm:$0xff]
      %v5778 = vld [vmem:[%s5 + $0x128] sm:$0xf]
      %v5779 = vld [vmem:[%s5 + $0x12c] sm:$0xff]
      %v5780 = vld [vmem:[%s5 + $0x134] sm:$0xf]
      %v5781 = vld [vmem:[%s5 + $0x138] sm:$0xff]
      %v5782 = vld [vmem:[%s5 + $0x140] sm:$0xf]
      %v5783 = vld [vmem:[%s5 + $0x144] sm:$0xff]
      %v5784 = vld [vmem:[%s5 + $0x14c] sm:$0xf]
      %v5785 = vld [vmem:[%s5 + $0x150] sm:$0xff]
      %v5786 = vld [vmem:[%s5 + $0x158] sm:$0xf]
      %v5787 = vld [vmem:[%s5 + $0x15c] sm:$0xff]
      %v5788 = vld [vmem:[%s5 + $0x164] sm:$0xf]
      %v5789 = vld [vmem:[%s5 + $0x168] sm:$0xff]
      %v5790 = vld [vmem:[%s5 + $0x170] sm:$0xf]
      %v5791 = vld [vmem:[%s5 + $0x174] sm:$0xff]
      %v5792 = vld [vmem:[%s5 + $0x17c] sm:$0xf]
      %v5793 = vld [vmem:[%s5 + $0x180] sm:$0xff]
      %v5794 = vld [vmem:[%s5 + $0x188] sm:$0xf]
      %v5795 = vld [vmem:[%s5 + $0x18c] sm:$0xff]
      %v5796 = vld [vmem:[%s5 + $0x194] sm:$0xf]
      %v5797 = vld [vmem:[%s5 + $0x198] sm:$0xff]
      %v5798 = vld [vmem:[%s5 + $0x1a0] sm:$0xf]
      %v5799 = vld [vmem:[%s5 + $0x1a4] sm:$0xff]
      %v5800 = vld [vmem:[%s5 + $0x1ac] sm:$0xf]
      %v5801 = vld [vmem:[%s5 + $0x1b0] sm:$0xff]
      %v5802 = vld [vmem:[%s5 + $0x1b8] sm:$0xf]
      %v5803 = vld [vmem:[%s5 + $0x1bc] sm:$0xff]
      %v5804 = vld [vmem:[%s5 + $0x1c4] sm:$0xf]
      %v5805 = vld [vmem:[%s5 + $0x1c8] sm:$0xff]
      %v5806 = vld [vmem:[%s5 + $0x1d0] sm:$0xf]
      %v5807 = vld [vmem:[%s5 + $0x1d4] sm:$0xff]
      %v5808 = vld [vmem:[%s5 + $0x1dc] sm:$0xf]
      %v5809 = vld [vmem:[%s5 + $0x1e0] sm:$0xff]
      %v5810 = vld [vmem:[%s5 + $0x1e8] sm:$0xf]
      %v5811 = vld [vmem:[%s5 + $0x1ec] sm:$0xff]
      %v5812 = vld [vmem:[%s5 + $0x1f4] sm:$0xf]
      %v5813 = vld [vmem:[%s5 + $0x1f8] sm:$0xff]
      %v5814 = vld [vmem:[%s5 + $0x200] sm:$0xf]
      %v5815 = vld [vmem:[%s5 + $0x204] sm:$0xff]
      %v5816 = vld [vmem:[%s5 + $0x20c] sm:$0xf]
      %v5817 = vld [vmem:[%s5 + $0x210] sm:$0xff]
      %v5818 = vld [vmem:[%s5 + $0x218] sm:$0xf]
      %v5819 = vld [vmem:[%s5 + $0x21c] sm:$0xff]
      %v5820 = vld [vmem:[%s5 + $0x224] sm:$0xf]
      %v5821 = vld [vmem:[%s5 + $0x228] sm:$0xff]
      %v5822 = vld [vmem:[%s5 + $0x230] sm:$0xf]
      %v5823 = vld [vmem:[%s5 + $0x234] sm:$0xff]
      %v5824 = vld [vmem:[%s5 + $0x23c] sm:$0xf]
      %v5825 = vld [vmem:[%s5 + $0x240] sm:$0xff]
      %v5826 = vld [vmem:[%s5 + $0x248] sm:$0xf]
      %v5827 = vld [vmem:[%s5 + $0x24c] sm:$0xff]
      %v5828 = vld [vmem:[%s5 + $0x254] sm:$0xf]
      %v5829 = vld [vmem:[%s5 + $0x258] sm:$0xff]
      %v5830 = vld [vmem:[%s5 + $0x260] sm:$0xf]
      %v5831 = vld [vmem:[%s5 + $0x264] sm:$0xff]
      %v5832 = vld [vmem:[%s5 + $0x26c] sm:$0xf]
      %v5833 = vld [vmem:[%s5 + $0x270] sm:$0xff]
      %v5834 = vld [vmem:[%s5 + $0x278] sm:$0xf]
      %v5835 = vld [vmem:[%s5 + $0x27c] sm:$0xff]
      %v5836 = vld [vmem:[%s5 + $0x284] sm:$0xf]
      %v5837 = vld [vmem:[%s5 + $0x288] sm:$0xff]
      %v5838 = vld [vmem:[%s5 + $0x290] sm:$0xf]
      %v5839 = vld [vmem:[%s5 + $0x294] sm:$0xff]
      %v5840 = vld [vmem:[%s5 + $0x29c] sm:$0xf]
      %v5841 = vld [vmem:[%s5 + $0x2a0] sm:$0xff]
      %v5842 = vld [vmem:[%s5 + $0x2a8] sm:$0xf]
      %v5843 = vld [vmem:[%s5 + $0x2ac] sm:$0xff]
      %v5844 = vld [vmem:[%s5 + $0x2b4] sm:$0xf]
      %v5845 = vld [vmem:[%s5 + $0x2b8] sm:$0xff]
      %v5846 = vld [vmem:[%s5 + $0x2c0] sm:$0xf]
      %v5847 = vld [vmem:[%s5 + $0x2c4] sm:$0xff]
      %v5848 = vld [vmem:[%s5 + $0x2cc] sm:$0xf]
      %v5849 = vld [vmem:[%s5 + $0x2d0] sm:$0xff]
      %v5850 = vld [vmem:[%s5 + $0x2d8] sm:$0xf]
      %v5851 = vld [vmem:[%s5 + $0x2dc] sm:$0xff]
      %v5852 = vld [vmem:[%s5 + $0x2e4] sm:$0xf]
      %v5853 = vld [vmem:[%s5 + $0x2e8] sm:$0xff]
      %v5854 = vld [vmem:[%s5 + $0x2f0] sm:$0xf]
      %v5855 = vld [vmem:[%s5 + $0x2f4] sm:$0xff]
      %v5856 = vld [vmem:[%s5 + $0x2fc] sm:$0xf]
      %v5857 = vld [vmem:[%s6] sm:$0x7]
      %v5859 = vlaneseq
      %v5860 = vshrl.u32 %v5859, 7
      %v5861 = vsub.s32 0, %v5860
      %v5862 = vrot.slane %v5857, %v5861
      %v5863 = vlaneseq
      %v5864 = vshrl.u32 %v5863, 7
      %v5865 = vsub.s32 1, %v5864
      %v5866 = vrot.slane %v5857, %v5865
      %v5867 = vlaneseq
      %v5868 = vshrl.u32 %v5867, 7
      %v5869 = vsub.s32 2, %v5868
      %v5870 = vrot.slane %v5857, %v5869
      %v6002 = vunpack.c.l.b16 %v5729
      %v6003 = vunpack.c.h.b16 %v5729
      %v6004 = vunpack.c.l.b16 %v5730
      %v6005 = vunpack.c.l.b16 %v5731
      %v6006 = vunpack.c.h.b16 %v5731
      %v6007 = vunpack.c.l.b16 %v5732
      %v6008 = vunpack.c.l.b16 %v5733
      %v6009 = vunpack.c.h.b16 %v5733
      %v6010 = vunpack.c.l.b16 %v5734
      %v6011 = vunpack.c.l.b16 %v5735
      %v6012 = vunpack.c.h.b16 %v5735
      %v6013 = vunpack.c.l.b16 %v5736
      %v6014 = vunpack.c.l.b16 %v5737
      %v6015 = vunpack.c.h.b16 %v5737
      %v6016 = vunpack.c.l.b16 %v5738
      %v6017 = vunpack.c.l.b16 %v5739
      %v6018 = vunpack.c.h.b16 %v5739
      %v6019 = vunpack.c.l.b16 %v5740
      %v6020 = vunpack.c.l.b16 %v5741
      %v6021 = vunpack.c.h.b16 %v5741
      %v6022 = vunpack.c.l.b16 %v5742
      %v6023 = vunpack.c.l.b16 %v5743
      %v6024 = vunpack.c.h.b16 %v5743
      %v6025 = vunpack.c.l.b16 %v5744
      %v6026 = vunpack.c.l.b16 %v5745
      %v6027 = vunpack.c.h.b16 %v5745
      %v6028 = vunpack.c.l.b16 %v5746
      %v6029 = vunpack.c.l.b16 %v5747
      %v6030 = vunpack.c.h.b16 %v5747
      %v6031 = vunpack.c.l.b16 %v5748
      %v6032 = vunpack.c.l.b16 %v5749
      %v6033 = vunpack.c.h.b16 %v5749
      %v6034 = vunpack.c.l.b16 %v5750
      %v6035 = vunpack.c.l.b16 %v5751
      %v6036 = vunpack.c.h.b16 %v5751
      %v6037 = vunpack.c.l.b16 %v5752
      %v6038 = vunpack.c.l.b16 %v5753
      %v6039 = vunpack.c.h.b16 %v5753
      %v6040 = vunpack.c.l.b16 %v5754
      %v6041 = vunpack.c.l.b16 %v5755
      %v6042 = vunpack.c.h.b16 %v5755
      %v6043 = vunpack.c.l.b16 %v5756
      %v6044 = vunpack.c.l.b16 %v5757
      %v6045 = vunpack.c.h.b16 %v5757
      %v6046 = vunpack.c.l.b16 %v5758
      %v6047 = vunpack.c.l.b16 %v5759
      %v6048 = vunpack.c.h.b16 %v5759
      %v6049 = vunpack.c.l.b16 %v5760
      %v6050 = vunpack.c.l.b16 %v5761
      %v6051 = vunpack.c.h.b16 %v5761
      %v6052 = vunpack.c.l.b16 %v5762
      %v6053 = vunpack.c.l.b16 %v5763
      %v6054 = vunpack.c.h.b16 %v5763
      %v6055 = vunpack.c.l.b16 %v5764
      %v6056 = vunpack.c.l.b16 %v5765
      %v6057 = vunpack.c.h.b16 %v5765
      %v6058 = vunpack.c.l.b16 %v5766
      %v6059 = vunpack.c.l.b16 %v5767
      %v6060 = vunpack.c.h.b16 %v5767
      %v6061 = vunpack.c.l.b16 %v5768
      %v6062 = vunpack.c.l.b16 %v5769
      %v6063 = vunpack.c.h.b16 %v5769
      %v6064 = vunpack.c.l.b16 %v5770
      %v6065 = vunpack.c.l.b16 %v5771
      %v6066 = vunpack.c.h.b16 %v5771
      %v6067 = vunpack.c.l.b16 %v5772
      %v6068 = vunpack.c.l.b16 %v5773
      %v6069 = vunpack.c.h.b16 %v5773
      %v6070 = vunpack.c.l.b16 %v5774
      %v6071 = vunpack.c.l.b16 %v5775
      %v6072 = vunpack.c.h.b16 %v5775
      %v6073 = vunpack.c.l.b16 %v5776
      %v6074 = vunpack.c.l.b16 %v5777
      %v6075 = vunpack.c.h.b16 %v5777
      %v6076 = vunpack.c.l.b16 %v5778
      %v6077 = vunpack.c.l.b16 %v5779
      %v6078 = vunpack.c.h.b16 %v5779
      %v6079 = vunpack.c.l.b16 %v5780
      %v6080 = vunpack.c.l.b16 %v5781
      %v6081 = vunpack.c.h.b16 %v5781
      %v6082 = vunpack.c.l.b16 %v5782
      %v6083 = vunpack.c.l.b16 %v5783
      %v6084 = vunpack.c.h.b16 %v5783
      %v6085 = vunpack.c.l.b16 %v5784
      %v6086 = vunpack.c.l.b16 %v5785
      %v6087 = vunpack.c.h.b16 %v5785
      %v6088 = vunpack.c.l.b16 %v5786
      %v6089 = vunpack.c.l.b16 %v5787
      %v6090 = vunpack.c.h.b16 %v5787
      %v6091 = vunpack.c.l.b16 %v5788
      %v6092 = vunpack.c.l.b16 %v5789
      %v6093 = vunpack.c.h.b16 %v5789
      %v6094 = vunpack.c.l.b16 %v5790
      %v6095 = vunpack.c.l.b16 %v5791
      %v6096 = vunpack.c.h.b16 %v5791
      %v6097 = vunpack.c.l.b16 %v5792
      %v6098 = vunpack.c.l.b16 %v5793
      %v6099 = vunpack.c.h.b16 %v5793
      %v6100 = vunpack.c.l.b16 %v5794
      %v6101 = vunpack.c.l.b16 %v5795
      %v6102 = vunpack.c.h.b16 %v5795
      %v6103 = vunpack.c.l.b16 %v5796
      %v6104 = vunpack.c.l.b16 %v5797
      %v6105 = vunpack.c.h.b16 %v5797
      %v6106 = vunpack.c.l.b16 %v5798
      %v6107 = vunpack.c.l.b16 %v5799
      %v6108 = vunpack.c.h.b16 %v5799
      %v6109 = vunpack.c.l.b16 %v5800
      %v6110 = vunpack.c.l.b16 %v5801
      %v6111 = vunpack.c.h.b16 %v5801
      %v6112 = vunpack.c.l.b16 %v5802
      %v6113 = vunpack.c.l.b16 %v5803
      %v6114 = vunpack.c.h.b16 %v5803
      %v6115 = vunpack.c.l.b16 %v5804
      %v6116 = vunpack.c.l.b16 %v5805
      %v6117 = vunpack.c.h.b16 %v5805
      %v6118 = vunpack.c.l.b16 %v5806
      %v6119 = vunpack.c.l.b16 %v5807
      %v6120 = vunpack.c.h.b16 %v5807
      %v6121 = vunpack.c.l.b16 %v5808
      %v6122 = vunpack.c.l.b16 %v5809
      %v6123 = vunpack.c.h.b16 %v5809
      %v6124 = vunpack.c.l.b16 %v5810
      %v6125 = vunpack.c.l.b16 %v5811
      %v6126 = vunpack.c.h.b16 %v5811
      %v6127 = vunpack.c.l.b16 %v5812
      %v6128 = vunpack.c.l.b16 %v5813
      %v6129 = vunpack.c.h.b16 %v5813
      %v6130 = vunpack.c.l.b16 %v5814
      %v6131 = vunpack.c.l.b16 %v5815
      %v6132 = vunpack.c.h.b16 %v5815
      %v6133 = vunpack.c.l.b16 %v5816
      %v6134 = vunpack.c.l.b16 %v5817
      %v6135 = vunpack.c.h.b16 %v5817
      %v6136 = vunpack.c.l.b16 %v5818
      %v6137 = vunpack.c.l.b16 %v5819
      %v6138 = vunpack.c.h.b16 %v5819
      %v6139 = vunpack.c.l.b16 %v5820
      %v6140 = vunpack.c.l.b16 %v5821
      %v6141 = vunpack.c.h.b16 %v5821
      %v6142 = vunpack.c.l.b16 %v5822
      %v6143 = vunpack.c.l.b16 %v5823
      %v6144 = vunpack.c.h.b16 %v5823
      %v6145 = vunpack.c.l.b16 %v5824
      %v6146 = vunpack.c.l.b16 %v5825
      %v6147 = vunpack.c.h.b16 %v5825
      %v6148 = vunpack.c.l.b16 %v5826
      %v6149 = vunpack.c.l.b16 %v5827
      %v6150 = vunpack.c.h.b16 %v5827
      %v6151 = vunpack.c.l.b16 %v5828
      %v6152 = vunpack.c.l.b16 %v5829
      %v6153 = vunpack.c.h.b16 %v5829
      %v6154 = vunpack.c.l.b16 %v5830
      %v6155 = vunpack.c.l.b16 %v5831
      %v6156 = vunpack.c.h.b16 %v5831
      %v6157 = vunpack.c.l.b16 %v5832
      %v6158 = vunpack.c.l.b16 %v5833
      %v6159 = vunpack.c.h.b16 %v5833
      %v6160 = vunpack.c.l.b16 %v5834
      %v6161 = vunpack.c.l.b16 %v5835
      %v6162 = vunpack.c.h.b16 %v5835
      %v6163 = vunpack.c.l.b16 %v5836
      %v6164 = vunpack.c.l.b16 %v5837
      %v6165 = vunpack.c.h.b16 %v5837
      %v6166 = vunpack.c.l.b16 %v5838
      %v6167 = vunpack.c.l.b16 %v5839
      %v6168 = vunpack.c.h.b16 %v5839
      %v6169 = vunpack.c.l.b16 %v5840
      %v6170 = vunpack.c.l.b16 %v5841
      %v6171 = vunpack.c.h.b16 %v5841
      %v6172 = vunpack.c.l.b16 %v5842
      %v6173 = vunpack.c.l.b16 %v5843
      %v6174 = vunpack.c.h.b16 %v5843
      %v6175 = vunpack.c.l.b16 %v5844
      %v6176 = vunpack.c.l.b16 %v5845
      %v6177 = vunpack.c.h.b16 %v5845
      %v6178 = vunpack.c.l.b16 %v5846
      %v6179 = vunpack.c.l.b16 %v5847
      %v6180 = vunpack.c.h.b16 %v5847
      %v6181 = vunpack.c.l.b16 %v5848
      %v6182 = vunpack.c.l.b16 %v5849
      %v6183 = vunpack.c.h.b16 %v5849
      %v6184 = vunpack.c.l.b16 %v5850
      %v6185 = vunpack.c.l.b16 %v5851
      %v6186 = vunpack.c.h.b16 %v5851
      %v6187 = vunpack.c.l.b16 %v5852
      %v6188 = vunpack.c.l.b16 %v5853
      %v6189 = vunpack.c.h.b16 %v5853
      %v6190 = vunpack.c.l.b16 %v5854
      %v6191 = vunpack.c.l.b16 %v5855
      %v6192 = vunpack.c.h.b16 %v5855
      %v6193 = vunpack.c.l.b16 %v5856
      %v6194 = vpack.c.b16 %v6005, %v6002
      %v6195 = vpack.c.b16 %v6006, %v6003
      %v6196 = vpack.c.b16 %v6007, %v6004
      %v6197 = vpack.c.b16 %v6011, %v6008
      %v6198 = vpack.c.b16 %v6012, %v6009
      %v6199 = vpack.c.b16 %v6013, %v6010
      %v6200 = vpack.c.b16 %v6017, %v6014
      %v6201 = vpack.c.b16 %v6018, %v6015
      %v6202 = vpack.c.b16 %v6019, %v6016
      %v6203 = vpack.c.b16 %v6023, %v6020
      %v6204 = vpack.c.b16 %v6024, %v6021
      %v6205 = vpack.c.b16 %v6025, %v6022
      %v6206 = vpack.c.b16 %v6029, %v6026
      %v6207 = vpack.c.b16 %v6030, %v6027
      %v6208 = vpack.c.b16 %v6031, %v6028
      %v6209 = vpack.c.b16 %v6035, %v6032
      %v6210 = vpack.c.b16 %v6036, %v6033
      %v6211 = vpack.c.b16 %v6037, %v6034
      %v6212 = vpack.c.b16 %v6041, %v6038
      %v6213 = vpack.c.b16 %v6042, %v6039
      %v6214 = vpack.c.b16 %v6043, %v6040
      %v6215 = vpack.c.b16 %v6047, %v6044
      %v6216 = vpack.c.b16 %v6048, %v6045
      %v6217 = vpack.c.b16 %v6049, %v6046
      %v6218 = vpack.c.b16 %v6053, %v6050
      %v6219 = vpack.c.b16 %v6054, %v6051
      %v6220 = vpack.c.b16 %v6055, %v6052
      %v6221 = vpack.c.b16 %v6059, %v6056
      %v6222 = vpack.c.b16 %v6060, %v6057
      %v6223 = vpack.c.b16 %v6061, %v6058
      %v6224 = vpack.c.b16 %v6065, %v6062
      %v6225 = vpack.c.b16 %v6066, %v6063
      %v6226 = vpack.c.b16 %v6067, %v6064
      %v6227 = vpack.c.b16 %v6071, %v6068
      %v6228 = vpack.c.b16 %v6072, %v6069
      %v6229 = vpack.c.b16 %v6073, %v6070
      %v6230 = vpack.c.b16 %v6077, %v6074
      %v6231 = vpack.c.b16 %v6078, %v6075
      %v6232 = vpack.c.b16 %v6079, %v6076
      %v6233 = vpack.c.b16 %v6083, %v6080
      %v6234 = vpack.c.b16 %v6084, %v6081
      %v6235 = vpack.c.b16 %v6085, %v6082
      %v6236 = vpack.c.b16 %v6089, %v6086
      %v6237 = vpack.c.b16 %v6090, %v6087
      %v6238 = vpack.c.b16 %v6091, %v6088
      %v6239 = vpack.c.b16 %v6095, %v6092
      %v6240 = vpack.c.b16 %v6096, %v6093
      %v6241 = vpack.c.b16 %v6097, %v6094
      %v6242 = vpack.c.b16 %v6101, %v6098
      %v6243 = vpack.c.b16 %v6102, %v6099
      %v6244 = vpack.c.b16 %v6103, %v6100
      %v6245 = vpack.c.b16 %v6107, %v6104
      %v6246 = vpack.c.b16 %v6108, %v6105
      %v6247 = vpack.c.b16 %v6109, %v6106
      %v6248 = vpack.c.b16 %v6113, %v6110
      %v6249 = vpack.c.b16 %v6114, %v6111
      %v6250 = vpack.c.b16 %v6115, %v6112
      %v6251 = vpack.c.b16 %v6119, %v6116
      %v6252 = vpack.c.b16 %v6120, %v6117
      %v6253 = vpack.c.b16 %v6121, %v6118
      %v6254 = vpack.c.b16 %v6125, %v6122
      %v6255 = vpack.c.b16 %v6126, %v6123
      %v6256 = vpack.c.b16 %v6127, %v6124
      %v6257 = vpack.c.b16 %v6131, %v6128
      %v6258 = vpack.c.b16 %v6132, %v6129
      %v6259 = vpack.c.b16 %v6133, %v6130
      %v6260 = vpack.c.b16 %v6137, %v6134
      %v6261 = vpack.c.b16 %v6138, %v6135
      %v6262 = vpack.c.b16 %v6139, %v6136
      %v6263 = vpack.c.b16 %v6143, %v6140
      %v6264 = vpack.c.b16 %v6144, %v6141
      %v6265 = vpack.c.b16 %v6145, %v6142
      %v6266 = vpack.c.b16 %v6149, %v6146
      %v6267 = vpack.c.b16 %v6150, %v6147
      %v6268 = vpack.c.b16 %v6151, %v6148
      %v6269 = vpack.c.b16 %v6155, %v6152
      %v6270 = vpack.c.b16 %v6156, %v6153
      %v6271 = vpack.c.b16 %v6157, %v6154
      %v6272 = vpack.c.b16 %v6161, %v6158
      %v6273 = vpack.c.b16 %v6162, %v6159
      %v6274 = vpack.c.b16 %v6163, %v6160
      %v6275 = vpack.c.b16 %v6167, %v6164
      %v6276 = vpack.c.b16 %v6168, %v6165
      %v6277 = vpack.c.b16 %v6169, %v6166
      %v6278 = vpack.c.b16 %v6173, %v6170
      %v6279 = vpack.c.b16 %v6174, %v6171
      %v6280 = vpack.c.b16 %v6175, %v6172
      %v6281 = vpack.c.b16 %v6179, %v6176
      %v6282 = vpack.c.b16 %v6180, %v6177
      %v6283 = vpack.c.b16 %v6181, %v6178
      %v6284 = vpack.c.b16 %v6185, %v6182
      %v6285 = vpack.c.b16 %v6186, %v6183
      %v6286 = vpack.c.b16 %v6187, %v6184
      %v6287 = vpack.c.b16 %v6191, %v6188
      %v6288 = vpack.c.b16 %v6192, %v6189
      %v6289 = vpack.c.b16 %v6193, %v6190
      %6386 = vmatprep.subr.bf16.mxu0 %v6195
      %6387 = vmatpush1.bf16.msra.mxu0 %v6194
      %6388 = vmatprep.subr.bf16.mxu0 %v6198
      %6389 = vmatpush1.bf16.msra.mxu0 %v6197
      %6390 = vmatprep.subr.bf16.mxu0 %v6201
      %6391 = vmatpush1.bf16.msra.mxu0 %v6200
      %6392 = vmatprep.subr.bf16.mxu0 %v6204
      %6393 = vmatpush1.bf16.msra.mxu0 %v6203
      %6394 = vmatprep.subr.bf16.mxu0 %v6207
      %6395 = vmatpush1.bf16.msra.mxu0 %v6206
      %6396 = vmatprep.subr.bf16.mxu0 %v6210
      %6397 = vmatpush1.bf16.msra.mxu0 %v6209
      %6398 = vmatprep.subr.bf16.mxu0 %v6213
      %6399 = vmatpush1.bf16.msra.mxu0 %v6212
      %6400 = vmatprep.subr.bf16.mxu0 %v6216
      %6401 = vmatpush1.bf16.msra.mxu0 %v6215
      %6402 = vmatprep.subr.bf16.mxu0 %v6219
      %6403 = vmatpush1.bf16.msra.mxu0 %v6218
      %6404 = vmatprep.subr.bf16.mxu0 %v6222
      %6405 = vmatpush1.bf16.msra.mxu0 %v6221
      %6406 = vmatprep.subr.bf16.mxu0 %v6225
      %6407 = vmatpush1.bf16.msra.mxu0 %v6224
      %6408 = vmatprep.subr.bf16.mxu0 %v6228
      %6409 = vmatpush1.bf16.msra.mxu0 %v6227
      %6410 = vmatprep.subr.bf16.mxu0 %v6231
      %6411 = vmatpush1.bf16.msra.mxu0 %v6230
      %6412 = vmatprep.subr.bf16.mxu0 %v6234
      %6413 = vmatpush1.bf16.msra.mxu0 %v6233
      %6414 = vmatprep.subr.bf16.mxu0 %v6237
      %6415 = vmatpush1.bf16.msra.mxu0 %v6236
      %6416 = vmatprep.subr.bf16.mxu0 %v6240
      %6417 = vmatpush1.bf16.msra.mxu0 %v6239
      %6418 = vmatprep.mubr.bf16.mxu0 %v5666
      %6419 = vmatmul.mubr.bf16.gmra.mrb[0].mxu0 %v5665
      %v6420 = vpop.f32.mrb[0].mxu0
      %v6421 = vadd.f32 %v5862, %v6420
      %v6422 = vpop.f32.mrb[0].mxu0
      %v6423 = vadd.f32 %v5866, %v6422
      %v6424 = vpop.f32.mrb[0].mxu0
      %v6425 = vadd.f32 %v5862, %v6424
      %v6426 = vpop.f32.mrb[0].mxu0
      %v6427 = vadd.f32 %v5866, %v6426
      %6428 = vmatprep.mubr.bf16.mxu0 %v5670
      %6429 = vmatmul.mubr.bf16.gmra.mrb[0].mxu0 %v5669
      %v6430 = vpop.f32.mrb[0].mxu0
      %v6431 = vadd.f32 %v5862, %v6430
      %v6432 = vpop.f32.mrb[0].mxu0
      %v6433 = vadd.f32 %v5866, %v6432
      %v6434 = vpop.f32.mrb[0].mxu0
      %v6435 = vadd.f32 %v5862, %v6434
      %v6436 = vpop.f32.mrb[0].mxu0
      %v6437 = vadd.f32 %v5866, %v6436
      %6438 = vmatprep.mubr.bf16.mxu0 %v5674
      %6439 = vmatmul.mubr.bf16.gmra.mrb[0].mxu0 %v5673
      %v6440 = vpop.f32.mrb[0].mxu0
      %v6441 = vadd.f32 %v5862, %v6440
      %v6442 = vpop.f32.mrb[0].mxu0
      %v6443 = vadd.f32 %v5866, %v6442
      %v6444 = vpop.f32.mrb[0].mxu0
      %v6445 = vadd.f32 %v5862, %v6444
      %v6446 = vpop.f32.mrb[0].mxu0
      %v6447 = vadd.f32 %v5866, %v6446
      %6448 = vmatprep.mubr.bf16.mxu0 %v5678
      %6449 = vmatmul.mubr.bf16.gmra.mrb[0].mxu0 %v5677
      %v6450 = vpop.f32.mrb[0].mxu0
      %v6451 = vadd.f32 %v5862, %v6450
      %v6452 = vpop.f32.mrb[0].mxu0
      %v6453 = vadd.f32 %v5866, %v6452
      %v6454 = vpop.f32.mrb[0].mxu0
      %v6455 = vadd.f32 %v5862, %v6454
      %v6456 = vpop.f32.mrb[0].mxu0
      %v6457 = vadd.f32 %v5866, %v6456
      %6458 = vmatprep.mubr.bf16.mxu0 %v5682
      %6459 = vmatmul.mubr.bf16.gmra.mrb[0].mxu0 %v5681
      %v6460 = vpop.f32.mrb[0].mxu0
      %v6461 = vadd.f32 %v5862, %v6460
      %v6462 = vpop.f32.mrb[0].mxu0
      %v6463 = vadd.f32 %v5866, %v6462
      %v6464 = vpop.f32.mrb[0].mxu0
      %v6465 = vadd.f32 %v5862, %v6464
      %v6466 = vpop.f32.mrb[0].mxu0
      %v6467 = vadd.f32 %v5866, %v6466
      %6468 = vmatprep.mubr.bf16.mxu0 %v5686
      %6469 = vmatmul.mubr.bf16.gmra.mrb[0].mxu0 %v5685
      %v6470 = vpop.f32.mrb[0].mxu0
      %v6471 = vadd.f32 %v5862, %v6470
      %v6472 = vpop.f32.mrb[0].mxu0
      %v6473 = vadd.f32 %v5866, %v6472
      %v6474 = vpop.f32.mrb[0].mxu0
      %v6475 = vadd.f32 %v5862, %v6474
      %v6476 = vpop.f32.mrb[0].mxu0
      %v6477 = vadd.f32 %v5866, %v6476
      %6478 = vmatprep.mubr.bf16.mxu0 %v5690
      %6479 = vmatmul.mubr.bf16.gmra.mrb[0].mxu0 %v5689
      %v6480 = vpop.f32.mrb[0].mxu0
      %v6481 = vadd.f32 %v5862, %v6480
      %v6482 = vpop.f32.mrb[0].mxu0
      %v6483 = vadd.f32 %v5866, %v6482
      %v6484 = vpop.f32.mrb[0].mxu0
      %v6485 = vadd.f32 %v5862, %v6484
      %v6486 = vpop.f32.mrb[0].mxu0
      %v6487 = vadd.f32 %v5866, %v6486
      %6488 = vmatprep.mubr.bf16.mxu0 %v5694
      %6489 = vmatmul.mubr.bf16.gmra.mrb[0].mxu0 %v5693
      %v6490 = vpop.f32.mrb[0].mxu0
      %v6491 = vadd.f32 %v5862, %v6490
      %v6492 = vpop.f32.mrb[0].mxu0
      %v6493 = vadd.f32 %v5866, %v6492
      %v6494 = vpop.f32.mrb[0].mxu0
      %v6495 = vadd.f32 %v5862, %v6494
      %v6496 = vpop.f32.mrb[0].mxu0
      %v6497 = vadd.f32 %v5866, %v6496
      %6498 = vmatprep.mubr.bf16.mxu0 %v5698
      %6499 = vmatmul.mubr.bf16.gmra.mrb[0].mxu0 %v5697
      %v6500 = vpop.f32.mrb[0].mxu0
      %v6501 = vadd.f32 %v5862, %v6500
      %v6502 = vpop.f32.mrb[0].mxu0
      %v6503 = vadd.f32 %v5866, %v6502
      %v6504 = vpop.f32.mrb[0].mxu0
      %v6505 = vadd.f32 %v5862, %v6504
      %v6506 = vpop.f32.mrb[0].mxu0
      %v6507 = vadd.f32 %v5866, %v6506
      %6508 = vmatprep.mubr.bf16.mxu0 %v5702
      %6509 = vmatmul.mubr.bf16.gmra.mrb[0].mxu0 %v5701
      %v6510 = vpop.f32.mrb[0].mxu0
      %v6511 = vadd.f32 %v5862, %v6510
      %v6512 = vpop.f32.mrb[0].mxu0
      %v6513 = vadd.f32 %v5866, %v6512
      %v6514 = vpop.f32.mrb[0].mxu0
      %v6515 = vadd.f32 %v5862, %v6514
      %v6516 = vpop.f32.mrb[0].mxu0
      %v6517 = vadd.f32 %v5866, %v6516
      %6518 = vmatprep.mubr.bf16.mxu0 %v5706
      %6519 = vmatmul.mubr.bf16.gmra.mrb[0].mxu0 %v5705
      %v6520 = vpop.f32.mrb[0].mxu0
      %v6521 = vadd.f32 %v5862, %v6520
      %v6522 = vpop.f32.mrb[0].mxu0
      %v6523 = vadd.f32 %v5866, %v6522
      %v6524 = vpop.f32.mrb[0].mxu0
      %v6525 = vadd.f32 %v5862, %v6524
      %v6526 = vpop.f32.mrb[0].mxu0
      %v6527 = vadd.f32 %v5866, %v6526
      %6528 = vmatprep.mubr.bf16.mxu0 %v5710
      %6529 = vmatmul.mubr.bf16.gmra.mrb[0].mxu0 %v5709
      %v6530 = vpop.f32.mrb[0].mxu0
      %v6531 = vadd.f32 %v5862, %v6530
      %v6532 = vpop.f32.mrb[0].mxu0
      %v6533 = vadd.f32 %v5866, %v6532
      %v6534 = vpop.f32.mrb[0].mxu0
      %v6535 = vadd.f32 %v5862, %v6534
      %v6536 = vpop.f32.mrb[0].mxu0
      %v6537 = vadd.f32 %v5866, %v6536
      %6538 = vmatprep.mubr.bf16.mxu0 %v5714
      %6539 = vmatmul.mubr.bf16.gmra.mrb[0].mxu0 %v5713
      %v6540 = vpop.f32.mrb[0].mxu0
      %v6541 = vadd.f32 %v5862, %v6540
      %v6542 = vpop.f32.mrb[0].mxu0
      %v6543 = vadd.f32 %v5866, %v6542
      %v6544 = vpop.f32.mrb[0].mxu0
      %v6545 = vadd.f32 %v5862, %v6544
      %v6546 = vpop.f32.mrb[0].mxu0
      %v6547 = vadd.f32 %v5866, %v6546
      %6548 = vmatprep.mubr.bf16.mxu0 %v5718
      %6549 = vmatmul.mubr.bf16.gmra.mrb[0].mxu0 %v5717
      %v6550 = vpop.f32.mrb[0].mxu0
      %v6551 = vadd.f32 %v5862, %v6550
      %v6552 = vpop.f32.mrb[0].mxu0
      %v6553 = vadd.f32 %v5866, %v6552
      %v6554 = vpop.f32.mrb[0].mxu0
      %v6555 = vadd.f32 %v5862, %v6554
      %v6556 = vpop.f32.mrb[0].mxu0
      %v6557 = vadd.f32 %v5866, %v6556
      %6558 = vmatprep.mubr.bf16.mxu0 %v5722
      %6559 = vmatmul.mubr.bf16.gmra.mrb[0].mxu0 %v5721
      %v6560 = vpop.f32.mrb[0].mxu0
      %v6561 = vadd.f32 %v5862, %v6560
      %v6562 = vpop.f32.mrb[0].mxu0
      %v6563 = vadd.f32 %v5866, %v6562
      %v6564 = vpop.f32.mrb[0].mxu0
      %v6565 = vadd.f32 %v5862, %v6564
      %v6566 = vpop.f32.mrb[0].mxu0
      %v6567 = vadd.f32 %v5866, %v6566
      %6568 = vmatprep.mubr.bf16.mxu0 %v5726
      %6569 = vmatmul.mubr.bf16.gmra.mrb[0].mxu0 %v5725
      %v6570 = vpop.f32.mrb[0].mxu0
      %v6571 = vadd.f32 %v5862, %v6570
      %v6572 = vpop.f32.mrb[0].mxu0
      %v6573 = vadd.f32 %v5866, %v6572
      %v6574 = vpop.f32.mrb[0].mxu0
      %v6575 = vadd.f32 %v5862, %v6574
      %v6576 = vpop.f32.mrb[0].mxu0
      %v6577 = vadd.f32 %v5866, %v6576
      %6578 = vdwg.mxu0
      %6579 = vmatprep.subr.bf16.mxu0 %v6243
      %6580 = vmatpush1.bf16.msra.mxu0 %v6242
      %6581 = vmatprep.subr.bf16.mxu0 %v6246
      %6582 = vmatpush1.bf16.msra.mxu0 %v6245
      %6583 = vmatprep.subr.bf16.mxu0 %v6249
      %6584 = vmatpush1.bf16.msra.mxu0 %v6248
      %6585 = vmatprep.subr.bf16.mxu0 %v6252
      %6586 = vmatpush1.bf16.msra.mxu0 %v6251
      %6587 = vmatprep.subr.bf16.mxu0 %v6255
      %6588 = vmatpush1.bf16.msra.mxu0 %v6254
      %6589 = vmatprep.subr.bf16.mxu0 %v6258
      %6590 = vmatpush1.bf16.msra.mxu0 %v6257
      %6591 = vmatprep.subr.bf16.mxu0 %v6261
      %6592 = vmatpush1.bf16.msra.mxu0 %v6260
      %6593 = vmatprep.subr.bf16.mxu0 %v6264
      %6594 = vmatpush1.bf16.msra.mxu0 %v6263
      %6595 = vmatprep.subr.bf16.mxu0 %v6267
      %6596 = vmatpush1.bf16.msra.mxu0 %v6266
      %6597 = vmatprep.subr.bf16.mxu0 %v6270
      %6598 = vmatpush1.bf16.msra.mxu0 %v6269
      %6599 = vmatprep.subr.bf16.mxu0 %v6273
      %6600 = vmatpush1.bf16.msra.mxu0 %v6272
      %6601 = vmatprep.subr.bf16.mxu0 %v6276
      %6602 = vmatpush1.bf16.msra.mxu0 %v6275
      %6603 = vmatprep.subr.bf16.mxu0 %v6279
      %6604 = vmatpush1.bf16.msra.mxu0 %v6278
      %6605 = vmatprep.subr.bf16.mxu0 %v6282
      %6606 = vmatpush1.bf16.msra.mxu0 %v6281
      %6607 = vmatprep.subr.bf16.mxu0 %v6285
      %6608 = vmatpush1.bf16.msra.mxu0 %v6284
      %6609 = vmatprep.subr.bf16.mxu0 %v6288
      %6610 = vmatpush1.bf16.msra.mxu0 %v6287
      %6611 = vmatprep.mubr.bf16.mxu0 %v5668
      %6612 = vmatmul.mubr.bf16.gmra.mrb[0].mxu0 %v5667
      %v6613 = vpop.f32.mrb[0].mxu0
      %v6614 = vadd.f32 %v6421, %v6613
      %v6615 = vpop.f32.mrb[0].mxu0
      %v6616 = vadd.f32 %v6423, %v6615
      %v6617 = vpop.f32.mrb[0].mxu0
      %v6618 = vadd.f32 %v6425, %v6617
      %v6619 = vpop.f32.mrb[0].mxu0
      %v6620 = vadd.f32 %v6427, %v6619
      %6621 = vmatprep.mubr.bf16.mxu0 %v5672
      %6622 = vmatmul.mubr.bf16.gmra.mrb[0].mxu0 %v5671
      %v6623 = vpop.f32.mrb[0].mxu0
      %v6624 = vadd.f32 %v6431, %v6623
      %v6625 = vpop.f32.mrb[0].mxu0
      %v6626 = vadd.f32 %v6433, %v6625
      %v6627 = vpop.f32.mrb[0].mxu0
      %v6628 = vadd.f32 %v6435, %v6627
      %v6629 = vpop.f32.mrb[0].mxu0
      %v6630 = vadd.f32 %v6437, %v6629
      %6631 = vmatprep.mubr.bf16.mxu0 %v5676
      %6632 = vmatmul.mubr.bf16.gmra.mrb[0].mxu0 %v5675
      %v6633 = vpop.f32.mrb[0].mxu0
      %v6634 = vadd.f32 %v6441, %v6633
      %v6635 = vpop.f32.mrb[0].mxu0
      %v6636 = vadd.f32 %v6443, %v6635
      %v6637 = vpop.f32.mrb[0].mxu0
      %v6638 = vadd.f32 %v6445, %v6637
      %v6639 = vpop.f32.mrb[0].mxu0
      %v6640 = vadd.f32 %v6447, %v6639
      %6641 = vmatprep.mubr.bf16.mxu0 %v5680
      %6642 = vmatmul.mubr.bf16.gmra.mrb[0].mxu0 %v5679
      %v6643 = vpop.f32.mrb[0].mxu0
      %v6644 = vadd.f32 %v6451, %v6643
      %v6645 = vpop.f32.mrb[0].mxu0
      %v6646 = vadd.f32 %v6453, %v6645
      %v6647 = vpop.f32.mrb[0].mxu0
      %v6648 = vadd.f32 %v6455, %v6647
      %v6649 = vpop.f32.mrb[0].mxu0
      %v6650 = vadd.f32 %v6457, %v6649
      %6651 = vmatprep.mubr.bf16.mxu0 %v5684
      %6652 = vmatmul.mubr.bf16.gmra.mrb[0].mxu0 %v5683
      %v6653 = vpop.f32.mrb[0].mxu0
      %v6654 = vadd.f32 %v6461, %v6653
      %v6655 = vpop.f32.mrb[0].mxu0
      %v6656 = vadd.f32 %v6463, %v6655
      %v6657 = vpop.f32.mrb[0].mxu0
      %v6658 = vadd.f32 %v6465, %v6657
      %v6659 = vpop.f32.mrb[0].mxu0
      %v6660 = vadd.f32 %v6467, %v6659
      %6661 = vmatprep.mubr.bf16.mxu0 %v5688
      %6662 = vmatmul.mubr.bf16.gmra.mrb[0].mxu0 %v5687
      %v6663 = vpop.f32.mrb[0].mxu0
      %v6664 = vadd.f32 %v6471, %v6663
      %v6665 = vpop.f32.mrb[0].mxu0
      %v6666 = vadd.f32 %v6473, %v6665
      %v6667 = vpop.f32.mrb[0].mxu0
      %v6668 = vadd.f32 %v6475, %v6667
      %v6669 = vpop.f32.mrb[0].mxu0
      %v6670 = vadd.f32 %v6477, %v6669
      %6671 = vmatprep.mubr.bf16.mxu0 %v5692
      %6672 = vmatmul.mubr.bf16.gmra.mrb[0].mxu0 %v5691
      %v6673 = vpop.f32.mrb[0].mxu0
      %v6674 = vadd.f32 %v6481, %v6673
      %v6675 = vpop.f32.mrb[0].mxu0
      %v6676 = vadd.f32 %v6483, %v6675
      %v6677 = vpop.f32.mrb[0].mxu0
      %v6678 = vadd.f32 %v6485, %v6677
      %v6679 = vpop.f32.mrb[0].mxu0
      %v6680 = vadd.f32 %v6487, %v6679
      %6681 = vmatprep.mubr.bf16.mxu0 %v5696
      %6682 = vmatmul.mubr.bf16.gmra.mrb[0].mxu0 %v5695
      %v6683 = vpop.f32.mrb[0].mxu0
      %v6684 = vadd.f32 %v6491, %v6683
      %v6685 = vpop.f32.mrb[0].mxu0
      %v6686 = vadd.f32 %v6493, %v6685
      %v6687 = vpop.f32.mrb[0].mxu0
      %v6688 = vadd.f32 %v6495, %v6687
      %v6689 = vpop.f32.mrb[0].mxu0
      %v6690 = vadd.f32 %v6497, %v6689
      %6691 = vmatprep.mubr.bf16.mxu0 %v5700
      %6692 = vmatmul.mubr.bf16.gmra.mrb[0].mxu0 %v5699
      %v6693 = vpop.f32.mrb[0].mxu0
      %v6694 = vadd.f32 %v6501, %v6693
      %v6695 = vpop.f32.mrb[0].mxu0
      %v6696 = vadd.f32 %v6503, %v6695
      %v6697 = vpop.f32.mrb[0].mxu0
      %v6698 = vadd.f32 %v6505, %v6697
      %v6699 = vpop.f32.mrb[0].mxu0
      %v6700 = vadd.f32 %v6507, %v6699
      %6701 = vmatprep.mubr.bf16.mxu0 %v5704
      %6702 = vmatmul.mubr.bf16.gmra.mrb[0].mxu0 %v5703
      %v6703 = vpop.f32.mrb[0].mxu0
      %v6704 = vadd.f32 %v6511, %v6703
      %v6705 = vpop.f32.mrb[0].mxu0
      %v6706 = vadd.f32 %v6513, %v6705
      %v6707 = vpop.f32.mrb[0].mxu0
      %v6708 = vadd.f32 %v6515, %v6707
      %v6709 = vpop.f32.mrb[0].mxu0
      %v6710 = vadd.f32 %v6517, %v6709
      %6711 = vmatprep.mubr.bf16.mxu0 %v5708
      %6712 = vmatmul.mubr.bf16.gmra.mrb[0].mxu0 %v5707
      %v6713 = vpop.f32.mrb[0].mxu0
      %v6714 = vadd.f32 %v6521, %v6713
      %v6715 = vpop.f32.mrb[0].mxu0
      %v6716 = vadd.f32 %v6523, %v6715
      %v6717 = vpop.f32.mrb[0].mxu0
      %v6718 = vadd.f32 %v6525, %v6717
      %v6719 = vpop.f32.mrb[0].mxu0
      %v6720 = vadd.f32 %v6527, %v6719
      %6721 = vmatprep.mubr.bf16.mxu0 %v5712
      %6722 = vmatmul.mubr.bf16.gmra.mrb[0].mxu0 %v5711
      %v6723 = vpop.f32.mrb[0].mxu0
      %v6724 = vadd.f32 %v6531, %v6723
      %v6725 = vpop.f32.mrb[0].mxu0
      %v6726 = vadd.f32 %v6533, %v6725
      %v6727 = vpop.f32.mrb[0].mxu0
      %v6728 = vadd.f32 %v6535, %v6727
      %v6729 = vpop.f32.mrb[0].mxu0
      %v6730 = vadd.f32 %v6537, %v6729
      %6731 = vmatprep.mubr.bf16.mxu0 %v5716
      %6732 = vmatmul.mubr.bf16.gmra.mrb[0].mxu0 %v5715
      %v6733 = vpop.f32.mrb[0].mxu0
      %v6734 = vadd.f32 %v6541, %v6733
      %v6735 = vpop.f32.mrb[0].mxu0
      %v6736 = vadd.f32 %v6543, %v6735
      %v6737 = vpop.f32.mrb[0].mxu0
      %v6738 = vadd.f32 %v6545, %v6737
      %v6739 = vpop.f32.mrb[0].mxu0
      %v6740 = vadd.f32 %v6547, %v6739
      %6741 = vmatprep.mubr.bf16.mxu0 %v5720
      %6742 = vmatmul.mubr.bf16.gmra.mrb[0].mxu0 %v5719
      %v6743 = vpop.f32.mrb[0].mxu0
      %v6744 = vadd.f32 %v6551, %v6743
      %v6745 = vpop.f32.mrb[0].mxu0
      %v6746 = vadd.f32 %v6553, %v6745
      %v6747 = vpop.f32.mrb[0].mxu0
      %v6748 = vadd.f32 %v6555, %v6747
      %v6749 = vpop.f32.mrb[0].mxu0
      %v6750 = vadd.f32 %v6557, %v6749
      %6751 = vmatprep.mubr.bf16.mxu0 %v5724
      %6752 = vmatmul.mubr.bf16.gmra.mrb[0].mxu0 %v5723
      %v6753 = vpop.f32.mrb[0].mxu0
      %v6754 = vadd.f32 %v6561, %v6753
      %v6755 = vpop.f32.mrb[0].mxu0
      %v6756 = vadd.f32 %v6563, %v6755
      %v6757 = vpop.f32.mrb[0].mxu0
      %v6758 = vadd.f32 %v6565, %v6757
      %v6759 = vpop.f32.mrb[0].mxu0
      %v6760 = vadd.f32 %v6567, %v6759
      %6761 = vmatprep.mubr.bf16.mxu0 %v5728
      %6762 = vmatmul.mubr.bf16.gmra.mrb[0].mxu0 %v5727
      %v6763 = vpop.f32.mrb[0].mxu0
      %v6764 = vadd.f32 %v6571, %v6763
      %v6765 = vpop.f32.mrb[0].mxu0
      %v6766 = vadd.f32 %v6573, %v6765
      %v6767 = vpop.f32.mrb[0].mxu0
      %v6768 = vadd.f32 %v6575, %v6767
      %v6769 = vpop.f32.mrb[0].mxu0
      %v6770 = vadd.f32 %v6577, %v6769
      %6771 = vdwg.mxu0
      %6772 = vmatprep.subr.bf16.mxu0 0
      %6773 = vmatpush1.bf16.msra.mxu0 %v6196
      %6774 = vmatprep.subr.bf16.mxu0 0
      %6775 = vmatpush1.bf16.msra.mxu0 %v6199
      %6776 = vmatprep.subr.bf16.mxu0 0
      %6777 = vmatpush1.bf16.msra.mxu0 %v6202
      %6778 = vmatprep.subr.bf16.mxu0 0
      %6779 = vmatpush1.bf16.msra.mxu0 %v6205
      %6780 = vmatprep.subr.bf16.mxu0 0
      %6781 = vmatpush1.bf16.msra.mxu0 %v6208
      %6782 = vmatprep.subr.bf16.mxu0 0
      %6783 = vmatpush1.bf16.msra.mxu0 %v6211
      %6784 = vmatprep.subr.bf16.mxu0 0
      %6785 = vmatpush1.bf16.msra.mxu0 %v6214
      %6786 = vmatprep.subr.bf16.mxu0 0
      %6787 = vmatpush1.bf16.msra.mxu0 %v6217
      %6788 = vmatprep.subr.bf16.mxu0 0
      %6789 = vmatpush1.bf16.msra.mxu0 %v6220
      %6790 = vmatprep.subr.bf16.mxu0 0
      %6791 = vmatpush1.bf16.msra.mxu0 %v6223
      %6792 = vmatprep.subr.bf16.mxu0 0
      %6793 = vmatpush1.bf16.msra.mxu0 %v6226
      %6794 = vmatprep.subr.bf16.mxu0 0
      %6795 = vmatpush1.bf16.msra.mxu0 %v6229
      %6796 = vmatprep.subr.bf16.mxu0 0
      %6797 = vmatpush1.bf16.msra.mxu0 %v6232
      %6798 = vmatprep.subr.bf16.mxu0 0
      %6799 = vmatpush1.bf16.msra.mxu0 %v6235
      %6800 = vmatprep.subr.bf16.mxu0 0
      %6801 = vmatpush1.bf16.msra.mxu0 %v6238
      %6802 = vmatprep.subr.bf16.mxu0 0
      %6803 = vmatpush1.bf16.msra.mxu0 %v6241
      %6804 = vmatprep.mubr.bf16.mxu0 %v5666
      %6805 = vmatmul.mubr.bf16.gmra.mrb[0].mxu0 %v5665
      %v6806 = vpop.f32.mrb[0].mxu0
      %v6807 = vadd.f32 %v5870, %v6806
      %v6808 = vpop.f32.mrb[0].mxu0
      %v6809 = vpop.f32.mrb[0].mxu0
      %v6810 = vadd.f32 %v5870, %v6809
      %v6811 = vpop.f32.mrb[0].mxu0
      %6812 = vmatprep.mubr.bf16.mxu0 %v5670
      %6813 = vmatmul.mubr.bf16.gmra.mrb[0].mxu0 %v5669
      %v6814 = vpop.f32.mrb[0].mxu0
      %v6815 = vadd.f32 %v5870, %v6814
      %v6816 = vpop.f32.mrb[0].mxu0
      %v6817 = vpop.f32.mrb[0].mxu0
      %v6818 = vadd.f32 %v5870, %v6817
      %v6819 = vpop.f32.mrb[0].mxu0
      %6820 = vmatprep.mubr.bf16.mxu0 %v5674
      %6821 = vmatmul.mubr.bf16.gmra.mrb[0].mxu0 %v5673
      %v6822 = vpop.f32.mrb[0].mxu0
      %v6823 = vadd.f32 %v5870, %v6822
      %v6824 = vpop.f32.mrb[0].mxu0
      %v6825 = vpop.f32.mrb[0].mxu0
      %v6826 = vadd.f32 %v5870, %v6825
      %v6827 = vpop.f32.mrb[0].mxu0
      %6828 = vmatprep.mubr.bf16.mxu0 %v5678
      %6829 = vmatmul.mubr.bf16.gmra.mrb[0].mxu0 %v5677
      %v6830 = vpop.f32.mrb[0].mxu0
      %v6831 = vadd.f32 %v5870, %v6830
      %v6832 = vpop.f32.mrb[0].mxu0
      %v6833 = vpop.f32.mrb[0].mxu0
      %v6834 = vadd.f32 %v5870, %v6833
      %v6835 = vpop.f32.mrb[0].mxu0
      %6836 = vmatprep.mubr.bf16.mxu0 %v5682
      %6837 = vmatmul.mubr.bf16.gmra.mrb[0].mxu0 %v5681
      %v6838 = vpop.f32.mrb[0].mxu0
      %v6839 = vadd.f32 %v5870, %v6838
      %v6840 = vpop.f32.mrb[0].mxu0
      %v6841 = vpop.f32.mrb[0].mxu0
      %v6842 = vadd.f32 %v5870, %v6841
      %v6843 = vpop.f32.mrb[0].mxu0
      %6844 = vmatprep.mubr.bf16.mxu0 %v5686
      %6845 = vmatmul.mubr.bf16.gmra.mrb[0].mxu0 %v5685
      %v6846 = vpop.f32.mrb[0].mxu0
      %v6847 = vadd.f32 %v5870, %v6846
      %v6848 = vpop.f32.mrb[0].mxu0
      %v6849 = vpop.f32.mrb[0].mxu0
      %v6850 = vadd.f32 %v5870, %v6849
      %v6851 = vpop.f32.mrb[0].mxu0
      %6852 = vmatprep.mubr.bf16.mxu0 %v5690
      %6853 = vmatmul.mubr.bf16.gmra.mrb[0].mxu0 %v5689
      %v6854 = vpop.f32.mrb[0].mxu0
      %v6855 = vadd.f32 %v5870, %v6854
      %v6856 = vpop.f32.mrb[0].mxu0
      %v6857 = vpop.f32.mrb[0].mxu0
      %v6858 = vadd.f32 %v5870, %v6857
      %v6859 = vpop.f32.mrb[0].mxu0
      %6860 = vmatprep.mubr.bf16.mxu0 %v5694
      %6861 = vmatmul.mubr.bf16.gmra.mrb[0].mxu0 %v5693
      %v6862 = vpop.f32.mrb[0].mxu0
      %v6863 = vadd.f32 %v5870, %v6862
      %v6864 = vpop.f32.mrb[0].mxu0
      %v6865 = vpop.f32.mrb[0].mxu0
      %v6866 = vadd.f32 %v5870, %v6865
      %v6867 = vpop.f32.mrb[0].mxu0
      %6868 = vmatprep.mubr.bf16.mxu0 %v5698
      %6869 = vmatmul.mubr.bf16.gmra.mrb[0].mxu0 %v5697
      %v6870 = vpop.f32.mrb[0].mxu0
      %v6871 = vadd.f32 %v5870, %v6870
      %v6872 = vpop.f32.mrb[0].mxu0
      %v6873 = vpop.f32.mrb[0].mxu0
      %v6874 = vadd.f32 %v5870, %v6873
      %v6875 = vpop.f32.mrb[0].mxu0
      %6876 = vmatprep.mubr.bf16.mxu0 %v5702
      %6877 = vmatmul.mubr.bf16.gmra.mrb[0].mxu0 %v5701
      %v6878 = vpop.f32.mrb[0].mxu0
      %v6879 = vadd.f32 %v5870, %v6878
      %v6880 = vpop.f32.mrb[0].mxu0
      %v6881 = vpop.f32.mrb[0].mxu0
      %v6882 = vadd.f32 %v5870, %v6881
      %v6883 = vpop.f32.mrb[0].mxu0
      %6884 = vmatprep.mubr.bf16.mxu0 %v5706
      %6885 = vmatmul.mubr.bf16.gmra.mrb[0].mxu0 %v5705
      %v6886 = vpop.f32.mrb[0].mxu0
      %v6887 = vadd.f32 %v5870, %v6886
      %v6888 = vpop.f32.mrb[0].mxu0
      %v6889 = vpop.f32.mrb[0].mxu0
      %v6890 = vadd.f32 %v5870, %v6889
      %v6891 = vpop.f32.mrb[0].mxu0
      %6892 = vmatprep.mubr.bf16.mxu0 %v5710
      %6893 = vmatmul.mubr.bf16.gmra.mrb[0].mxu0 %v5709
      %v6894 = vpop.f32.mrb[0].mxu0
      %v6895 = vadd.f32 %v5870, %v6894
      %v6896 = vpop.f32.mrb[0].mxu0
      %v6897 = vpop.f32.mrb[0].mxu0
      %v6898 = vadd.f32 %v5870, %v6897
      %v6899 = vpop.f32.mrb[0].mxu0
      %6900 = vmatprep.mubr.bf16.mxu0 %v5714
      %6901 = vmatmul.mubr.bf16.gmra.mrb[0].mxu0 %v5713
      %v6902 = vpop.f32.mrb[0].mxu0
      %v6903 = vadd.f32 %v5870, %v6902
      %v6904 = vpop.f32.mrb[0].mxu0
      %v6905 = vpop.f32.mrb[0].mxu0
      %v6906 = vadd.f32 %v5870, %v6905
      %v6907 = vpop.f32.mrb[0].mxu0
      %6908 = vmatprep.mubr.bf16.mxu0 %v5718
      %6909 = vmatmul.mubr.bf16.gmra.mrb[0].mxu0 %v5717
      %v6910 = vpop.f32.mrb[0].mxu0
      %v6911 = vadd.f32 %v5870, %v6910
      %v6912 = vpop.f32.mrb[0].mxu0
      %v6913 = vpop.f32.mrb[0].mxu0
      %v6914 = vadd.f32 %v5870, %v6913
      %v6915 = vpop.f32.mrb[0].mxu0
      %6916 = vmatprep.mubr.bf16.mxu0 %v5722
      %6917 = vmatmul.mubr.bf16.gmra.mrb[0].mxu0 %v5721
      %v6918 = vpop.f32.mrb[0].mxu0
      %v6919 = vadd.f32 %v5870, %v6918
      %v6920 = vpop.f32.mrb[0].mxu0
      %v6921 = vpop.f32.mrb[0].mxu0
      %v6922 = vadd.f32 %v5870, %v6921
      %v6923 = vpop.f32.mrb[0].mxu0
      %6924 = vmatprep.mubr.bf16.mxu0 %v5726
      %6925 = vmatmul.mubr.bf16.gmra.mrb[0].mxu0 %v5725
      %v6926 = vpop.f32.mrb[0].mxu0
      %v6927 = vadd.f32 %v5870, %v6926
      %v6928 = vpop.f32.mrb[0].mxu0
      %v6929 = vpop.f32.mrb[0].mxu0
      %v6930 = vadd.f32 %v5870, %v6929
      %v6931 = vpop.f32.mrb[0].mxu0
      %6932 = vdwg.mxu0
      %6933 = vmatprep.subr.bf16.mxu0 0
      %6934 = vmatpush1.bf16.msra.mxu0 %v6244
      %6935 = vmatprep.subr.bf16.mxu0 0
      %6936 = vmatpush1.bf16.msra.mxu0 %v6247
      %6937 = vmatprep.subr.bf16.mxu0 0
      %6938 = vmatpush1.bf16.msra.mxu0 %v6250
      %6939 = vmatprep.subr.bf16.mxu0 0
      %6940 = vmatpush1.bf16.msra.mxu0 %v6253
      %6941 = vmatprep.subr.bf16.mxu0 0
      %6942 = vmatpush1.bf16.msra.mxu0 %v6256
      %6943 = vmatprep.subr.bf16.mxu0 0
      %6944 = vmatpush1.bf16.msra.mxu0 %v6259
      %6945 = vmatprep.subr.bf16.mxu0 0
      %6946 = vmatpush1.bf16.msra.mxu0 %v6262
      %6947 = vmatprep.subr.bf16.mxu0 0
      %6948 = vmatpush1.bf16.msra.mxu0 %v6265
      %6949 = vmatprep.subr.bf16.mxu0 0
      %6950 = vmatpush1.bf16.msra.mxu0 %v6268
      %6951 = vmatprep.subr.bf16.mxu0 0
      %6952 = vmatpush1.bf16.msra.mxu0 %v6271
      %6953 = vmatprep.subr.bf16.mxu0 0
      %6954 = vmatpush1.bf16.msra.mxu0 %v6274
      %6955 = vmatprep.subr.bf16.mxu0 0
      %6956 = vmatpush1.bf16.msra.mxu0 %v6277
      %6957 = vmatprep.subr.bf16.mxu0 0
      %6958 = vmatpush1.bf16.msra.mxu0 %v6280
      %6959 = vmatprep.subr.bf16.mxu0 0
      %6960 = vmatpush1.bf16.msra.mxu0 %v6283
      %6961 = vmatprep.subr.bf16.mxu0 0
      %6962 = vmatpush1.bf16.msra.mxu0 %v6286
      %6963 = vmatprep.subr.bf16.mxu0 0
      %6964 = vmatpush1.bf16.msra.mxu0 %v6289
      %6965 = vmatprep.mubr.bf16.mxu0 %v5668
      %6966 = vmatmul.mubr.bf16.gmra.mrb[0].mxu0 %v5667
      %v6967 = vpop.f32.mrb[0].mxu0
      %v6968 = vadd.f32 %v6807, %v6967
      %v6969 = vpop.f32.mrb[0].mxu0
      %v6970 = vpop.f32.mrb[0].mxu0
      %v6971 = vadd.f32 %v6810, %v6970
      %v6972 = vpop.f32.mrb[0].mxu0
      %6973 = vmatprep.mubr.bf16.mxu0 %v5672
      %6974 = vmatmul.mubr.bf16.gmra.mrb[0].mxu0 %v5671
      %v6975 = vpop.f32.mrb[0].mxu0
      %v6976 = vadd.f32 %v6815, %v6975
      %v6977 = vpop.f32.mrb[0].mxu0
      %v6978 = vpop.f32.mrb[0].mxu0
      %v6979 = vadd.f32 %v6818, %v6978
      %v6980 = vpop.f32.mrb[0].mxu0
      %6981 = vmatprep.mubr.bf16.mxu0 %v5676
      %6982 = vmatmul.mubr.bf16.gmra.mrb[0].mxu0 %v5675
      %v6983 = vpop.f32.mrb[0].mxu0
      %v6984 = vadd.f32 %v6823, %v6983
      %v6985 = vpop.f32.mrb[0].mxu0
      %v6986 = vpop.f32.mrb[0].mxu0
      %v6987 = vadd.f32 %v6826, %v6986
      %v6988 = vpop.f32.mrb[0].mxu0
      %6989 = vmatprep.mubr.bf16.mxu0 %v5680
      %6990 = vmatmul.mubr.bf16.gmra.mrb[0].mxu0 %v5679
      %v6991 = vpop.f32.mrb[0].mxu0
      %v6992 = vadd.f32 %v6831, %v6991
      %v6993 = vpop.f32.mrb[0].mxu0
      %v6994 = vpop.f32.mrb[0].mxu0
      %v6995 = vadd.f32 %v6834, %v6994
      %v6996 = vpop.f32.mrb[0].mxu0
      %6997 = vmatprep.mubr.bf16.mxu0 %v5684
      %6998 = vmatmul.mubr.bf16.gmra.mrb[0].mxu0 %v5683
      %v6999 = vpop.f32.mrb[0].mxu0
      %v7000 = vadd.f32 %v6839, %v6999
      %v7001 = vpop.f32.mrb[0].mxu0
      %v7002 = vpop.f32.mrb[0].mxu0
      %v7003 = vadd.f32 %v6842, %v7002
      %v7004 = vpop.f32.mrb[0].mxu0
      %7005 = vmatprep.mubr.bf16.mxu0 %v5688
      %7006 = vmatmul.mubr.bf16.gmra.mrb[0].mxu0 %v5687
      %v7007 = vpop.f32.mrb[0].mxu0
      %v7008 = vadd.f32 %v6847, %v7007
      %v7009 = vpop.f32.mrb[0].mxu0
      %v7010 = vpop.f32.mrb[0].mxu0
      %v7011 = vadd.f32 %v6850, %v7010
      %v7012 = vpop.f32.mrb[0].mxu0
      %7013 = vmatprep.mubr.bf16.mxu0 %v5692
      %7014 = vmatmul.mubr.bf16.gmra.mrb[0].mxu0 %v5691
      %v7015 = vpop.f32.mrb[0].mxu0
      %v7016 = vadd.f32 %v6855, %v7015
      %v7017 = vpop.f32.mrb[0].mxu0
      %v7018 = vpop.f32.mrb[0].mxu0
      %v7019 = vadd.f32 %v6858, %v7018
      %v7020 = vpop.f32.mrb[0].mxu0
      %7021 = vmatprep.mubr.bf16.mxu0 %v5696
      %7022 = vmatmul.mubr.bf16.gmra.mrb[0].mxu0 %v5695
      %v7023 = vpop.f32.mrb[0].mxu0
      %v7024 = vadd.f32 %v6863, %v7023
      %v7025 = vpop.f32.mrb[0].mxu0
      %v7026 = vpop.f32.mrb[0].mxu0
      %v7027 = vadd.f32 %v6866, %v7026
      %v7028 = vpop.f32.mrb[0].mxu0
      %7029 = vmatprep.mubr.bf16.mxu0 %v5700
      %7030 = vmatmul.mubr.bf16.gmra.mrb[0].mxu0 %v5699
      %v7031 = vpop.f32.mrb[0].mxu0
      %v7032 = vadd.f32 %v6871, %v7031
      %v7033 = vpop.f32.mrb[0].mxu0
      %v7034 = vpop.f32.mrb[0].mxu0
      %v7035 = vadd.f32 %v6874, %v7034
      %v7036 = vpop.f32.mrb[0].mxu0
      %7037 = vmatprep.mubr.bf16.mxu0 %v5704
      %7038 = vmatmul.mubr.bf16.gmra.mrb[0].mxu0 %v5703
      %v7039 = vpop.f32.mrb[0].mxu0
      %v7040 = vadd.f32 %v6879, %v7039
      %v7041 = vpop.f32.mrb[0].mxu0
      %v7042 = vpop.f32.mrb[0].mxu0
      %v7043 = vadd.f32 %v6882, %v7042
      %v7044 = vpop.f32.mrb[0].mxu0
      %7045 = vmatprep.mubr.bf16.mxu0 %v5708
      %7046 = vmatmul.mubr.bf16.gmra.mrb[0].mxu0 %v5707
      %v7047 = vpop.f32.mrb[0].mxu0
      %v7048 = vadd.f32 %v6887, %v7047
      %v7049 = vpop.f32.mrb[0].mxu0
      %v7050 = vpop.f32.mrb[0].mxu0
      %v7051 = vadd.f32 %v6890, %v7050
      %v7052 = vpop.f32.mrb[0].mxu0
      %7053 = vmatprep.mubr.bf16.mxu0 %v5712
      %7054 = vmatmul.mubr.bf16.gmra.mrb[0].mxu0 %v5711
      %v7055 = vpop.f32.mrb[0].mxu0
      %v7056 = vadd.f32 %v6895, %v7055
      %v7057 = vpop.f32.mrb[0].mxu0
      %v7058 = vpop.f32.mrb[0].mxu0
      %v7059 = vadd.f32 %v6898, %v7058
      %v7060 = vpop.f32.mrb[0].mxu0
      %7061 = vmatprep.mubr.bf16.mxu0 %v5716
      %7062 = vmatmul.mubr.bf16.gmra.mrb[0].mxu0 %v5715
      %v7063 = vpop.f32.mrb[0].mxu0
      %v7064 = vadd.f32 %v6903, %v7063
      %v7065 = vpop.f32.mrb[0].mxu0
      %v7066 = vpop.f32.mrb[0].mxu0
      %v7067 = vadd.f32 %v6906, %v7066
      %v7068 = vpop.f32.mrb[0].mxu0
      %7069 = vmatprep.mubr.bf16.mxu0 %v5720
      %7070 = vmatmul.mubr.bf16.gmra.mrb[0].mxu0 %v5719
      %v7071 = vpop.f32.mrb[0].mxu0
      %v7072 = vadd.f32 %v6911, %v7071
      %v7073 = vpop.f32.mrb[0].mxu0
      %v7074 = vpop.f32.mrb[0].mxu0
      %v7075 = vadd.f32 %v6914, %v7074
      %v7076 = vpop.f32.mrb[0].mxu0
      %7077 = vmatprep.mubr.bf16.mxu0 %v5724
      %7078 = vmatmul.mubr.bf16.gmra.mrb[0].mxu0 %v5723
      %v7079 = vpop.f32.mrb[0].mxu0
      %v7080 = vadd.f32 %v6919, %v7079
      %v7081 = vpop.f32.mrb[0].mxu0
      %v7082 = vpop.f32.mrb[0].mxu0
      %v7083 = vadd.f32 %v6922, %v7082
      %v7084 = vpop.f32.mrb[0].mxu0
      %7085 = vmatprep.mubr.bf16.mxu0 %v5728
      %7086 = vmatmul.mubr.bf16.gmra.mrb[0].mxu0 %v5727
      %v7087 = vpop.f32.mrb[0].mxu0
      %v7088 = vadd.f32 %v6927, %v7087
      %v7089 = vpop.f32.mrb[0].mxu0
      %v7090 = vpop.f32.mrb[0].mxu0
      %v7091 = vadd.f32 %v6930, %v7090
      %v7092 = vpop.f32.mrb[0].mxu0
      %7093 = vdwg.mxu0
      %v7094 = vmax.f32 %v6614, 0.0
      %v7095 = vmax.f32 %v6616, 0.0
      %v7096 = vmax.f32 %v6968, 0.0
      %v7097 = vmax.f32 %v6618, 0.0
      %v7098 = vmax.f32 %v6620, 0.0
      %v7099 = vmax.f32 %v6971, 0.0
      %v7100 = vmax.f32 %v6624, 0.0
      %v7101 = vmax.f32 %v6626, 0.0
      %v7102 = vmax.f32 %v6976, 0.0
      %v7103 = vmax.f32 %v6628, 0.0
      %v7104 = vmax.f32 %v6630, 0.0
      %v7105 = vmax.f32 %v6979, 0.0
      %v7106 = vmax.f32 %v6634, 0.0
      %v7107 = vmax.f32 %v6636, 0.0
      %v7108 = vmax.f32 %v6984, 0.0
      %v7109 = vmax.f32 %v6638, 0.0
      %v7110 = vmax.f32 %v6640, 0.0
      %v7111 = vmax.f32 %v6987, 0.0
      %v7112 = vmax.f32 %v6644, 0.0
      %v7113 = vmax.f32 %v6646, 0.0
      %v7114 = vmax.f32 %v6992, 0.0
      %v7115 = vmax.f32 %v6648, 0.0
      %v7116 = vmax.f32 %v6650, 0.0
      %v7117 = vmax.f32 %v6995, 0.0
      %v7118 = vmax.f32 %v6654, 0.0
      %v7119 = vmax.f32 %v6656, 0.0
      %v7120 = vmax.f32 %v7000, 0.0
      %v7121 = vmax.f32 %v6658, 0.0
      %v7122 = vmax.f32 %v6660, 0.0
      %v7123 = vmax.f32 %v7003, 0.0
      %v7124 = vmax.f32 %v6664, 0.0
      %v7125 = vmax.f32 %v6666, 0.0
      %v7126 = vmax.f32 %v7008, 0.0
      %v7127 = vmax.f32 %v6668, 0.0
      %v7128 = vmax.f32 %v6670, 0.0
      %v7129 = vmax.f32 %v7011, 0.0
      %v7130 = vmax.f32 %v6674, 0.0
      %v7131 = vmax.f32 %v6676, 0.0
      %v7132 = vmax.f32 %v7016, 0.0
      %v7133 = vmax.f32 %v6678, 0.0
      %v7134 = vmax.f32 %v6680, 0.0
      %v7135 = vmax.f32 %v7019, 0.0
      %v7136 = vmax.f32 %v6684, 0.0
      %v7137 = vmax.f32 %v6686, 0.0
      %v7138 = vmax.f32 %v7024, 0.0
      %v7139 = vmax.f32 %v6688, 0.0
      %v7140 = vmax.f32 %v6690, 0.0
      %v7141 = vmax.f32 %v7027, 0.0
      %v7142 = vmax.f32 %v6694, 0.0
      %v7143 = vmax.f32 %v6696, 0.0
      %v7144 = vmax.f32 %v7032, 0.0
      %v7145 = vmax.f32 %v6698, 0.0
      %v7146 = vmax.f32 %v6700, 0.0
      %v7147 = vmax.f32 %v7035, 0.0
      %v7148 = vmax.f32 %v6704, 0.0
      %v7149 = vmax.f32 %v6706, 0.0
      %v7150 = vmax.f32 %v7040, 0.0
      %v7151 = vmax.f32 %v6708, 0.0
      %v7152 = vmax.f32 %v6710, 0.0
      %v7153 = vmax.f32 %v7043, 0.0
      %v7154 = vmax.f32 %v6714, 0.0
      %v7155 = vmax.f32 %v6716, 0.0
      %v7156 = vmax.f32 %v7048, 0.0
      %v7157 = vmax.f32 %v6718, 0.0
      %v7158 = vmax.f32 %v6720, 0.0
      %v7159 = vmax.f32 %v7051, 0.0
      %v7160 = vmax.f32 %v6724, 0.0
      %v7161 = vmax.f32 %v6726, 0.0
      %v7162 = vmax.f32 %v7056, 0.0
      %v7163 = vmax.f32 %v6728, 0.0
      %v7164 = vmax.f32 %v6730, 0.0
      %v7165 = vmax.f32 %v7059, 0.0
      %v7166 = vmax.f32 %v6734, 0.0
      %v7167 = vmax.f32 %v6736, 0.0
      %v7168 = vmax.f32 %v7064, 0.0
      %v7169 = vmax.f32 %v6738, 0.0
      %v7170 = vmax.f32 %v6740, 0.0
      %v7171 = vmax.f32 %v7067, 0.0
      %v7172 = vmax.f32 %v6744, 0.0
      %v7173 = vmax.f32 %v6746, 0.0
      %v7174 = vmax.f32 %v7072, 0.0
      %v7175 = vmax.f32 %v6748, 0.0
      %v7176 = vmax.f32 %v6750, 0.0
      %v7177 = vmax.f32 %v7075, 0.0
      %v7178 = vmax.f32 %v6754, 0.0
      %v7179 = vmax.f32 %v6756, 0.0
      %v7180 = vmax.f32 %v7080, 0.0
      %v7181 = vmax.f32 %v6758, 0.0
      %v7182 = vmax.f32 %v6760, 0.0
      %v7183 = vmax.f32 %v7083, 0.0
      %v7184 = vmax.f32 %v6764, 0.0
      %v7185 = vmax.f32 %v6766, 0.0
      %v7186 = vmax.f32 %v7088, 0.0
      %v7187 = vmax.f32 %v6768, 0.0
      %v7188 = vmax.f32 %v6770, 0.0
      %v7189 = vmax.f32 %v7091, 0.0
      %v7190 = vpack.c.bf16 %v7097, %v7094
      %v7191 = vpack.c.bf16 %v7098, %v7095
      %v7192 = vpack.c.bf16 %v7099, %v7096
      %v7193 = vpack.c.bf16 %v7103, %v7100
      %v7194 = vpack.c.bf16 %v7104, %v7101
      %v7195 = vpack.c.bf16 %v7105, %v7102
      %v7196 = vpack.c.bf16 %v7109, %v7106
      %v7197 = vpack.c.bf16 %v7110, %v7107
      %v7198 = vpack.c.bf16 %v7111, %v7108
      %v7199 = vpack.c.bf16 %v7115, %v7112
      %v7200 = vpack.c.bf16 %v7116, %v7113
      %v7201 = vpack.c.bf16 %v7117, %v7114
      %v7202 = vpack.c.bf16 %v7121, %v7118
      %v7203 = vpack.c.bf16 %v7122, %v7119
      %v7204 = vpack.c.bf16 %v7123, %v7120
      %v7205 = vpack.c.bf16 %v7127, %v7124
      %v7206 = vpack.c.bf16 %v7128, %v7125
      %v7207 = vpack.c.bf16 %v7129, %v7126
      %v7208 = vpack.c.bf16 %v7133, %v7130
      %v7209 = vpack.c.bf16 %v7134, %v7131
      %v7210 = vpack.c.bf16 %v7135, %v7132
      %v7211 = vpack.c.bf16 %v7139, %v7136
      %v7212 = vpack.c.bf16 %v7140, %v7137
      %v7213 = vpack.c.bf16 %v7141, %v7138
      %v7214 = vpack.c.bf16 %v7145, %v7142
      %v7215 = vpack.c.bf16 %v7146, %v7143
      %v7216 = vpack.c.bf16 %v7147, %v7144
      %v7217 = vpack.c.bf16 %v7151, %v7148
      %v7218 = vpack.c.bf16 %v7152, %v7149
      %v7219 = vpack.c.bf16 %v7153, %v7150
      %v7220 = vpack.c.bf16 %v7157, %v7154
      %v7221 = vpack.c.bf16 %v7158, %v7155
      %v7222 = vpack.c.bf16 %v7159, %v7156
      %v7223 = vpack.c.bf16 %v7163, %v7160
      %v7224 = vpack.c.bf16 %v7164, %v7161
      %v7225 = vpack.c.bf16 %v7165, %v7162
      %v7226 = vpack.c.bf16 %v7169, %v7166
      %v7227 = vpack.c.bf16 %v7170, %v7167
      %v7228 = vpack.c.bf16 %v7171, %v7168
      %v7229 = vpack.c.bf16 %v7175, %v7172
      %v7230 = vpack.c.bf16 %v7176, %v7173
      %v7231 = vpack.c.bf16 %v7177, %v7174
      %v7232 = vpack.c.bf16 %v7181, %v7178
      %v7233 = vpack.c.bf16 %v7182, %v7179
      %v7234 = vpack.c.bf16 %v7183, %v7180
      %v7235 = vpack.c.bf16 %v7187, %v7184
      %v7236 = vpack.c.bf16 %v7188, %v7185
      %v7237 = vpack.c.bf16 %v7189, %v7186
      %v7238 = vld [vmem:[%s7] sm:$0xff]
      %v7239 = vld [vmem:[%s7 + $0x8] sm:$0xff]
      %v7240 = vld [vmem:[%s7 + $0x10] sm:$0xff]
      %v7241 = vld [vmem:[%s7 + $0x18] sm:$0xff]
      %v7242 = vld [vmem:[%s7 + $0x20] sm:$0xff]
      %v7243 = vld [vmem:[%s7 + $0x28] sm:$0xff]
      %v7244 = vld [vmem:[%s7 + $0x30] sm:$0xff]
      %v7245 = vld [vmem:[%s7 + $0x38] sm:$0xff]
      %v7246 = vld [vmem:[%s7 + $0x40] sm:$0xff]
      %v7247 = vld [vmem:[%s7 + $0x48] sm:$0xff]
      %v7248 = vld [vmem:[%s7 + $0x50] sm:$0xff]
      %v7249 = vld [vmem:[%s7 + $0x58] sm:$0xff]
      %v7250 = vld [vmem:[%s7 + $0x60] sm:$0xff]
      %v7251 = vld [vmem:[%s7 + $0x68] sm:$0xff]
      %v7252 = vld [vmem:[%s7 + $0x70] sm:$0xff]
      %v7253 = vld [vmem:[%s7 + $0x78] sm:$0xff]
      %v7254 = vld [vmem:[%s7 + $0x80] sm:$0xff]
      %v7255 = vld [vmem:[%s7 + $0x88] sm:$0xff]
      %v7256 = vld [vmem:[%s7 + $0x90] sm:$0xff]
      %v7257 = vld [vmem:[%s7 + $0x98] sm:$0xff]
      %v7258 = vld [vmem:[%s7 + $0xa0] sm:$0xff]
      %v7259 = vld [vmem:[%s7 + $0xa8] sm:$0xff]
      %v7260 = vld [vmem:[%s7 + $0xb0] sm:$0xff]
      %v7261 = vld [vmem:[%s7 + $0xb8] sm:$0xff]
      %v7262 = vld [vmem:[%s7 + $0xc0] sm:$0xff]
      %v7263 = vld [vmem:[%s7 + $0xc8] sm:$0xff]
      %v7264 = vld [vmem:[%s7 + $0xd0] sm:$0xff]
      %v7265 = vld [vmem:[%s7 + $0xd8] sm:$0xff]
      %v7266 = vld [vmem:[%s7 + $0xe0] sm:$0xff]
      %v7267 = vld [vmem:[%s7 + $0xe8] sm:$0xff]
      %v7268 = vld [vmem:[%s7 + $0xf0] sm:$0xff]
      %v7269 = vld [vmem:[%s7 + $0xf8] sm:$0xff]
      %v7270 = vld [vmem:[%s7 + $0x100] sm:$0xff]
      %v7271 = vld [vmem:[%s7 + $0x108] sm:$0xff]
      %v7272 = vld [vmem:[%s7 + $0x110] sm:$0xff]
      %v7273 = vld [vmem:[%s7 + $0x118] sm:$0xff]
      %v7274 = vld [vmem:[%s7 + $0x120] sm:$0xff]
      %v7275 = vld [vmem:[%s7 + $0x128] sm:$0xff]
      %v7276 = vld [vmem:[%s7 + $0x130] sm:$0xff]
      %v7277 = vld [vmem:[%s7 + $0x138] sm:$0xff]
      %v7278 = vld [vmem:[%s7 + $0x140] sm:$0xff]
      %v7279 = vld [vmem:[%s7 + $0x148] sm:$0xff]
      %v7280 = vld [vmem:[%s7 + $0x150] sm:$0xff]
      %v7281 = vld [vmem:[%s7 + $0x158] sm:$0xff]
      %v7282 = vld [vmem:[%s7 + $0x160] sm:$0xff]
      %v7283 = vld [vmem:[%s7 + $0x168] sm:$0xff]
      %v7284 = vld [vmem:[%s7 + $0x170] sm:$0xff]
      %v7285 = vld [vmem:[%s7 + $0x178] sm:$0xff]
      %v7286 = vld [vmem:[%s8] sm:$0x3]
      %v7288 = vlaneseq
      %v7289 = vshrl.u32 %v7288, 7
      %v7290 = vsub.s32 0, %v7289
      %v7291 = vrot.slane %v7286, %v7290
      %v7292 = vlaneseq
      %v7293 = vshrl.u32 %v7292, 7
      %v7294 = vsub.s32 1, %v7293
      %v7295 = vrot.slane %v7286, %v7294
      %v7346 = vunpack.c.l.b16 %v7238
      %v7347 = vunpack.c.h.b16 %v7238
      %v7348 = vunpack.c.l.b16 %v7239
      %v7349 = vunpack.c.h.b16 %v7239
      %v7350 = vunpack.c.l.b16 %v7240
      %v7351 = vunpack.c.h.b16 %v7240
      %v7352 = vunpack.c.l.b16 %v7241
      %v7353 = vunpack.c.h.b16 %v7241
      %v7354 = vunpack.c.l.b16 %v7242
      %v7355 = vunpack.c.h.b16 %v7242
      %v7356 = vunpack.c.l.b16 %v7243
      %v7357 = vunpack.c.h.b16 %v7243
      %v7358 = vunpack.c.l.b16 %v7244
      %v7359 = vunpack.c.h.b16 %v7244
      %v7360 = vunpack.c.l.b16 %v7245
      %v7361 = vunpack.c.h.b16 %v7245
      %v7362 = vunpack.c.l.b16 %v7246
      %v7363 = vunpack.c.h.b16 %v7246
      %v7364 = vunpack.c.l.b16 %v7247
      %v7365 = vunpack.c.h.b16 %v7247
      %v7366 = vunpack.c.l.b16 %v7248
      %v7367 = vunpack.c.h.b16 %v7248
      %v7368 = vunpack.c.l.b16 %v7249
      %v7369 = vunpack.c.h.b16 %v7249
      %v7370 = vunpack.c.l.b16 %v7250
      %v7371 = vunpack.c.h.b16 %v7250
      %v7372 = vunpack.c.l.b16 %v7251
      %v7373 = vunpack.c.h.b16 %v7251
      %v7374 = vunpack.c.l.b16 %v7252
      %v7375 = vunpack.c.h.b16 %v7252
      %v7376 = vunpack.c.l.b16 %v7253
      %v7377 = vunpack.c.h.b16 %v7253
      %v7378 = vunpack.c.l.b16 %v7254
      %v7379 = vunpack.c.h.b16 %v7254
      %v7380 = vunpack.c.l.b16 %v7255
      %v7381 = vunpack.c.h.b16 %v7255
      %v7382 = vunpack.c.l.b16 %v7256
      %v7383 = vunpack.c.h.b16 %v7256
      %v7384 = vunpack.c.l.b16 %v7257
      %v7385 = vunpack.c.h.b16 %v7257
      %v7386 = vunpack.c.l.b16 %v7258
      %v7387 = vunpack.c.h.b16 %v7258
      %v7388 = vunpack.c.l.b16 %v7259
      %v7389 = vunpack.c.h.b16 %v7259
      %v7390 = vunpack.c.l.b16 %v7260
      %v7391 = vunpack.c.h.b16 %v7260
      %v7392 = vunpack.c.l.b16 %v7261
      %v7393 = vunpack.c.h.b16 %v7261
      %v7394 = vunpack.c.l.b16 %v7262
      %v7395 = vunpack.c.h.b16 %v7262
      %v7396 = vunpack.c.l.b16 %v7263
      %v7397 = vunpack.c.h.b16 %v7263
      %v7398 = vunpack.c.l.b16 %v7264
      %v7399 = vunpack.c.h.b16 %v7264
      %v7400 = vunpack.c.l.b16 %v7265
      %v7401 = vunpack.c.h.b16 %v7265
      %v7402 = vunpack.c.l.b16 %v7266
      %v7403 = vunpack.c.h.b16 %v7266
      %v7404 = vunpack.c.l.b16 %v7267
      %v7405 = vunpack.c.h.b16 %v7267
      %v7406 = vunpack.c.l.b16 %v7268
      %v7407 = vunpack.c.h.b16 %v7268
      %v7408 = vunpack.c.l.b16 %v7269
      %v7409 = vunpack.c.h.b16 %v7269
      %v7410 = vunpack.c.l.b16 %v7270
      %v7411 = vunpack.c.h.b16 %v7270
      %v7412 = vunpack.c.l.b16 %v7271
      %v7413 = vunpack.c.h.b16 %v7271
      %v7414 = vunpack.c.l.b16 %v7272
      %v7415 = vunpack.c.h.b16 %v7272
      %v7416 = vunpack.c.l.b16 %v7273
      %v7417 = vunpack.c.h.b16 %v7273
      %v7418 = vunpack.c.l.b16 %v7274
      %v7419 = vunpack.c.h.b16 %v7274
      %v7420 = vunpack.c.l.b16 %v7275
      %v7421 = vunpack.c.h.b16 %v7275
      %v7422 = vunpack.c.l.b16 %v7276
      %v7423 = vunpack.c.h.b16 %v7276
      %v7424 = vunpack.c.l.b16 %v7277
      %v7425 = vunpack.c.h.b16 %v7277
      %v7426 = vunpack.c.l.b16 %v7278
      %v7427 = vunpack.c.h.b16 %v7278
      %v7428 = vunpack.c.l.b16 %v7279
      %v7429 = vunpack.c.h.b16 %v7279
      %v7430 = vunpack.c.l.b16 %v7280
      %v7431 = vunpack.c.h.b16 %v7280
      %v7432 = vunpack.c.l.b16 %v7281
      %v7433 = vunpack.c.h.b16 %v7281
      %v7434 = vunpack.c.l.b16 %v7282
      %v7435 = vunpack.c.h.b16 %v7282
      %v7436 = vunpack.c.l.b16 %v7283
      %v7437 = vunpack.c.h.b16 %v7283
      %v7438 = vunpack.c.l.b16 %v7284
      %v7439 = vunpack.c.h.b16 %v7284
      %v7440 = vunpack.c.l.b16 %v7285
      %v7441 = vunpack.c.h.b16 %v7285
      %v7442 = vpack.c.b16 %v7348, %v7346
      %v7443 = vpack.c.b16 %v7349, %v7347
      %v7444 = vpack.c.b16 %v7352, %v7350
      %v7445 = vpack.c.b16 %v7353, %v7351
      %v7446 = vpack.c.b16 %v7356, %v7354
      %v7447 = vpack.c.b16 %v7357, %v7355
      %v7448 = vpack.c.b16 %v7360, %v7358
      %v7449 = vpack.c.b16 %v7361, %v7359
      %v7450 = vpack.c.b16 %v7364, %v7362
      %v7451 = vpack.c.b16 %v7365, %v7363
      %v7452 = vpack.c.b16 %v7368, %v7366
      %v7453 = vpack.c.b16 %v7369, %v7367
      %v7454 = vpack.c.b16 %v7372, %v7370
      %v7455 = vpack.c.b16 %v7373, %v7371
      %v7456 = vpack.c.b16 %v7376, %v7374
      %v7457 = vpack.c.b16 %v7377, %v7375
      %v7458 = vpack.c.b16 %v7380, %v7378
      %v7459 = vpack.c.b16 %v7381, %v7379
      %v7460 = vpack.c.b16 %v7384, %v7382
      %v7461 = vpack.c.b16 %v7385, %v7383
      %v7462 = vpack.c.b16 %v7388, %v7386
      %v7463 = vpack.c.b16 %v7389, %v7387
      %v7464 = vpack.c.b16 %v7392, %v7390
      %v7465 = vpack.c.b16 %v7393, %v7391
      %v7466 = vpack.c.b16 %v7396, %v7394
      %v7467 = vpack.c.b16 %v7397, %v7395
      %v7468 = vpack.c.b16 %v7400, %v7398
      %v7469 = vpack.c.b16 %v7401, %v7399
      %v7470 = vpack.c.b16 %v7404, %v7402
      %v7471 = vpack.c.b16 %v7405, %v7403
      %v7472 = vpack.c.b16 %v7408, %v7406
      %v7473 = vpack.c.b16 %v7409, %v7407
      %v7474 = vpack.c.b16 %v7412, %v7410
      %v7475 = vpack.c.b16 %v7413, %v7411
      %v7476 = vpack.c.b16 %v7416, %v7414
      %v7477 = vpack.c.b16 %v7417, %v7415
      %v7478 = vpack.c.b16 %v7420, %v7418
      %v7479 = vpack.c.b16 %v7421, %v7419
      %v7480 = vpack.c.b16 %v7424, %v7422
      %v7481 = vpack.c.b16 %v7425, %v7423
      %v7482 = vpack.c.b16 %v7428, %v7426
      %v7483 = vpack.c.b16 %v7429, %v7427
      %v7484 = vpack.c.b16 %v7432, %v7430
      %v7485 = vpack.c.b16 %v7433, %v7431
      %v7486 = vpack.c.b16 %v7436, %v7434
      %v7487 = vpack.c.b16 %v7437, %v7435
      %v7488 = vpack.c.b16 %v7440, %v7438
      %v7489 = vpack.c.b16 %v7441, %v7439
      %7538 = vmatprep.subr.bf16.mxu0 %v7443
      %7539 = vmatpush1.bf16.msra.mxu0 %v7442
      %7540 = vmatprep.subr.bf16.mxu0 %v7445
      %7541 = vmatpush1.bf16.msra.mxu0 %v7444
      %7542 = vmatprep.subr.bf16.mxu0 %v7447
      %7543 = vmatpush1.bf16.msra.mxu0 %v7446
      %7544 = vmatprep.subr.bf16.mxu0 %v7449
      %7545 = vmatpush1.bf16.msra.mxu0 %v7448
      %7546 = vmatprep.subr.bf16.mxu0 %v7451
      %7547 = vmatpush1.bf16.msra.mxu0 %v7450
      %7548 = vmatprep.subr.bf16.mxu0 %v7453
      %7549 = vmatpush1.bf16.msra.mxu0 %v7452
      %7550 = vmatprep.subr.bf16.mxu0 %v7455
      %7551 = vmatpush1.bf16.msra.mxu0 %v7454
      %7552 = vmatprep.subr.bf16.mxu0 %v7457
      %7553 = vmatpush1.bf16.msra.mxu0 %v7456
      %7554 = vmatprep.subr.bf16.mxu0 %v7459
      %7555 = vmatpush1.bf16.msra.mxu0 %v7458
      %7556 = vmatprep.subr.bf16.mxu0 %v7461
      %7557 = vmatpush1.bf16.msra.mxu0 %v7460
      %7558 = vmatprep.subr.bf16.mxu0 %v7463
      %7559 = vmatpush1.bf16.msra.mxu0 %v7462
      %7560 = vmatprep.subr.bf16.mxu0 %v7465
      %7561 = vmatpush1.bf16.msra.mxu0 %v7464
      %7562 = vmatprep.subr.bf16.mxu0 %v7467
      %7563 = vmatpush1.bf16.msra.mxu0 %v7466
      %7564 = vmatprep.subr.bf16.mxu0 %v7469
      %7565 = vmatpush1.bf16.msra.mxu0 %v7468
      %7566 = vmatprep.subr.bf16.mxu0 %v7471
      %7567 = vmatpush1.bf16.msra.mxu0 %v7470
      %7568 = vmatprep.subr.bf16.mxu0 %v7473
      %7569 = vmatpush1.bf16.msra.mxu0 %v7472
      %7570 = vmatprep.mubr.bf16.mxu0 %v7191
      %7571 = vmatmul.mubr.bf16.gmra.mrb[0].mxu0 %v7190
      %v7572 = vpop.f32.mrb[0].mxu0
      %v7573 = vadd.f32 %v7291, %v7572
      %v7574 = vpop.f32.mrb[0].mxu0
      %v7575 = vadd.f32 %v7295, %v7574
      %v7576 = vpop.f32.mrb[0].mxu0
      %v7577 = vadd.f32 %v7291, %v7576
      %v7578 = vpop.f32.mrb[0].mxu0
      %v7579 = vadd.f32 %v7295, %v7578
      %7580 = vmatprep.mubr.bf16.mxu0 %v7194
      %7581 = vmatmul.mubr.bf16.gmra.mrb[0].mxu0 %v7193
      %v7582 = vpop.f32.mrb[0].mxu0
      %v7583 = vadd.f32 %v7291, %v7582
      %v7584 = vpop.f32.mrb[0].mxu0
      %v7585 = vadd.f32 %v7295, %v7584
      %v7586 = vpop.f32.mrb[0].mxu0
      %v7587 = vadd.f32 %v7291, %v7586
      %v7588 = vpop.f32.mrb[0].mxu0
      %v7589 = vadd.f32 %v7295, %v7588
      %7590 = vmatprep.mubr.bf16.mxu0 %v7197
      %7591 = vmatmul.mubr.bf16.gmra.mrb[0].mxu0 %v7196
      %v7592 = vpop.f32.mrb[0].mxu0
      %v7593 = vadd.f32 %v7291, %v7592
      %v7594 = vpop.f32.mrb[0].mxu0
      %v7595 = vadd.f32 %v7295, %v7594
      %v7596 = vpop.f32.mrb[0].mxu0
      %v7597 = vadd.f32 %v7291, %v7596
      %v7598 = vpop.f32.mrb[0].mxu0
      %v7599 = vadd.f32 %v7295, %v7598
      %7600 = vmatprep.mubr.bf16.mxu0 %v7200
      %7601 = vmatmul.mubr.bf16.gmra.mrb[0].mxu0 %v7199
      %v7602 = vpop.f32.mrb[0].mxu0
      %v7603 = vadd.f32 %v7291, %v7602
      %v7604 = vpop.f32.mrb[0].mxu0
      %v7605 = vadd.f32 %v7295, %v7604
      %v7606 = vpop.f32.mrb[0].mxu0
      %v7607 = vadd.f32 %v7291, %v7606
      %v7608 = vpop.f32.mrb[0].mxu0
      %v7609 = vadd.f32 %v7295, %v7608
      %7610 = vmatprep.mubr.bf16.mxu0 %v7203
      %7611 = vmatmul.mubr.bf16.gmra.mrb[0].mxu0 %v7202
      %v7612 = vpop.f32.mrb[0].mxu0
      %v7613 = vadd.f32 %v7291, %v7612
      %v7614 = vpop.f32.mrb[0].mxu0
      %v7615 = vadd.f32 %v7295, %v7614
      %v7616 = vpop.f32.mrb[0].mxu0
      %v7617 = vadd.f32 %v7291, %v7616
      %v7618 = vpop.f32.mrb[0].mxu0
      %v7619 = vadd.f32 %v7295, %v7618
      %7620 = vmatprep.mubr.bf16.mxu0 %v7206
      %7621 = vmatmul.mubr.bf16.gmra.mrb[0].mxu0 %v7205
      %v7622 = vpop.f32.mrb[0].mxu0
      %v7623 = vadd.f32 %v7291, %v7622
      %v7624 = vpop.f32.mrb[0].mxu0
      %v7625 = vadd.f32 %v7295, %v7624
      %v7626 = vpop.f32.mrb[0].mxu0
      %v7627 = vadd.f32 %v7291, %v7626
      %v7628 = vpop.f32.mrb[0].mxu0
      %v7629 = vadd.f32 %v7295, %v7628
      %7630 = vmatprep.mubr.bf16.mxu0 %v7209
      %7631 = vmatmul.mubr.bf16.gmra.mrb[0].mxu0 %v7208
      %v7632 = vpop.f32.mrb[0].mxu0
      %v7633 = vadd.f32 %v7291, %v7632
      %v7634 = vpop.f32.mrb[0].mxu0
      %v7635 = vadd.f32 %v7295, %v7634
      %v7636 = vpop.f32.mrb[0].mxu0
      %v7637 = vadd.f32 %v7291, %v7636
      %v7638 = vpop.f32.mrb[0].mxu0
      %v7639 = vadd.f32 %v7295, %v7638
      %7640 = vmatprep.mubr.bf16.mxu0 %v7212
      %7641 = vmatmul.mubr.bf16.gmra.mrb[0].mxu0 %v7211
      %v7642 = vpop.f32.mrb[0].mxu0
      %v7643 = vadd.f32 %v7291, %v7642
      %v7644 = vpop.f32.mrb[0].mxu0
      %v7645 = vadd.f32 %v7295, %v7644
      %v7646 = vpop.f32.mrb[0].mxu0
      %v7647 = vadd.f32 %v7291, %v7646
      %v7648 = vpop.f32.mrb[0].mxu0
      %v7649 = vadd.f32 %v7295, %v7648
      %7650 = vmatprep.mubr.bf16.mxu0 %v7215
      %7651 = vmatmul.mubr.bf16.gmra.mrb[0].mxu0 %v7214
      %v7652 = vpop.f32.mrb[0].mxu0
      %v7653 = vadd.f32 %v7291, %v7652
      %v7654 = vpop.f32.mrb[0].mxu0
      %v7655 = vadd.f32 %v7295, %v7654
      %v7656 = vpop.f32.mrb[0].mxu0
      %v7657 = vadd.f32 %v7291, %v7656
      %v7658 = vpop.f32.mrb[0].mxu0
      %v7659 = vadd.f32 %v7295, %v7658
      %7660 = vmatprep.mubr.bf16.mxu0 %v7218
      %7661 = vmatmul.mubr.bf16.gmra.mrb[0].mxu0 %v7217
      %v7662 = vpop.f32.mrb[0].mxu0
      %v7663 = vadd.f32 %v7291, %v7662
      %v7664 = vpop.f32.mrb[0].mxu0
      %v7665 = vadd.f32 %v7295, %v7664
      %v7666 = vpop.f32.mrb[0].mxu0
      %v7667 = vadd.f32 %v7291, %v7666
      %v7668 = vpop.f32.mrb[0].mxu0
      %v7669 = vadd.f32 %v7295, %v7668
      %7670 = vmatprep.mubr.bf16.mxu0 %v7221
      %7671 = vmatmul.mubr.bf16.gmra.mrb[0].mxu0 %v7220
      %v7672 = vpop.f32.mrb[0].mxu0
      %v7673 = vadd.f32 %v7291, %v7672
      %v7674 = vpop.f32.mrb[0].mxu0
      %v7675 = vadd.f32 %v7295, %v7674
      %v7676 = vpop.f32.mrb[0].mxu0
      %v7677 = vadd.f32 %v7291, %v7676
      %v7678 = vpop.f32.mrb[0].mxu0
      %v7679 = vadd.f32 %v7295, %v7678
      %7680 = vmatprep.mubr.bf16.mxu0 %v7224
      %7681 = vmatmul.mubr.bf16.gmra.mrb[0].mxu0 %v7223
      %v7682 = vpop.f32.mrb[0].mxu0
      %v7683 = vadd.f32 %v7291, %v7682
      %v7684 = vpop.f32.mrb[0].mxu0
      %v7685 = vadd.f32 %v7295, %v7684
      %v7686 = vpop.f32.mrb[0].mxu0
      %v7687 = vadd.f32 %v7291, %v7686
      %v7688 = vpop.f32.mrb[0].mxu0
      %v7689 = vadd.f32 %v7295, %v7688
      %7690 = vmatprep.mubr.bf16.mxu0 %v7227
      %7691 = vmatmul.mubr.bf16.gmra.mrb[0].mxu0 %v7226
      %v7692 = vpop.f32.mrb[0].mxu0
      %v7693 = vadd.f32 %v7291, %v7692
      %v7694 = vpop.f32.mrb[0].mxu0
      %v7695 = vadd.f32 %v7295, %v7694
      %v7696 = vpop.f32.mrb[0].mxu0
      %v7697 = vadd.f32 %v7291, %v7696
      %v7698 = vpop.f32.mrb[0].mxu0
      %v7699 = vadd.f32 %v7295, %v7698
      %7700 = vmatprep.mubr.bf16.mxu0 %v7230
      %7701 = vmatmul.mubr.bf16.gmra.mrb[0].mxu0 %v7229
      %v7702 = vpop.f32.mrb[0].mxu0
      %v7703 = vadd.f32 %v7291, %v7702
      %v7704 = vpop.f32.mrb[0].mxu0
      %v7705 = vadd.f32 %v7295, %v7704
      %v7706 = vpop.f32.mrb[0].mxu0
      %v7707 = vadd.f32 %v7291, %v7706
      %v7708 = vpop.f32.mrb[0].mxu0
      %v7709 = vadd.f32 %v7295, %v7708
      %7710 = vmatprep.mubr.bf16.mxu0 %v7233
      %7711 = vmatmul.mubr.bf16.gmra.mrb[0].mxu0 %v7232
      %v7712 = vpop.f32.mrb[0].mxu0
      %v7713 = vadd.f32 %v7291, %v7712
      %v7714 = vpop.f32.mrb[0].mxu0
      %v7715 = vadd.f32 %v7295, %v7714
      %v7716 = vpop.f32.mrb[0].mxu0
      %v7717 = vadd.f32 %v7291, %v7716
      %v7718 = vpop.f32.mrb[0].mxu0
      %v7719 = vadd.f32 %v7295, %v7718
      %7720 = vmatprep.mubr.bf16.mxu0 %v7236
      %7721 = vmatmul.mubr.bf16.gmra.mrb[0].mxu0 %v7235
      %v7722 = vpop.f32.mrb[0].mxu0
      %v7723 = vadd.f32 %v7291, %v7722
      %v7724 = vpop.f32.mrb[0].mxu0
      %v7725 = vadd.f32 %v7295, %v7724
      %v7726 = vpop.f32.mrb[0].mxu0
      %v7727 = vadd.f32 %v7291, %v7726
      %v7728 = vpop.f32.mrb[0].mxu0
      %v7729 = vadd.f32 %v7295, %v7728
      %7730 = vdwg.mxu0
      %7731 = vmatprep.subr.bf16.mxu0 %v7475
      %7732 = vmatpush1.bf16.msra.mxu0 %v7474
      %7733 = vmatprep.subr.bf16.mxu0 %v7477
      %7734 = vmatpush1.bf16.msra.mxu0 %v7476
      %7735 = vmatprep.subr.bf16.mxu0 %v7479
      %7736 = vmatpush1.bf16.msra.mxu0 %v7478
      %7737 = vmatprep.subr.bf16.mxu0 %v7481
      %7738 = vmatpush1.bf16.msra.mxu0 %v7480
      %7739 = vmatprep.subr.bf16.mxu0 %v7483
      %7740 = vmatpush1.bf16.msra.mxu0 %v7482
      %7741 = vmatprep.subr.bf16.mxu0 %v7485
      %7742 = vmatpush1.bf16.msra.mxu0 %v7484
      %7743 = vmatprep.subr.bf16.mxu0 %v7487
      %7744 = vmatpush1.bf16.msra.mxu0 %v7486
      %7745 = vmatprep.subr.bf16.mxu0 %v7489
      %7746 = vmatpush1.bf16.msra.mxu0 %v7488
      %7747 = vmatprep.subr.bf16.mxu0 0
      %7748 = vmatpush1.bf16.msra.mxu0 0
      %7749 = vmatprep.subr.bf16.mxu0 0
      %7750 = vmatpush1.bf16.msra.mxu0 0
      %7751 = vmatprep.subr.bf16.mxu0 0
      %7752 = vmatpush1.bf16.msra.mxu0 0
      %7753 = vmatprep.subr.bf16.mxu0 0
      %7754 = vmatpush1.bf16.msra.mxu0 0
      %7755 = vmatprep.subr.bf16.mxu0 0
      %7756 = vmatpush1.bf16.msra.mxu0 0
      %7757 = vmatprep.subr.bf16.mxu0 0
      %7758 = vmatpush1.bf16.msra.mxu0 0
      %7759 = vmatprep.subr.bf16.mxu0 0
      %7760 = vmatpush1.bf16.msra.mxu0 0
      %7761 = vmatprep.subr.bf16.mxu0 0
      %7762 = vmatpush1.bf16.msra.mxu0 0
      %7763 = vmatprep.mubr.bf16.mxu0 0
      %7764 = vmatmul.mubr.bf16.gmra.mrb[0].mxu0 %v7192
      %v7765 = vpop.f32.mrb[0].mxu0
      %v7766 = vadd.f32 %v7573, %v7765
      %v7767 = vpop.f32.mrb[0].mxu0
      %v7768 = vadd.f32 %v7575, %v7767
      %v7769 = vpop.f32.mrb[0].mxu0
      %v7770 = vadd.f32 %v7577, %v7769
      %v7771 = vpop.f32.mrb[0].mxu0
      %v7772 = vadd.f32 %v7579, %v7771
      %7773 = vmatprep.mubr.bf16.mxu0 0
      %7774 = vmatmul.mubr.bf16.gmra.mrb[0].mxu0 %v7195
      %v7775 = vpop.f32.mrb[0].mxu0
      %v7776 = vadd.f32 %v7583, %v7775
      %v7777 = vpop.f32.mrb[0].mxu0
      %v7778 = vadd.f32 %v7585, %v7777
      %v7779 = vpop.f32.mrb[0].mxu0
      %v7780 = vadd.f32 %v7587, %v7779
      %v7781 = vpop.f32.mrb[0].mxu0
      %v7782 = vadd.f32 %v7589, %v7781
      %7783 = vmatprep.mubr.bf16.mxu0 0
      %7784 = vmatmul.mubr.bf16.gmra.mrb[0].mxu0 %v7198
      %v7785 = vpop.f32.mrb[0].mxu0
      %v7786 = vadd.f32 %v7593, %v7785
      %v7787 = vpop.f32.mrb[0].mxu0
      %v7788 = vadd.f32 %v7595, %v7787
      %v7789 = vpop.f32.mrb[0].mxu0
      %v7790 = vadd.f32 %v7597, %v7789
      %v7791 = vpop.f32.mrb[0].mxu0
      %v7792 = vadd.f32 %v7599, %v7791
      %7793 = vmatprep.mubr.bf16.mxu0 0
      %7794 = vmatmul.mubr.bf16.gmra.mrb[0].mxu0 %v7201
      %v7795 = vpop.f32.mrb[0].mxu0
      %v7796 = vadd.f32 %v7603, %v7795
      %v7797 = vpop.f32.mrb[0].mxu0
      %v7798 = vadd.f32 %v7605, %v7797
      %v7799 = vpop.f32.mrb[0].mxu0
      %v7800 = vadd.f32 %v7607, %v7799
      %v7801 = vpop.f32.mrb[0].mxu0
      %v7802 = vadd.f32 %v7609, %v7801
      %7803 = vmatprep.mubr.bf16.mxu0 0
      %7804 = vmatmul.mubr.bf16.gmra.mrb[0].mxu0 %v7204
      %v7805 = vpop.f32.mrb[0].mxu0
      %v7806 = vadd.f32 %v7613, %v7805
      %v7807 = vpop.f32.mrb[0].mxu0
      %v7808 = vadd.f32 %v7615, %v7807
      %v7809 = vpop.f32.mrb[0].mxu0
      %v7810 = vadd.f32 %v7617, %v7809
      %v7811 = vpop.f32.mrb[0].mxu0
      %v7812 = vadd.f32 %v7619, %v7811
      %7813 = vmatprep.mubr.bf16.mxu0 0
      %7814 = vmatmul.mubr.bf16.gmra.mrb[0].mxu0 %v7207
      %v7815 = vpop.f32.mrb[0].mxu0
      %v7816 = vadd.f32 %v7623, %v7815
      %v7817 = vpop.f32.mrb[0].mxu0
      %v7818 = vadd.f32 %v7625, %v7817
      %v7819 = vpop.f32.mrb[0].mxu0
      %v7820 = vadd.f32 %v7627, %v7819
      %v7821 = vpop.f32.mrb[0].mxu0
      %v7822 = vadd.f32 %v7629, %v7821
      %7823 = vmatprep.mubr.bf16.mxu0 0
      %7824 = vmatmul.mubr.bf16.gmra.mrb[0].mxu0 %v7210
      %v7825 = vpop.f32.mrb[0].mxu0
      %v7826 = vadd.f32 %v7633, %v7825
      %v7827 = vpop.f32.mrb[0].mxu0
      %v7828 = vadd.f32 %v7635, %v7827
      %v7829 = vpop.f32.mrb[0].mxu0
      %v7830 = vadd.f32 %v7637, %v7829
      %v7831 = vpop.f32.mrb[0].mxu0
      %v7832 = vadd.f32 %v7639, %v7831
      %7833 = vmatprep.mubr.bf16.mxu0 0
      %7834 = vmatmul.mubr.bf16.gmra.mrb[0].mxu0 %v7213
      %v7835 = vpop.f32.mrb[0].mxu0
      %v7836 = vadd.f32 %v7643, %v7835
      %v7837 = vpop.f32.mrb[0].mxu0
      %v7838 = vadd.f32 %v7645, %v7837
      %v7839 = vpop.f32.mrb[0].mxu0
      %v7840 = vadd.f32 %v7647, %v7839
      %v7841 = vpop.f32.mrb[0].mxu0
      %v7842 = vadd.f32 %v7649, %v7841
      %7843 = vmatprep.mubr.bf16.mxu0 0
      %7844 = vmatmul.mubr.bf16.gmra.mrb[0].mxu0 %v7216
      %v7845 = vpop.f32.mrb[0].mxu0
      %v7846 = vadd.f32 %v7653, %v7845
      %v7847 = vpop.f32.mrb[0].mxu0
      %v7848 = vadd.f32 %v7655, %v7847
      %v7849 = vpop.f32.mrb[0].mxu0
      %v7850 = vadd.f32 %v7657, %v7849
      %v7851 = vpop.f32.mrb[0].mxu0
      %v7852 = vadd.f32 %v7659, %v7851
      %7853 = vmatprep.mubr.bf16.mxu0 0
      %7854 = vmatmul.mubr.bf16.gmra.mrb[0].mxu0 %v7219
      %v7855 = vpop.f32.mrb[0].mxu0
      %v7856 = vadd.f32 %v7663, %v7855
      %v7857 = vpop.f32.mrb[0].mxu0
      %v7858 = vadd.f32 %v7665, %v7857
      %v7859 = vpop.f32.mrb[0].mxu0
      %v7860 = vadd.f32 %v7667, %v7859
      %v7861 = vpop.f32.mrb[0].mxu0
      %v7862 = vadd.f32 %v7669, %v7861
      %7863 = vmatprep.mubr.bf16.mxu0 0
      %7864 = vmatmul.mubr.bf16.gmra.mrb[0].mxu0 %v7222
      %v7865 = vpop.f32.mrb[0].mxu0
      %v7866 = vadd.f32 %v7673, %v7865
      %v7867 = vpop.f32.mrb[0].mxu0
      %v7868 = vadd.f32 %v7675, %v7867
      %v7869 = vpop.f32.mrb[0].mxu0
      %v7870 = vadd.f32 %v7677, %v7869
      %v7871 = vpop.f32.mrb[0].mxu0
      %v7872 = vadd.f32 %v7679, %v7871
      %7873 = vmatprep.mubr.bf16.mxu0 0
      %7874 = vmatmul.mubr.bf16.gmra.mrb[0].mxu0 %v7225
      %v7875 = vpop.f32.mrb[0].mxu0
      %v7876 = vadd.f32 %v7683, %v7875
      %v7877 = vpop.f32.mrb[0].mxu0
      %v7878 = vadd.f32 %v7685, %v7877
      %v7879 = vpop.f32.mrb[0].mxu0
      %v7880 = vadd.f32 %v7687, %v7879
      %v7881 = vpop.f32.mrb[0].mxu0
      %v7882 = vadd.f32 %v7689, %v7881
      %7883 = vmatprep.mubr.bf16.mxu0 0
      %7884 = vmatmul.mubr.bf16.gmra.mrb[0].mxu0 %v7228
      %v7885 = vpop.f32.mrb[0].mxu0
      %v7886 = vadd.f32 %v7693, %v7885
      %v7887 = vpop.f32.mrb[0].mxu0
      %v7888 = vadd.f32 %v7695, %v7887
      %v7889 = vpop.f32.mrb[0].mxu0
      %v7890 = vadd.f32 %v7697, %v7889
      %v7891 = vpop.f32.mrb[0].mxu0
      %v7892 = vadd.f32 %v7699, %v7891
      %7893 = vmatprep.mubr.bf16.mxu0 0
      %7894 = vmatmul.mubr.bf16.gmra.mrb[0].mxu0 %v7231
      %v7895 = vpop.f32.mrb[0].mxu0
      %v7896 = vadd.f32 %v7703, %v7895
      %v7897 = vpop.f32.mrb[0].mxu0
      %v7898 = vadd.f32 %v7705, %v7897
      %v7899 = vpop.f32.mrb[0].mxu0
      %v7900 = vadd.f32 %v7707, %v7899
      %v7901 = vpop.f32.mrb[0].mxu0
      %v7902 = vadd.f32 %v7709, %v7901
      %7903 = vmatprep.mubr.bf16.mxu0 0
      %7904 = vmatmul.mubr.bf16.gmra.mrb[0].mxu0 %v7234
      %v7905 = vpop.f32.mrb[0].mxu0
      %v7906 = vadd.f32 %v7713, %v7905
      %v7907 = vpop.f32.mrb[0].mxu0
      %v7908 = vadd.f32 %v7715, %v7907
      %v7909 = vpop.f32.mrb[0].mxu0
      %v7910 = vadd.f32 %v7717, %v7909
      %v7911 = vpop.f32.mrb[0].mxu0
      %v7912 = vadd.f32 %v7719, %v7911
      %7913 = vmatprep.mubr.bf16.mxu0 0
      %7914 = vmatmul.mubr.bf16.gmra.mrb[0].mxu0 %v7237
      %v7915 = vpop.f32.mrb[0].mxu0
      %v7916 = vadd.f32 %v7723, %v7915
      %v7917 = vpop.f32.mrb[0].mxu0
      %v7918 = vadd.f32 %v7725, %v7917
      %v7919 = vpop.f32.mrb[0].mxu0
      %v7920 = vadd.f32 %v7727, %v7919
      %v7921 = vpop.f32.mrb[0].mxu0
      %v7922 = vadd.f32 %v7729, %v7921
      %7923 = vdwg.mxu0
      %v7924 = vmax.f32 %v7766, 0.0
      %v7925 = vmax.f32 %v7768, 0.0
      %v7926 = vmax.f32 %v7770, 0.0
      %v7927 = vmax.f32 %v7772, 0.0
      %v7928 = vmax.f32 %v7776, 0.0
      %v7929 = vmax.f32 %v7778, 0.0
      %v7930 = vmax.f32 %v7780, 0.0
      %v7931 = vmax.f32 %v7782, 0.0
      %v7932 = vmax.f32 %v7786, 0.0
      %v7933 = vmax.f32 %v7788, 0.0
      %v7934 = vmax.f32 %v7790, 0.0
      %v7935 = vmax.f32 %v7792, 0.0
      %v7936 = vmax.f32 %v7796, 0.0
      %v7937 = vmax.f32 %v7798, 0.0
      %v7938 = vmax.f32 %v7800, 0.0
      %v7939 = vmax.f32 %v7802, 0.0
      %v7940 = vmax.f32 %v7806, 0.0
      %v7941 = vmax.f32 %v7808, 0.0
      %v7942 = vmax.f32 %v7810, 0.0
      %v7943 = vmax.f32 %v7812, 0.0
      %v7944 = vmax.f32 %v7816, 0.0
      %v7945 = vmax.f32 %v7818, 0.0
      %v7946 = vmax.f32 %v7820, 0.0
      %v7947 = vmax.f32 %v7822, 0.0
      %v7948 = vmax.f32 %v7826, 0.0
      %v7949 = vmax.f32 %v7828, 0.0
      %v7950 = vmax.f32 %v7830, 0.0
      %v7951 = vmax.f32 %v7832, 0.0
      %v7952 = vmax.f32 %v7836, 0.0
      %v7953 = vmax.f32 %v7838, 0.0
      %v7954 = vmax.f32 %v7840, 0.0
      %v7955 = vmax.f32 %v7842, 0.0
      %v7956 = vmax.f32 %v7846, 0.0
      %v7957 = vmax.f32 %v7848, 0.0
      %v7958 = vmax.f32 %v7850, 0.0
      %v7959 = vmax.f32 %v7852, 0.0
      %v7960 = vmax.f32 %v7856, 0.0
      %v7961 = vmax.f32 %v7858, 0.0
      %v7962 = vmax.f32 %v7860, 0.0
      %v7963 = vmax.f32 %v7862, 0.0
      %v7964 = vmax.f32 %v7866, 0.0
      %v7965 = vmax.f32 %v7868, 0.0
      %v7966 = vmax.f32 %v7870, 0.0
      %v7967 = vmax.f32 %v7872, 0.0
      %v7968 = vmax.f32 %v7876, 0.0
      %v7969 = vmax.f32 %v7878, 0.0
      %v7970 = vmax.f32 %v7880, 0.0
      %v7971 = vmax.f32 %v7882, 0.0
      %v7972 = vmax.f32 %v7886, 0.0
      %v7973 = vmax.f32 %v7888, 0.0
      %v7974 = vmax.f32 %v7890, 0.0
      %v7975 = vmax.f32 %v7892, 0.0
      %v7976 = vmax.f32 %v7896, 0.0
      %v7977 = vmax.f32 %v7898, 0.0
      %v7978 = vmax.f32 %v7900, 0.0
      %v7979 = vmax.f32 %v7902, 0.0
      %v7980 = vmax.f32 %v7906, 0.0
      %v7981 = vmax.f32 %v7908, 0.0
      %v7982 = vmax.f32 %v7910, 0.0
      %v7983 = vmax.f32 %v7912, 0.0
      %v7984 = vmax.f32 %v7916, 0.0
      %v7985 = vmax.f32 %v7918, 0.0
      %v7986 = vmax.f32 %v7920, 0.0
      %v7987 = vmax.f32 %v7922, 0.0
      %v7988 = vpack.c.bf16 %v7926, %v7924
      %v7989 = vpack.c.bf16 %v7927, %v7925
      %v7990 = vpack.c.bf16 %v7930, %v7928
      %v7991 = vpack.c.bf16 %v7931, %v7929
      %v7992 = vpack.c.bf16 %v7934, %v7932
      %v7993 = vpack.c.bf16 %v7935, %v7933
      %v7994 = vpack.c.bf16 %v7938, %v7936
      %v7995 = vpack.c.bf16 %v7939, %v7937
      %v7996 = vpack.c.bf16 %v7942, %v7940
      %v7997 = vpack.c.bf16 %v7943, %v7941
      %v7998 = vpack.c.bf16 %v7946, %v7944
      %v7999 = vpack.c.bf16 %v7947, %v7945
      %v8000 = vpack.c.bf16 %v7950, %v7948
      %v8001 = vpack.c.bf16 %v7951, %v7949
      %v8002 = vpack.c.bf16 %v7954, %v7952
      %v8003 = vpack.c.bf16 %v7955, %v7953
      %v8004 = vpack.c.bf16 %v7958, %v7956
      %v8005 = vpack.c.bf16 %v7959, %v7957
      %v8006 = vpack.c.bf16 %v7962, %v7960
      %v8007 = vpack.c.bf16 %v7963, %v7961
      %v8008 = vpack.c.bf16 %v7966, %v7964
      %v8009 = vpack.c.bf16 %v7967, %v7965
      %v8010 = vpack.c.bf16 %v7970, %v7968
      %v8011 = vpack.c.bf16 %v7971, %v7969
      %v8012 = vpack.c.bf16 %v7974, %v7972
      %v8013 = vpack.c.bf16 %v7975, %v7973
      %v8014 = vpack.c.bf16 %v7978, %v7976
      %v8015 = vpack.c.bf16 %v7979, %v7977
      %v8016 = vpack.c.bf16 %v7982, %v7980
      %v8017 = vpack.c.bf16 %v7983, %v7981
      %v8018 = vpack.c.bf16 %v7986, %v7984
      %v8019 = vpack.c.bf16 %v7987, %v7985
      %v8020 = vld [vmem:[%s9] sm:$0xff]
      %v8021 = vld [vmem:[%s9 + $0x8] sm:$0xff]
      %v8022 = vld [vmem:[%s9 + $0x10] sm:$0xff]
      %v8023 = vld [vmem:[%s9 + $0x18] sm:$0xff]
      %v8024 = vld [vmem:[%s9 + $0x20] sm:$0xff]
      %v8025 = vld [vmem:[%s9 + $0x28] sm:$0xff]
      %v8026 = vld [vmem:[%s9 + $0x30] sm:$0xff]
      %v8027 = vld [vmem:[%s9 + $0x38] sm:$0xff]
      %v8028 = vld [vmem:[%s9 + $0x40] sm:$0xff]
      %v8029 = vld [vmem:[%s9 + $0x48] sm:$0xff]
      %v8030 = vld [vmem:[%s9 + $0x50] sm:$0xff]
      %v8031 = vld [vmem:[%s9 + $0x58] sm:$0xff]
      %v8032 = vld [vmem:[%s9 + $0x60] sm:$0xff]
      %v8033 = vld [vmem:[%s9 + $0x68] sm:$0xff]
      %v8034 = vld [vmem:[%s9 + $0x70] sm:$0xff]
      %v8035 = vld [vmem:[%s9 + $0x78] sm:$0xff]
      %v8036 = vld [vmem:[%s9 + $0x80] sm:$0xff]
      %v8037 = vld [vmem:[%s9 + $0x88] sm:$0xff]
      %v8038 = vld [vmem:[%s9 + $0x90] sm:$0xff]
      %v8039 = vld [vmem:[%s9 + $0x98] sm:$0xff]
      %v8040 = vld [vmem:[%s9 + $0xa0] sm:$0xff]
      %v8041 = vld [vmem:[%s9 + $0xa8] sm:$0xff]
      %v8042 = vld [vmem:[%s9 + $0xb0] sm:$0xff]
      %v8043 = vld [vmem:[%s9 + $0xb8] sm:$0xff]
      %v8044 = vld [vmem:[%s9 + $0xc0] sm:$0xff]
      %v8045 = vld [vmem:[%s9 + $0xc8] sm:$0xff]
      %v8046 = vld [vmem:[%s9 + $0xd0] sm:$0xff]
      %v8047 = vld [vmem:[%s9 + $0xd8] sm:$0xff]
      %v8048 = vld [vmem:[%s9 + $0xe0] sm:$0xff]
      %v8049 = vld [vmem:[%s9 + $0xe8] sm:$0xff]
      %v8050 = vld [vmem:[%s9 + $0xf0] sm:$0xff]
      %v8051 = vld [vmem:[%s9 + $0xf8] sm:$0xff]
      %v8052 = vld [vmem:[%s9 + $0x100] sm:$0xff]
      %v8053 = vld [vmem:[%s9 + $0x108] sm:$0xff]
      %v8054 = vld [vmem:[%s9 + $0x110] sm:$0xff]
      %v8055 = vld [vmem:[%s9 + $0x118] sm:$0xff]
      %v8056 = vld [vmem:[%s9 + $0x120] sm:$0xff]
      %v8057 = vld [vmem:[%s9 + $0x128] sm:$0xff]
      %v8058 = vld [vmem:[%s9 + $0x130] sm:$0xff]
      %v8059 = vld [vmem:[%s9 + $0x138] sm:$0xff]
      %v8060 = vld [vmem:[%s9 + $0x140] sm:$0xff]
      %v8061 = vld [vmem:[%s9 + $0x148] sm:$0xff]
      %v8062 = vld [vmem:[%s9 + $0x150] sm:$0xff]
      %v8063 = vld [vmem:[%s9 + $0x158] sm:$0xff]
      %v8064 = vld [vmem:[%s9 + $0x160] sm:$0xff]
      %v8065 = vld [vmem:[%s9 + $0x168] sm:$0xff]
      %v8066 = vld [vmem:[%s9 + $0x170] sm:$0xff]
      %v8067 = vld [vmem:[%s9 + $0x178] sm:$0xff]
      %v8068 = vld [vmem:[%s9 + $0x180] sm:$0xff]
      %v8069 = vld [vmem:[%s9 + $0x188] sm:$0xff]
      %v8070 = vld [vmem:[%s9 + $0x190] sm:$0xff]
      %v8071 = vld [vmem:[%s9 + $0x198] sm:$0xff]
      %v8072 = vld [vmem:[%s9 + $0x1a0] sm:$0xff]
      %v8073 = vld [vmem:[%s9 + $0x1a8] sm:$0xff]
      %v8074 = vld [vmem:[%s9 + $0x1b0] sm:$0xff]
      %v8075 = vld [vmem:[%s9 + $0x1b8] sm:$0xff]
      %v8076 = vld [vmem:[%s9 + $0x1c0] sm:$0xff]
      %v8077 = vld [vmem:[%s9 + $0x1c8] sm:$0xff]
      %v8078 = vld [vmem:[%s9 + $0x1d0] sm:$0xff]
      %v8079 = vld [vmem:[%s9 + $0x1d8] sm:$0xff]
      %v8080 = vld [vmem:[%s9 + $0x1e0] sm:$0xff]
      %v8081 = vld [vmem:[%s9 + $0x1e8] sm:$0xff]
      %v8082 = vld [vmem:[%s9 + $0x1f0] sm:$0xff]
      %v8083 = vld [vmem:[%s9 + $0x1f8] sm:$0xff]
      %v8084 = vld [vmem:[%s10] sm:$0xf]
      %v8086 = vlaneseq
      %v8087 = vshrl.u32 %v8086, 7
      %v8088 = vsub.s32 0, %v8087
      %v8089 = vrot.slane %v8084, %v8088
      %v8090 = vlaneseq
      %v8091 = vshrl.u32 %v8090, 7
      %v8092 = vsub.s32 1, %v8091
      %v8093 = vrot.slane %v8084, %v8092
      %v8094 = vlaneseq
      %v8095 = vshrl.u32 %v8094, 7
      %v8096 = vsub.s32 2, %v8095
      %v8097 = vrot.slane %v8084, %v8096
      %v8098 = vlaneseq
      %v8099 = vshrl.u32 %v8098, 7
      %v8100 = vsub.s32 3, %v8099
      %v8101 = vrot.slane %v8084, %v8100
      %v8170 = vunpack.c.l.b16 %v8020
      %v8171 = vunpack.c.h.b16 %v8020
      %v8172 = vunpack.c.l.b16 %v8021
      %v8173 = vunpack.c.h.b16 %v8021
      %v8174 = vunpack.c.l.b16 %v8022
      %v8175 = vunpack.c.h.b16 %v8022
      %v8176 = vunpack.c.l.b16 %v8023
      %v8177 = vunpack.c.h.b16 %v8023
      %v8178 = vunpack.c.l.b16 %v8024
      %v8179 = vunpack.c.h.b16 %v8024
      %v8180 = vunpack.c.l.b16 %v8025
      %v8181 = vunpack.c.h.b16 %v8025
      %v8182 = vunpack.c.l.b16 %v8026
      %v8183 = vunpack.c.h.b16 %v8026
      %v8184 = vunpack.c.l.b16 %v8027
      %v8185 = vunpack.c.h.b16 %v8027
      %v8186 = vunpack.c.l.b16 %v8028
      %v8187 = vunpack.c.h.b16 %v8028
      %v8188 = vunpack.c.l.b16 %v8029
      %v8189 = vunpack.c.h.b16 %v8029
      %v8190 = vunpack.c.l.b16 %v8030
      %v8191 = vunpack.c.h.b16 %v8030
      %v8192 = vunpack.c.l.b16 %v8031
      %v8193 = vunpack.c.h.b16 %v8031
      %v8194 = vunpack.c.l.b16 %v8032
      %v8195 = vunpack.c.h.b16 %v8032
      %v8196 = vunpack.c.l.b16 %v8033
      %v8197 = vunpack.c.h.b16 %v8033
      %v8198 = vunpack.c.l.b16 %v8034
      %v8199 = vunpack.c.h.b16 %v8034
      %v8200 = vunpack.c.l.b16 %v8035
      %v8201 = vunpack.c.h.b16 %v8035
      %v8202 = vunpack.c.l.b16 %v8036
      %v8203 = vunpack.c.h.b16 %v8036
      %v8204 = vunpack.c.l.b16 %v8037
      %v8205 = vunpack.c.h.b16 %v8037
      %v8206 = vunpack.c.l.b16 %v8038
      %v8207 = vunpack.c.h.b16 %v8038
      %v8208 = vunpack.c.l.b16 %v8039
      %v8209 = vunpack.c.h.b16 %v8039
      %v8210 = vunpack.c.l.b16 %v8040
      %v8211 = vunpack.c.h.b16 %v8040
      %v8212 = vunpack.c.l.b16 %v8041
      %v8213 = vunpack.c.h.b16 %v8041
      %v8214 = vunpack.c.l.b16 %v8042
      %v8215 = vunpack.c.h.b16 %v8042
      %v8216 = vunpack.c.l.b16 %v8043
      %v8217 = vunpack.c.h.b16 %v8043
      %v8218 = vunpack.c.l.b16 %v8044
      %v8219 = vunpack.c.h.b16 %v8044
      %v8220 = vunpack.c.l.b16 %v8045
      %v8221 = vunpack.c.h.b16 %v8045
      %v8222 = vunpack.c.l.b16 %v8046
      %v8223 = vunpack.c.h.b16 %v8046
      %v8224 = vunpack.c.l.b16 %v8047
      %v8225 = vunpack.c.h.b16 %v8047
      %v8226 = vunpack.c.l.b16 %v8048
      %v8227 = vunpack.c.h.b16 %v8048
      %v8228 = vunpack.c.l.b16 %v8049
      %v8229 = vunpack.c.h.b16 %v8049
      %v8230 = vunpack.c.l.b16 %v8050
      %v8231 = vunpack.c.h.b16 %v8050
      %v8232 = vunpack.c.l.b16 %v8051
      %v8233 = vunpack.c.h.b16 %v8051
      %v8234 = vunpack.c.l.b16 %v8052
      %v8235 = vunpack.c.h.b16 %v8052
      %v8236 = vunpack.c.l.b16 %v8053
      %v8237 = vunpack.c.h.b16 %v8053
      %v8238 = vunpack.c.l.b16 %v8054
      %v8239 = vunpack.c.h.b16 %v8054
      %v8240 = vunpack.c.l.b16 %v8055
      %v8241 = vunpack.c.h.b16 %v8055
      %v8242 = vunpack.c.l.b16 %v8056
      %v8243 = vunpack.c.h.b16 %v8056
      %v8244 = vunpack.c.l.b16 %v8057
      %v8245 = vunpack.c.h.b16 %v8057
      %v8246 = vunpack.c.l.b16 %v8058
      %v8247 = vunpack.c.h.b16 %v8058
      %v8248 = vunpack.c.l.b16 %v8059
      %v8249 = vunpack.c.h.b16 %v8059
      %v8250 = vunpack.c.l.b16 %v8060
      %v8251 = vunpack.c.h.b16 %v8060
      %v8252 = vunpack.c.l.b16 %v8061
      %v8253 = vunpack.c.h.b16 %v8061
      %v8254 = vunpack.c.l.b16 %v8062
      %v8255 = vunpack.c.h.b16 %v8062
      %v8256 = vunpack.c.l.b16 %v8063
      %v8257 = vunpack.c.h.b16 %v8063
      %v8258 = vunpack.c.l.b16 %v8064
      %v8259 = vunpack.c.h.b16 %v8064
      %v8260 = vunpack.c.l.b16 %v8065
      %v8261 = vunpack.c.h.b16 %v8065
      %v8262 = vunpack.c.l.b16 %v8066
      %v8263 = vunpack.c.h.b16 %v8066
      %v8264 = vunpack.c.l.b16 %v8067
      %v8265 = vunpack.c.h.b16 %v8067
      %v8266 = vunpack.c.l.b16 %v8068
      %v8267 = vunpack.c.h.b16 %v8068
      %v8268 = vunpack.c.l.b16 %v8069
      %v8269 = vunpack.c.h.b16 %v8069
      %v8270 = vunpack.c.l.b16 %v8070
      %v8271 = vunpack.c.h.b16 %v8070
      %v8272 = vunpack.c.l.b16 %v8071
      %v8273 = vunpack.c.h.b16 %v8071
      %v8274 = vunpack.c.l.b16 %v8072
      %v8275 = vunpack.c.h.b16 %v8072
      %v8276 = vunpack.c.l.b16 %v8073
      %v8277 = vunpack.c.h.b16 %v8073
      %v8278 = vunpack.c.l.b16 %v8074
      %v8279 = vunpack.c.h.b16 %v8074
      %v8280 = vunpack.c.l.b16 %v8075
      %v8281 = vunpack.c.h.b16 %v8075
      %v8282 = vunpack.c.l.b16 %v8076
      %v8283 = vunpack.c.h.b16 %v8076
      %v8284 = vunpack.c.l.b16 %v8077
      %v8285 = vunpack.c.h.b16 %v8077
      %v8286 = vunpack.c.l.b16 %v8078
      %v8287 = vunpack.c.h.b16 %v8078
      %v8288 = vunpack.c.l.b16 %v8079
      %v8289 = vunpack.c.h.b16 %v8079
      %v8290 = vunpack.c.l.b16 %v8080
      %v8291 = vunpack.c.h.b16 %v8080
      %v8292 = vunpack.c.l.b16 %v8081
      %v8293 = vunpack.c.h.b16 %v8081
      %v8294 = vunpack.c.l.b16 %v8082
      %v8295 = vunpack.c.h.b16 %v8082
      %v8296 = vunpack.c.l.b16 %v8083
      %v8297 = vunpack.c.h.b16 %v8083
      %v8298 = vpack.c.b16 %v8174, %v8170
      %v8299 = vpack.c.b16 %v8175, %v8171
      %v8300 = vpack.c.b16 %v8176, %v8172
      %v8301 = vpack.c.b16 %v8177, %v8173
      %v8302 = vpack.c.b16 %v8182, %v8178
      %v8303 = vpack.c.b16 %v8183, %v8179
      %v8304 = vpack.c.b16 %v8184, %v8180
      %v8305 = vpack.c.b16 %v8185, %v8181
      %v8306 = vpack.c.b16 %v8190, %v8186
      %v8307 = vpack.c.b16 %v8191, %v8187
      %v8308 = vpack.c.b16 %v8192, %v8188
      %v8309 = vpack.c.b16 %v8193, %v8189
      %v8310 = vpack.c.b16 %v8198, %v8194
      %v8311 = vpack.c.b16 %v8199, %v8195
      %v8312 = vpack.c.b16 %v8200, %v8196
      %v8313 = vpack.c.b16 %v8201, %v8197
      %v8314 = vpack.c.b16 %v8206, %v8202
      %v8315 = vpack.c.b16 %v8207, %v8203
      %v8316 = vpack.c.b16 %v8208, %v8204
      %v8317 = vpack.c.b16 %v8209, %v8205
      %v8318 = vpack.c.b16 %v8214, %v8210
      %v8319 = vpack.c.b16 %v8215, %v8211
      %v8320 = vpack.c.b16 %v8216, %v8212
      %v8321 = vpack.c.b16 %v8217, %v8213
      %v8322 = vpack.c.b16 %v8222, %v8218
      %v8323 = vpack.c.b16 %v8223, %v8219
      %v8324 = vpack.c.b16 %v8224, %v8220
      %v8325 = vpack.c.b16 %v8225, %v8221
      %v8326 = vpack.c.b16 %v8230, %v8226
      %v8327 = vpack.c.b16 %v8231, %v8227
      %v8328 = vpack.c.b16 %v8232, %v8228
      %v8329 = vpack.c.b16 %v8233, %v8229
      %v8330 = vpack.c.b16 %v8238, %v8234
      %v8331 = vpack.c.b16 %v8239, %v8235
      %v8332 = vpack.c.b16 %v8240, %v8236
      %v8333 = vpack.c.b16 %v8241, %v8237
      %v8334 = vpack.c.b16 %v8246, %v8242
      %v8335 = vpack.c.b16 %v8247, %v8243
      %v8336 = vpack.c.b16 %v8248, %v8244
      %v8337 = vpack.c.b16 %v8249, %v8245
      %v8338 = vpack.c.b16 %v8254, %v8250
      %v8339 = vpack.c.b16 %v8255, %v8251
      %v8340 = vpack.c.b16 %v8256, %v8252
      %v8341 = vpack.c.b16 %v8257, %v8253
      %v8342 = vpack.c.b16 %v8262, %v8258
      %v8343 = vpack.c.b16 %v8263, %v8259
      %v8344 = vpack.c.b16 %v8264, %v8260
      %v8345 = vpack.c.b16 %v8265, %v8261
      %v8346 = vpack.c.b16 %v8270, %v8266
      %v8347 = vpack.c.b16 %v8271, %v8267
      %v8348 = vpack.c.b16 %v8272, %v8268
      %v8349 = vpack.c.b16 %v8273, %v8269
      %v8350 = vpack.c.b16 %v8278, %v8274
      %v8351 = vpack.c.b16 %v8279, %v8275
      %v8352 = vpack.c.b16 %v8280, %v8276
      %v8353 = vpack.c.b16 %v8281, %v8277
      %v8354 = vpack.c.b16 %v8286, %v8282
      %v8355 = vpack.c.b16 %v8287, %v8283
      %v8356 = vpack.c.b16 %v8288, %v8284
      %v8357 = vpack.c.b16 %v8289, %v8285
      %v8358 = vpack.c.b16 %v8294, %v8290
      %v8359 = vpack.c.b16 %v8295, %v8291
      %v8360 = vpack.c.b16 %v8296, %v8292
      %v8361 = vpack.c.b16 %v8297, %v8293
      %8426 = vmatprep.subr.bf16.mxu0 %v8299
      %8427 = vmatpush1.bf16.msra.mxu0 %v8298
      %8428 = vmatprep.subr.bf16.mxu0 %v8303
      %8429 = vmatpush1.bf16.msra.mxu0 %v8302
      %8430 = vmatprep.subr.bf16.mxu0 %v8307
      %8431 = vmatpush1.bf16.msra.mxu0 %v8306
      %8432 = vmatprep.subr.bf16.mxu0 %v8311
      %8433 = vmatpush1.bf16.msra.mxu0 %v8310
      %8434 = vmatprep.subr.bf16.mxu0 %v8315
      %8435 = vmatpush1.bf16.msra.mxu0 %v8314
      %8436 = vmatprep.subr.bf16.mxu0 %v8319
      %8437 = vmatpush1.bf16.msra.mxu0 %v8318
      %8438 = vmatprep.subr.bf16.mxu0 %v8323
      %8439 = vmatpush1.bf16.msra.mxu0 %v8322
      %8440 = vmatprep.subr.bf16.mxu0 %v8327
      %8441 = vmatpush1.bf16.msra.mxu0 %v8326
      %8442 = vmatprep.subr.bf16.mxu0 %v8331
      %8443 = vmatpush1.bf16.msra.mxu0 %v8330
      %8444 = vmatprep.subr.bf16.mxu0 %v8335
      %8445 = vmatpush1.bf16.msra.mxu0 %v8334
      %8446 = vmatprep.subr.bf16.mxu0 %v8339
      %8447 = vmatpush1.bf16.msra.mxu0 %v8338
      %8448 = vmatprep.subr.bf16.mxu0 %v8343
      %8449 = vmatpush1.bf16.msra.mxu0 %v8342
      %8450 = vmatprep.subr.bf16.mxu0 %v8347
      %8451 = vmatpush1.bf16.msra.mxu0 %v8346
      %8452 = vmatprep.subr.bf16.mxu0 %v8351
      %8453 = vmatpush1.bf16.msra.mxu0 %v8350
      %8454 = vmatprep.subr.bf16.mxu0 %v8355
      %8455 = vmatpush1.bf16.msra.mxu0 %v8354
      %8456 = vmatprep.subr.bf16.mxu0 %v8359
      %8457 = vmatpush1.bf16.msra.mxu0 %v8358
      %8458 = vmatprep.mubr.bf16.mxu0 %v7989
      %8459 = vmatmul.mubr.bf16.gmra.mrb[0].mxu0 %v7988
      %v8460 = vpop.f32.mrb[0].mxu0
      %v8461 = vadd.f32 %v8089, %v8460
      %v8462 = vpop.f32.mrb[0].mxu0
      %v8463 = vadd.f32 %v8093, %v8462
      %v8464 = vpop.f32.mrb[0].mxu0
      %v8465 = vadd.f32 %v8089, %v8464
      %v8466 = vpop.f32.mrb[0].mxu0
      %v8467 = vadd.f32 %v8093, %v8466
      %8468 = vmatprep.mubr.bf16.mxu0 %v7991
      %8469 = vmatmul.mubr.bf16.gmra.mrb[0].mxu0 %v7990
      %v8470 = vpop.f32.mrb[0].mxu0
      %v8471 = vadd.f32 %v8089, %v8470
      %v8472 = vpop.f32.mrb[0].mxu0
      %v8473 = vadd.f32 %v8093, %v8472
      %v8474 = vpop.f32.mrb[0].mxu0
      %v8475 = vadd.f32 %v8089, %v8474
      %v8476 = vpop.f32.mrb[0].mxu0
      %v8477 = vadd.f32 %v8093, %v8476
      %8478 = vmatprep.mubr.bf16.mxu0 %v7993
      %8479 = vmatmul.mubr.bf16.gmra.mrb[0].mxu0 %v7992
      %v8480 = vpop.f32.mrb[0].mxu0
      %v8481 = vadd.f32 %v8089, %v8480
      %v8482 = vpop.f32.mrb[0].mxu0
      %v8483 = vadd.f32 %v8093, %v8482
      %v8484 = vpop.f32.mrb[0].mxu0
      %v8485 = vadd.f32 %v8089, %v8484
      %v8486 = vpop.f32.mrb[0].mxu0
      %v8487 = vadd.f32 %v8093, %v8486
      %8488 = vmatprep.mubr.bf16.mxu0 %v7995
      %8489 = vmatmul.mubr.bf16.gmra.mrb[0].mxu0 %v7994
      %v8490 = vpop.f32.mrb[0].mxu0
      %v8491 = vadd.f32 %v8089, %v8490
      %v8492 = vpop.f32.mrb[0].mxu0
      %v8493 = vadd.f32 %v8093, %v8492
      %v8494 = vpop.f32.mrb[0].mxu0
      %v8495 = vadd.f32 %v8089, %v8494
      %v8496 = vpop.f32.mrb[0].mxu0
      %v8497 = vadd.f32 %v8093, %v8496
      %8498 = vmatprep.mubr.bf16.mxu0 %v7997
      %8499 = vmatmul.mubr.bf16.gmra.mrb[0].mxu0 %v7996
      %v8500 = vpop.f32.mrb[0].mxu0
      %v8501 = vadd.f32 %v8089, %v8500
      %v8502 = vpop.f32.mrb[0].mxu0
      %v8503 = vadd.f32 %v8093, %v8502
      %v8504 = vpop.f32.mrb[0].mxu0
      %v8505 = vadd.f32 %v8089, %v8504
      %v8506 = vpop.f32.mrb[0].mxu0
      %v8507 = vadd.f32 %v8093, %v8506
      %8508 = vmatprep.mubr.bf16.mxu0 %v7999
      %8509 = vmatmul.mubr.bf16.gmra.mrb[0].mxu0 %v7998
      %v8510 = vpop.f32.mrb[0].mxu0
      %v8511 = vadd.f32 %v8089, %v8510
      %v8512 = vpop.f32.mrb[0].mxu0
      %v8513 = vadd.f32 %v8093, %v8512
      %v8514 = vpop.f32.mrb[0].mxu0
      %v8515 = vadd.f32 %v8089, %v8514
      %v8516 = vpop.f32.mrb[0].mxu0
      %v8517 = vadd.f32 %v8093, %v8516
      %8518 = vmatprep.mubr.bf16.mxu0 %v8001
      %8519 = vmatmul.mubr.bf16.gmra.mrb[0].mxu0 %v8000
      %v8520 = vpop.f32.mrb[0].mxu0
      %v8521 = vadd.f32 %v8089, %v8520
      %v8522 = vpop.f32.mrb[0].mxu0
      %v8523 = vadd.f32 %v8093, %v8522
      %v8524 = vpop.f32.mrb[0].mxu0
      %v8525 = vadd.f32 %v8089, %v8524
      %v8526 = vpop.f32.mrb[0].mxu0
      %v8527 = vadd.f32 %v8093, %v8526
      %8528 = vmatprep.mubr.bf16.mxu0 %v8003
      %8529 = vmatmul.mubr.bf16.gmra.mrb[0].mxu0 %v8002
      %v8530 = vpop.f32.mrb[0].mxu0
      %v8531 = vadd.f32 %v8089, %v8530
      %v8532 = vpop.f32.mrb[0].mxu0
      %v8533 = vadd.f32 %v8093, %v8532
      %v8534 = vpop.f32.mrb[0].mxu0
      %v8535 = vadd.f32 %v8089, %v8534
      %v8536 = vpop.f32.mrb[0].mxu0
      %v8537 = vadd.f32 %v8093, %v8536
      %8538 = vmatprep.mubr.bf16.mxu0 %v8005
      %8539 = vmatmul.mubr.bf16.gmra.mrb[0].mxu0 %v8004
      %v8540 = vpop.f32.mrb[0].mxu0
      %v8541 = vadd.f32 %v8089, %v8540
      %v8542 = vpop.f32.mrb[0].mxu0
      %v8543 = vadd.f32 %v8093, %v8542
      %v8544 = vpop.f32.mrb[0].mxu0
      %v8545 = vadd.f32 %v8089, %v8544
      %v8546 = vpop.f32.mrb[0].mxu0
      %v8547 = vadd.f32 %v8093, %v8546
      %8548 = vmatprep.mubr.bf16.mxu0 %v8007
      %8549 = vmatmul.mubr.bf16.gmra.mrb[0].mxu0 %v8006
      %v8550 = vpop.f32.mrb[0].mxu0
      %v8551 = vadd.f32 %v8089, %v8550
      %v8552 = vpop.f32.mrb[0].mxu0
      %v8553 = vadd.f32 %v8093, %v8552
      %v8554 = vpop.f32.mrb[0].mxu0
      %v8555 = vadd.f32 %v8089, %v8554
      %v8556 = vpop.f32.mrb[0].mxu0
      %v8557 = vadd.f32 %v8093, %v8556
      %8558 = vmatprep.mubr.bf16.mxu0 %v8009
      %8559 = vmatmul.mubr.bf16.gmra.mrb[0].mxu0 %v8008
      %v8560 = vpop.f32.mrb[0].mxu0
      %v8561 = vadd.f32 %v8089, %v8560
      %v8562 = vpop.f32.mrb[0].mxu0
      %v8563 = vadd.f32 %v8093, %v8562
      %v8564 = vpop.f32.mrb[0].mxu0
      %v8565 = vadd.f32 %v8089, %v8564
      %v8566 = vpop.f32.mrb[0].mxu0
      %v8567 = vadd.f32 %v8093, %v8566
      %8568 = vmatprep.mubr.bf16.mxu0 %v8011
      %8569 = vmatmul.mubr.bf16.gmra.mrb[0].mxu0 %v8010
      %v8570 = vpop.f32.mrb[0].mxu0
      %v8571 = vadd.f32 %v8089, %v8570
      %v8572 = vpop.f32.mrb[0].mxu0
      %v8573 = vadd.f32 %v8093, %v8572
      %v8574 = vpop.f32.mrb[0].mxu0
      %v8575 = vadd.f32 %v8089, %v8574
      %v8576 = vpop.f32.mrb[0].mxu0
      %v8577 = vadd.f32 %v8093, %v8576
      %8578 = vmatprep.mubr.bf16.mxu0 %v8013
      %8579 = vmatmul.mubr.bf16.gmra.mrb[0].mxu0 %v8012
      %v8580 = vpop.f32.mrb[0].mxu0
      %v8581 = vadd.f32 %v8089, %v8580
      %v8582 = vpop.f32.mrb[0].mxu0
      %v8583 = vadd.f32 %v8093, %v8582
      %v8584 = vpop.f32.mrb[0].mxu0
      %v8585 = vadd.f32 %v8089, %v8584
      %v8586 = vpop.f32.mrb[0].mxu0
      %v8587 = vadd.f32 %v8093, %v8586
      %8588 = vmatprep.mubr.bf16.mxu0 %v8015
      %8589 = vmatmul.mubr.bf16.gmra.mrb[0].mxu0 %v8014
      %v8590 = vpop.f32.mrb[0].mxu0
      %v8591 = vadd.f32 %v8089, %v8590
      %v8592 = vpop.f32.mrb[0].mxu0
      %v8593 = vadd.f32 %v8093, %v8592
      %v8594 = vpop.f32.mrb[0].mxu0
      %v8595 = vadd.f32 %v8089, %v8594
      %v8596 = vpop.f32.mrb[0].mxu0
      %v8597 = vadd.f32 %v8093, %v8596
      %8598 = vmatprep.mubr.bf16.mxu0 %v8017
      %8599 = vmatmul.mubr.bf16.gmra.mrb[0].mxu0 %v8016
      %v8600 = vpop.f32.mrb[0].mxu0
      %v8601 = vadd.f32 %v8089, %v8600
      %v8602 = vpop.f32.mrb[0].mxu0
      %v8603 = vadd.f32 %v8093, %v8602
      %v8604 = vpop.f32.mrb[0].mxu0
      %v8605 = vadd.f32 %v8089, %v8604
      %v8606 = vpop.f32.mrb[0].mxu0
      %v8607 = vadd.f32 %v8093, %v8606
      %8608 = vmatprep.mubr.bf16.mxu0 %v8019
      %8609 = vmatmul.mubr.bf16.gmra.mrb[0].mxu0 %v8018
      %v8610 = vpop.f32.mrb[0].mxu0
      %v8611 = vadd.f32 %v8089, %v8610
      %v8612 = vpop.f32.mrb[0].mxu0
      %v8613 = vadd.f32 %v8093, %v8612
      %v8614 = vpop.f32.mrb[0].mxu0
      %v8615 = vadd.f32 %v8089, %v8614
      %v8616 = vpop.f32.mrb[0].mxu0
      %v8617 = vadd.f32 %v8093, %v8616
      %8618 = vdwg.mxu0
      %8619 = vmatprep.subr.bf16.mxu0 %v8301
      %8620 = vmatpush1.bf16.msra.mxu0 %v8300
      %8621 = vmatprep.subr.bf16.mxu0 %v8305
      %8622 = vmatpush1.bf16.msra.mxu0 %v8304
      %8623 = vmatprep.subr.bf16.mxu0 %v8309
      %8624 = vmatpush1.bf16.msra.mxu0 %v8308
      %8625 = vmatprep.subr.bf16.mxu0 %v8313
      %8626 = vmatpush1.bf16.msra.mxu0 %v8312
      %8627 = vmatprep.subr.bf16.mxu0 %v8317
      %8628 = vmatpush1.bf16.msra.mxu0 %v8316
      %8629 = vmatprep.subr.bf16.mxu0 %v8321
      %8630 = vmatpush1.bf16.msra.mxu0 %v8320
      %8631 = vmatprep.subr.bf16.mxu0 %v8325
      %8632 = vmatpush1.bf16.msra.mxu0 %v8324
      %8633 = vmatprep.subr.bf16.mxu0 %v8329
      %8634 = vmatpush1.bf16.msra.mxu0 %v8328
      %8635 = vmatprep.subr.bf16.mxu0 %v8333
      %8636 = vmatpush1.bf16.msra.mxu0 %v8332
      %8637 = vmatprep.subr.bf16.mxu0 %v8337
      %8638 = vmatpush1.bf16.msra.mxu0 %v8336
      %8639 = vmatprep.subr.bf16.mxu0 %v8341
      %8640 = vmatpush1.bf16.msra.mxu0 %v8340
      %8641 = vmatprep.subr.bf16.mxu0 %v8345
      %8642 = vmatpush1.bf16.msra.mxu0 %v8344
      %8643 = vmatprep.subr.bf16.mxu0 %v8349
      %8644 = vmatpush1.bf16.msra.mxu0 %v8348
      %8645 = vmatprep.subr.bf16.mxu0 %v8353
      %8646 = vmatpush1.bf16.msra.mxu0 %v8352
      %8647 = vmatprep.subr.bf16.mxu0 %v8357
      %8648 = vmatpush1.bf16.msra.mxu0 %v8356
      %8649 = vmatprep.subr.bf16.mxu0 %v8361
      %8650 = vmatpush1.bf16.msra.mxu0 %v8360
      %8651 = vmatprep.mubr.bf16.mxu0 %v7989
      %8652 = vmatmul.mubr.bf16.gmra.mrb[0].mxu0 %v7988
      %v8653 = vpop.f32.mrb[0].mxu0
      %v8654 = vadd.f32 %v8097, %v8653
      %v8655 = vpop.f32.mrb[0].mxu0
      %v8656 = vadd.f32 %v8101, %v8655
      %v8657 = vpop.f32.mrb[0].mxu0
      %v8658 = vadd.f32 %v8097, %v8657
      %v8659 = vpop.f32.mrb[0].mxu0
      %v8660 = vadd.f32 %v8101, %v8659
      %8661 = vmatprep.mubr.bf16.mxu0 %v7991
      %8662 = vmatmul.mubr.bf16.gmra.mrb[0].mxu0 %v7990
      %v8663 = vpop.f32.mrb[0].mxu0
      %v8664 = vadd.f32 %v8097, %v8663
      %v8665 = vpop.f32.mrb[0].mxu0
      %v8666 = vadd.f32 %v8101, %v8665
      %v8667 = vpop.f32.mrb[0].mxu0
      %v8668 = vadd.f32 %v8097, %v8667
      %v8669 = vpop.f32.mrb[0].mxu0
      %v8670 = vadd.f32 %v8101, %v8669
      %8671 = vmatprep.mubr.bf16.mxu0 %v7993
      %8672 = vmatmul.mubr.bf16.gmra.mrb[0].mxu0 %v7992
      %v8673 = vpop.f32.mrb[0].mxu0
      %v8674 = vadd.f32 %v8097, %v8673
      %v8675 = vpop.f32.mrb[0].mxu0
      %v8676 = vadd.f32 %v8101, %v8675
      %v8677 = vpop.f32.mrb[0].mxu0
      %v8678 = vadd.f32 %v8097, %v8677
      %v8679 = vpop.f32.mrb[0].mxu0
      %v8680 = vadd.f32 %v8101, %v8679
      %8681 = vmatprep.mubr.bf16.mxu0 %v7995
      %8682 = vmatmul.mubr.bf16.gmra.mrb[0].mxu0 %v7994
      %v8683 = vpop.f32.mrb[0].mxu0
      %v8684 = vadd.f32 %v8097, %v8683
      %v8685 = vpop.f32.mrb[0].mxu0
      %v8686 = vadd.f32 %v8101, %v8685
      %v8687 = vpop.f32.mrb[0].mxu0
      %v8688 = vadd.f32 %v8097, %v8687
      %v8689 = vpop.f32.mrb[0].mxu0
      %v8690 = vadd.f32 %v8101, %v8689
      %8691 = vmatprep.mubr.bf16.mxu0 %v7997
      %8692 = vmatmul.mubr.bf16.gmra.mrb[0].mxu0 %v7996
      %v8693 = vpop.f32.mrb[0].mxu0
      %v8694 = vadd.f32 %v8097, %v8693
      %v8695 = vpop.f32.mrb[0].mxu0
      %v8696 = vadd.f32 %v8101, %v8695
      %v8697 = vpop.f32.mrb[0].mxu0
      %v8698 = vadd.f32 %v8097, %v8697
      %v8699 = vpop.f32.mrb[0].mxu0
      %v8700 = vadd.f32 %v8101, %v8699
      %8701 = vmatprep.mubr.bf16.mxu0 %v7999
      %8702 = vmatmul.mubr.bf16.gmra.mrb[0].mxu0 %v7998
      %v8703 = vpop.f32.mrb[0].mxu0
      %v8704 = vadd.f32 %v8097, %v8703
      %v8705 = vpop.f32.mrb[0].mxu0
      %v8706 = vadd.f32 %v8101, %v8705
      %v8707 = vpop.f32.mrb[0].mxu0
      %v8708 = vadd.f32 %v8097, %v8707
      %v8709 = vpop.f32.mrb[0].mxu0
      %v8710 = vadd.f32 %v8101, %v8709
      %8711 = vmatprep.mubr.bf16.mxu0 %v8001
      %8712 = vmatmul.mubr.bf16.gmra.mrb[0].mxu0 %v8000
      %v8713 = vpop.f32.mrb[0].mxu0
      %v8714 = vadd.f32 %v8097, %v8713
      %v8715 = vpop.f32.mrb[0].mxu0
      %v8716 = vadd.f32 %v8101, %v8715
      %v8717 = vpop.f32.mrb[0].mxu0
      %v8718 = vadd.f32 %v8097, %v8717
      %v8719 = vpop.f32.mrb[0].mxu0
      %v8720 = vadd.f32 %v8101, %v8719
      %8721 = vmatprep.mubr.bf16.mxu0 %v8003
      %8722 = vmatmul.mubr.bf16.gmra.mrb[0].mxu0 %v8002
      %v8723 = vpop.f32.mrb[0].mxu0
      %v8724 = vadd.f32 %v8097, %v8723
      %v8725 = vpop.f32.mrb[0].mxu0
      %v8726 = vadd.f32 %v8101, %v8725
      %v8727 = vpop.f32.mrb[0].mxu0
      %v8728 = vadd.f32 %v8097, %v8727
      %v8729 = vpop.f32.mrb[0].mxu0
      %v8730 = vadd.f32 %v8101, %v8729
      %8731 = vmatprep.mubr.bf16.mxu0 %v8005
      %8732 = vmatmul.mubr.bf16.gmra.mrb[0].mxu0 %v8004
      %v8733 = vpop.f32.mrb[0].mxu0
      %v8734 = vadd.f32 %v8097, %v8733
      %v8735 = vpop.f32.mrb[0].mxu0
      %v8736 = vadd.f32 %v8101, %v8735
      %v8737 = vpop.f32.mrb[0].mxu0
      %v8738 = vadd.f32 %v8097, %v8737
      %v8739 = vpop.f32.mrb[0].mxu0
      %v8740 = vadd.f32 %v8101, %v8739
      %8741 = vmatprep.mubr.bf16.mxu0 %v8007
      %8742 = vmatmul.mubr.bf16.gmra.mrb[0].mxu0 %v8006
      %v8743 = vpop.f32.mrb[0].mxu0
      %v8744 = vadd.f32 %v8097, %v8743
      %v8745 = vpop.f32.mrb[0].mxu0
      %v8746 = vadd.f32 %v8101, %v8745
      %v8747 = vpop.f32.mrb[0].mxu0
      %v8748 = vadd.f32 %v8097, %v8747
      %v8749 = vpop.f32.mrb[0].mxu0
      %v8750 = vadd.f32 %v8101, %v8749
      %8751 = vmatprep.mubr.bf16.mxu0 %v8009
      %8752 = vmatmul.mubr.bf16.gmra.mrb[0].mxu0 %v8008
      %v8753 = vpop.f32.mrb[0].mxu0
      %v8754 = vadd.f32 %v8097, %v8753
      %v8755 = vpop.f32.mrb[0].mxu0
      %v8756 = vadd.f32 %v8101, %v8755
      %v8757 = vpop.f32.mrb[0].mxu0
      %v8758 = vadd.f32 %v8097, %v8757
      %v8759 = vpop.f32.mrb[0].mxu0
      %v8760 = vadd.f32 %v8101, %v8759
      %8761 = vmatprep.mubr.bf16.mxu0 %v8011
      %8762 = vmatmul.mubr.bf16.gmra.mrb[0].mxu0 %v8010
      %v8763 = vpop.f32.mrb[0].mxu0
      %v8764 = vadd.f32 %v8097, %v8763
      %v8765 = vpop.f32.mrb[0].mxu0
      %v8766 = vadd.f32 %v8101, %v8765
      %v8767 = vpop.f32.mrb[0].mxu0
      %v8768 = vadd.f32 %v8097, %v8767
      %v8769 = vpop.f32.mrb[0].mxu0
      %v8770 = vadd.f32 %v8101, %v8769
      %8771 = vmatprep.mubr.bf16.mxu0 %v8013
      %8772 = vmatmul.mubr.bf16.gmra.mrb[0].mxu0 %v8012
      %v8773 = vpop.f32.mrb[0].mxu0
      %v8774 = vadd.f32 %v8097, %v8773
      %v8775 = vpop.f32.mrb[0].mxu0
      %v8776 = vadd.f32 %v8101, %v8775
      %v8777 = vpop.f32.mrb[0].mxu0
      %v8778 = vadd.f32 %v8097, %v8777
      %v8779 = vpop.f32.mrb[0].mxu0
      %v8780 = vadd.f32 %v8101, %v8779
      %8781 = vmatprep.mubr.bf16.mxu0 %v8015
      %8782 = vmatmul.mubr.bf16.gmra.mrb[0].mxu0 %v8014
      %v8783 = vpop.f32.mrb[0].mxu0
      %v8784 = vadd.f32 %v8097, %v8783
      %v8785 = vpop.f32.mrb[0].mxu0
      %v8786 = vadd.f32 %v8101, %v8785
      %v8787 = vpop.f32.mrb[0].mxu0
      %v8788 = vadd.f32 %v8097, %v8787
      %v8789 = vpop.f32.mrb[0].mxu0
      %v8790 = vadd.f32 %v8101, %v8789
      %8791 = vmatprep.mubr.bf16.mxu0 %v8017
      %8792 = vmatmul.mubr.bf16.gmra.mrb[0].mxu0 %v8016
      %v8793 = vpop.f32.mrb[0].mxu0
      %v8794 = vadd.f32 %v8097, %v8793
      %v8795 = vpop.f32.mrb[0].mxu0
      %v8796 = vadd.f32 %v8101, %v8795
      %v8797 = vpop.f32.mrb[0].mxu0
      %v8798 = vadd.f32 %v8097, %v8797
      %v8799 = vpop.f32.mrb[0].mxu0
      %v8800 = vadd.f32 %v8101, %v8799
      %8801 = vmatprep.mubr.bf16.mxu0 %v8019
      %8802 = vmatmul.mubr.bf16.gmra.mrb[0].mxu0 %v8018
      %v8803 = vpop.f32.mrb[0].mxu0
      %v8804 = vadd.f32 %v8097, %v8803
      %v8805 = vpop.f32.mrb[0].mxu0
      %v8806 = vadd.f32 %v8101, %v8805
      %v8807 = vpop.f32.mrb[0].mxu0
      %v8808 = vadd.f32 %v8097, %v8807
      %v8809 = vpop.f32.mrb[0].mxu0
      %v8810 = vadd.f32 %v8101, %v8809
      %8811 = vdwg.mxu0
      %vm8812 = vcmp.gt.f32.partialorder %v8461, 0.0
      %vm8813 = vcmp.gt.f32.partialorder %v8463, 0.0
      %vm8814 = vcmp.gt.f32.partialorder %v8654, 0.0
      %vm8815 = vcmp.gt.f32.partialorder %v8656, 0.0
      %vm8816 = vcmp.gt.f32.partialorder %v8465, 0.0
      %vm8817 = vcmp.gt.f32.partialorder %v8467, 0.0
      %vm8818 = vcmp.gt.f32.partialorder %v8658, 0.0
      %vm8819 = vcmp.gt.f32.partialorder %v8660, 0.0
      %vm8820 = vcmp.gt.f32.partialorder %v8471, 0.0
      %vm8821 = vcmp.gt.f32.partialorder %v8473, 0.0
      %vm8822 = vcmp.gt.f32.partialorder %v8664, 0.0
      %vm8823 = vcmp.gt.f32.partialorder %v8666, 0.0
      %vm8824 = vcmp.gt.f32.partialorder %v8475, 0.0
      %vm8825 = vcmp.gt.f32.partialorder %v8477, 0.0
      %vm8826 = vcmp.gt.f32.partialorder %v8668, 0.0
      %vm8827 = vcmp.gt.f32.partialorder %v8670, 0.0
      %vm8828 = vcmp.gt.f32.partialorder %v8481, 0.0
      %vm8829 = vcmp.gt.f32.partialorder %v8483, 0.0
      %vm8830 = vcmp.gt.f32.partialorder %v8674, 0.0
      %vm8831 = vcmp.gt.f32.partialorder %v8676, 0.0
      %vm8832 = vcmp.gt.f32.partialorder %v8485, 0.0
      %vm8833 = vcmp.gt.f32.partialorder %v8487, 0.0
      %vm8834 = vcmp.gt.f32.partialorder %v8678, 0.0
      %vm8835 = vcmp.gt.f32.partialorder %v8680, 0.0
      %vm8836 = vcmp.gt.f32.partialorder %v8491, 0.0
      %vm8837 = vcmp.gt.f32.partialorder %v8493, 0.0
      %vm8838 = vcmp.gt.f32.partialorder %v8684, 0.0
      %vm8839 = vcmp.gt.f32.partialorder %v8686, 0.0
      %vm8840 = vcmp.gt.f32.partialorder %v8495, 0.0
      %vm8841 = vcmp.gt.f32.partialorder %v8497, 0.0
      %vm8842 = vcmp.gt.f32.partialorder %v8688, 0.0
      %vm8843 = vcmp.gt.f32.partialorder %v8690, 0.0
      %vm8844 = vcmp.gt.f32.partialorder %v8501, 0.0
      %vm8845 = vcmp.gt.f32.partialorder %v8503, 0.0
      %vm8846 = vcmp.gt.f32.partialorder %v8694, 0.0
      %vm8847 = vcmp.gt.f32.partialorder %v8696, 0.0
      %vm8848 = vcmp.gt.f32.partialorder %v8505, 0.0
      %vm8849 = vcmp.gt.f32.partialorder %v8507, 0.0
      %vm8850 = vcmp.gt.f32.partialorder %v8698, 0.0
      %vm8851 = vcmp.gt.f32.partialorder %v8700, 0.0
      %vm8852 = vcmp.gt.f32.partialorder %v8511, 0.0
      %vm8853 = vcmp.gt.f32.partialorder %v8513, 0.0
      %vm8854 = vcmp.gt.f32.partialorder %v8704, 0.0
      %vm8855 = vcmp.gt.f32.partialorder %v8706, 0.0
      %vm8856 = vcmp.gt.f32.partialorder %v8515, 0.0
      %vm8857 = vcmp.gt.f32.partialorder %v8517, 0.0
      %vm8858 = vcmp.gt.f32.partialorder %v8708, 0.0
      %vm8859 = vcmp.gt.f32.partialorder %v8710, 0.0
      %vm8860 = vcmp.gt.f32.partialorder %v8521, 0.0
      %vm8861 = vcmp.gt.f32.partialorder %v8523, 0.0
      %vm8862 = vcmp.gt.f32.partialorder %v8714, 0.0
      %vm8863 = vcmp.gt.f32.partialorder %v8716, 0.0
      %vm8864 = vcmp.gt.f32.partialorder %v8525, 0.0
      %vm8865 = vcmp.gt.f32.partialorder %v8527, 0.0
      %vm8866 = vcmp.gt.f32.partialorder %v8718, 0.0
      %vm8867 = vcmp.gt.f32.partialorder %v8720, 0.0
      %vm8868 = vcmp.gt.f32.partialorder %v8531, 0.0
      %vm8869 = vcmp.gt.f32.partialorder %v8533, 0.0
      %vm8870 = vcmp.gt.f32.partialorder %v8724, 0.0
      %vm8871 = vcmp.gt.f32.partialorder %v8726, 0.0
      %vm8872 = vcmp.gt.f32.partialorder %v8535, 0.0
      %vm8873 = vcmp.gt.f32.partialorder %v8537, 0.0
      %vm8874 = vcmp.gt.f32.partialorder %v8728, 0.0
      %vm8875 = vcmp.gt.f32.partialorder %v8730, 0.0
      %vm8876 = vcmp.gt.f32.partialorder %v8541, 0.0
      %vm8877 = vcmp.gt.f32.partialorder %v8543, 0.0
      %vm8878 = vcmp.gt.f32.partialorder %v8734, 0.0
      %vm8879 = vcmp.gt.f32.partialorder %v8736, 0.0
      %vm8880 = vcmp.gt.f32.partialorder %v8545, 0.0
      %vm8881 = vcmp.gt.f32.partialorder %v8547, 0.0
      %vm8882 = vcmp.gt.f32.partialorder %v8738, 0.0
      %vm8883 = vcmp.gt.f32.partialorder %v8740, 0.0
      %vm8884 = vcmp.gt.f32.partialorder %v8551, 0.0
      %vm8885 = vcmp.gt.f32.partialorder %v8553, 0.0
      %vm8886 = vcmp.gt.f32.partialorder %v8744, 0.0
      %vm8887 = vcmp.gt.f32.partialorder %v8746, 0.0
      %vm8888 = vcmp.gt.f32.partialorder %v8555, 0.0
      %vm8889 = vcmp.gt.f32.partialorder %v8557, 0.0
      %vm8890 = vcmp.gt.f32.partialorder %v8748, 0.0
      %vm8891 = vcmp.gt.f32.partialorder %v8750, 0.0
      %vm8892 = vcmp.gt.f32.partialorder %v8561, 0.0
      %vm8893 = vcmp.gt.f32.partialorder %v8563, 0.0
      %vm8894 = vcmp.gt.f32.partialorder %v8754, 0.0
      %vm8895 = vcmp.gt.f32.partialorder %v8756, 0.0
      %vm8896 = vcmp.gt.f32.partialorder %v8565, 0.0
      %vm8897 = vcmp.gt.f32.partialorder %v8567, 0.0
      %vm8898 = vcmp.gt.f32.partialorder %v8758, 0.0
      %vm8899 = vcmp.gt.f32.partialorder %v8760, 0.0
      %vm8900 = vcmp.gt.f32.partialorder %v8571, 0.0
      %vm8901 = vcmp.gt.f32.partialorder %v8573, 0.0
      %vm8902 = vcmp.gt.f32.partialorder %v8764, 0.0
      %vm8903 = vcmp.gt.f32.partialorder %v8766, 0.0
      %vm8904 = vcmp.gt.f32.partialorder %v8575, 0.0
      %vm8905 = vcmp.gt.f32.partialorder %v8577, 0.0
      %vm8906 = vcmp.gt.f32.partialorder %v8768, 0.0
      %vm8907 = vcmp.gt.f32.partialorder %v8770, 0.0
      %vm8908 = vcmp.gt.f32.partialorder %v8581, 0.0
      %vm8909 = vcmp.gt.f32.partialorder %v8583, 0.0
      %vm8910 = vcmp.gt.f32.partialorder %v8774, 0.0
      %vm8911 = vcmp.gt.f32.partialorder %v8776, 0.0
      %vm8912 = vcmp.gt.f32.partialorder %v8585, 0.0
      %vm8913 = vcmp.gt.f32.partialorder %v8587, 0.0
      %vm8914 = vcmp.gt.f32.partialorder %v8778, 0.0
      %vm8915 = vcmp.gt.f32.partialorder %v8780, 0.0
      %vm8916 = vcmp.gt.f32.partialorder %v8591, 0.0
      %vm8917 = vcmp.gt.f32.partialorder %v8593, 0.0
      %vm8918 = vcmp.gt.f32.partialorder %v8784, 0.0
      %vm8919 = vcmp.gt.f32.partialorder %v8786, 0.0
      %vm8920 = vcmp.gt.f32.partialorder %v8595, 0.0
      %vm8921 = vcmp.gt.f32.partialorder %v8597, 0.0
      %vm8922 = vcmp.gt.f32.partialorder %v8788, 0.0
      %vm8923 = vcmp.gt.f32.partialorder %v8790, 0.0
      %vm8924 = vcmp.gt.f32.partialorder %v8601, 0.0
      %vm8925 = vcmp.gt.f32.partialorder %v8603, 0.0
      %vm8926 = vcmp.gt.f32.partialorder %v8794, 0.0
      %vm8927 = vcmp.gt.f32.partialorder %v8796, 0.0
      %vm8928 = vcmp.gt.f32.partialorder %v8605, 0.0
      %vm8929 = vcmp.gt.f32.partialorder %v8607, 0.0
      %vm8930 = vcmp.gt.f32.partialorder %v8798, 0.0
      %vm8931 = vcmp.gt.f32.partialorder %v8800, 0.0
      %vm8932 = vcmp.gt.f32.partialorder %v8611, 0.0
      %vm8933 = vcmp.gt.f32.partialorder %v8613, 0.0
      %vm8934 = vcmp.gt.f32.partialorder %v8804, 0.0
      %vm8935 = vcmp.gt.f32.partialorder %v8806, 0.0
      %vm8936 = vcmp.gt.f32.partialorder %v8615, 0.0
      %vm8937 = vcmp.gt.f32.partialorder %v8617, 0.0
      %vm8938 = vcmp.gt.f32.partialorder %v8808, 0.0
      %vm8939 = vcmp.gt.f32.partialorder %v8810, 0.0
      %v8940 = vmin.f32 %v8461, 0.0
      %v8941 = vmin.f32 %v8463, 0.0
      %v8942 = vmin.f32 %v8654, 0.0
      %v8943 = vmin.f32 %v8656, 0.0
      %v8944 = vmin.f32 %v8465, 0.0
      %v8945 = vmin.f32 %v8467, 0.0
      %v8946 = vmin.f32 %v8658, 0.0
      %v8947 = vmin.f32 %v8660, 0.0
      %v8948 = vmin.f32 %v8471, 0.0
      %v8949 = vmin.f32 %v8473, 0.0
      %v8950 = vmin.f32 %v8664, 0.0
      %v8951 = vmin.f32 %v8666, 0.0
      %v8952 = vmin.f32 %v8475, 0.0
      %v8953 = vmin.f32 %v8477, 0.0
      %v8954 = vmin.f32 %v8668, 0.0
      %v8955 = vmin.f32 %v8670, 0.0
      %v8956 = vmin.f32 %v8481, 0.0
      %v8957 = vmin.f32 %v8483, 0.0
      %v8958 = vmin.f32 %v8674, 0.0
      %v8959 = vmin.f32 %v8676, 0.0
      %v8960 = vmin.f32 %v8485, 0.0
      %v8961 = vmin.f32 %v8487, 0.0
      %v8962 = vmin.f32 %v8678, 0.0
      %v8963 = vmin.f32 %v8680, 0.0
      %v8964 = vmin.f32 %v8491, 0.0
      %v8965 = vmin.f32 %v8493, 0.0
      %v8966 = vmin.f32 %v8684, 0.0
      %v8967 = vmin.f32 %v8686, 0.0
      %v8968 = vmin.f32 %v8495, 0.0
      %v8969 = vmin.f32 %v8497, 0.0
      %v8970 = vmin.f32 %v8688, 0.0
      %v8971 = vmin.f32 %v8690, 0.0
      %v8972 = vmin.f32 %v8501, 0.0
      %v8973 = vmin.f32 %v8503, 0.0
      %v8974 = vmin.f32 %v8694, 0.0
      %v8975 = vmin.f32 %v8696, 0.0
      %v8976 = vmin.f32 %v8505, 0.0
      %v8977 = vmin.f32 %v8507, 0.0
      %v8978 = vmin.f32 %v8698, 0.0
      %v8979 = vmin.f32 %v8700, 0.0
      %v8980 = vmin.f32 %v8511, 0.0
      %v8981 = vmin.f32 %v8513, 0.0
      %v8982 = vmin.f32 %v8704, 0.0
      %v8983 = vmin.f32 %v8706, 0.0
      %v8984 = vmin.f32 %v8515, 0.0
      %v8985 = vmin.f32 %v8517, 0.0
      %v8986 = vmin.f32 %v8708, 0.0
      %v8987 = vmin.f32 %v8710, 0.0
      %v8988 = vmin.f32 %v8521, 0.0
      %v8989 = vmin.f32 %v8523, 0.0
      %v8990 = vmin.f32 %v8714, 0.0
      %v8991 = vmin.f32 %v8716, 0.0
      %v8992 = vmin.f32 %v8525, 0.0
      %v8993 = vmin.f32 %v8527, 0.0
      %v8994 = vmin.f32 %v8718, 0.0
      %v8995 = vmin.f32 %v8720, 0.0
      %v8996 = vmin.f32 %v8531, 0.0
      %v8997 = vmin.f32 %v8533, 0.0
      %v8998 = vmin.f32 %v8724, 0.0
      %v8999 = vmin.f32 %v8726, 0.0
      %v9000 = vmin.f32 %v8535, 0.0
      %v9001 = vmin.f32 %v8537, 0.0
      %v9002 = vmin.f32 %v8728, 0.0
      %v9003 = vmin.f32 %v8730, 0.0
      %v9004 = vmin.f32 %v8541, 0.0
      %v9005 = vmin.f32 %v8543, 0.0
      %v9006 = vmin.f32 %v8734, 0.0
      %v9007 = vmin.f32 %v8736, 0.0
      %v9008 = vmin.f32 %v8545, 0.0
      %v9009 = vmin.f32 %v8547, 0.0
      %v9010 = vmin.f32 %v8738, 0.0
      %v9011 = vmin.f32 %v8740, 0.0
      %v9012 = vmin.f32 %v8551, 0.0
      %v9013 = vmin.f32 %v8553, 0.0
      %v9014 = vmin.f32 %v8744, 0.0
      %v9015 = vmin.f32 %v8746, 0.0
      %v9016 = vmin.f32 %v8555, 0.0
      %v9017 = vmin.f32 %v8557, 0.0
      %v9018 = vmin.f32 %v8748, 0.0
      %v9019 = vmin.f32 %v8750, 0.0
      %v9020 = vmin.f32 %v8561, 0.0
      %v9021 = vmin.f32 %v8563, 0.0
      %v9022 = vmin.f32 %v8754, 0.0
      %v9023 = vmin.f32 %v8756, 0.0
      %v9024 = vmin.f32 %v8565, 0.0
      %v9025 = vmin.f32 %v8567, 0.0
      %v9026 = vmin.f32 %v8758, 0.0
      %v9027 = vmin.f32 %v8760, 0.0
      %v9028 = vmin.f32 %v8571, 0.0
      %v9029 = vmin.f32 %v8573, 0.0
      %v9030 = vmin.f32 %v8764, 0.0
      %v9031 = vmin.f32 %v8766, 0.0
      %v9032 = vmin.f32 %v8575, 0.0
      %v9033 = vmin.f32 %v8577, 0.0
      %v9034 = vmin.f32 %v8768, 0.0
      %v9035 = vmin.f32 %v8770, 0.0
      %v9036 = vmin.f32 %v8581, 0.0
      %v9037 = vmin.f32 %v8583, 0.0
      %v9038 = vmin.f32 %v8774, 0.0
      %v9039 = vmin.f32 %v8776, 0.0
      %v9040 = vmin.f32 %v8585, 0.0
      %v9041 = vmin.f32 %v8587, 0.0
      %v9042 = vmin.f32 %v8778, 0.0
      %v9043 = vmin.f32 %v8780, 0.0
      %v9044 = vmin.f32 %v8591, 0.0
      %v9045 = vmin.f32 %v8593, 0.0
      %v9046 = vmin.f32 %v8784, 0.0
      %v9047 = vmin.f32 %v8786, 0.0
      %v9048 = vmin.f32 %v8595, 0.0
      %v9049 = vmin.f32 %v8597, 0.0
      %v9050 = vmin.f32 %v8788, 0.0
      %v9051 = vmin.f32 %v8790, 0.0
      %v9052 = vmin.f32 %v8601, 0.0
      %v9053 = vmin.f32 %v8603, 0.0
      %v9054 = vmin.f32 %v8794, 0.0
      %v9055 = vmin.f32 %v8796, 0.0
      %v9056 = vmin.f32 %v8605, 0.0
      %v9057 = vmin.f32 %v8607, 0.0
      %v9058 = vmin.f32 %v8798, 0.0
      %v9059 = vmin.f32 %v8800, 0.0
      %v9060 = vmin.f32 %v8611, 0.0
      %v9061 = vmin.f32 %v8613, 0.0
      %v9062 = vmin.f32 %v8804, 0.0
      %v9063 = vmin.f32 %v8806, 0.0
      %v9064 = vmin.f32 %v8615, 0.0
      %v9065 = vmin.f32 %v8617, 0.0
      %v9066 = vmin.f32 %v8808, 0.0
      %v9067 = vmin.f32 %v8810, 0.0
      %v9068 = vmul.f32 %v8940, 1.442695
      %v9069 = vpow.pop %v9068
      %v9070 = vmul.f32 %v8941, 1.442695
      %v9071 = vpow.pop %v9070
      %v9072 = vmul.f32 %v8942, 1.442695
      %v9073 = vpow.pop %v9072
      %v9074 = vmul.f32 %v8943, 1.442695
      %v9075 = vpow.pop %v9074
      %v9076 = vmul.f32 %v8944, 1.442695
      %v9077 = vpow.pop %v9076
      %v9078 = vmul.f32 %v8945, 1.442695
      %v9079 = vpow.pop %v9078
      %v9080 = vmul.f32 %v8946, 1.442695
      %v9081 = vpow.pop %v9080
      %v9082 = vmul.f32 %v8947, 1.442695
      %v9083 = vpow.pop %v9082
      %v9084 = vmul.f32 %v8948, 1.442695
      %v9085 = vpow.pop %v9084
      %v9086 = vmul.f32 %v8949, 1.442695
      %v9087 = vpow.pop %v9086
      %v9088 = vmul.f32 %v8950, 1.442695
      %v9089 = vpow.pop %v9088
      %v9090 = vmul.f32 %v8951, 1.442695
      %v9091 = vpow.pop %v9090
      %v9092 = vmul.f32 %v8952, 1.442695
      %v9093 = vpow.pop %v9092
      %v9094 = vmul.f32 %v8953, 1.442695
      %v9095 = vpow.pop %v9094
      %v9096 = vmul.f32 %v8954, 1.442695
      %v9097 = vpow.pop %v9096
      %v9098 = vmul.f32 %v8955, 1.442695
      %v9099 = vpow.pop %v9098
      %v9100 = vmul.f32 %v8956, 1.442695
      %v9101 = vpow.pop %v9100
      %v9102 = vmul.f32 %v8957, 1.442695
      %v9103 = vpow.pop %v9102
      %v9104 = vmul.f32 %v8958, 1.442695
      %v9105 = vpow.pop %v9104
      %v9106 = vmul.f32 %v8959, 1.442695
      %v9107 = vpow.pop %v9106
      %v9108 = vmul.f32 %v8960, 1.442695
      %v9109 = vpow.pop %v9108
      %v9110 = vmul.f32 %v8961, 1.442695
      %v9111 = vpow.pop %v9110
      %v9112 = vmul.f32 %v8962, 1.442695
      %v9113 = vpow.pop %v9112
      %v9114 = vmul.f32 %v8963, 1.442695
      %v9115 = vpow.pop %v9114
      %v9116 = vmul.f32 %v8964, 1.442695
      %v9117 = vpow.pop %v9116
      %v9118 = vmul.f32 %v8965, 1.442695
      %v9119 = vpow.pop %v9118
      %v9120 = vmul.f32 %v8966, 1.442695
      %v9121 = vpow.pop %v9120
      %v9122 = vmul.f32 %v8967, 1.442695
      %v9123 = vpow.pop %v9122
      %v9124 = vmul.f32 %v8968, 1.442695
      %v9125 = vpow.pop %v9124
      %v9126 = vmul.f32 %v8969, 1.442695
      %v9127 = vpow.pop %v9126
      %v9128 = vmul.f32 %v8970, 1.442695
      %v9129 = vpow.pop %v9128
      %v9130 = vmul.f32 %v8971, 1.442695
      %v9131 = vpow.pop %v9130
      %v9132 = vmul.f32 %v8972, 1.442695
      %v9133 = vpow.pop %v9132
      %v9134 = vmul.f32 %v8973, 1.442695
      %v9135 = vpow.pop %v9134
      %v9136 = vmul.f32 %v8974, 1.442695
      %v9137 = vpow.pop %v9136
      %v9138 = vmul.f32 %v8975, 1.442695
      %v9139 = vpow.pop %v9138
      %v9140 = vmul.f32 %v8976, 1.442695
      %v9141 = vpow.pop %v9140
      %v9142 = vmul.f32 %v8977, 1.442695
      %v9143 = vpow.pop %v9142
      %v9144 = vmul.f32 %v8978, 1.442695
      %v9145 = vpow.pop %v9144
      %v9146 = vmul.f32 %v8979, 1.442695
      %v9147 = vpow.pop %v9146
      %v9148 = vmul.f32 %v8980, 1.442695
      %v9149 = vpow.pop %v9148
      %v9150 = vmul.f32 %v8981, 1.442695
      %v9151 = vpow.pop %v9150
      %v9152 = vmul.f32 %v8982, 1.442695
      %v9153 = vpow.pop %v9152
      %v9154 = vmul.f32 %v8983, 1.442695
      %v9155 = vpow.pop %v9154
      %v9156 = vmul.f32 %v8984, 1.442695
      %v9157 = vpow.pop %v9156
      %v9158 = vmul.f32 %v8985, 1.442695
      %v9159 = vpow.pop %v9158
      %v9160 = vmul.f32 %v8986, 1.442695
      %v9161 = vpow.pop %v9160
      %v9162 = vmul.f32 %v8987, 1.442695
      %v9163 = vpow.pop %v9162
      %v9164 = vmul.f32 %v8988, 1.442695
      %v9165 = vpow.pop %v9164
      %v9166 = vmul.f32 %v8989, 1.442695
      %v9167 = vpow.pop %v9166
      %v9168 = vmul.f32 %v8990, 1.442695
      %v9169 = vpow.pop %v9168
      %v9170 = vmul.f32 %v8991, 1.442695
      %v9171 = vpow.pop %v9170
      %v9172 = vmul.f32 %v8992, 1.442695
      %v9173 = vpow.pop %v9172
      %v9174 = vmul.f32 %v8993, 1.442695
      %v9175 = vpow.pop %v9174
      %v9176 = vmul.f32 %v8994, 1.442695
      %v9177 = vpow.pop %v9176
      %v9178 = vmul.f32 %v8995, 1.442695
      %v9179 = vpow.pop %v9178
      %v9180 = vmul.f32 %v8996, 1.442695
      %v9181 = vpow.pop %v9180
      %v9182 = vmul.f32 %v8997, 1.442695
      %v9183 = vpow.pop %v9182
      %v9184 = vmul.f32 %v8998, 1.442695
      %v9185 = vpow.pop %v9184
      %v9186 = vmul.f32 %v8999, 1.442695
      %v9187 = vpow.pop %v9186
      %v9188 = vmul.f32 %v9000, 1.442695
      %v9189 = vpow.pop %v9188
      %v9190 = vmul.f32 %v9001, 1.442695
      %v9191 = vpow.pop %v9190
      %v9192 = vmul.f32 %v9002, 1.442695
      %v9193 = vpow.pop %v9192
      %v9194 = vmul.f32 %v9003, 1.442695
      %v9195 = vpow.pop %v9194
      %v9196 = vmul.f32 %v9004, 1.442695
      %v9197 = vpow.pop %v9196
      %v9198 = vmul.f32 %v9005, 1.442695
      %v9199 = vpow.pop %v9198
      %v9200 = vmul.f32 %v9006, 1.442695
      %v9201 = vpow.pop %v9200
      %v9202 = vmul.f32 %v9007, 1.442695
      %v9203 = vpow.pop %v9202
      %v9204 = vmul.f32 %v9008, 1.442695
      %v9205 = vpow.pop %v9204
      %v9206 = vmul.f32 %v9009, 1.442695
      %v9207 = vpow.pop %v9206
      %v9208 = vmul.f32 %v9010, 1.442695
      %v9209 = vpow.pop %v9208
      %v9210 = vmul.f32 %v9011, 1.442695
      %v9211 = vpow.pop %v9210
      %v9212 = vmul.f32 %v9012, 1.442695
      %v9213 = vpow.pop %v9212
      %v9214 = vmul.f32 %v9013, 1.442695
      %v9215 = vpow.pop %v9214
      %v9216 = vmul.f32 %v9014, 1.442695
      %v9217 = vpow.pop %v9216
      %v9218 = vmul.f32 %v9015, 1.442695
      %v9219 = vpow.pop %v9218
      %v9220 = vmul.f32 %v9016, 1.442695
      %v9221 = vpow.pop %v9220
      %v9222 = vmul.f32 %v9017, 1.442695
      %v9223 = vpow.pop %v9222
      %v9224 = vmul.f32 %v9018, 1.442695
      %v9225 = vpow.pop %v9224
      %v9226 = vmul.f32 %v9019, 1.442695
      %v9227 = vpow.pop %v9226
      %v9228 = vmul.f32 %v9020, 1.442695
      %v9229 = vpow.pop %v9228
      %v9230 = vmul.f32 %v9021, 1.442695
      %v9231 = vpow.pop %v9230
      %v9232 = vmul.f32 %v9022, 1.442695
      %v9233 = vpow.pop %v9232
      %v9234 = vmul.f32 %v9023, 1.442695
      %v9235 = vpow.pop %v9234
      %v9236 = vmul.f32 %v9024, 1.442695
      %v9237 = vpow.pop %v9236
      %v9238 = vmul.f32 %v9025, 1.442695
      %v9239 = vpow.pop %v9238
      %v9240 = vmul.f32 %v9026, 1.442695
      %v9241 = vpow.pop %v9240
      %v9242 = vmul.f32 %v9027, 1.442695
      %v9243 = vpow.pop %v9242
      %v9244 = vmul.f32 %v9028, 1.442695
      %v9245 = vpow.pop %v9244
      %v9246 = vmul.f32 %v9029, 1.442695
      %v9247 = vpow.pop %v9246
      %v9248 = vmul.f32 %v9030, 1.442695
      %v9249 = vpow.pop %v9248
      %v9250 = vmul.f32 %v9031, 1.442695
      %v9251 = vpow.pop %v9250
      %v9252 = vmul.f32 %v9032, 1.442695
      %v9253 = vpow.pop %v9252
      %v9254 = vmul.f32 %v9033, 1.442695
      %v9255 = vpow.pop %v9254
      %v9256 = vmul.f32 %v9034, 1.442695
      %v9257 = vpow.pop %v9256
      %v9258 = vmul.f32 %v9035, 1.442695
      %v9259 = vpow.pop %v9258
      %v9260 = vmul.f32 %v9036, 1.442695
      %v9261 = vpow.pop %v9260
      %v9262 = vmul.f32 %v9037, 1.442695
      %v9263 = vpow.pop %v9262
      %v9264 = vmul.f32 %v9038, 1.442695
      %v9265 = vpow.pop %v9264
      %v9266 = vmul.f32 %v9039, 1.442695
      %v9267 = vpow.pop %v9266
      %v9268 = vmul.f32 %v9040, 1.442695
      %v9269 = vpow.pop %v9268
      %v9270 = vmul.f32 %v9041, 1.442695
      %v9271 = vpow.pop %v9270
      %v9272 = vmul.f32 %v9042, 1.442695
      %v9273 = vpow.pop %v9272
      %v9274 = vmul.f32 %v9043, 1.442695
      %v9275 = vpow.pop %v9274
      %v9276 = vmul.f32 %v9044, 1.442695
      %v9277 = vpow.pop %v9276
      %v9278 = vmul.f32 %v9045, 1.442695
      %v9279 = vpow.pop %v9278
      %v9280 = vmul.f32 %v9046, 1.442695
      %v9281 = vpow.pop %v9280
      %v9282 = vmul.f32 %v9047, 1.442695
      %v9283 = vpow.pop %v9282
      %v9284 = vmul.f32 %v9048, 1.442695
      %v9285 = vpow.pop %v9284
      %v9286 = vmul.f32 %v9049, 1.442695
      %v9287 = vpow.pop %v9286
      %v9288 = vmul.f32 %v9050, 1.442695
      %v9289 = vpow.pop %v9288
      %v9290 = vmul.f32 %v9051, 1.442695
      %v9291 = vpow.pop %v9290
      %v9292 = vmul.f32 %v9052, 1.442695
      %v9293 = vpow.pop %v9292
      %v9294 = vmul.f32 %v9053, 1.442695
      %v9295 = vpow.pop %v9294
      %v9296 = vmul.f32 %v9054, 1.442695
      %v9297 = vpow.pop %v9296
      %v9298 = vmul.f32 %v9055, 1.442695
      %v9299 = vpow.pop %v9298
      %v9300 = vmul.f32 %v9056, 1.442695
      %v9301 = vpow.pop %v9300
      %v9302 = vmul.f32 %v9057, 1.442695
      %v9303 = vpow.pop %v9302
      %v9304 = vmul.f32 %v9058, 1.442695
      %v9305 = vpow.pop %v9304
      %v9306 = vmul.f32 %v9059, 1.442695
      %v9307 = vpow.pop %v9306
      %v9308 = vmul.f32 %v9060, 1.442695
      %v9309 = vpow.pop %v9308
      %v9310 = vmul.f32 %v9061, 1.442695
      %v9311 = vpow.pop %v9310
      %v9312 = vmul.f32 %v9062, 1.442695
      %v9313 = vpow.pop %v9312
      %v9314 = vmul.f32 %v9063, 1.442695
      %v9315 = vpow.pop %v9314
      %v9316 = vmul.f32 %v9064, 1.442695
      %v9317 = vpow.pop %v9316
      %v9318 = vmul.f32 %v9065, 1.442695
      %v9319 = vpow.pop %v9318
      %v9320 = vmul.f32 %v9066, 1.442695
      %v9321 = vpow.pop %v9320
      %v9322 = vmul.f32 %v9067, 1.442695
      %v9323 = vpow.pop %v9322
      %v9324 = vsub.f32 %v9069, 1.0
      %v9325 = vsub.f32 %v9071, 1.0
      %v9326 = vsub.f32 %v9073, 1.0
      %v9327 = vsub.f32 %v9075, 1.0
      %v9328 = vsub.f32 %v9077, 1.0
      %v9329 = vsub.f32 %v9079, 1.0
      %v9330 = vsub.f32 %v9081, 1.0
      %v9331 = vsub.f32 %v9083, 1.0
      %v9332 = vsub.f32 %v9085, 1.0
      %v9333 = vsub.f32 %v9087, 1.0
      %v9334 = vsub.f32 %v9089, 1.0
      %v9335 = vsub.f32 %v9091, 1.0
      %v9336 = vsub.f32 %v9093, 1.0
      %v9337 = vsub.f32 %v9095, 1.0
      %v9338 = vsub.f32 %v9097, 1.0
      %v9339 = vsub.f32 %v9099, 1.0
      %v9340 = vsub.f32 %v9101, 1.0
      %v9341 = vsub.f32 %v9103, 1.0
      %v9342 = vsub.f32 %v9105, 1.0
      %v9343 = vsub.f32 %v9107, 1.0
      %v9344 = vsub.f32 %v9109, 1.0
      %v9345 = vsub.f32 %v9111, 1.0
      %v9346 = vsub.f32 %v9113, 1.0
      %v9347 = vsub.f32 %v9115, 1.0
      %v9348 = vsub.f32 %v9117, 1.0
      %v9349 = vsub.f32 %v9119, 1.0
      %v9350 = vsub.f32 %v9121, 1.0
      %v9351 = vsub.f32 %v9123, 1.0
      %v9352 = vsub.f32 %v9125, 1.0
      %v9353 = vsub.f32 %v9127, 1.0
      %v9354 = vsub.f32 %v9129, 1.0
      %v9355 = vsub.f32 %v9131, 1.0
      %v9356 = vsub.f32 %v9133, 1.0
      %v9357 = vsub.f32 %v9135, 1.0
      %v9358 = vsub.f32 %v9137, 1.0
      %v9359 = vsub.f32 %v9139, 1.0
      %v9360 = vsub.f32 %v9141, 1.0
      %v9361 = vsub.f32 %v9143, 1.0
      %v9362 = vsub.f32 %v9145, 1.0
      %v9363 = vsub.f32 %v9147, 1.0
      %v9364 = vsub.f32 %v9149, 1.0
      %v9365 = vsub.f32 %v9151, 1.0
      %v9366 = vsub.f32 %v9153, 1.0
      %v9367 = vsub.f32 %v9155, 1.0
      %v9368 = vsub.f32 %v9157, 1.0
      %v9369 = vsub.f32 %v9159, 1.0
      %v9370 = vsub.f32 %v9161, 1.0
      %v9371 = vsub.f32 %v9163, 1.0
      %v9372 = vsub.f32 %v9165, 1.0
      %v9373 = vsub.f32 %v9167, 1.0
      %v9374 = vsub.f32 %v9169, 1.0
      %v9375 = vsub.f32 %v9171, 1.0
      %v9376 = vsub.f32 %v9173, 1.0
      %v9377 = vsub.f32 %v9175, 1.0
      %v9378 = vsub.f32 %v9177, 1.0
      %v9379 = vsub.f32 %v9179, 1.0
      %v9380 = vsub.f32 %v9181, 1.0
      %v9381 = vsub.f32 %v9183, 1.0
      %v9382 = vsub.f32 %v9185, 1.0
      %v9383 = vsub.f32 %v9187, 1.0
      %v9384 = vsub.f32 %v9189, 1.0
      %v9385 = vsub.f32 %v9191, 1.0
      %v9386 = vsub.f32 %v9193, 1.0
      %v9387 = vsub.f32 %v9195, 1.0
      %v9388 = vsub.f32 %v9197, 1.0
      %v9389 = vsub.f32 %v9199, 1.0
      %v9390 = vsub.f32 %v9201, 1.0
      %v9391 = vsub.f32 %v9203, 1.0
      %v9392 = vsub.f32 %v9205, 1.0
      %v9393 = vsub.f32 %v9207, 1.0
      %v9394 = vsub.f32 %v9209, 1.0
      %v9395 = vsub.f32 %v9211, 1.0
      %v9396 = vsub.f32 %v9213, 1.0
      %v9397 = vsub.f32 %v9215, 1.0
      %v9398 = vsub.f32 %v9217, 1.0
      %v9399 = vsub.f32 %v9219, 1.0
      %v9400 = vsub.f32 %v9221, 1.0
      %v9401 = vsub.f32 %v9223, 1.0
      %v9402 = vsub.f32 %v9225, 1.0
      %v9403 = vsub.f32 %v9227, 1.0
      %v9404 = vsub.f32 %v9229, 1.0
      %v9405 = vsub.f32 %v9231, 1.0
      %v9406 = vsub.f32 %v9233, 1.0
      %v9407 = vsub.f32 %v9235, 1.0
      %v9408 = vsub.f32 %v9237, 1.0
      %v9409 = vsub.f32 %v9239, 1.0
      %v9410 = vsub.f32 %v9241, 1.0
      %v9411 = vsub.f32 %v9243, 1.0
      %v9412 = vsub.f32 %v9245, 1.0
      %v9413 = vsub.f32 %v9247, 1.0
      %v9414 = vsub.f32 %v9249, 1.0
      %v9415 = vsub.f32 %v9251, 1.0
      %v9416 = vsub.f32 %v9253, 1.0
      %v9417 = vsub.f32 %v9255, 1.0
      %v9418 = vsub.f32 %v9257, 1.0
      %v9419 = vsub.f32 %v9259, 1.0
      %v9420 = vsub.f32 %v9261, 1.0
      %v9421 = vsub.f32 %v9263, 1.0
      %v9422 = vsub.f32 %v9265, 1.0
      %v9423 = vsub.f32 %v9267, 1.0
      %v9424 = vsub.f32 %v9269, 1.0
      %v9425 = vsub.f32 %v9271, 1.0
      %v9426 = vsub.f32 %v9273, 1.0
      %v9427 = vsub.f32 %v9275, 1.0
      %v9428 = vsub.f32 %v9277, 1.0
      %v9429 = vsub.f32 %v9279, 1.0
      %v9430 = vsub.f32 %v9281, 1.0
      %v9431 = vsub.f32 %v9283, 1.0
      %v9432 = vsub.f32 %v9285, 1.0
      %v9433 = vsub.f32 %v9287, 1.0
      %v9434 = vsub.f32 %v9289, 1.0
      %v9435 = vsub.f32 %v9291, 1.0
      %v9436 = vsub.f32 %v9293, 1.0
      %v9437 = vsub.f32 %v9295, 1.0
      %v9438 = vsub.f32 %v9297, 1.0
      %v9439 = vsub.f32 %v9299, 1.0
      %v9440 = vsub.f32 %v9301, 1.0
      %v9441 = vsub.f32 %v9303, 1.0
      %v9442 = vsub.f32 %v9305, 1.0
      %v9443 = vsub.f32 %v9307, 1.0
      %v9444 = vsub.f32 %v9309, 1.0
      %v9445 = vsub.f32 %v9311, 1.0
      %v9446 = vsub.f32 %v9313, 1.0
      %v9447 = vsub.f32 %v9315, 1.0
      %v9448 = vsub.f32 %v9317, 1.0
      %v9449 = vsub.f32 %v9319, 1.0
      %v9450 = vsub.f32 %v9321, 1.0
      %v9451 = vsub.f32 %v9323, 1.0
      %v9452 = vmul.f32 %v9324, 1.6732632
      %v9453 = vmul.f32 %v9325, 1.6732632
      %v9454 = vmul.f32 %v9326, 1.6732632
      %v9455 = vmul.f32 %v9327, 1.6732632
      %v9456 = vmul.f32 %v9328, 1.6732632
      %v9457 = vmul.f32 %v9329, 1.6732632
      %v9458 = vmul.f32 %v9330, 1.6732632
      %v9459 = vmul.f32 %v9331, 1.6732632
      %v9460 = vmul.f32 %v9332, 1.6732632
      %v9461 = vmul.f32 %v9333, 1.6732632
      %v9462 = vmul.f32 %v9334, 1.6732632
      %v9463 = vmul.f32 %v9335, 1.6732632
      %v9464 = vmul.f32 %v9336, 1.6732632
      %v9465 = vmul.f32 %v9337, 1.6732632
      %v9466 = vmul.f32 %v9338, 1.6732632
      %v9467 = vmul.f32 %v9339, 1.6732632
      %v9468 = vmul.f32 %v9340, 1.6732632
      %v9469 = vmul.f32 %v9341, 1.6732632
      %v9470 = vmul.f32 %v9342, 1.6732632
      %v9471 = vmul.f32 %v9343, 1.6732632
      %v9472 = vmul.f32 %v9344, 1.6732632
      %v9473 = vmul.f32 %v9345, 1.6732632
      %v9474 = vmul.f32 %v9346, 1.6732632
      %v9475 = vmul.f32 %v9347, 1.6732632
      %v9476 = vmul.f32 %v9348, 1.6732632
      %v9477 = vmul.f32 %v9349, 1.6732632
      %v9478 = vmul.f32 %v9350, 1.6732632
      %v9479 = vmul.f32 %v9351, 1.6732632
      %v9480 = vmul.f32 %v9352, 1.6732632
      %v9481 = vmul.f32 %v9353, 1.6732632
      %v9482 = vmul.f32 %v9354, 1.6732632
      %v9483 = vmul.f32 %v9355, 1.6732632
      %v9484 = vmul.f32 %v9356, 1.6732632
      %v9485 = vmul.f32 %v9357, 1.6732632
      %v9486 = vmul.f32 %v9358, 1.6732632
      %v9487 = vmul.f32 %v9359, 1.6732632
      %v9488 = vmul.f32 %v9360, 1.6732632
      %v9489 = vmul.f32 %v9361, 1.6732632
      %v9490 = vmul.f32 %v9362, 1.6732632
      %v9491 = vmul.f32 %v9363, 1.6732632
      %v9492 = vmul.f32 %v9364, 1.6732632
      %v9493 = vmul.f32 %v9365, 1.6732632
      %v9494 = vmul.f32 %v9366, 1.6732632
      %v9495 = vmul.f32 %v9367, 1.6732632
      %v9496 = vmul.f32 %v9368, 1.6732632
      %v9497 = vmul.f32 %v9369, 1.6732632
      %v9498 = vmul.f32 %v9370, 1.6732632
      %v9499 = vmul.f32 %v9371, 1.6732632
      %v9500 = vmul.f32 %v9372, 1.6732632
      %v9501 = vmul.f32 %v9373, 1.6732632
      %v9502 = vmul.f32 %v9374, 1.6732632
      %v9503 = vmul.f32 %v9375, 1.6732632
      %v9504 = vmul.f32 %v9376, 1.6732632
      %v9505 = vmul.f32 %v9377, 1.6732632
      %v9506 = vmul.f32 %v9378, 1.6732632
      %v9507 = vmul.f32 %v9379, 1.6732632
      %v9508 = vmul.f32 %v9380, 1.6732632
      %v9509 = vmul.f32 %v9381, 1.6732632
      %v9510 = vmul.f32 %v9382, 1.6732632
      %v9511 = vmul.f32 %v9383, 1.6732632
      %v9512 = vmul.f32 %v9384, 1.6732632
      %v9513 = vmul.f32 %v9385, 1.6732632
      %v9514 = vmul.f32 %v9386, 1.6732632
      %v9515 = vmul.f32 %v9387, 1.6732632
      %v9516 = vmul.f32 %v9388, 1.6732632
      %v9517 = vmul.f32 %v9389, 1.6732632
      %v9518 = vmul.f32 %v9390, 1.6732632
      %v9519 = vmul.f32 %v9391, 1.6732632
      %v9520 = vmul.f32 %v9392, 1.6732632
      %v9521 = vmul.f32 %v9393, 1.6732632
      %v9522 = vmul.f32 %v9394, 1.6732632
      %v9523 = vmul.f32 %v9395, 1.6732632
      %v9524 = vmul.f32 %v9396, 1.6732632
      %v9525 = vmul.f32 %v9397, 1.6732632
      %v9526 = vmul.f32 %v9398, 1.6732632
      %v9527 = vmul.f32 %v9399, 1.6732632
      %v9528 = vmul.f32 %v9400, 1.6732632
      %v9529 = vmul.f32 %v9401, 1.6732632
      %v9530 = vmul.f32 %v9402, 1.6732632
      %v9531 = vmul.f32 %v9403, 1.6732632
      %v9532 = vmul.f32 %v9404, 1.6732632
      %v9533 = vmul.f32 %v9405, 1.6732632
      %v9534 = vmul.f32 %v9406, 1.6732632
      %v9535 = vmul.f32 %v9407, 1.6732632
      %v9536 = vmul.f32 %v9408, 1.6732632
      %v9537 = vmul.f32 %v9409, 1.6732632
      %v9538 = vmul.f32 %v9410, 1.6732632
      %v9539 = vmul.f32 %v9411, 1.6732632
      %v9540 = vmul.f32 %v9412, 1.6732632
      %v9541 = vmul.f32 %v9413, 1.6732632
      %v9542 = vmul.f32 %v9414, 1.6732632
      %v9543 = vmul.f32 %v9415, 1.6732632
      %v9544 = vmul.f32 %v9416, 1.6732632
      %v9545 = vmul.f32 %v9417, 1.6732632
      %v9546 = vmul.f32 %v9418, 1.6732632
      %v9547 = vmul.f32 %v9419, 1.6732632
      %v9548 = vmul.f32 %v9420, 1.6732632
      %v9549 = vmul.f32 %v9421, 1.6732632
      %v9550 = vmul.f32 %v9422, 1.6732632
      %v9551 = vmul.f32 %v9423, 1.6732632
      %v9552 = vmul.f32 %v9424, 1.6732632
      %v9553 = vmul.f32 %v9425, 1.6732632
      %v9554 = vmul.f32 %v9426, 1.6732632
      %v9555 = vmul.f32 %v9427, 1.6732632
      %v9556 = vmul.f32 %v9428, 1.6732632
      %v9557 = vmul.f32 %v9429, 1.6732632
      %v9558 = vmul.f32 %v9430, 1.6732632
      %v9559 = vmul.f32 %v9431, 1.6732632
      %v9560 = vmul.f32 %v9432, 1.6732632
      %v9561 = vmul.f32 %v9433, 1.6732632
      %v9562 = vmul.f32 %v9434, 1.6732632
      %v9563 = vmul.f32 %v9435, 1.6732632
      %v9564 = vmul.f32 %v9436, 1.6732632
      %v9565 = vmul.f32 %v9437, 1.6732632
      %v9566 = vmul.f32 %v9438, 1.6732632
      %v9567 = vmul.f32 %v9439, 1.6732632
      %v9568 = vmul.f32 %v9440, 1.6732632
      %v9569 = vmul.f32 %v9441, 1.6732632
      %v9570 = vmul.f32 %v9442, 1.6732632
      %v9571 = vmul.f32 %v9443, 1.6732632
      %v9572 = vmul.f32 %v9444, 1.6732632
      %v9573 = vmul.f32 %v9445, 1.6732632
      %v9574 = vmul.f32 %v9446, 1.6732632
      %v9575 = vmul.f32 %v9447, 1.6732632
      %v9576 = vmul.f32 %v9448, 1.6732632
      %v9577 = vmul.f32 %v9449, 1.6732632
      %v9578 = vmul.f32 %v9450, 1.6732632
      %v9579 = vmul.f32 %v9451, 1.6732632
      %v9580 = vsel %vm8812, %v8461, %v9452
      %v9581 = vsel %vm8813, %v8463, %v9453
      %v9582 = vsel %vm8814, %v8654, %v9454
      %v9583 = vsel %vm8815, %v8656, %v9455
      %v9584 = vsel %vm8816, %v8465, %v9456
      %v9585 = vsel %vm8817, %v8467, %v9457
      %v9586 = vsel %vm8818, %v8658, %v9458
      %v9587 = vsel %vm8819, %v8660, %v9459
      %v9588 = vsel %vm8820, %v8471, %v9460
      %v9589 = vsel %vm8821, %v8473, %v9461
      %v9590 = vsel %vm8822, %v8664, %v9462
      %v9591 = vsel %vm8823, %v8666, %v9463
      %v9592 = vsel %vm8824, %v8475, %v9464
      %v9593 = vsel %vm8825, %v8477, %v9465
      %v9594 = vsel %vm8826, %v8668, %v9466
      %v9595 = vsel %vm8827, %v8670, %v9467
      %v9596 = vsel %vm8828, %v8481, %v9468
      %v9597 = vsel %vm8829, %v8483, %v9469
      %v9598 = vsel %vm8830, %v8674, %v9470
      %v9599 = vsel %vm8831, %v8676, %v9471
      %v9600 = vsel %vm8832, %v8485, %v9472
      %v9601 = vsel %vm8833, %v8487, %v9473
      %v9602 = vsel %vm8834, %v8678, %v9474
      %v9603 = vsel %vm8835, %v8680, %v9475
      %v9604 = vsel %vm8836, %v8491, %v9476
      %v9605 = vsel %vm8837, %v8493, %v9477
      %v9606 = vsel %vm8838, %v8684, %v9478
      %v9607 = vsel %vm8839, %v8686, %v9479
      %v9608 = vsel %vm8840, %v8495, %v9480
      %v9609 = vsel %vm8841, %v8497, %v9481
      %v9610 = vsel %vm8842, %v8688, %v9482
      %v9611 = vsel %vm8843, %v8690, %v9483
      %v9612 = vsel %vm8844, %v8501, %v9484
      %v9613 = vsel %vm8845, %v8503, %v9485
      %v9614 = vsel %vm8846, %v8694, %v9486
      %v9615 = vsel %vm8847, %v8696, %v9487
      %v9616 = vsel %vm8848, %v8505, %v9488
      %v9617 = vsel %vm8849, %v8507, %v9489
      %v9618 = vsel %vm8850, %v8698, %v9490
      %v9619 = vsel %vm8851, %v8700, %v9491
      %v9620 = vsel %vm8852, %v8511, %v9492
      %v9621 = vsel %vm8853, %v8513, %v9493
      %v9622 = vsel %vm8854, %v8704, %v9494
      %v9623 = vsel %vm8855, %v8706, %v9495
      %v9624 = vsel %vm8856, %v8515, %v9496
      %v9625 = vsel %vm8857, %v8517, %v9497
      %v9626 = vsel %vm8858, %v8708, %v9498
      %v9627 = vsel %vm8859, %v8710, %v9499
      %v9628 = vsel %vm8860, %v8521, %v9500
      %v9629 = vsel %vm8861, %v8523, %v9501
      %v9630 = vsel %vm8862, %v8714, %v9502
      %v9631 = vsel %vm8863, %v8716, %v9503
      %v9632 = vsel %vm8864, %v8525, %v9504
      %v9633 = vsel %vm8865, %v8527, %v9505
      %v9634 = vsel %vm8866, %v8718, %v9506
      %v9635 = vsel %vm8867, %v8720, %v9507
      %v9636 = vsel %vm8868, %v8531, %v9508
      %v9637 = vsel %vm8869, %v8533, %v9509
      %v9638 = vsel %vm8870, %v8724, %v9510
      %v9639 = vsel %vm8871, %v8726, %v9511
      %v9640 = vsel %vm8872, %v8535, %v9512
      %v9641 = vsel %vm8873, %v8537, %v9513
      %v9642 = vsel %vm8874, %v8728, %v9514
      %v9643 = vsel %vm8875, %v8730, %v9515
      %v9644 = vsel %vm8876, %v8541, %v9516
      %v9645 = vsel %vm8877, %v8543, %v9517
      %v9646 = vsel %vm8878, %v8734, %v9518
      %v9647 = vsel %vm8879, %v8736, %v9519
      %v9648 = vsel %vm8880, %v8545, %v9520
      %v9649 = vsel %vm8881, %v8547, %v9521
      %v9650 = vsel %vm8882, %v8738, %v9522
      %v9651 = vsel %vm8883, %v8740, %v9523
      %v9652 = vsel %vm8884, %v8551, %v9524
      %v9653 = vsel %vm8885, %v8553, %v9525
      %v9654 = vsel %vm8886, %v8744, %v9526
      %v9655 = vsel %vm8887, %v8746, %v9527
      %v9656 = vsel %vm8888, %v8555, %v9528
      %v9657 = vsel %vm8889, %v8557, %v9529
      %v9658 = vsel %vm8890, %v8748, %v9530
      %v9659 = vsel %vm8891, %v8750, %v9531
      %v9660 = vsel %vm8892, %v8561, %v9532
      %v9661 = vsel %vm8893, %v8563, %v9533
      %v9662 = vsel %vm8894, %v8754, %v9534
      %v9663 = vsel %vm8895, %v8756, %v9535
      %v9664 = vsel %vm8896, %v8565, %v9536
      %v9665 = vsel %vm8897, %v8567, %v9537
      %v9666 = vsel %vm8898, %v8758, %v9538
      %v9667 = vsel %vm8899, %v8760, %v9539
      %v9668 = vsel %vm8900, %v8571, %v9540
      %v9669 = vsel %vm8901, %v8573, %v9541
      %v9670 = vsel %vm8902, %v8764, %v9542
      %v9671 = vsel %vm8903, %v8766, %v9543
      %v9672 = vsel %vm8904, %v8575, %v9544
      %v9673 = vsel %vm8905, %v8577, %v9545
      %v9674 = vsel %vm8906, %v8768, %v9546
      %v9675 = vsel %vm8907, %v8770, %v9547
      %v9676 = vsel %vm8908, %v8581, %v9548
      %v9677 = vsel %vm8909, %v8583, %v9549
      %v9678 = vsel %vm8910, %v8774, %v9550
      %v9679 = vsel %vm8911, %v8776, %v9551
      %v9680 = vsel %vm8912, %v8585, %v9552
      %v9681 = vsel %vm8913, %v8587, %v9553
      %v9682 = vsel %vm8914, %v8778, %v9554
      %v9683 = vsel %vm8915, %v8780, %v9555
      %v9684 = vsel %vm8916, %v8591, %v9556
      %v9685 = vsel %vm8917, %v8593, %v9557
      %v9686 = vsel %vm8918, %v8784, %v9558
      %v9687 = vsel %vm8919, %v8786, %v9559
      %v9688 = vsel %vm8920, %v8595, %v9560
      %v9689 = vsel %vm8921, %v8597, %v9561
      %v9690 = vsel %vm8922, %v8788, %v9562
      %v9691 = vsel %vm8923, %v8790, %v9563
      %v9692 = vsel %vm8924, %v8601, %v9564
      %v9693 = vsel %vm8925, %v8603, %v9565
      %v9694 = vsel %vm8926, %v8794, %v9566
      %v9695 = vsel %vm8927, %v8796, %v9567
      %v9696 = vsel %vm8928, %v8605, %v9568
      %v9697 = vsel %vm8929, %v8607, %v9569
      %v9698 = vsel %vm8930, %v8798, %v9570
      %v9699 = vsel %vm8931, %v8800, %v9571
      %v9700 = vsel %vm8932, %v8611, %v9572
      %v9701 = vsel %vm8933, %v8613, %v9573
      %v9702 = vsel %vm8934, %v8804, %v9574
      %v9703 = vsel %vm8935, %v8806, %v9575
      %v9704 = vsel %vm8936, %v8615, %v9576
      %v9705 = vsel %vm8937, %v8617, %v9577
      %v9706 = vsel %vm8938, %v8808, %v9578
      %v9707 = vsel %vm8939, %v8810, %v9579
      %v9708 = vmul.f32 %v9580, 1.050701
      %v9709 = vmul.f32 %v9581, 1.050701
      %v9710 = vmul.f32 %v9582, 1.050701
      %v9711 = vmul.f32 %v9583, 1.050701
      %v9712 = vmul.f32 %v9584, 1.050701
      %v9713 = vmul.f32 %v9585, 1.050701
      %v9714 = vmul.f32 %v9586, 1.050701
      %v9715 = vmul.f32 %v9587, 1.050701
      %v9716 = vmul.f32 %v9588, 1.050701
      %v9717 = vmul.f32 %v9589, 1.050701
      %v9718 = vmul.f32 %v9590, 1.050701
      %v9719 = vmul.f32 %v9591, 1.050701
      %v9720 = vmul.f32 %v9592, 1.050701
      %v9721 = vmul.f32 %v9593, 1.050701
      %v9722 = vmul.f32 %v9594, 1.050701
      %v9723 = vmul.f32 %v9595, 1.050701
      %v9724 = vmul.f32 %v9596, 1.050701
      %v9725 = vmul.f32 %v9597, 1.050701
      %v9726 = vmul.f32 %v9598, 1.050701
      %v9727 = vmul.f32 %v9599, 1.050701
      %v9728 = vmul.f32 %v9600, 1.050701
      %v9729 = vmul.f32 %v9601, 1.050701
      %v9730 = vmul.f32 %v9602, 1.050701
      %v9731 = vmul.f32 %v9603, 1.050701
      %v9732 = vmul.f32 %v9604, 1.050701
      %v9733 = vmul.f32 %v9605, 1.050701
      %v9734 = vmul.f32 %v9606, 1.050701
      %v9735 = vmul.f32 %v9607, 1.050701
      %v9736 = vmul.f32 %v9608, 1.050701
      %v9737 = vmul.f32 %v9609, 1.050701
      %v9738 = vmul.f32 %v9610, 1.050701
      %v9739 = vmul.f32 %v9611, 1.050701
      %v9740 = vmul.f32 %v9612, 1.050701
      %v9741 = vmul.f32 %v9613, 1.050701
      %v9742 = vmul.f32 %v9614, 1.050701
      %v9743 = vmul.f32 %v9615, 1.050701
      %v9744 = vmul.f32 %v9616, 1.050701
      %v9745 = vmul.f32 %v9617, 1.050701
      %v9746 = vmul.f32 %v9618, 1.050701
      %v9747 = vmul.f32 %v9619, 1.050701
      %v9748 = vmul.f32 %v9620, 1.050701
      %v9749 = vmul.f32 %v9621, 1.050701
      %v9750 = vmul.f32 %v9622, 1.050701
      %v9751 = vmul.f32 %v9623, 1.050701
      %v9752 = vmul.f32 %v9624, 1.050701
      %v9753 = vmul.f32 %v9625, 1.050701
      %v9754 = vmul.f32 %v9626, 1.050701
      %v9755 = vmul.f32 %v9627, 1.050701
      %v9756 = vmul.f32 %v9628, 1.050701
      %v9757 = vmul.f32 %v9629, 1.050701
      %v9758 = vmul.f32 %v9630, 1.050701
      %v9759 = vmul.f32 %v9631, 1.050701
      %v9760 = vmul.f32 %v9632, 1.050701
      %v9761 = vmul.f32 %v9633, 1.050701
      %v9762 = vmul.f32 %v9634, 1.050701
      %v9763 = vmul.f32 %v9635, 1.050701
      %v9764 = vmul.f32 %v9636, 1.050701
      %v9765 = vmul.f32 %v9637, 1.050701
      %v9766 = vmul.f32 %v9638, 1.050701
      %v9767 = vmul.f32 %v9639, 1.050701
      %v9768 = vmul.f32 %v9640, 1.050701
      %v9769 = vmul.f32 %v9641, 1.050701
      %v9770 = vmul.f32 %v9642, 1.050701
      %v9771 = vmul.f32 %v9643, 1.050701
      %v9772 = vmul.f32 %v9644, 1.050701
      %v9773 = vmul.f32 %v9645, 1.050701
      %v9774 = vmul.f32 %v9646, 1.050701
      %v9775 = vmul.f32 %v9647, 1.050701
      %v9776 = vmul.f32 %v9648, 1.050701
      %v9777 = vmul.f32 %v9649, 1.050701
      %v9778 = vmul.f32 %v9650, 1.050701
      %v9779 = vmul.f32 %v9651, 1.050701
      %v9780 = vmul.f32 %v9652, 1.050701
      %v9781 = vmul.f32 %v9653, 1.050701
      %v9782 = vmul.f32 %v9654, 1.050701
      %v9783 = vmul.f32 %v9655, 1.050701
      %v9784 = vmul.f32 %v9656, 1.050701
      %v9785 = vmul.f32 %v9657, 1.050701
      %v9786 = vmul.f32 %v9658, 1.050701
      %v9787 = vmul.f32 %v9659, 1.050701
      %v9788 = vmul.f32 %v9660, 1.050701
      %v9789 = vmul.f32 %v9661, 1.050701
      %v9790 = vmul.f32 %v9662, 1.050701
      %v9791 = vmul.f32 %v9663, 1.050701
      %v9792 = vmul.f32 %v9664, 1.050701
      %v9793 = vmul.f32 %v9665, 1.050701
      %v9794 = vmul.f32 %v9666, 1.050701
      %v9795 = vmul.f32 %v9667, 1.050701
      %v9796 = vmul.f32 %v9668, 1.050701
      %v9797 = vmul.f32 %v9669, 1.050701
      %v9798 = vmul.f32 %v9670, 1.050701
      %v9799 = vmul.f32 %v9671, 1.050701
      %v9800 = vmul.f32 %v9672, 1.050701
      %v9801 = vmul.f32 %v9673, 1.050701
      %v9802 = vmul.f32 %v9674, 1.050701
      %v9803 = vmul.f32 %v9675, 1.050701
      %v9804 = vmul.f32 %v9676, 1.050701
      %v9805 = vmul.f32 %v9677, 1.050701
      %v9806 = vmul.f32 %v9678, 1.050701
      %v9807 = vmul.f32 %v9679, 1.050701
      %v9808 = vmul.f32 %v9680, 1.050701
      %v9809 = vmul.f32 %v9681, 1.050701
      %v9810 = vmul.f32 %v9682, 1.050701
      %v9811 = vmul.f32 %v9683, 1.050701
      %v9812 = vmul.f32 %v9684, 1.050701
      %v9813 = vmul.f32 %v9685, 1.050701
      %v9814 = vmul.f32 %v9686, 1.050701
      %v9815 = vmul.f32 %v9687, 1.050701
      %v9816 = vmul.f32 %v9688, 1.050701
      %v9817 = vmul.f32 %v9689, 1.050701
      %v9818 = vmul.f32 %v9690, 1.050701
      %v9819 = vmul.f32 %v9691, 1.050701
      %v9820 = vmul.f32 %v9692, 1.050701
      %v9821 = vmul.f32 %v9693, 1.050701
      %v9822 = vmul.f32 %v9694, 1.050701
      %v9823 = vmul.f32 %v9695, 1.050701
      %v9824 = vmul.f32 %v9696, 1.050701
      %v9825 = vmul.f32 %v9697, 1.050701
      %v9826 = vmul.f32 %v9698, 1.050701
      %v9827 = vmul.f32 %v9699, 1.050701
      %v9828 = vmul.f32 %v9700, 1.050701
      %v9829 = vmul.f32 %v9701, 1.050701
      %v9830 = vmul.f32 %v9702, 1.050701
      %v9831 = vmul.f32 %v9703, 1.050701
      %v9832 = vmul.f32 %v9704, 1.050701
      %v9833 = vmul.f32 %v9705, 1.050701
      %v9834 = vmul.f32 %v9706, 1.050701
      %v9835 = vmul.f32 %v9707, 1.050701
      %v9836 = vpack.c.bf16 %v9712, %v9708
      %v9837 = vpack.c.bf16 %v9713, %v9709
      %v9838 = vpack.c.bf16 %v9714, %v9710
      %v9839 = vpack.c.bf16 %v9715, %v9711
      %v9840 = vpack.c.bf16 %v9720, %v9716
      %v9841 = vpack.c.bf16 %v9721, %v9717
      %v9842 = vpack.c.bf16 %v9722, %v9718
      %v9843 = vpack.c.bf16 %v9723, %v9719
      %v9844 = vpack.c.bf16 %v9728, %v9724
      %v9845 = vpack.c.bf16 %v9729, %v9725
      %v9846 = vpack.c.bf16 %v9730, %v9726
      %v9847 = vpack.c.bf16 %v9731, %v9727
      %v9848 = vpack.c.bf16 %v9736, %v9732
      %v9849 = vpack.c.bf16 %v9737, %v9733
      %v9850 = vpack.c.bf16 %v9738, %v9734
      %v9851 = vpack.c.bf16 %v9739, %v9735
      %v9852 = vpack.c.bf16 %v9744, %v9740
      %v9853 = vpack.c.bf16 %v9745, %v9741
      %v9854 = vpack.c.bf16 %v9746, %v9742
      %v9855 = vpack.c.bf16 %v9747, %v9743
      %v9856 = vpack.c.bf16 %v9752, %v9748
      %v9857 = vpack.c.bf16 %v9753, %v9749
      %v9858 = vpack.c.bf16 %v9754, %v9750
      %v9859 = vpack.c.bf16 %v9755, %v9751
      %v9860 = vpack.c.bf16 %v9760, %v9756
      %v9861 = vpack.c.bf16 %v9761, %v9757
      %v9862 = vpack.c.bf16 %v9762, %v9758
      %v9863 = vpack.c.bf16 %v9763, %v9759
      %v9864 = vpack.c.bf16 %v9768, %v9764
      %v9865 = vpack.c.bf16 %v9769, %v9765
      %v9866 = vpack.c.bf16 %v9770, %v9766
      %v9867 = vpack.c.bf16 %v9771, %v9767
      %v9868 = vpack.c.bf16 %v9776, %v9772
      %v9869 = vpack.c.bf16 %v9777, %v9773
      %v9870 = vpack.c.bf16 %v9778, %v9774
      %v9871 = vpack.c.bf16 %v9779, %v9775
      %v9872 = vpack.c.bf16 %v9784, %v9780
      %v9873 = vpack.c.bf16 %v9785, %v9781
      %v9874 = vpack.c.bf16 %v9786, %v9782
      %v9875 = vpack.c.bf16 %v9787, %v9783
      %v9876 = vpack.c.bf16 %v9792, %v9788
      %v9877 = vpack.c.bf16 %v9793, %v9789
      %v9878 = vpack.c.bf16 %v9794, %v9790
      %v9879 = vpack.c.bf16 %v9795, %v9791
      %v9880 = vpack.c.bf16 %v9800, %v9796
      %v9881 = vpack.c.bf16 %v9801, %v9797
      %v9882 = vpack.c.bf16 %v9802, %v9798
      %v9883 = vpack.c.bf16 %v9803, %v9799
      %v9884 = vpack.c.bf16 %v9808, %v9804
      %v9885 = vpack.c.bf16 %v9809, %v9805
      %v9886 = vpack.c.bf16 %v9810, %v9806
      %v9887 = vpack.c.bf16 %v9811, %v9807
      %v9888 = vpack.c.bf16 %v9816, %v9812
      %v9889 = vpack.c.bf16 %v9817, %v9813
      %v9890 = vpack.c.bf16 %v9818, %v9814
      %v9891 = vpack.c.bf16 %v9819, %v9815
      %v9892 = vpack.c.bf16 %v9824, %v9820
      %v9893 = vpack.c.bf16 %v9825, %v9821
      %v9894 = vpack.c.bf16 %v9826, %v9822
      %v9895 = vpack.c.bf16 %v9827, %v9823
      %v9896 = vpack.c.bf16 %v9832, %v9828
      %v9897 = vpack.c.bf16 %v9833, %v9829
      %v9898 = vpack.c.bf16 %v9834, %v9830
      %v9899 = vpack.c.bf16 %v9835, %v9831
      %v9900 = vld [vmem:[%s11] sm:$0xf]
      %v9901 = vld [vmem:[%s11 + $0x4] sm:$0xf]
      %v9902 = vld [vmem:[%s11 + $0x8] sm:$0xf]
      %v9903 = vld [vmem:[%s11 + $0xc] sm:$0xf]
      %v9904 = vld [vmem:[%s11 + $0x10] sm:$0xf]
      %v9905 = vld [vmem:[%s11 + $0x14] sm:$0xf]
      %v9906 = vld [vmem:[%s11 + $0x18] sm:$0xf]
      %v9907 = vld [vmem:[%s11 + $0x1c] sm:$0xf]
      %v9908 = vld [vmem:[%s11 + $0x20] sm:$0xf]
      %v9909 = vld [vmem:[%s11 + $0x24] sm:$0xf]
      %v9910 = vld [vmem:[%s11 + $0x28] sm:$0xf]
      %v9911 = vld [vmem:[%s11 + $0x2c] sm:$0xf]
      %v9912 = vld [vmem:[%s11 + $0x30] sm:$0xf]
      %v9913 = vld [vmem:[%s11 + $0x34] sm:$0xf]
      %v9914 = vld [vmem:[%s11 + $0x38] sm:$0xf]
      %v9915 = vld [vmem:[%s11 + $0x3c] sm:$0xf]
      %v9916 = vld [vmem:[%s11 + $0x40] sm:$0xf]
      %v9917 = vld [vmem:[%s11 + $0x44] sm:$0xf]
      %v9918 = vld [vmem:[%s11 + $0x48] sm:$0xf]
      %v9919 = vld [vmem:[%s11 + $0x4c] sm:$0xf]
      %v9920 = vld [vmem:[%s11 + $0x50] sm:$0xf]
      %v9921 = vld [vmem:[%s11 + $0x54] sm:$0xf]
      %v9922 = vld [vmem:[%s11 + $0x58] sm:$0xf]
      %v9923 = vld [vmem:[%s11 + $0x5c] sm:$0xf]
      %v9924 = vld [vmem:[%s11 + $0x60] sm:$0xf]
      %v9925 = vld [vmem:[%s11 + $0x64] sm:$0xf]
      %v9926 = vld [vmem:[%s11 + $0x68] sm:$0xf]
      %v9927 = vld [vmem:[%s11 + $0x6c] sm:$0xf]
      %v9928 = vld [vmem:[%s11 + $0x70] sm:$0xf]
      %v9929 = vld [vmem:[%s11 + $0x74] sm:$0xf]
      %v9930 = vld [vmem:[%s11 + $0x78] sm:$0xf]
      %v9931 = vld [vmem:[%s11 + $0x7c] sm:$0xf]
      %v9932 = vld [vmem:[%s11 + $0x80] sm:$0xf]
      %v9933 = vld [vmem:[%s11 + $0x84] sm:$0xf]
      %v9934 = vld [vmem:[%s11 + $0x88] sm:$0xf]
      %v9935 = vld [vmem:[%s11 + $0x8c] sm:$0xf]
      %v9936 = vld [vmem:[%s11 + $0x90] sm:$0xf]
      %v9937 = vld [vmem:[%s11 + $0x94] sm:$0xf]
      %v9938 = vld [vmem:[%s11 + $0x98] sm:$0xf]
      %v9939 = vld [vmem:[%s11 + $0x9c] sm:$0xf]
      %v9940 = vld [vmem:[%s11 + $0xa0] sm:$0xf]
      %v9941 = vld [vmem:[%s11 + $0xa4] sm:$0xf]
      %v9942 = vld [vmem:[%s11 + $0xa8] sm:$0xf]
      %v9943 = vld [vmem:[%s11 + $0xac] sm:$0xf]
      %v9944 = vld [vmem:[%s11 + $0xb0] sm:$0xf]
      %v9945 = vld [vmem:[%s11 + $0xb4] sm:$0xf]
      %v9946 = vld [vmem:[%s11 + $0xb8] sm:$0xf]
      %v9947 = vld [vmem:[%s11 + $0xbc] sm:$0xf]
      %v9948 = vld [vmem:[%s11 + $0xc0] sm:$0xf]
      %v9949 = vld [vmem:[%s11 + $0xc4] sm:$0xf]
      %v9950 = vld [vmem:[%s11 + $0xc8] sm:$0xf]
      %v9951 = vld [vmem:[%s11 + $0xcc] sm:$0xf]
      %v9952 = vld [vmem:[%s11 + $0xd0] sm:$0xf]
      %v9953 = vld [vmem:[%s11 + $0xd4] sm:$0xf]
      %v9954 = vld [vmem:[%s11 + $0xd8] sm:$0xf]
      %v9955 = vld [vmem:[%s11 + $0xdc] sm:$0xf]
      %v9956 = vld [vmem:[%s11 + $0xe0] sm:$0xf]
      %v9957 = vld [vmem:[%s11 + $0xe4] sm:$0xf]
      %v9958 = vld [vmem:[%s11 + $0xe8] sm:$0xf]
      %v9959 = vld [vmem:[%s11 + $0xec] sm:$0xf]
      %v9960 = vld [vmem:[%s11 + $0xf0] sm:$0xf]
      %v9961 = vld [vmem:[%s11 + $0xf4] sm:$0xf]
      %v9962 = vld [vmem:[%s11 + $0xf8] sm:$0xf]
      %v9963 = vld [vmem:[%s11 + $0xfc] sm:$0xf]
      %v9964 = vld [vmem:[%s12] sm:$0x1]
      %v9966 = vlaneseq
      %v9967 = vshrl.u32 %v9966, 7
      %v9968 = vsub.s32 0, %v9967
      %v9969 = vrot.slane %v9964, %v9968
      %v10035 = vunpack.c.l.b16 %v9900
      %v10036 = vunpack.c.l.b16 %v9901
      %v10037 = vunpack.c.l.b16 %v9902
      %v10038 = vunpack.c.l.b16 %v9903
      %v10039 = vunpack.c.l.b16 %v9904
      %v10040 = vunpack.c.l.b16 %v9905
      %v10041 = vunpack.c.l.b16 %v9906
      %v10042 = vunpack.c.l.b16 %v9907
      %v10043 = vunpack.c.l.b16 %v9908
      %v10044 = vunpack.c.l.b16 %v9909
      %v10045 = vunpack.c.l.b16 %v9910
      %v10046 = vunpack.c.l.b16 %v9911
      %v10047 = vunpack.c.l.b16 %v9912
      %v10048 = vunpack.c.l.b16 %v9913
      %v10049 = vunpack.c.l.b16 %v9914
      %v10050 = vunpack.c.l.b16 %v9915
      %v10051 = vunpack.c.l.b16 %v9916
      %v10052 = vunpack.c.l.b16 %v9917
      %v10053 = vunpack.c.l.b16 %v9918
      %v10054 = vunpack.c.l.b16 %v9919
      %v10055 = vunpack.c.l.b16 %v9920
      %v10056 = vunpack.c.l.b16 %v9921
      %v10057 = vunpack.c.l.b16 %v9922
      %v10058 = vunpack.c.l.b16 %v9923
      %v10059 = vunpack.c.l.b16 %v9924
      %v10060 = vunpack.c.l.b16 %v9925
      %v10061 = vunpack.c.l.b16 %v9926
      %v10062 = vunpack.c.l.b16 %v9927
      %v10063 = vunpack.c.l.b16 %v9928
      %v10064 = vunpack.c.l.b16 %v9929
      %v10065 = vunpack.c.l.b16 %v9930
      %v10066 = vunpack.c.l.b16 %v9931
      %v10067 = vunpack.c.l.b16 %v9932
      %v10068 = vunpack.c.l.b16 %v9933
      %v10069 = vunpack.c.l.b16 %v9934
      %v10070 = vunpack.c.l.b16 %v9935
      %v10071 = vunpack.c.l.b16 %v9936
      %v10072 = vunpack.c.l.b16 %v9937
      %v10073 = vunpack.c.l.b16 %v9938
      %v10074 = vunpack.c.l.b16 %v9939
      %v10075 = vunpack.c.l.b16 %v9940
      %v10076 = vunpack.c.l.b16 %v9941
      %v10077 = vunpack.c.l.b16 %v9942
      %v10078 = vunpack.c.l.b16 %v9943
      %v10079 = vunpack.c.l.b16 %v9944
      %v10080 = vunpack.c.l.b16 %v9945
      %v10081 = vunpack.c.l.b16 %v9946
      %v10082 = vunpack.c.l.b16 %v9947
      %v10083 = vunpack.c.l.b16 %v9948
      %v10084 = vunpack.c.l.b16 %v9949
      %v10085 = vunpack.c.l.b16 %v9950
      %v10086 = vunpack.c.l.b16 %v9951
      %v10087 = vunpack.c.l.b16 %v9952
      %v10088 = vunpack.c.l.b16 %v9953
      %v10089 = vunpack.c.l.b16 %v9954
      %v10090 = vunpack.c.l.b16 %v9955
      %v10091 = vunpack.c.l.b16 %v9956
      %v10092 = vunpack.c.l.b16 %v9957
      %v10093 = vunpack.c.l.b16 %v9958
      %v10094 = vunpack.c.l.b16 %v9959
      %v10095 = vunpack.c.l.b16 %v9960
      %v10096 = vunpack.c.l.b16 %v9961
      %v10097 = vunpack.c.l.b16 %v9962
      %v10098 = vunpack.c.l.b16 %v9963
      %v10099 = vpack.c.b16 %v10036, %v10035
      %v10100 = vpack.c.b16 %v10038, %v10037
      %v10101 = vpack.c.b16 %v10040, %v10039
      %v10102 = vpack.c.b16 %v10042, %v10041
      %v10103 = vpack.c.b16 %v10044, %v10043
      %v10104 = vpack.c.b16 %v10046, %v10045
      %v10105 = vpack.c.b16 %v10048, %v10047
      %v10106 = vpack.c.b16 %v10050, %v10049
      %v10107 = vpack.c.b16 %v10052, %v10051
      %v10108 = vpack.c.b16 %v10054, %v10053
      %v10109 = vpack.c.b16 %v10056, %v10055
      %v10110 = vpack.c.b16 %v10058, %v10057
      %v10111 = vpack.c.b16 %v10060, %v10059
      %v10112 = vpack.c.b16 %v10062, %v10061
      %v10113 = vpack.c.b16 %v10064, %v10063
      %v10114 = vpack.c.b16 %v10066, %v10065
      %v10115 = vpack.c.b16 %v10068, %v10067
      %v10116 = vpack.c.b16 %v10070, %v10069
      %v10117 = vpack.c.b16 %v10072, %v10071
      %v10118 = vpack.c.b16 %v10074, %v10073
      %v10119 = vpack.c.b16 %v10076, %v10075
      %v10120 = vpack.c.b16 %v10078, %v10077
      %v10121 = vpack.c.b16 %v10080, %v10079
      %v10122 = vpack.c.b16 %v10082, %v10081
      %v10123 = vpack.c.b16 %v10084, %v10083
      %v10124 = vpack.c.b16 %v10086, %v10085
      %v10125 = vpack.c.b16 %v10088, %v10087
      %v10126 = vpack.c.b16 %v10090, %v10089
      %v10127 = vpack.c.b16 %v10092, %v10091
      %v10128 = vpack.c.b16 %v10094, %v10093
      %v10129 = vpack.c.b16 %v10096, %v10095
      %v10130 = vpack.c.b16 %v10098, %v10097
      %10163 = vmatprep.subr.bf16.mxu0 0
      %10164 = vmatpush1.bf16.msra.mxu0 %v10099
      %10165 = vmatprep.subr.bf16.mxu0 0
      %10166 = vmatpush1.bf16.msra.mxu0 %v10100
      %10167 = vmatprep.subr.bf16.mxu0 0
      %10168 = vmatpush1.bf16.msra.mxu0 %v10101
      %10169 = vmatprep.subr.bf16.mxu0 0
      %10170 = vmatpush1.bf16.msra.mxu0 %v10102
      %10171 = vmatprep.subr.bf16.mxu0 0
      %10172 = vmatpush1.bf16.msra.mxu0 %v10103
      %10173 = vmatprep.subr.bf16.mxu0 0
      %10174 = vmatpush1.bf16.msra.mxu0 %v10104
      %10175 = vmatprep.subr.bf16.mxu0 0
      %10176 = vmatpush1.bf16.msra.mxu0 %v10105
      %10177 = vmatprep.subr.bf16.mxu0 0
      %10178 = vmatpush1.bf16.msra.mxu0 %v10106
      %10179 = vmatprep.subr.bf16.mxu0 0
      %10180 = vmatpush1.bf16.msra.mxu0 %v10107
      %10181 = vmatprep.subr.bf16.mxu0 0
      %10182 = vmatpush1.bf16.msra.mxu0 %v10108
      %10183 = vmatprep.subr.bf16.mxu0 0
      %10184 = vmatpush1.bf16.msra.mxu0 %v10109
      %10185 = vmatprep.subr.bf16.mxu0 0
      %10186 = vmatpush1.bf16.msra.mxu0 %v10110
      %10187 = vmatprep.subr.bf16.mxu0 0
      %10188 = vmatpush1.bf16.msra.mxu0 %v10111
      %10189 = vmatprep.subr.bf16.mxu0 0
      %10190 = vmatpush1.bf16.msra.mxu0 %v10112
      %10191 = vmatprep.subr.bf16.mxu0 0
      %10192 = vmatpush1.bf16.msra.mxu0 %v10113
      %10193 = vmatprep.subr.bf16.mxu0 0
      %10194 = vmatpush1.bf16.msra.mxu0 %v10114
      %10195 = vmatprep.mubr.bf16.mxu0 %v9837
      %10196 = vmatmul.mubr.bf16.gmra.mrb[0].mxu0 %v9836
      %v10197 = vpop.f32.mrb[0].mxu0
      %v10198 = vadd.f32 %v9969, %v10197
      %v10199 = vpop.f32.mrb[0].mxu0
      %v10200 = vpop.f32.mrb[0].mxu0
      %v10201 = vadd.f32 %v9969, %v10200
      %v10202 = vpop.f32.mrb[0].mxu0
      %10203 = vmatprep.mubr.bf16.mxu0 %v9841
      %10204 = vmatmul.mubr.bf16.gmra.mrb[0].mxu0 %v9840
      %v10205 = vpop.f32.mrb[0].mxu0
      %v10206 = vadd.f32 %v9969, %v10205
      %v10207 = vpop.f32.mrb[0].mxu0
      %v10208 = vpop.f32.mrb[0].mxu0
      %v10209 = vadd.f32 %v9969, %v10208
      %v10210 = vpop.f32.mrb[0].mxu0
      %10211 = vmatprep.mubr.bf16.mxu0 %v9845
      %10212 = vmatmul.mubr.bf16.gmra.mrb[0].mxu0 %v9844
      %v10213 = vpop.f32.mrb[0].mxu0
      %v10214 = vadd.f32 %v9969, %v10213
      %v10215 = vpop.f32.mrb[0].mxu0
      %v10216 = vpop.f32.mrb[0].mxu0
      %v10217 = vadd.f32 %v9969, %v10216
      %v10218 = vpop.f32.mrb[0].mxu0
      %10219 = vmatprep.mubr.bf16.mxu0 %v9849
      %10220 = vmatmul.mubr.bf16.gmra.mrb[0].mxu0 %v9848
      %v10221 = vpop.f32.mrb[0].mxu0
      %v10222 = vadd.f32 %v9969, %v10221
      %v10223 = vpop.f32.mrb[0].mxu0
      %v10224 = vpop.f32.mrb[0].mxu0
      %v10225 = vadd.f32 %v9969, %v10224
      %v10226 = vpop.f32.mrb[0].mxu0
      %10227 = vmatprep.mubr.bf16.mxu0 %v9853
      %10228 = vmatmul.mubr.bf16.gmra.mrb[0].mxu0 %v9852
      %v10229 = vpop.f32.mrb[0].mxu0
      %v10230 = vadd.f32 %v9969, %v10229
      %v10231 = vpop.f32.mrb[0].mxu0
      %v10232 = vpop.f32.mrb[0].mxu0
      %v10233 = vadd.f32 %v9969, %v10232
      %v10234 = vpop.f32.mrb[0].mxu0
      %10235 = vmatprep.mubr.bf16.mxu0 %v9857
      %10236 = vmatmul.mubr.bf16.gmra.mrb[0].mxu0 %v9856
      %v10237 = vpop.f32.mrb[0].mxu0
      %v10238 = vadd.f32 %v9969, %v10237
      %v10239 = vpop.f32.mrb[0].mxu0
      %v10240 = vpop.f32.mrb[0].mxu0
      %v10241 = vadd.f32 %v9969, %v10240
      %v10242 = vpop.f32.mrb[0].mxu0
      %10243 = vmatprep.mubr.bf16.mxu0 %v9861
      %10244 = vmatmul.mubr.bf16.gmra.mrb[0].mxu0 %v9860
      %v10245 = vpop.f32.mrb[0].mxu0
      %v10246 = vadd.f32 %v9969, %v10245
      %v10247 = vpop.f32.mrb[0].mxu0
      %v10248 = vpop.f32.mrb[0].mxu0
      %v10249 = vadd.f32 %v9969, %v10248
      %v10250 = vpop.f32.mrb[0].mxu0
      %10251 = vmatprep.mubr.bf16.mxu0 %v9865
      %10252 = vmatmul.mubr.bf16.gmra.mrb[0].mxu0 %v9864
      %v10253 = vpop.f32.mrb[0].mxu0
      %v10254 = vadd.f32 %v9969, %v10253
      %v10255 = vpop.f32.mrb[0].mxu0
      %v10256 = vpop.f32.mrb[0].mxu0
      %v10257 = vadd.f32 %v9969, %v10256
      %v10258 = vpop.f32.mrb[0].mxu0
      %10259 = vmatprep.mubr.bf16.mxu0 %v9869
      %10260 = vmatmul.mubr.bf16.gmra.mrb[0].mxu0 %v9868
      %v10261 = vpop.f32.mrb[0].mxu0
      %v10262 = vadd.f32 %v9969, %v10261
      %v10263 = vpop.f32.mrb[0].mxu0
      %v10264 = vpop.f32.mrb[0].mxu0
      %v10265 = vadd.f32 %v9969, %v10264
      %v10266 = vpop.f32.mrb[0].mxu0
      %10267 = vmatprep.mubr.bf16.mxu0 %v9873
      %10268 = vmatmul.mubr.bf16.gmra.mrb[0].mxu0 %v9872
      %v10269 = vpop.f32.mrb[0].mxu0
      %v10270 = vadd.f32 %v9969, %v10269
      %v10271 = vpop.f32.mrb[0].mxu0
      %v10272 = vpop.f32.mrb[0].mxu0
      %v10273 = vadd.f32 %v9969, %v10272
      %v10274 = vpop.f32.mrb[0].mxu0
      %10275 = vmatprep.mubr.bf16.mxu0 %v9877
      %10276 = vmatmul.mubr.bf16.gmra.mrb[0].mxu0 %v9876
      %v10277 = vpop.f32.mrb[0].mxu0
      %v10278 = vadd.f32 %v9969, %v10277
      %v10279 = vpop.f32.mrb[0].mxu0
      %v10280 = vpop.f32.mrb[0].mxu0
      %v10281 = vadd.f32 %v9969, %v10280
      %v10282 = vpop.f32.mrb[0].mxu0
      %10283 = vmatprep.mubr.bf16.mxu0 %v9881
      %10284 = vmatmul.mubr.bf16.gmra.mrb[0].mxu0 %v9880
      %v10285 = vpop.f32.mrb[0].mxu0
      %v10286 = vadd.f32 %v9969, %v10285
      %v10287 = vpop.f32.mrb[0].mxu0
      %v10288 = vpop.f32.mrb[0].mxu0
      %v10289 = vadd.f32 %v9969, %v10288
      %v10290 = vpop.f32.mrb[0].mxu0
      %10291 = vmatprep.mubr.bf16.mxu0 %v9885
      %10292 = vmatmul.mubr.bf16.gmra.mrb[0].mxu0 %v9884
      %v10293 = vpop.f32.mrb[0].mxu0
      %v10294 = vadd.f32 %v9969, %v10293
      %v10295 = vpop.f32.mrb[0].mxu0
      %v10296 = vpop.f32.mrb[0].mxu0
      %v10297 = vadd.f32 %v9969, %v10296
      %v10298 = vpop.f32.mrb[0].mxu0
      %10299 = vmatprep.mubr.bf16.mxu0 %v9889
      %10300 = vmatmul.mubr.bf16.gmra.mrb[0].mxu0 %v9888
      %v10301 = vpop.f32.mrb[0].mxu0
      %v10302 = vadd.f32 %v9969, %v10301
      %v10303 = vpop.f32.mrb[0].mxu0
      %v10304 = vpop.f32.mrb[0].mxu0
      %v10305 = vadd.f32 %v9969, %v10304
      %v10306 = vpop.f32.mrb[0].mxu0
      %10307 = vmatprep.mubr.bf16.mxu0 %v9893
      %10308 = vmatmul.mubr.bf16.gmra.mrb[0].mxu0 %v9892
      %v10309 = vpop.f32.mrb[0].mxu0
      %v10310 = vadd.f32 %v9969, %v10309
      %v10311 = vpop.f32.mrb[0].mxu0
      %v10312 = vpop.f32.mrb[0].mxu0
      %v10313 = vadd.f32 %v9969, %v10312
      %v10314 = vpop.f32.mrb[0].mxu0
      %10315 = vmatprep.mubr.bf16.mxu0 %v9897
      %10316 = vmatmul.mubr.bf16.gmra.mrb[0].mxu0 %v9896
      %v10317 = vpop.f32.mrb[0].mxu0
      %v10318 = vadd.f32 %v9969, %v10317
      %v10319 = vpop.f32.mrb[0].mxu0
      %v10320 = vpop.f32.mrb[0].mxu0
      %v10321 = vadd.f32 %v9969, %v10320
      %v10322 = vpop.f32.mrb[0].mxu0
      %10323 = vdwg.mxu0
      %10324 = vmatprep.subr.bf16.mxu0 0
      %10325 = vmatpush1.bf16.msra.mxu0 %v10115
      %10326 = vmatprep.subr.bf16.mxu0 0
      %10327 = vmatpush1.bf16.msra.mxu0 %v10116
      %10328 = vmatprep.subr.bf16.mxu0 0
      %10329 = vmatpush1.bf16.msra.mxu0 %v10117
      %10330 = vmatprep.subr.bf16.mxu0 0
      %10331 = vmatpush1.bf16.msra.mxu0 %v10118
      %10332 = vmatprep.subr.bf16.mxu0 0
      %10333 = vmatpush1.bf16.msra.mxu0 %v10119
      %10334 = vmatprep.subr.bf16.mxu0 0
      %10335 = vmatpush1.bf16.msra.mxu0 %v10120
      %10336 = vmatprep.subr.bf16.mxu0 0
      %10337 = vmatpush1.bf16.msra.mxu0 %v10121
      %10338 = vmatprep.subr.bf16.mxu0 0
      %10339 = vmatpush1.bf16.msra.mxu0 %v10122
      %10340 = vmatprep.subr.bf16.mxu0 0
      %10341 = vmatpush1.bf16.msra.mxu0 %v10123
      %10342 = vmatprep.subr.bf16.mxu0 0
      %10343 = vmatpush1.bf16.msra.mxu0 %v10124
      %10344 = vmatprep.subr.bf16.mxu0 0
      %10345 = vmatpush1.bf16.msra.mxu0 %v10125
      %10346 = vmatprep.subr.bf16.mxu0 0
      %10347 = vmatpush1.bf16.msra.mxu0 %v10126
      %10348 = vmatprep.subr.bf16.mxu0 0
      %10349 = vmatpush1.bf16.msra.mxu0 %v10127
      %10350 = vmatprep.subr.bf16.mxu0 0
      %10351 = vmatpush1.bf16.msra.mxu0 %v10128
      %10352 = vmatprep.subr.bf16.mxu0 0
      %10353 = vmatpush1.bf16.msra.mxu0 %v10129
      %10354 = vmatprep.subr.bf16.mxu0 0
      %10355 = vmatpush1.bf16.msra.mxu0 %v10130
      %10356 = vmatprep.mubr.bf16.mxu0 %v9839
      %10357 = vmatmul.mubr.bf16.gmra.mrb[0].mxu0 %v9838
      %v10358 = vpop.f32.mrb[0].mxu0
      %v10359 = vadd.f32 %v10198, %v10358
      %v10360 = vpop.f32.mrb[0].mxu0
      %v10361 = vpop.f32.mrb[0].mxu0
      %v10362 = vadd.f32 %v10201, %v10361
      %v10363 = vpop.f32.mrb[0].mxu0
      %10364 = vmatprep.mubr.bf16.mxu0 %v9843
      %10365 = vmatmul.mubr.bf16.gmra.mrb[0].mxu0 %v9842
      %v10366 = vpop.f32.mrb[0].mxu0
      %v10367 = vadd.f32 %v10206, %v10366
      %v10368 = vpop.f32.mrb[0].mxu0
      %v10369 = vpop.f32.mrb[0].mxu0
      %v10370 = vadd.f32 %v10209, %v10369
      %v10371 = vpop.f32.mrb[0].mxu0
      %10372 = vmatprep.mubr.bf16.mxu0 %v9847
      %10373 = vmatmul.mubr.bf16.gmra.mrb[0].mxu0 %v9846
      %v10374 = vpop.f32.mrb[0].mxu0
      %v10375 = vadd.f32 %v10214, %v10374
      %v10376 = vpop.f32.mrb[0].mxu0
      %v10377 = vpop.f32.mrb[0].mxu0
      %v10378 = vadd.f32 %v10217, %v10377
      %v10379 = vpop.f32.mrb[0].mxu0
      %10380 = vmatprep.mubr.bf16.mxu0 %v9851
      %10381 = vmatmul.mubr.bf16.gmra.mrb[0].mxu0 %v9850
      %v10382 = vpop.f32.mrb[0].mxu0
      %v10383 = vadd.f32 %v10222, %v10382
      %v10384 = vpop.f32.mrb[0].mxu0
      %v10385 = vpop.f32.mrb[0].mxu0
      %v10386 = vadd.f32 %v10225, %v10385
      %v10387 = vpop.f32.mrb[0].mxu0
      %10388 = vmatprep.mubr.bf16.mxu0 %v9855
      %10389 = vmatmul.mubr.bf16.gmra.mrb[0].mxu0 %v9854
      %v10390 = vpop.f32.mrb[0].mxu0
      %v10391 = vadd.f32 %v10230, %v10390
      %v10392 = vpop.f32.mrb[0].mxu0
      %v10393 = vpop.f32.mrb[0].mxu0
      %v10394 = vadd.f32 %v10233, %v10393
      %v10395 = vpop.f32.mrb[0].mxu0
      %10396 = vmatprep.mubr.bf16.mxu0 %v9859
      %10397 = vmatmul.mubr.bf16.gmra.mrb[0].mxu0 %v9858
      %v10398 = vpop.f32.mrb[0].mxu0
      %v10399 = vadd.f32 %v10238, %v10398
      %v10400 = vpop.f32.mrb[0].mxu0
      %v10401 = vpop.f32.mrb[0].mxu0
      %v10402 = vadd.f32 %v10241, %v10401
      %v10403 = vpop.f32.mrb[0].mxu0
      %10404 = vmatprep.mubr.bf16.mxu0 %v9863
      %10405 = vmatmul.mubr.bf16.gmra.mrb[0].mxu0 %v9862
      %v10406 = vpop.f32.mrb[0].mxu0
      %v10407 = vadd.f32 %v10246, %v10406
      %v10408 = vpop.f32.mrb[0].mxu0
      %v10409 = vpop.f32.mrb[0].mxu0
      %v10410 = vadd.f32 %v10249, %v10409
      %v10411 = vpop.f32.mrb[0].mxu0
      %10412 = vmatprep.mubr.bf16.mxu0 %v9867
      %10413 = vmatmul.mubr.bf16.gmra.mrb[0].mxu0 %v9866
      %v10414 = vpop.f32.mrb[0].mxu0
      %v10415 = vadd.f32 %v10254, %v10414
      %v10416 = vpop.f32.mrb[0].mxu0
      %v10417 = vpop.f32.mrb[0].mxu0
      %v10418 = vadd.f32 %v10257, %v10417
      %v10419 = vpop.f32.mrb[0].mxu0
      %10420 = vmatprep.mubr.bf16.mxu0 %v9871
      %10421 = vmatmul.mubr.bf16.gmra.mrb[0].mxu0 %v9870
      %v10422 = vpop.f32.mrb[0].mxu0
      %v10423 = vadd.f32 %v10262, %v10422
      %v10424 = vpop.f32.mrb[0].mxu0
      %v10425 = vpop.f32.mrb[0].mxu0
      %v10426 = vadd.f32 %v10265, %v10425
      %v10427 = vpop.f32.mrb[0].mxu0
      %10428 = vmatprep.mubr.bf16.mxu0 %v9875
      %10429 = vmatmul.mubr.bf16.gmra.mrb[0].mxu0 %v9874
      %v10430 = vpop.f32.mrb[0].mxu0
      %v10431 = vadd.f32 %v10270, %v10430
      %v10432 = vpop.f32.mrb[0].mxu0
      %v10433 = vpop.f32.mrb[0].mxu0
      %v10434 = vadd.f32 %v10273, %v10433
      %v10435 = vpop.f32.mrb[0].mxu0
      %10436 = vmatprep.mubr.bf16.mxu0 %v9879
      %10437 = vmatmul.mubr.bf16.gmra.mrb[0].mxu0 %v9878
      %v10438 = vpop.f32.mrb[0].mxu0
      %v10439 = vadd.f32 %v10278, %v10438
      %v10440 = vpop.f32.mrb[0].mxu0
      %v10441 = vpop.f32.mrb[0].mxu0
      %v10442 = vadd.f32 %v10281, %v10441
      %v10443 = vpop.f32.mrb[0].mxu0
      %10444 = vmatprep.mubr.bf16.mxu0 %v9883
      %10445 = vmatmul.mubr.bf16.gmra.mrb[0].mxu0 %v9882
      %v10446 = vpop.f32.mrb[0].mxu0
      %v10447 = vadd.f32 %v10286, %v10446
      %v10448 = vpop.f32.mrb[0].mxu0
      %v10449 = vpop.f32.mrb[0].mxu0
      %v10450 = vadd.f32 %v10289, %v10449
      %v10451 = vpop.f32.mrb[0].mxu0
      %10452 = vmatprep.mubr.bf16.mxu0 %v9887
      %10453 = vmatmul.mubr.bf16.gmra.mrb[0].mxu0 %v9886
      %v10454 = vpop.f32.mrb[0].mxu0
      %v10455 = vadd.f32 %v10294, %v10454
      %v10456 = vpop.f32.mrb[0].mxu0
      %v10457 = vpop.f32.mrb[0].mxu0
      %v10458 = vadd.f32 %v10297, %v10457
      %v10459 = vpop.f32.mrb[0].mxu0
      %10460 = vmatprep.mubr.bf16.mxu0 %v9891
      %10461 = vmatmul.mubr.bf16.gmra.mrb[0].mxu0 %v9890
      %v10462 = vpop.f32.mrb[0].mxu0
      %v10463 = vadd.f32 %v10302, %v10462
      %v10464 = vpop.f32.mrb[0].mxu0
      %v10465 = vpop.f32.mrb[0].mxu0
      %v10466 = vadd.f32 %v10305, %v10465
      %v10467 = vpop.f32.mrb[0].mxu0
      %10468 = vmatprep.mubr.bf16.mxu0 %v9895
      %10469 = vmatmul.mubr.bf16.gmra.mrb[0].mxu0 %v9894
      %v10470 = vpop.f32.mrb[0].mxu0
      %v10471 = vadd.f32 %v10310, %v10470
      %v10472 = vpop.f32.mrb[0].mxu0
      %v10473 = vpop.f32.mrb[0].mxu0
      %v10474 = vadd.f32 %v10313, %v10473
      %v10475 = vpop.f32.mrb[0].mxu0
      %10476 = vmatprep.mubr.bf16.mxu0 %v9899
      %10477 = vmatmul.mubr.bf16.gmra.mrb[0].mxu0 %v9898
      %v10478 = vpop.f32.mrb[0].mxu0
      %v10479 = vadd.f32 %v10318, %v10478
      %v10480 = vpop.f32.mrb[0].mxu0
      %v10481 = vpop.f32.mrb[0].mxu0
      %v10482 = vadd.f32 %v10321, %v10481
      %v10483 = vpop.f32.mrb[0].mxu0
      %10484 = vdwg.mxu0
      %10485 = vst [vmem:[%s442] sm:$0xff] %v10359
      %10486 = vst [vmem:[%s442 + $0x8] sm:$0xff] %v10362
      %10487 = vst [vmem:[%s442 + $0x10] sm:$0xff] %v10367
      %10488 = vst [vmem:[%s442 + $0x18] sm:$0xff] %v10370
      %10489 = vst [vmem:[%s442 + $0x20] sm:$0xff] %v10375
      %10490 = vst [vmem:[%s442 + $0x28] sm:$0xff] %v10378
      %10491 = vst [vmem:[%s442 + $0x30] sm:$0xff] %v10383
      %10492 = vst [vmem:[%s442 + $0x38] sm:$0xff] %v10386
      %10493 = vst [vmem:[%s442 + $0x40] sm:$0xff] %v10391
      %10494 = vst [vmem:[%s442 + $0x48] sm:$0xff] %v10394
      %10495 = vst [vmem:[%s442 + $0x50] sm:$0xff] %v10399
      %10496 = vst [vmem:[%s442 + $0x58] sm:$0xff] %v10402
      %10497 = vst [vmem:[%s442 + $0x60] sm:$0xff] %v10407
      %10498 = vst [vmem:[%s442 + $0x68] sm:$0xff] %v10410
      %10499 = vst [vmem:[%s442 + $0x70] sm:$0xff] %v10415
      %10500 = vst [vmem:[%s442 + $0x78] sm:$0xff] %v10418
      %10501 = vst [vmem:[%s442 + $0x80] sm:$0xff] %v10423
      %10502 = vst [vmem:[%s442 + $0x88] sm:$0xff] %v10426
      %10503 = vst [vmem:[%s442 + $0x90] sm:$0xff] %v10431
      %10504 = vst [vmem:[%s442 + $0x98] sm:$0xff] %v10434
      %10505 = vst [vmem:[%s442 + $0xa0] sm:$0xff] %v10439
      %10506 = vst [vmem:[%s442 + $0xa8] sm:$0xff] %v10442
      %10507 = vst [vmem:[%s442 + $0xb0] sm:$0xff] %v10447
      %10508 = vst [vmem:[%s442 + $0xb8] sm:$0xff] %v10450
      %10509 = vst [vmem:[%s442 + $0xc0] sm:$0xff] %v10455
      %10510 = vst [vmem:[%s442 + $0xc8] sm:$0xff] %v10458
      %10511 = vst [vmem:[%s442 + $0xd0] sm:$0xff] %v10463
      %10512 = vst [vmem:[%s442 + $0xd8] sm:$0xff] %v10466
      %10513 = vst [vmem:[%s442 + $0xe0] sm:$0xff] %v10471
      %10514 = vst [vmem:[%s442 + $0xe8] sm:$0xff] %v10474
      %10515 = vst [vmem:[%s442 + $0xf0] sm:$0xff] %v10479
      %10516 = vst [vmem:[%s442 + $0xf8] sm:$0xff] %v10482
      %s10517 = smul.u32 32, %s24
      %p10518 = scmp.lt.s32.totalorder %s10517, 63
      %s10519 = scalar_select %p10518, %s10517, 63
      %s10520 = smul.addr %s10519, 8
      %s10521 = scalar_lea.vmem %s13, %s10520
      // Predicated region
      $region73: #{tipd_encoder_forward.1} parent=71 // pred_check
        %p10522 = pneg %p320
      $region74: #{tipd_encoder_forward.1} parent=71 // pred_check_branch
        %10524 = sbr.rel (%p10522) target = $region76
      $region75: #{tipd_encoder_forward.1} parent=71 // pred_region
        %s10525 = smul.u32 32, %s24
      $region76: #{tipd_encoder_forward.1} parent=71 // pred_fallthru
        _
    $region72: #{tipd_encoder_forward.1} parent=5 // pred_fallthru
      _
    %p10526 = scmp.le.s32.totalorder 2, %s19
    // Predicated region
    $region77: #{tipd_encoder_forward.1} parent=5 // pred_check
      %p10527 = pneg %p10526
    $region78: #{tipd_encoder_forward.1} parent=5 // pred_check_branch
      %10529 = sbr.rel (%p10527) target = $region80
    $region79: #{tipd_encoder_forward.1} parent=5 // pred_region
      %s10530 = ssub.s32 %s19, 2
      // Predicated region
      $region81: #{tipd_encoder_forward.1} parent=79 // pred_check
        %p10531 = pneg %p326
      $region82: #{tipd_encoder_forward.1} parent=79 // pred_check_branch
        %10533 = sbr.rel (%p10531) target = $region84
      $region83: #{tipd_encoder_forward.1} parent=79 // pred_region
        %s10534 = smul.u32 32, %s25
        %p10535 = scmp.lt.s32.totalorder %s10534, 63
        %s10536 = scalar_select %p10535, %s10534, 63
        %s10537 = smul.addr %s10536, 8
        %s10538 = scalar_lea.vmem %s13, %s10537
      $region84: #{tipd_encoder_forward.1} parent=79 // pred_fallthru
        _
    $region80: #{tipd_encoder_forward.1} parent=5 // pred_fallthru
      _
  $region6: #{tipd_encoder_forward.1} parent=0 // loop_footer
    %s23 = sadd.s32 1, %s19
  $region7: #{tipd_encoder_forward.1} parent=0 // loop_footer_branch
    %18 = sbr.rel target = $region3
  $region8: #{tipd_encoder_forward.1} parent=0 // loop_exit
    _

</llo_original>
